<compile_context>
chip_gen: v7x
topology: tpu7x:2x2x1
jax: 0.10.0
libtpu: 0.0.40
codegen_flags: <defaults>
</compile_context>

<pallas_src>
import jax
import jax.numpy as jnp
from jax.experimental import pallas as pl
from jax.experimental.pallas import tpu as pltpu

PAD = 128  # lane padding (one full vreg) on each side of the flattened spatial axis


# ---------------------------------------------------------------------------
# In-kernel helpers
# ---------------------------------------------------------------------------
def _gelu(x):
    # tanh-approximate GELU (tanh runs on the EUP; much cheaper than an erf polynomial).
    c = 0.7978845608028654  # sqrt(2/pi)
    return 0.5 * x * (1.0 + jnp.tanh(c * (x + 0.044715 * x * x * x)))


def _layernorm(x, w_ref, b_ref):
    # WithBias LayerNorm over the channel (sublane) axis, independently per pixel column.
    mu = jnp.mean(x, axis=0, keepdims=True)
    var = jnp.mean(jnp.square(x - mu), axis=0, keepdims=True)
    return (x - mu) * jax.lax.rsqrt(var + 1e-5) * w_ref[...] + b_ref[...]


def _write_padded(xpad_ref, x, n, row0=0):
    # xpad = [PAD zeros | x | PAD zeros] along lanes.  Any tap read landing in the pad
    # region is zeroed by the validity masks; we zero the pads anyway so stale VMEM
    # (NaN/Inf) can never leak through 0 * garbage.
    r = x.shape[0]
    z = jnp.zeros((r, PAD), jnp.float32)
    xpad_ref[row0:row0 + r, 0:PAD] = z
    xpad_ref[row0:row0 + r, PAD:PAD + n] = x
    xpad_ref[row0:row0 + r, PAD + n:2 * PAD + n] = z


def _tap(xpad_ref, rows, t, width, n):
    # Shifted flat view of the padded activation for 3x3 tap t (stride 1, padding 1).
    dy, dx = t // 3, t % 3
    off = PAD + (dy - 1) * width + (dx - 1)
    return xpad_ref[0:rows, off:off + n]


def _conv3x3(xpad_ref, cin, w_ref, b_ref, masks_ref, stack_ref, width, n):
    # Dense 3x3 conv: build a pre-masked bf16 (9*Cin, N) im2col stack in VMEM, then run
    # ONE (Cout, 9*Cin) @ (9*Cin, N) MXU matmul with f32 accumulation.
    for t in range(9):
        stack_ref[t * cin:(t + 1) * cin, :] = (
            _tap(xpad_ref, cin, t, width, n) * masks_ref[t]).astype(jnp.bfloat16)
    y = jnp.dot(w_ref[...], stack_ref[0:9 * cin, :], preferred_element_type=jnp.float32)
    return y if b_ref is None else y + b_ref[...]


def _dw3x3(xpad_ref, rows, wdw_ref, masks_ref, width, n):
    # Depthwise 3x3 conv directly on the lane-dense (C, B*HW) layout (bias-free).
    acc = jnp.zeros((rows, n), jnp.float32)
    for t in range(9):
        acc = acc + _tap(xpad_ref, rows, t, width, n) * masks_ref[t] * wdw_ref[t]
    return acc


# ---------------------------------------------------------------------------
# Fused Pallas kernels
# ---------------------------------------------------------------------------
def _bfa_kernel(B, HW, C, heads, hidden_p, width):
    # Full BFA block:  x = x + Attn(LN1(x));  x = x + FFN(LN2(x))
    N = B * HW
    ch = C // heads

    def kernel(x_ref, masks_ref, ln1w_ref, ln1b_ref, qkv_w_ref, qkv_dw_ref, temp_ref,
               proj_w_ref, ln2w_ref, ln2b_ref, fin_w_ref, fdw_ref, fout_w_ref,
               o_ref, xpad_ref, qkv_scr, attn_scr):
        x = x_ref[...]                                              # (C, N) f32
        # ------------------------------ attention branch -------------------------
        xn = _layernorm(x, ln1w_ref, ln1b_ref)
        qkv = jnp.dot(qkv_w_ref[...], xn.astype(jnp.bfloat16),     # packed q|k|v 1x1
                      preferred_element_type=jnp.float32)           # (3C, N)
        _write_padded(xpad_ref, qkv, N)
        qkv_scr[...] = _dw3x3(xpad_ref, 3 * C, qkv_dw_ref, masks_ref, width, N)
        for b in range(B):
            c0 = b * HW
            for h in range(heads):
                r0 = h * ch
                q = qkv_scr[r0:r0 + ch, c0:c0 + HW]
                k = qkv_scr[C + r0:C + r0 + ch, c0:c0 + HW]
                v = qkv_scr[2 * C + r0:2 * C + r0 + ch, c0:c0 + HW]
                qn = q * jax.lax.rsqrt(
                    jnp.maximum(jnp.sum(q * q, axis=-1, keepdims=True), 1e-24))
                kn = k * jax.lax.rsqrt(
                    jnp.maximum(jnp.sum(k * k, axis=-1, keepdims=True), 1e-24))
                s = jax.lax.dot_general(qn.astype(jnp.bfloat16), kn.astype(jnp.bfloat16),
                                        (((1,), (1,)), ((), ())),
                                        preferred_element_type=jnp.float32)
                s = s * temp_ref[h]                                  # (1,1) broadcast
                s = s - jnp.max(s, axis=-1, keepdims=True)
                e = jnp.exp(s)
                p = e / jnp.sum(e, axis=-1, keepdims=True)           # exact softmax
                attn_scr[r0:r0 + ch, c0:c0 + HW] = jnp.dot(
                    p.astype(jnp.bfloat16), v.astype(jnp.bfloat16),
                    preferred_element_type=jnp.float32)
        x1 = x + jnp.dot(proj_w_ref[...], attn_scr[...].astype(jnp.bfloat16),
                         preferred_element_type=jnp.float32)         # project_out + residual
        # ------------------------------ FFN branch --------------------------------
        x1n = _layernorm(x1, ln2w_ref, ln2b_ref)
        hdn = jnp.dot(fin_w_ref[...], x1n.astype(jnp.bfloat16),
                      preferred_element_type=jnp.float32)            # (2*hidden_p, N)
        _write_padded(xpad_ref, hdn, N)
        hdw = _dw3x3(xpad_ref, 2 * hidden_p, fdw_ref, masks_ref, width, N)
        g = _gelu(hdw[:hidden_p]) * hdw[hidden_p:]                   # gated GELU
        o_ref[...] = x1 + jnp.dot(fout_w_ref[...], g.astype(jnp.bfloat16),
                                  preferred_element_type=jnp.float32)
    return kernel


def _offset_head_kernel(width, n, C, with_prev):
    # bottleneck (3x3 + GELU) [+ bottleneck_o (3x3 + GELU)] + offset_conv (3x3), fused.
    def kernel(*refs):
        if with_prev:
            (cat_ref, prev_ref, masks_ref, w1_ref, w1o_ref, w2_ref,
             o_ref, xpad_ref, stack_ref) = refs
        else:
            (cat_ref, masks_ref, w1_ref, w2_ref,
             o_ref, xpad_ref, stack_ref) = refs
        _write_padded(xpad_ref, cat_ref[...], n)
        h = _gelu(_conv3x3(xpad_ref, 2 * C, w1_ref, None, masks_ref, stack_ref, width, n))
        if with_prev:
            _write_padded(xpad_ref, prev_ref[...], n, 0)
            _write_padded(xpad_ref, h, n, C)
            h = _gelu(_conv3x3(xpad_ref, 2 * C, w1o_ref, None, masks_ref, stack_ref,
                               width, n))
        _write_padded(xpad_ref, h, n)
        o_ref[...] = _conv3x3(xpad_ref, C, w2_ref, None, masks_ref, stack_ref, width, n)
    return kernel


def _rbfm_tail_kernel(width, n, C):
    # feat_fusion + feat_expand + (exp - cat) + diff_fusion + residual add, fused.
    def kernel(cat_ref, masks_ref, wf_ref, bf_ref, we_ref, be_ref, wd_ref, bd_ref,
               o_ref, xpad_ref, stack_ref):
        cat = cat_ref[...]                                            # (2C, N)
        _write_padded(xpad_ref, cat, n)
        fused = _gelu(_conv3x3(xpad_ref, 2 * C, wf_ref, bf_ref, masks_ref, stack_ref,
                               width, n))
        _write_padded(xpad_ref, fused, n)
        exp = _gelu(_conv3x3(xpad_ref, C, we_ref, be_ref, masks_ref, stack_ref, width, n))
        _write_padded(xpad_ref, exp - cat, n)
        resid = _gelu(_conv3x3(xpad_ref, 2 * C, wd_ref, bd_ref, masks_ref, stack_ref,
                               width, n))
        o_ref[...] = fused + resid
    return kernel


def _pw_kernel(x_ref, w_ref, b_ref, o_ref):
    # Lane-dense pointwise matmul (used for the block-diagonal deform-conv reduction).
    o_ref[...] = jnp.dot(w_ref[...], x_ref[...].astype(jnp.bfloat16),
                         preferred_element_type=jnp.float32) + b_ref[...]


# ---------------------------------------------------------------------------
# Pallas wrappers (whole-problem-per-call; no grid needed at these sizes)
# ---------------------------------------------------------------------------
def _call_bfa(bp, masks, x_cols, B, HW, width):
    C, N = x_cols.shape
    heads = bp["temp"].shape[0]
    hidden_p = bp["fout_w"].shape[1]
    rows = max(3 * C, 2 * hidden_p)
    return pl.pallas_call(
        _bfa_kernel(B, HW, C, heads, hidden_p, width),
        out_shape=jax.ShapeDtypeStruct((C, N), jnp.float32),
        scratch_shapes=[pltpu.VMEM((rows, N + 2 * PAD), jnp.float32),   # padded act
                        pltpu.VMEM((3 * C, N), jnp.float32),            # qkv after dw
                        pltpu.VMEM((C, N), jnp.float32)],                # attention out
    )(x_cols, masks, bp["ln1w"], bp["ln1b"], bp["qkv_w"], bp["qkv_dw"], bp["temp"],
      bp["proj_w"], bp["ln2w"], bp["ln2b"], bp["fin_w"], bp["fdw"], bp["fout_w"])


def _call_offset_head(hp, masks, cat, prev_cols, width):
    C2, N = cat.shape
    C = C2 // 2
    Cout = hp["w2"].shape[0]
    with_prev = prev_cols is not None
    args = ([cat, prev_cols] if with_prev else [cat]) + [masks, hp["w1"]]
    args += ([hp["w1o"], hp["w2"]] if with_prev else [hp["w2"]])
    return pl.pallas_call(
        _offset_head_kernel(width, N, C, with_prev),
        out_shape=jax.ShapeDtypeStruct((Cout, N), jnp.float32),
        scratch_shapes=[pltpu.VMEM((2 * C, N + 2 * PAD), jnp.float32),
                        pltpu.VMEM((9 * 2 * C, N), jnp.bfloat16)],
    )(*args)


def _call_rbfm_tail(tp, masks, cat, width):
    C2, N = cat.shape
    C = C2 // 2
    return pl.pallas_call(
        _rbfm_tail_kernel(width, N, C),
        out_shape=jax.ShapeDtypeStruct((C, N), jnp.float32),
        scratch_shapes=[pltpu.VMEM((2 * C, N + 2 * PAD), jnp.float32),
                        pltpu.VMEM((9 * 2 * C, N), jnp.bfloat16)],
    )(cat, masks, tp["wf"], tp["bf"], tp["we"], tp["be"], tp["wd"], tp["bd"])


def _call_pw(x_cols, w, b):
    Cout = w.shape[0]
    N = x_cols.shape[1]
    return pl.pallas_call(
        _pw_kernel,
        out_shape=jax.ShapeDtypeStruct((Cout, N), jnp.float32),
    )(x_cols, w, b)


# ---------------------------------------------------------------------------
# Modulated deformable conv (torchvision DeformConv2d semantics)
# ---------------------------------------------------------------------------
def _deform_patches(x, off_cols, G=8, pad=2, dil=2):
    # TODO(synk): the data-dependent bilinear sampling-matrix construction stays in JAX;
    # the gather itself is replaced by a one-hot bilinear matrix contracted on the MXU,
    # and the grouped reduction runs as a block-diagonal Pallas matmul (_call_pw).
    B, C, H, W = x.shape
    HW = H * W
    K = 9
    Cg = C // G
    off = off_cols.reshape(3 * G * K, B, HW)
    o12 = off[:2 * G * K].reshape(G, K, 2, B, HW)          # channel = (g*K+k)*2 + {dy,dx}
    dy = jnp.transpose(o12[:, :, 0], (2, 0, 1, 3))         # (B, G, K, HW)
    dx = jnp.transpose(o12[:, :, 1], (2, 0, 1, 3))
    msk = jax.nn.sigmoid(jnp.transpose(off[2 * G * K:].reshape(G, K, B, HW), (2, 0, 1, 3)))

    ki, kj = jnp.meshgrid(jnp.arange(3), jnp.arange(3), indexing="ij")
    base_y = (-pad + dil * ki).reshape(K).astype(jnp.float32)
    base_x = (-pad + dil * kj).reshape(K).astype(jnp.float32)
    hh = (jnp.arange(HW) // W).astype(jnp.float32)
    ww = (jnp.arange(HW) % W).astype(jnp.float32)
    py = hh[None, None, None, :] + base_y[None, None, :, None] + dy   # (B,G,K,HW)
    px = ww[None, None, None, :] + base_x[None, None, :, None] + dx
    y0 = jnp.floor(py)
    x0 = jnp.floor(px)
    ly = py - y0
    lx = px - x0
    y0i = y0.astype(jnp.int32)
    x0i = x0.astype(jnp.int32)
    jidx = jnp.arange(HW, dtype=jnp.int32)

    def corner(yi, xi, wgt):
        valid = ((yi >= 0) & (yi < H) & (xi >= 0) & (xi < W)).astype(jnp.float32)
        idx = jnp.clip(yi, 0, H - 1) * W + jnp.clip(xi, 0, W - 1)
        onehot = (idx[..., None] == jidx).astype(jnp.float32)          # (B,G,K,HW,HW)
        return onehot * (wgt * valid)[..., None]

    S = (corner(y0i, x0i, (1 - ly) * (1 - lx)) +
         corner(y0i, x0i + 1, (1 - ly) * lx) +
         corner(y0i + 1, x0i, ly * (1 - lx)) +
         corner(y0i + 1, x0i + 1, ly * lx))
    S = S * msk[..., None]                                             # fold modulation mask

    x_g = x.reshape(B, G, Cg, HW)
    v = jnp.einsum('bgkpj,bgcj->bgckp', S, x_g)                        # MXU-mapped sampling
    patches = v.reshape(B, G * Cg * K, HW)
    return jnp.transpose(patches, (1, 0, 2)).reshape(G * Cg * K, B * HW)


# ---------------------------------------------------------------------------
# Module forward (channel-major, lane-dense (C, B*HW) layout throughout)
# ---------------------------------------------------------------------------
def far_moduls_forward(prep, x, prev_offset_feat=None):
    B, C, H, W = x.shape
    HW = H * W
    N = B * HW
    masks = prep["masks"]
    xc = jnp.transpose(x, (1, 0, 2, 3)).reshape(C, N)
    ref = jnp.tile(xc[:, :HW], (1, B))
    cat = jnp.concatenate([ref, xc], axis=0)                           # cat([ref, x], 1)
    prev_cols = None
    if prev_offset_feat is not None:
        prev_cols = jnp.transpose(prev_offset_feat, (1, 0, 2, 3)).reshape(C, N)
    off_cols = _call_offset_head(prep["head"], masks, cat, prev_cols, W)   # (216, N)
    patches = _deform_patches(x, off_cols, G=8, pad=2, dil=2)               # (144, N)
    aligned = _call_pw(patches, prep["deform_wbd"], prep["deform_b"])       # (C, N)
    aligned = jnp.concatenate([xc[:, :HW], aligned[:, HW:]], axis=1)        # aligned[0]=x[0]
    f = _call_bfa(prep["bfa"][0], masks, aligned, B, HW, W)
    f = _call_bfa(prep["bfa"][1], masks, f, B, HW, W)
    ref2 = jnp.tile(f[:, :HW], (1, B))
    cat2 = jnp.concatenate([ref2, f], axis=0)
    out = _call_rbfm_tail(prep["tail"], masks, cat2, W)
    return jnp.transpose(out.reshape(C, B, HW), (1, 0, 2)).reshape(B, C, H, W)


# ---------------------------------------------------------------------------
# One-time parameter preparation (hoisted out of the traced forward)
# ---------------------------------------------------------------------------
def _conv_w_pack(w):
    # (Cout, Cin, 3, 3) -> (Cout, 9*Cin) bf16 matching the tap-major im2col stack.
    return jnp.transpose(w, (0, 2, 3, 1)).reshape(w.shape[0], -1).astype(jnp.bfloat16)


def _dw_w_pack(w2):
    # (C, 9) -> (9, C, 1) f32 so the kernel indexes one tap with a leading-dim load.
    return jnp.transpose(w2.reshape(w2.shape[0], 9), (1, 0))[:, :, None].astype(jnp.float32)


def _tap_masks(B, H, W):
    hh = jnp.arange(H)[:, None]
    ww = jnp.arange(W)[None, :]
    ms = []
    for dy in range(3):
        for dx in range(3):
            ok = ((hh + dy - 1 >= 0) & (hh + dy - 1 < H) &
                  (ww + dx - 1 >= 0) & (ww + dx - 1 < W))
            ms.append(ok.astype(jnp.float32).reshape(H * W))
    m = jnp.stack(ms, axis=0)                                           # (9, HW)
    return jnp.tile(m, (1, B)).reshape(9, 1, B * H * W)


def _prep_bfa(bp):
    a, f = bp["attn"], bp["ffn"]
    C = a["proj_w"].shape[0]
    heads = int(a["temperature"].shape[0])
    qkv_w = jnp.concatenate([a["qk_w"].reshape(2 * C, C),
                             a["v_w"].reshape(C, C)], axis=0).astype(jnp.bfloat16)
    qkv_dw = _dw_w_pack(jnp.concatenate([a["qk_dw_w"].reshape(2 * C, 9),
                                         a["v_dw_w"].reshape(C, 9)], axis=0))
    in_w = f["in_w"].reshape(-1, C)
    hidden = in_w.shape[0] // 2
    hidden_p = ((hidden + 7) // 8) * 8          # pad gate/value channels to 8-row alignment
    dw_w = f["dw_w"].reshape(-1, 9)
    out_w = f["out_w"].reshape(C, hidden)
    in_p = jnp.zeros((2 * hidden_p, C), jnp.float32)
    in_p = in_p.at[:hidden].set(in_w[:hidden]).at[hidden_p:hidden_p + hidden].set(in_w[hidden:])
    dw_p = jnp.zeros((2 * hidden_p, 9), jnp.float32)
    dw_p = dw_p.at[:hidden].set(dw_w[:hidden]).at[hidden_p:hidden_p + hidden].set(dw_w[hidden:])
    out_p = jnp.zeros((C, hidden_p), jnp.float32).at[:, :hidden].set(out_w)
    return {
        "ln1w": bp["n1_w"].reshape(C, 1).astype(jnp.float32),
        "ln1b": bp["n1_b"].reshape(C, 1).astype(jnp.float32),
        "qkv_w": qkv_w, "qkv_dw": qkv_dw,
        "temp": a["temperature"].reshape(heads, 1, 1).astype(jnp.float32),
        "proj_w": a["proj_w"].reshape(C, C).astype(jnp.bfloat16),
        "ln2w": bp["n2_w"].reshape(C, 1).astype(jnp.float32),
        "ln2b": bp["n2_b"].reshape(C, 1).astype(jnp.float32),
        "fin_w": in_p.astype(jnp.bfloat16),
        "fdw": _dw_w_pack(dw_p),
        "fout_w": out_p.astype(jnp.bfloat16),
    }


def prepare_params(params, B, H, W, deform_groups=8):
    C = params["deform_w"].shape[0]
    G = deform_groups
    Cg = C // G
    Cog = C // G
    wg = params["deform_w"].reshape(G, Cog, Cg * 9)
    wbd = (wg[:, :, None, :] * jnp.eye(G, dtype=wg.dtype)[:, None, :, None]
           ).reshape(G * Cog, G * Cg * 9).astype(jnp.bfloat16)          # block-diag, no scatter
    r = params["rbfm"]
    return {
        "masks": _tap_masks(B, H, W),
        "head": {"w1": _conv_w_pack(params["bottleneck_w"]),
                 "w1o": _conv_w_pack(params["bottleneck_o_w"]),
                 "w2": _conv_w_pack(params["offset_conv_w"])},
        "deform_wbd": wbd,
        "deform_b": params["deform_b"].reshape(C, 1).astype(jnp.float32),
        "bfa": [_prep_bfa(bp) for bp in r["bfa"]],
        "tail": {"wf": _conv_w_pack(r["fuse_w"]),
                 "bf": r["fuse_b"].reshape(-1, 1).astype(jnp.float32),
                 "we": _conv_w_pack(r["expand_w"]),
                 "be": r["expand_b"].reshape(-1, 1).astype(jnp.float32),
                 "wd": _conv_w_pack(r["diff_w"]),
                 "bd": r["diff_b"].reshape(-1, 1).astype(jnp.float32)},
    }


# ---------------------------------------------------------------------------
# Deterministic parameter init (synthetic; shapes follow the PyTorch __init__)
# ---------------------------------------------------------------------------
def init_params(key, dim=16):
    keys = iter(jax.random.split(key, 64))

    def w(shape, scale=0.05):
        return (scale * jax.random.normal(next(keys), shape)).astype(jnp.float32)

    def bfa_params(d, ffn_factor=2.66):
        hidden = int(d * ffn_factor)
        return {
            "n1_w": jnp.ones((d,), jnp.float32), "n1_b": jnp.zeros((d,), jnp.float32),
            "attn": {
                "temperature": jnp.ones((1,), jnp.float32),   # num_heads = 1
                "qk_w": w((2 * d, d, 1, 1)), "qk_dw_w": w((2 * d, 1, 3, 3)),
                "v_w": w((d, d, 1, 1)), "v_dw_w": w((d, 1, 3, 3)),
                "proj_w": w((d, d, 1, 1)),
            },
            "n2_w": jnp.ones((d,), jnp.float32), "n2_b": jnp.zeros((d,), jnp.float32),
            "ffn": {
                "in_w": w((hidden * 2, d, 1, 1)),
                "dw_w": w((hidden * 2, 1, 3, 3)),
                "out_w": w((d, hidden, 1, 1)),
            },
        }

    deform_groups = 8
    return {
        "offset_conv_w": w((deform_groups * 3 * 9, dim, 3, 3)),
        "deform_w": w((dim, dim // deform_groups, 3, 3)),
        "deform_b": w((dim,)),
        "bottleneck_w": w((dim, dim * 2, 3, 3)),
        "bottleneck_o_w": w((dim, dim * 2, 3, 3)),
        "rbfm": {
            "fuse_w": w((dim, dim * 2, 3, 3)), "fuse_b": w((dim,)),
            "expand_w": w((dim * 2, dim, 3, 3)), "expand_b": w((dim * 2,)),
            "diff_w": w((dim, dim * 2, 3, 3)), "diff_b": w((dim,)),
            "bfa": [bfa_params(dim), bfa_params(dim)],
        },
    }


if __name__ == "__main__":
    dim, B, H, W = 16, 2, 8, 8          # dim must be divisible by deform_groups=8
    key = jax.random.PRNGKey(0)
    pkey, xkey = jax.random.split(key)
    params = init_params(pkey, dim)
    prep = prepare_params(params, B, H, W)      # one-time packing / casting / mask build
    x = jax.random.normal(xkey, (B, dim, H, W), dtype=jnp.float32)

    fwd = jax.jit(far_moduls_forward)
    out = jax.block_until_ready(fwd(prep, x))
    assert out.shape == (B, dim, H, W) and out.dtype == jnp.float32
    print("KERNEL_OK")
</pallas_src>

<mosaic_0001>
module attributes {stable_mosaic.version = 11 : i64} {
  func.func @kernel(%arg0: memref<32x128xf32, #tpu.memory_space<vmem>>, %arg1: memref<9x1x128xf32, #tpu.memory_space<vmem>>, %arg2: memref<16x288xbf16, #tpu.memory_space<vmem>>, %arg3: memref<216x144xbf16, #tpu.memory_space<vmem>>, %arg4: memref<216x128xf32, #tpu.memory_space<vmem>>, %arg5: memref<32x384xf32, #tpu.memory_space<vmem>>, %arg6: memref<288x128xbf16, #tpu.memory_space<vmem>>) attributes {dimension_semantics = [], scalar_prefetch = 0 : i64, scratch_operands = 2 : i64, tpu.core_type = #tpu.core_type<tc>} {
    %c0 = arith.constant 0 : index
    %c0_0 = arith.constant 0 : index
    %0 = vector.load %arg0[%c0, %c0_0] : memref<32x128xf32, #tpu.memory_space<vmem>>, vector<32x128xf32>
    %cst = arith.constant 0.000000e+00 : f32
    %1 = vector.broadcast %cst : f32 to vector<32x128xf32>
    %c0_1 = arith.constant 0 : index
    %c0_2 = arith.constant 0 : index
    %2 = vector.load %arg5[%c0_1, %c0_2] : memref<32x384xf32, #tpu.memory_space<vmem>>, vector<32x128xf32>
    tpu.vector_store %arg5[%c0_1, %c0_2], %1 {strides = array<i32>} : memref<32x384xf32, #tpu.memory_space<vmem>>, vector<32x128xf32>,
    %c0_3 = arith.constant 0 : index
    %c128 = arith.constant 128 : index
    %3 = vector.load %arg5[%c0_3, %c128] : memref<32x384xf32, #tpu.memory_space<vmem>>, vector<32x128xf32>
    tpu.vector_store %arg5[%c0_3, %c128], %0 {strides = array<i32>} : memref<32x384xf32, #tpu.memory_space<vmem>>, vector<32x128xf32>,
    %c0_4 = arith.constant 0 : index
    %c256 = arith.constant 256 : index
    %4 = vector.load %arg5[%c0_4, %c256] : memref<32x384xf32, #tpu.memory_space<vmem>>, vector<32x128xf32>
    tpu.vector_store %arg5[%c0_4, %c256], %1 {strides = array<i32>} : memref<32x384xf32, #tpu.memory_space<vmem>>, vector<32x128xf32>,
    %c0_5 = arith.constant 0 : index
    %c119 = arith.constant 119 : index
    %5 = vector.load %arg5[%c0_5, %c119] : memref<32x384xf32, #tpu.memory_space<vmem>>, vector<32x128xf32>
    %c0_6 = arith.constant 0 : index
    %c0_7 = arith.constant 0 : index
    %c0_8 = arith.constant 0 : index
    %6 = vector.load %arg1[%c0_6, %c0_7, %c0_8] : memref<9x1x128xf32, #tpu.memory_space<vmem>>, vector<1x1x128xf32>
    %7 = vector.shape_cast %6 : vector<1x1x128xf32> to vector<1x128xf32>
    %8 = vector.broadcast %7 : vector<1x128xf32> to vector<32x128xf32>
    %9 = arith.mulf %5, %8 : vector<32x128xf32>
    %10 = arith.truncf %9 : vector<32x128xf32> to vector<32x128xbf16>
    %c0_9 = arith.constant 0 : index
    %c0_10 = arith.constant 0 : index
    %11 = vector.load %arg6[%c0_9, %c0_10] : memref<288x128xbf16, #tpu.memory_space<vmem>>, vector<32x128xbf16>
    tpu.vector_store %arg6[%c0_9, %c0_10], %10 {strides = array<i32>} : memref<288x128xbf16, #tpu.memory_space<vmem>>, vector<32x128xbf16>,
    %c0_11 = arith.constant 0 : index
    %c120 = arith.constant 120 : index
    %12 = vector.load %arg5[%c0_11, %c120] : memref<32x384xf32, #tpu.memory_space<vmem>>, vector<32x128xf32>
    %c1 = arith.constant 1 : index
    %c0_12 = arith.constant 0 : index
    %c0_13 = arith.constant 0 : index
    %13 = vector.load %arg1[%c1, %c0_12, %c0_13] : memref<9x1x128xf32, #tpu.memory_space<vmem>>, vector<1x1x128xf32>
    %14 = vector.shape_cast %13 : vector<1x1x128xf32> to vector<1x128xf32>
    %15 = vector.broadcast %14 : vector<1x128xf32> to vector<32x128xf32>
    %16 = arith.mulf %12, %15 : vector<32x128xf32>
    %17 = arith.truncf %16 : vector<32x128xf32> to vector<32x128xbf16>
    %c32 = arith.constant 32 : index
    %c0_14 = arith.constant 0 : index
    %18 = vector.load %arg6[%c32, %c0_14] : memref<288x128xbf16, #tpu.memory_space<vmem>>, vector<32x128xbf16>
    tpu.vector_store %arg6[%c32, %c0_14], %17 {strides = array<i32>} : memref<288x128xbf16, #tpu.memory_space<vmem>>, vector<32x128xbf16>,
    %c0_15 = arith.constant 0 : index
    %c121 = arith.constant 121 : index
    %19 = vector.load %arg5[%c0_15, %c121] : memref<32x384xf32, #tpu.memory_space<vmem>>, vector<32x128xf32>
    %c2 = arith.constant 2 : index
    %c0_16 = arith.constant 0 : index
    %c0_17 = arith.constant 0 : index
    %20 = vector.load %arg1[%c2, %c0_16, %c0_17] : memref<9x1x128xf32, #tpu.memory_space<vmem>>, vector<1x1x128xf32>
    %21 = vector.shape_cast %20 : vector<1x1x128xf32> to vector<1x128xf32>
    %22 = vector.broadcast %21 : vector<1x128xf32> to vector<32x128xf32>
    %23 = arith.mulf %19, %22 : vector<32x128xf32>
    %24 = arith.truncf %23 : vector<32x128xf32> to vector<32x128xbf16>
    %c64 = arith.constant 64 : index
    %c0_18 = arith.constant 0 : index
    %25 = vector.load %arg6[%c64, %c0_18] : memref<288x128xbf16, #tpu.memory_space<vmem>>, vector<32x128xbf16>
    tpu.vector_store %arg6[%c64, %c0_18], %24 {strides = array<i32>} : memref<288x128xbf16, #tpu.memory_space<vmem>>, vector<32x128xbf16>,
    %c0_19 = arith.constant 0 : index
    %c127 = arith.constant 127 : index
    %26 = vector.load %arg5[%c0_19, %c127] : memref<32x384xf32, #tpu.memory_space<vmem>>, vector<32x128xf32>
    %c3 = arith.constant 3 : index
    %c0_20 = arith.constant 0 : index
    %c0_21 = arith.constant 0 : index
    %27 = vector.load %arg1[%c3, %c0_20, %c0_21] : memref<9x1x128xf32, #tpu.memory_space<vmem>>, vector<1x1x128xf32>
    %28 = vector.shape_cast %27 : vector<1x1x128xf32> to vector<1x128xf32>
    %29 = vector.broadcast %28 : vector<1x128xf32> to vector<32x128xf32>
    %30 = arith.mulf %26, %29 : vector<32x128xf32>
    %31 = arith.truncf %30 : vector<32x128xf32> to vector<32x128xbf16>
    %c96 = arith.constant 96 : index
    %c0_22 = arith.constant 0 : index
    %32 = vector.load %arg6[%c96, %c0_22] : memref<288x128xbf16, #tpu.memory_space<vmem>>, vector<32x128xbf16>
    tpu.vector_store %arg6[%c96, %c0_22], %31 {strides = array<i32>} : memref<288x128xbf16, #tpu.memory_space<vmem>>, vector<32x128xbf16>,
    %c0_23 = arith.constant 0 : index
    %c128_24 = arith.constant 128 : index
    %33 = vector.load %arg5[%c0_23, %c128_24] : memref<32x384xf32, #tpu.memory_space<vmem>>, vector<32x128xf32>
    %c4 = arith.constant 4 : index
    %c0_25 = arith.constant 0 : index
    %c0_26 = arith.constant 0 : index
    %34 = vector.load %arg1[%c4, %c0_25, %c0_26] : memref<9x1x128xf32, #tpu.memory_space<vmem>>, vector<1x1x128xf32>
    %35 = vector.shape_cast %34 : vector<1x1x128xf32> to vector<1x128xf32>
    %36 = vector.broadcast %35 : vector<1x128xf32> to vector<32x128xf32>
    %37 = arith.mulf %33, %36 : vector<32x128xf32>
    %38 = arith.truncf %37 : vector<32x128xf32> to vector<32x128xbf16>
    %c128_27 = arith.constant 128 : index
    %c0_28 = arith.constant 0 : index
    %39 = vector.load %arg6[%c128_27, %c0_28] : memref<288x128xbf16, #tpu.memory_space<vmem>>, vector<32x128xbf16>
    tpu.vector_store %arg6[%c128_27, %c0_28], %38 {strides = array<i32>} : memref<288x128xbf16, #tpu.memory_space<vmem>>, vector<32x128xbf16>,
    %c0_29 = arith.constant 0 : index
    %c129 = arith.constant 129 : index
    %40 = vector.load %arg5[%c0_29, %c129] : memref<32x384xf32, #tpu.memory_space<vmem>>, vector<32x128xf32>
    %c5 = arith.constant 5 : index
    %c0_30 = arith.constant 0 : index
    %c0_31 = arith.constant 0 : index
    %41 = vector.load %arg1[%c5, %c0_30, %c0_31] : memref<9x1x128xf32, #tpu.memory_space<vmem>>, vector<1x1x128xf32>
    %42 = vector.shape_cast %41 : vector<1x1x128xf32> to vector<1x128xf32>
    %43 = vector.broadcast %42 : vector<1x128xf32> to vector<32x128xf32>
    %44 = arith.mulf %40, %43 : vector<32x128xf32>
    %45 = arith.truncf %44 : vector<32x128xf32> to vector<32x128xbf16>
    %c160 = arith.constant 160 : index
    %c0_32 = arith.constant 0 : index
    %46 = vector.load %arg6[%c160, %c0_32] : memref<288x128xbf16, #tpu.memory_space<vmem>>, vector<32x128xbf16>
    tpu.vector_store %arg6[%c160, %c0_32], %45 {strides = array<i32>} : memref<288x128xbf16, #tpu.memory_space<vmem>>, vector<32x128xbf16>,
    %c0_33 = arith.constant 0 : index
    %c135 = arith.constant 135 : index
    %47 = vector.load %arg5[%c0_33, %c135] : memref<32x384xf32, #tpu.memory_space<vmem>>, vector<32x128xf32>
    %c6 = arith.constant 6 : index
    %c0_34 = arith.constant 0 : index
    %c0_35 = arith.constant 0 : index
    %48 = vector.load %arg1[%c6, %c0_34, %c0_35] : memref<9x1x128xf32, #tpu.memory_space<vmem>>, vector<1x1x128xf32>
    %49 = vector.shape_cast %48 : vector<1x1x128xf32> to vector<1x128xf32>
    %50 = vector.broadcast %49 : vector<1x128xf32> to vector<32x128xf32>
    %51 = arith.mulf %47, %50 : vector<32x128xf32>
    %52 = arith.truncf %51 : vector<32x128xf32> to vector<32x128xbf16>
    %c192 = arith.constant 192 : index
    %c0_36 = arith.constant 0 : index
    %53 = vector.load %arg6[%c192, %c0_36] : memref<288x128xbf16, #tpu.memory_space<vmem>>, vector<32x128xbf16>
    tpu.vector_store %arg6[%c192, %c0_36], %52 {strides = array<i32>} : memref<288x128xbf16, #tpu.memory_space<vmem>>, vector<32x128xbf16>,
    %c0_37 = arith.constant 0 : index
    %c136 = arith.constant 136 : index
    %54 = vector.load %arg5[%c0_37, %c136] : memref<32x384xf32, #tpu.memory_space<vmem>>, vector<32x128xf32>
    %c7 = arith.constant 7 : index
    %c0_38 = arith.constant 0 : index
    %c0_39 = arith.constant 0 : index
    %55 = vector.load %arg1[%c7, %c0_38, %c0_39] : memref<9x1x128xf32, #tpu.memory_space<vmem>>, vector<1x1x128xf32>
    %56 = vector.shape_cast %55 : vector<1x1x128xf32> to vector<1x128xf32>
    %57 = vector.broadcast %56 : vector<1x128xf32> to vector<32x128xf32>
    %58 = arith.mulf %54, %57 : vector<32x128xf32>
    %59 = arith.truncf %58 : vector<32x128xf32> to vector<32x128xbf16>
    %c224 = arith.constant 224 : index
    %c0_40 = arith.constant 0 : index
    %60 = vector.load %arg6[%c224, %c0_40] : memref<288x128xbf16, #tpu.memory_space<vmem>>, vector<32x128xbf16>
    tpu.vector_store %arg6[%c224, %c0_40], %59 {strides = array<i32>} : memref<288x128xbf16, #tpu.memory_space<vmem>>, vector<32x128xbf16>,
    %c0_41 = arith.constant 0 : index
    %c137 = arith.constant 137 : index
    %61 = vector.load %arg5[%c0_41, %c137] : memref<32x384xf32, #tpu.memory_space<vmem>>, vector<32x128xf32>
    %c8 = arith.constant 8 : index
    %c0_42 = arith.constant 0 : index
    %c0_43 = arith.constant 0 : index
    %62 = vector.load %arg1[%c8, %c0_42, %c0_43] : memref<9x1x128xf32, #tpu.memory_space<vmem>>, vector<1x1x128xf32>
    %63 = vector.shape_cast %62 : vector<1x1x128xf32> to vector<1x128xf32>
    %64 = vector.broadcast %63 : vector<1x128xf32> to vector<32x128xf32>
    %65 = arith.mulf %61, %64 : vector<32x128xf32>
    %66 = arith.truncf %65 : vector<32x128xf32> to vector<32x128xbf16>
    %c256_44 = arith.constant 256 : index
    %c0_45 = arith.constant 0 : index
    %67 = vector.load %arg6[%c256_44, %c0_45] : memref<288x128xbf16, #tpu.memory_space<vmem>>, vector<32x128xbf16>
    tpu.vector_store %arg6[%c256_44, %c0_45], %66 {strides = array<i32>} : memref<288x128xbf16, #tpu.memory_space<vmem>>, vector<32x128xbf16>,
    %c0_46 = arith.constant 0 : index
    %c0_47 = arith.constant 0 : index
    %68 = vector.load %arg2[%c0_46, %c0_47] : memref<16x288xbf16, #tpu.memory_space<vmem>>, vector<16x288xbf16>
    %c0_48 = arith.constant 0 : index
    %c0_49 = arith.constant 0 : index
    %69 = vector.load %arg6[%c0_48, %c0_49] : memref<288x128xbf16, #tpu.memory_space<vmem>>, vector<288x128xbf16>
    %cst_50 = arith.constant dense<0.000000e+00> : vector<16x128xf32>
    %70 = tpu.matmul %68, %69, %cst_50 {dimension_numbers = #tpu.dot_dimension_numbers<[1], [0], [0], [1], [0, 0, 1, 1], [], []>} : vector<16x288xbf16>, vector<288x128xbf16>, vector<16x128xf32> -> vector<16x128xf32>
    %cst_51 = arith.constant 5.000000e-01 : f32
    %71 = vector.broadcast %cst_51 : f32 to vector<16x128xf32>
    %72 = arith.mulf %71, %70 : vector<16x128xf32>
    %cst_52 = arith.constant 4.471500e-02 : f32
    %73 = vector.broadcast %cst_52 : f32 to vector<16x128xf32>
    %74 = arith.mulf %73, %70 : vector<16x128xf32>
    %75 = arith.mulf %74, %70 : vector<16x128xf32>
    %76 = arith.mulf %75, %70 : vector<16x128xf32>
    %77 = arith.addf %70, %76 : vector<16x128xf32>
    %cst_53 = arith.constant 0.797884583 : f32
    %78 = vector.broadcast %cst_53 : f32 to vector<16x128xf32>
    %79 = arith.mulf %78, %77 : vector<16x128xf32>
    %80 = math.tanh %79 : vector<16x128xf32>
    %cst_54 = arith.constant 1.000000e+00 : f32
    %81 = vector.broadcast %cst_54 : f32 to vector<16x128xf32>
    %82 = arith.addf %81, %80 : vector<16x128xf32>
    %83 = arith.mulf %72, %82 : vector<16x128xf32>
    %cst_55 = arith.constant 0.000000e+00 : f32
    %84 = vector.broadcast %cst_55 : f32 to vector<16x128xf32>
    %c0_56 = arith.constant 0 : index
    %c0_57 = arith.constant 0 : index
    %85 = vector.load %arg5[%c0_56, %c0_57] : memref<32x384xf32, #tpu.memory_space<vmem>>, vector<16x128xf32>
    tpu.vector_store %arg5[%c0_56, %c0_57], %84 {strides = array<i32>} : memref<32x384xf32, #tpu.memory_space<vmem>>, vector<16x128xf32>,
    %c0_58 = arith.constant 0 : index
    %c128_59 = arith.constant 128 : index
    %86 = vector.load %arg5[%c0_58, %c128_59] : memref<32x384xf32, #tpu.memory_space<vmem>>, vector<16x128xf32>
    tpu.vector_store %arg5[%c0_58, %c128_59], %83 {strides = array<i32>} : memref<32x384xf32, #tpu.memory_space<vmem>>, vector<16x128xf32>,
    %c0_60 = arith.constant 0 : index
    %c256_61 = arith.constant 256 : index
    %87 = vector.load %arg5[%c0_60, %c256_61] : memref<32x384xf32, #tpu.memory_space<vmem>>, vector<16x128xf32>
    tpu.vector_store %arg5[%c0_60, %c256_61], %84 {strides = array<i32>} : memref<32x384xf32, #tpu.memory_space<vmem>>, vector<16x128xf32>,
    %c0_62 = arith.constant 0 : index
    %c119_63 = arith.constant 119 : index
    %88 = vector.load %arg5[%c0_62, %c119_63] : memref<32x384xf32, #tpu.memory_space<vmem>>, vector<16x128xf32>
    %c0_64 = arith.constant 0 : index
    %c0_65 = arith.constant 0 : index
    %c0_66 = arith.constant 0 : index
    %89 = vector.load %arg1[%c0_64, %c0_65, %c0_66] : memref<9x1x128xf32, #tpu.memory_space<vmem>>, vector<1x1x128xf32>
    %90 = vector.shape_cast %89 : vector<1x1x128xf32> to vector<1x128xf32>
    %91 = vector.broadcast %90 : vector<1x128xf32> to vector<16x128xf32>
    %92 = arith.mulf %88, %91 : vector<16x128xf32>
    %93 = arith.truncf %92 : vector<16x128xf32> to vector<16x128xbf16>
    %c0_67 = arith.constant 0 : index
    %c0_68 = arith.constant 0 : index
    %94 = vector.load %arg6[%c0_67, %c0_68] : memref<288x128xbf16, #tpu.memory_space<vmem>>, vector<16x128xbf16>
    tpu.vector_store %arg6[%c0_67, %c0_68], %93 {strides = array<i32>} : memref<288x128xbf16, #tpu.memory_space<vmem>>, vector<16x128xbf16>,
    %c0_69 = arith.constant 0 : index
    %c120_70 = arith.constant 120 : index
    %95 = vector.load %arg5[%c0_69, %c120_70] : memref<32x384xf32, #tpu.memory_space<vmem>>, vector<16x128xf32>
    %c1_71 = arith.constant 1 : index
    %c0_72 = arith.constant 0 : index
    %c0_73 = arith.constant 0 : index
    %96 = vector.load %arg1[%c1_71, %c0_72, %c0_73] : memref<9x1x128xf32, #tpu.memory_space<vmem>>, vector<1x1x128xf32>
    %97 = vector.shape_cast %96 : vector<1x1x128xf32> to vector<1x128xf32>
    %98 = vector.broadcast %97 : vector<1x128xf32> to vector<16x128xf32>
    %99 = arith.mulf %95, %98 : vector<16x128xf32>
    %100 = arith.truncf %99 : vector<16x128xf32> to vector<16x128xbf16>
    %c16 = arith.constant 16 : index
    %c0_74 = arith.constant 0 : index
    %101 = vector.load %arg6[%c16, %c0_74] : memref<288x128xbf16, #tpu.memory_space<vmem>>, vector<16x128xbf16>
    tpu.vector_store %arg6[%c16, %c0_74], %100 {strides = array<i32>} : memref<288x128xbf16, #tpu.memory_space<vmem>>, vector<16x128xbf16>,
    %c0_75 = arith.constant 0 : index
    %c121_76 = arith.constant 121 : index
    %102 = vector.load %arg5[%c0_75, %c121_76] : memref<32x384xf32, #tpu.memory_space<vmem>>, vector<16x128xf32>
    %c2_77 = arith.constant 2 : index
    %c0_78 = arith.constant 0 : index
    %c0_79 = arith.constant 0 : index
    %103 = vector.load %arg1[%c2_77, %c0_78, %c0_79] : memref<9x1x128xf32, #tpu.memory_space<vmem>>, vector<1x1x128xf32>
    %104 = vector.shape_cast %103 : vector<1x1x128xf32> to vector<1x128xf32>
    %105 = vector.broadcast %104 : vector<1x128xf32> to vector<16x128xf32>
    %106 = arith.mulf %102, %105 : vector<16x128xf32>
    %107 = arith.truncf %106 : vector<16x128xf32> to vector<16x128xbf16>
    %c32_80 = arith.constant 32 : index
    %c0_81 = arith.constant 0 : index
    %108 = vector.load %arg6[%c32_80, %c0_81] : memref<288x128xbf16, #tpu.memory_space<vmem>>, vector<16x128xbf16>
    tpu.vector_store %arg6[%c32_80, %c0_81], %107 {strides = array<i32>} : memref<288x128xbf16, #tpu.memory_space<vmem>>, vector<16x128xbf16>,
    %c0_82 = arith.constant 0 : index
    %c127_83 = arith.constant 127 : index
    %109 = vector.load %arg5[%c0_82, %c127_83] : memref<32x384xf32, #tpu.memory_space<vmem>>, vector<16x128xf32>
    %c3_84 = arith.constant 3 : index
    %c0_85 = arith.constant 0 : index
    %c0_86 = arith.constant 0 : index
    %110 = vector.load %arg1[%c3_84, %c0_85, %c0_86] : memref<9x1x128xf32, #tpu.memory_space<vmem>>, vector<1x1x128xf32>
    %111 = vector.shape_cast %110 : vector<1x1x128xf32> to vector<1x128xf32>
    %112 = vector.broadcast %111 : vector<1x128xf32> to vector<16x128xf32>
    %113 = arith.mulf %109, %112 : vector<16x128xf32>
    %114 = arith.truncf %113 : vector<16x128xf32> to vector<16x128xbf16>
    %c48 = arith.constant 48 : index
    %c0_87 = arith.constant 0 : index
    %115 = vector.load %arg6[%c48, %c0_87] : memref<288x128xbf16, #tpu.memory_space<vmem>>, vector<16x128xbf16>
    tpu.vector_store %arg6[%c48, %c0_87], %114 {strides = array<i32>} : memref<288x128xbf16, #tpu.memory_space<vmem>>, vector<16x128xbf16>,
    %c0_88 = arith.constant 0 : index
    %c128_89 = arith.constant 128 : index
    %116 = vector.load %arg5[%c0_88, %c128_89] : memref<32x384xf32, #tpu.memory_space<vmem>>, vector<16x128xf32>
    %c4_90 = arith.constant 4 : index
    %c0_91 = arith.constant 0 : index
    %c0_92 = arith.constant 0 : index
    %117 = vector.load %arg1[%c4_90, %c0_91, %c0_92] : memref<9x1x128xf32, #tpu.memory_space<vmem>>, vector<1x1x128xf32>
    %118 = vector.shape_cast %117 : vector<1x1x128xf32> to vector<1x128xf32>
    %119 = vector.broadcast %118 : vector<1x128xf32> to vector<16x128xf32>
    %120 = arith.mulf %116, %119 : vector<16x128xf32>
    %121 = arith.truncf %120 : vector<16x128xf32> to vector<16x128xbf16>
    %c64_93 = arith.constant 64 : index
    %c0_94 = arith.constant 0 : index
    %122 = vector.load %arg6[%c64_93, %c0_94] : memref<288x128xbf16, #tpu.memory_space<vmem>>, vector<16x128xbf16>
    tpu.vector_store %arg6[%c64_93, %c0_94], %121 {strides = array<i32>} : memref<288x128xbf16, #tpu.memory_space<vmem>>, vector<16x128xbf16>,
    %c0_95 = arith.constant 0 : index
    %c129_96 = arith.constant 129 : index
    %123 = vector.load %arg5[%c0_95, %c129_96] : memref<32x384xf32, #tpu.memory_space<vmem>>, vector<16x128xf32>
    %c5_97 = arith.constant 5 : index
    %c0_98 = arith.constant 0 : index
    %c0_99 = arith.constant 0 : index
    %124 = vector.load %arg1[%c5_97, %c0_98, %c0_99] : memref<9x1x128xf32, #tpu.memory_space<vmem>>, vector<1x1x128xf32>
    %125 = vector.shape_cast %124 : vector<1x1x128xf32> to vector<1x128xf32>
    %126 = vector.broadcast %125 : vector<1x128xf32> to vector<16x128xf32>
    %127 = arith.mulf %123, %126 : vector<16x128xf32>
    %128 = arith.truncf %127 : vector<16x128xf32> to vector<16x128xbf16>
    %c80 = arith.constant 80 : index
    %c0_100 = arith.constant 0 : index
    %129 = vector.load %arg6[%c80, %c0_100] : memref<288x128xbf16, #tpu.memory_space<vmem>>, vector<16x128xbf16>
    tpu.vector_store %arg6[%c80, %c0_100], %128 {strides = array<i32>} : memref<288x128xbf16, #tpu.memory_space<vmem>>, vector<16x128xbf16>,
    %c0_101 = arith.constant 0 : index
    %c135_102 = arith.constant 135 : index
    %130 = vector.load %arg5[%c0_101, %c135_102] : memref<32x384xf32, #tpu.memory_space<vmem>>, vector<16x128xf32>
    %c6_103 = arith.constant 6 : index
    %c0_104 = arith.constant 0 : index
    %c0_105 = arith.constant 0 : index
    %131 = vector.load %arg1[%c6_103, %c0_104, %c0_105] : memref<9x1x128xf32, #tpu.memory_space<vmem>>, vector<1x1x128xf32>
    %132 = vector.shape_cast %131 : vector<1x1x128xf32> to vector<1x128xf32>
    %133 = vector.broadcast %132 : vector<1x128xf32> to vector<16x128xf32>
    %134 = arith.mulf %130, %133 : vector<16x128xf32>
    %135 = arith.truncf %134 : vector<16x128xf32> to vector<16x128xbf16>
    %c96_106 = arith.constant 96 : index
    %c0_107 = arith.constant 0 : index
    %136 = vector.load %arg6[%c96_106, %c0_107] : memref<288x128xbf16, #tpu.memory_space<vmem>>, vector<16x128xbf16>
    tpu.vector_store %arg6[%c96_106, %c0_107], %135 {strides = array<i32>} : memref<288x128xbf16, #tpu.memory_space<vmem>>, vector<16x128xbf16>,
    %c0_108 = arith.constant 0 : index
    %c136_109 = arith.constant 136 : index
    %137 = vector.load %arg5[%c0_108, %c136_109] : memref<32x384xf32, #tpu.memory_space<vmem>>, vector<16x128xf32>
    %c7_110 = arith.constant 7 : index
    %c0_111 = arith.constant 0 : index
    %c0_112 = arith.constant 0 : index
    %138 = vector.load %arg1[%c7_110, %c0_111, %c0_112] : memref<9x1x128xf32, #tpu.memory_space<vmem>>, vector<1x1x128xf32>
    %139 = vector.shape_cast %138 : vector<1x1x128xf32> to vector<1x128xf32>
    %140 = vector.broadcast %139 : vector<1x128xf32> to vector<16x128xf32>
    %141 = arith.mulf %137, %140 : vector<16x128xf32>
    %142 = arith.truncf %141 : vector<16x128xf32> to vector<16x128xbf16>
    %c112 = arith.constant 112 : index
    %c0_113 = arith.constant 0 : index
    %143 = vector.load %arg6[%c112, %c0_113] : memref<288x128xbf16, #tpu.memory_space<vmem>>, vector<16x128xbf16>
    tpu.vector_store %arg6[%c112, %c0_113], %142 {strides = array<i32>} : memref<288x128xbf16, #tpu.memory_space<vmem>>, vector<16x128xbf16>,
    %c0_114 = arith.constant 0 : index
    %c137_115 = arith.constant 137 : index
    %144 = vector.load %arg5[%c0_114, %c137_115] : memref<32x384xf32, #tpu.memory_space<vmem>>, vector<16x128xf32>
    %c8_116 = arith.constant 8 : index
    %c0_117 = arith.constant 0 : index
    %c0_118 = arith.constant 0 : index
    %145 = vector.load %arg1[%c8_116, %c0_117, %c0_118] : memref<9x1x128xf32, #tpu.memory_space<vmem>>, vector<1x1x128xf32>
    %146 = vector.shape_cast %145 : vector<1x1x128xf32> to vector<1x128xf32>
    %147 = vector.broadcast %146 : vector<1x128xf32> to vector<16x128xf32>
    %148 = arith.mulf %144, %147 : vector<16x128xf32>
    %149 = arith.truncf %148 : vector<16x128xf32> to vector<16x128xbf16>
    %c128_119 = arith.constant 128 : index
    %c0_120 = arith.constant 0 : index
    %150 = vector.load %arg6[%c128_119, %c0_120] : memref<288x128xbf16, #tpu.memory_space<vmem>>, vector<16x128xbf16>
    tpu.vector_store %arg6[%c128_119, %c0_120], %149 {strides = array<i32>} : memref<288x128xbf16, #tpu.memory_space<vmem>>, vector<16x128xbf16>,
    %c0_121 = arith.constant 0 : index
    %c0_122 = arith.constant 0 : index
    %151 = vector.load %arg3[%c0_121, %c0_122] : memref<216x144xbf16, #tpu.memory_space<vmem>>, vector<216x144xbf16>
    %c0_123 = arith.constant 0 : index
    %c0_124 = arith.constant 0 : index
    %152 = vector.load %arg6[%c0_123, %c0_124] : memref<288x128xbf16, #tpu.memory_space<vmem>>, vector<144x128xbf16>
    %cst_125 = arith.constant dense<0.000000e+00> : vector<216x128xf32>
    %153 = tpu.matmul %151, %152, %cst_125 {dimension_numbers = #tpu.dot_dimension_numbers<[1], [0], [0], [1], [0, 0, 1, 1], [], []>} : vector<216x144xbf16>, vector<144x128xbf16>, vector<216x128xf32> -> vector<216x128xf32>
    %c0_126 = arith.constant 0 : index
    %c0_127 = arith.constant 0 : index
    %154 = vector.load %arg4[%c0_126, %c0_127] : memref<216x128xf32, #tpu.memory_space<vmem>>, vector<216x128xf32>
    tpu.vector_store %arg4[%c0_126, %c0_127], %153 {strides = array<i32>} : memref<216x128xf32, #tpu.memory_space<vmem>>, vector<216x128xf32>,
    return
  }
}

module attributes {stable_mosaic.version = 11 : i64} {
  func.func @_pw_kernel(%arg0: memref<144x128xf32, #tpu.memory_space<vmem>>, %arg1: memref<16x144xbf16, #tpu.memory_space<vmem>>, %arg2: memref<16x1xf32, #tpu.memory_space<vmem>>, %arg3: memref<16x128xf32, #tpu.memory_space<vmem>>) attributes {dimension_semantics = [], scalar_prefetch = 0 : i64, scratch_operands = 0 : i64, tpu.core_type = #tpu.core_type<tc>} {
    %c0 = arith.constant 0 : index
    %c0_0 = arith.constant 0 : index
    %0 = vector.load %arg1[%c0, %c0_0] : memref<16x144xbf16, #tpu.memory_space<vmem>>, vector<16x144xbf16>
    %c0_1 = arith.constant 0 : index
    %c0_2 = arith.constant 0 : index
    %1 = vector.load %arg0[%c0_1, %c0_2] : memref<144x128xf32, #tpu.memory_space<vmem>>, vector<144x128xf32>
    %2 = arith.truncf %1 : vector<144x128xf32> to vector<144x128xbf16>
    %cst = arith.constant dense<0.000000e+00> : vector<16x128xf32>
    %3 = tpu.matmul %0, %2, %cst {dimension_numbers = #tpu.dot_dimension_numbers<[1], [0], [0], [1], [0, 0, 1, 1], [], []>} : vector<16x144xbf16>, vector<144x128xbf16>, vector<16x128xf32> -> vector<16x128xf32>
    %c0_3 = arith.constant 0 : index
    %c0_4 = arith.constant 0 : index
    %4 = vector.load %arg2[%c0_3, %c0_4] : memref<16x1xf32, #tpu.memory_space<vmem>>, vector<16x1xf32>
    %5 = vector.broadcast %4 : vector<16x1xf32> to vector<16x128xf32>
    %6 = arith.addf %3, %5 : vector<16x128xf32>
    %c0_5 = arith.constant 0 : index
    %c0_6 = arith.constant 0 : index
    %7 = vector.load %arg3[%c0_5, %c0_6] : memref<16x128xf32, #tpu.memory_space<vmem>>, vector<16x128xf32>
    tpu.vector_store %arg3[%c0_5, %c0_6], %6 {strides = array<i32>} : memref<16x128xf32, #tpu.memory_space<vmem>>, vector<16x128xf32>,
    return
  }
}

module attributes {stable_mosaic.version = 11 : i64} {
  func.func @kernel(%arg0: memref<32x128xf32, #tpu.memory_space<vmem>>, %arg1: memref<9x1x128xf32, #tpu.memory_space<vmem>>, %arg2: memref<16x288xbf16, #tpu.memory_space<vmem>>, %arg3: memref<16x1xf32, #tpu.memory_space<vmem>>, %arg4: memref<32x144xbf16, #tpu.memory_space<vmem>>, %arg5: memref<32x1xf32, #tpu.memory_space<vmem>>, %arg6: memref<16x288xbf16, #tpu.memory_space<vmem>>, %arg7: memref<16x1xf32, #tpu.memory_space<vmem>>, %arg8: memref<16x128xf32, #tpu.memory_space<vmem>>, %arg9: memref<32x384xf32, #tpu.memory_space<vmem>>, %arg10: memref<288x128xbf16, #tpu.memory_space<vmem>>) attributes {dimension_semantics = [], scalar_prefetch = 0 : i64, scratch_operands = 2 : i64, tpu.core_type = #tpu.core_type<tc>} {
    %c0 = arith.constant 0 : index
    %c0_0 = arith.constant 0 : index
    %0 = vector.load %arg0[%c0, %c0_0] : memref<32x128xf32, #tpu.memory_space<vmem>>, vector<32x128xf32>
    %cst = arith.constant 0.000000e+00 : f32
    %1 = vector.broadcast %cst : f32 to vector<32x128xf32>
    %c0_1 = arith.constant 0 : index
    %c0_2 = arith.constant 0 : index
    %2 = vector.load %arg9[%c0_1, %c0_2] : memref<32x384xf32, #tpu.memory_space<vmem>>, vector<32x128xf32>
    tpu.vector_store %arg9[%c0_1, %c0_2], %1 {strides = array<i32>} : memref<32x384xf32, #tpu.memory_space<vmem>>, vector<32x128xf32>,
    %c0_3 = arith.constant 0 : index
    %c128 = arith.constant 128 : index
    %3 = vector.load %arg9[%c0_3, %c128] : memref<32x384xf32, #tpu.memory_space<vmem>>, vector<32x128xf32>
    tpu.vector_store %arg9[%c0_3, %c128], %0 {strides = array<i32>} : memref<32x384xf32, #tpu.memory_space<vmem>>, vector<32x128xf32>,
    %c0_4 = arith.constant 0 : index
    %c256 = arith.constant 256 : index
    %4 = vector.load %arg9[%c0_4, %c256] : memref<32x384xf32, #tpu.memory_space<vmem>>, vector<32x128xf32>
    tpu.vector_store %arg9[%c0_4, %c256], %1 {strides = array<i32>} : memref<32x384xf32, #tpu.memory_space<vmem>>, vector<32x128xf32>,
    %c0_5 = arith.constant 0 : index
    %c119 = arith.constant 119 : index
    %5 = vector.load %arg9[%c0_5, %c119] : memref<32x384xf32, #tpu.memory_space<vmem>>, vector<32x128xf32>
    %c0_6 = arith.constant 0 : index
    %c0_7 = arith.constant 0 : index
    %c0_8 = arith.constant 0 : index
    %6 = vector.load %arg1[%c0_6, %c0_7, %c0_8] : memref<9x1x128xf32, #tpu.memory_space<vmem>>, vector<1x1x128xf32>
    %7 = vector.shape_cast %6 : vector<1x1x128xf32> to vector<1x128xf32>
    %8 = vector.broadcast %7 : vector<1x128xf32> to vector<32x128xf32>
    %9 = arith.mulf %5, %8 : vector<32x128xf32>
    %10 = arith.truncf %9 : vector<32x128xf32> to vector<32x128xbf16>
    %c0_9 = arith.constant 0 : index
    %c0_10 = arith.constant 0 : index
    %11 = vector.load %arg10[%c0_9, %c0_10] : memref<288x128xbf16, #tpu.memory_space<vmem>>, vector<32x128xbf16>
    tpu.vector_store %arg10[%c0_9, %c0_10], %10 {strides = array<i32>} : memref<288x128xbf16, #tpu.memory_space<vmem>>, vector<32x128xbf16>,
    %c0_11 = arith.constant 0 : index
    %c120 = arith.constant 120 : index
    %12 = vector.load %arg9[%c0_11, %c120] : memref<32x384xf32, #tpu.memory_space<vmem>>, vector<32x128xf32>
    %c1 = arith.constant 1 : index
    %c0_12 = arith.constant 0 : index
    %c0_13 = arith.constant 0 : index
    %13 = vector.load %arg1[%c1, %c0_12, %c0_13] : memref<9x1x128xf32, #tpu.memory_space<vmem>>, vector<1x1x128xf32>
    %14 = vector.shape_cast %13 : vector<1x1x128xf32> to vector<1x128xf32>
    %15 = vector.broadcast %14 : vector<1x128xf32> to vector<32x128xf32>
    %16 = arith.mulf %12, %15 : vector<32x128xf32>
    %17 = arith.truncf %16 : vector<32x128xf32> to vector<32x128xbf16>
    %c32 = arith.constant 32 : index
    %c0_14 = arith.constant 0 : index
    %18 = vector.load %arg10[%c32, %c0_14] : memref<288x128xbf16, #tpu.memory_space<vmem>>, vector<32x128xbf16>
    tpu.vector_store %arg10[%c32, %c0_14], %17 {strides = array<i32>} : memref<288x128xbf16, #tpu.memory_space<vmem>>, vector<32x128xbf16>,
    %c0_15 = arith.constant 0 : index
    %c121 = arith.constant 121 : index
    %19 = vector.load %arg9[%c0_15, %c121] : memref<32x384xf32, #tpu.memory_space<vmem>>, vector<32x128xf32>
    %c2 = arith.constant 2 : index
    %c0_16 = arith.constant 0 : index
    %c0_17 = arith.constant 0 : index
    %20 = vector.load %arg1[%c2, %c0_16, %c0_17] : memref<9x1x128xf32, #tpu.memory_space<vmem>>, vector<1x1x128xf32>
    %21 = vector.shape_cast %20 : vector<1x1x128xf32> to vector<1x128xf32>
    %22 = vector.broadcast %21 : vector<1x128xf32> to vector<32x128xf32>
    %23 = arith.mulf %19, %22 : vector<32x128xf32>
    %24 = arith.truncf %23 : vector<32x128xf32> to vector<32x128xbf16>
    %c64 = arith.constant 64 : index
    %c0_18 = arith.constant 0 : index
    %25 = vector.load %arg10[%c64, %c0_18] : memref<288x128xbf16, #tpu.memory_space<vmem>>, vector<32x128xbf16>
    tpu.vector_store %arg10[%c64, %c0_18], %24 {strides = array<i32>} : memref<288x128xbf16, #tpu.memory_space<vmem>>, vector<32x128xbf16>,
    %c0_19 = arith.constant 0 : index
    %c127 = arith.constant 127 : index
    %26 = vector.load %arg9[%c0_19, %c127] : memref<32x384xf32, #tpu.memory_space<vmem>>, vector<32x128xf32>
    %c3 = arith.constant 3 : index
    %c0_20 = arith.constant 0 : index
    %c0_21 = arith.constant 0 : index
    %27 = vector.load %arg1[%c3, %c0_20, %c0_21] : memref<9x1x128xf32, #tpu.memory_space<vmem>>, vector<1x1x128xf32>
    %28 = vector.shape_cast %27 : vector<1x1x128xf32> to vector<1x128xf32>
    %29 = vector.broadcast %28 : vector<1x128xf32> to vector<32x128xf32>
    %30 = arith.mulf %26, %29 : vector<32x128xf32>
    %31 = arith.truncf %30 : vector<32x128xf32> to vector<32x128xbf16>
    %c96 = arith.constant 96 : index
    %c0_22 = arith.constant 0 : index
    %32 = vector.load %arg10[%c96, %c0_22] : memref<288x128xbf16, #tpu.memory_space<vmem>>, vector<32x128xbf16>
    tpu.vector_store %arg10[%c96, %c0_22], %31 {strides = array<i32>} : memref<288x128xbf16, #tpu.memory_space<vmem>>, vector<32x128xbf16>,
    %c0_23 = arith.constant 0 : index
    %c128_24 = arith.constant 128 : index
    %33 = vector.load %arg9[%c0_23, %c128_24] : memref<32x384xf32, #tpu.memory_space<vmem>>, vector<32x128xf32>
    %c4 = arith.constant 4 : index
    %c0_25 = arith.constant 0 : index
    %c0_26 = arith.constant 0 : index
    %34 = vector.load %arg1[%c4, %c0_25, %c0_26] : memref<9x1x128xf32, #tpu.memory_space<vmem>>, vector<1x1x128xf32>
    %35 = vector.shape_cast %34 : vector<1x1x128xf32> to vector<1x128xf32>
    %36 = vector.broadcast %35 : vector<1x128xf32> to vector<32x128xf32>
    %37 = arith.mulf %33, %36 : vector<32x128xf32>
    %38 = arith.truncf %37 : vector<32x128xf32> to vector<32x128xbf16>
    %c128_27 = arith.constant 128 : index
    %c0_28 = arith.constant 0 : index
    %39 = vector.load %arg10[%c128_27, %c0_28] : memref<288x128xbf16, #tpu.memory_space<vmem>>, vector<32x128xbf16>
    tpu.vector_store %arg10[%c128_27, %c0_28], %38 {strides = array<i32>} : memref<288x128xbf16, #tpu.memory_space<vmem>>, vector<32x128xbf16>,
    %c0_29 = arith.constant 0 : index
    %c129 = arith.constant 129 : index
    %40 = vector.load %arg9[%c0_29, %c129] : memref<32x384xf32, #tpu.memory_space<vmem>>, vector<32x128xf32>
    %c5 = arith.constant 5 : index
    %c0_30 = arith.constant 0 : index
    %c0_31 = arith.constant 0 : index
    %41 = vector.load %arg1[%c5, %c0_30, %c0_31] : memref<9x1x128xf32, #tpu.memory_space<vmem>>, vector<1x1x128xf32>
    %42 = vector.shape_cast %41 : vector<1x1x128xf32> to vector<1x128xf32>
    %43 = vector.broadcast %42 : vector<1x128xf32> to vector<32x128xf32>
    %44 = arith.mulf %40, %43 : vector<32x128xf32>
    %45 = arith.truncf %44 : vector<32x128xf32> to vector<32x128xbf16>
    %c160 = arith.constant 160 : index
    %c0_32 = arith.constant 0 : index
    %46 = vector.load %arg10[%c160, %c0_32] : memref<288x128xbf16, #tpu.memory_space<vmem>>, vector<32x128xbf16>
    tpu.vector_store %arg10[%c160, %c0_32], %45 {strides = array<i32>} : memref<288x128xbf16, #tpu.memory_space<vmem>>, vector<32x128xbf16>,
    %c0_33 = arith.constant 0 : index
    %c135 = arith.constant 135 : index
    %47 = vector.load %arg9[%c0_33, %c135] : memref<32x384xf32, #tpu.memory_space<vmem>>, vector<32x128xf32>
    %c6 = arith.constant 6 : index
    %c0_34 = arith.constant 0 : index
    %c0_35 = arith.constant 0 : index
    %48 = vector.load %arg1[%c6, %c0_34, %c0_35] : memref<9x1x128xf32, #tpu.memory_space<vmem>>, vector<1x1x128xf32>
    %49 = vector.shape_cast %48 : vector<1x1x128xf32> to vector<1x128xf32>
    %50 = vector.broadcast %49 : vector<1x128xf32> to vector<32x128xf32>
    %51 = arith.mulf %47, %50 : vector<32x128xf32>
    %52 = arith.truncf %51 : vector<32x128xf32> to vector<32x128xbf16>
    %c192 = arith.constant 192 : index
    %c0_36 = arith.constant 0 : index
    %53 = vector.load %arg10[%c192, %c0_36] : memref<288x128xbf16, #tpu.memory_space<vmem>>, vector<32x128xbf16>
    tpu.vector_store %arg10[%c192, %c0_36], %52 {strides = array<i32>} : memref<288x128xbf16, #tpu.memory_space<vmem>>, vector<32x128xbf16>,
    %c0_37 = arith.constant 0 : index
    %c136 = arith.constant 136 : index
    %54 = vector.load %arg9[%c0_37, %c136] : memref<32x384xf32, #tpu.memory_space<vmem>>, vector<32x128xf32>
    %c7 = arith.constant 7 : index
    %c0_38 = arith.constant 0 : index
    %c0_39 = arith.constant 0 : index
    %55 = vector.load %arg1[%c7, %c0_38, %c0_39] : memref<9x1x128xf32, #tpu.memory_space<vmem>>, vector<1x1x128xf32>
    %56 = vector.shape_cast %55 : vector<1x1x128xf32> to vector<1x128xf32>
    %57 = vector.broadcast %56 : vector<1x128xf32> to vector<32x128xf32>
    %58 = arith.mulf %54, %57 : vector<32x128xf32>
    %59 = arith.truncf %58 : vector<32x128xf32> to vector<32x128xbf16>
    %c224 = arith.constant 224 : index
    %c0_40 = arith.constant 0 : index
    %60 = vector.load %arg10[%c224, %c0_40] : memref<288x128xbf16, #tpu.memory_space<vmem>>, vector<32x128xbf16>
    tpu.vector_store %arg10[%c224, %c0_40], %59 {strides = array<i32>} : memref<288x128xbf16, #tpu.memory_space<vmem>>, vector<32x128xbf16>,
    %c0_41 = arith.constant 0 : index
    %c137 = arith.constant 137 : index
    %61 = vector.load %arg9[%c0_41, %c137] : memref<32x384xf32, #tpu.memory_space<vmem>>, vector<32x128xf32>
    %c8 = arith.constant 8 : index
    %c0_42 = arith.constant 0 : index
    %c0_43 = arith.constant 0 : index
    %62 = vector.load %arg1[%c8, %c0_42, %c0_43] : memref<9x1x128xf32, #tpu.memory_space<vmem>>, vector<1x1x128xf32>
    %63 = vector.shape_cast %62 : vector<1x1x128xf32> to vector<1x128xf32>
    %64 = vector.broadcast %63 : vector<1x128xf32> to vector<32x128xf32>
    %65 = arith.mulf %61, %64 : vector<32x128xf32>
    %66 = arith.truncf %65 : vector<32x128xf32> to vector<32x128xbf16>
    %c256_44 = arith.constant 256 : index
    %c0_45 = arith.constant 0 : index
    %67 = vector.load %arg10[%c256_44, %c0_45] : memref<288x128xbf16, #tpu.memory_space<vmem>>, vector<32x128xbf16>
    tpu.vector_store %arg10[%c256_44, %c0_45], %66 {strides = array<i32>} : memref<288x128xbf16, #tpu.memory_space<vmem>>, vector<32x128xbf16>,
    %c0_46 = arith.constant 0 : index
    %c0_47 = arith.constant 0 : index
    %68 = vector.load %arg2[%c0_46, %c0_47] : memref<16x288xbf16, #tpu.memory_space<vmem>>, vector<16x288xbf16>
    %c0_48 = arith.constant 0 : index
    %c0_49 = arith.constant 0 : index
    %69 = vector.load %arg10[%c0_48, %c0_49] : memref<288x128xbf16, #tpu.memory_space<vmem>>, vector<288x128xbf16>
    %cst_50 = arith.constant dense<0.000000e+00> : vector<16x128xf32>
    %70 = tpu.matmul %68, %69, %cst_50 {dimension_numbers = #tpu.dot_dimension_numbers<[1], [0], [0], [1], [0, 0, 1, 1], [], []>} : vector<16x288xbf16>, vector<288x128xbf16>, vector<16x128xf32> -> vector<16x128xf32>
    %c0_51 = arith.constant 0 : index
    %c0_52 = arith.constant 0 : index
    %71 = vector.load %arg3[%c0_51, %c0_52] : memref<16x1xf32, #tpu.memory_space<vmem>>, vector<16x1xf32>
    %72 = vector.broadcast %71 : vector<16x1xf32> to vector<16x128xf32>
    %73 = arith.addf %70, %72 : vector<16x128xf32>
    %cst_53 = arith.constant 5.000000e-01 : f32
    %74 = vector.broadcast %cst_53 : f32 to vector<16x128xf32>
    %75 = arith.mulf %74, %73 : vector<16x128xf32>
    %cst_54 = arith.constant 4.471500e-02 : f32
    %76 = vector.broadcast %cst_54 : f32 to vector<16x128xf32>
    %77 = arith.mulf %76, %73 : vector<16x128xf32>
    %78 = arith.mulf %77, %73 : vector<16x128xf32>
    %79 = arith.mulf %78, %73 : vector<16x128xf32>
    %80 = arith.addf %73, %79 : vector<16x128xf32>
    %cst_55 = arith.constant 0.797884583 : f32
    %81 = vector.broadcast %cst_55 : f32 to vector<16x128xf32>
    %82 = arith.mulf %81, %80 : vector<16x128xf32>
    %83 = math.tanh %82 : vector<16x128xf32>
    %cst_56 = arith.constant 1.000000e+00 : f32
    %84 = vector.broadcast %cst_56 : f32 to vector<16x128xf32>
    %85 = arith.addf %84, %83 : vector<16x128xf32>
    %86 = arith.mulf %75, %85 : vector<16x128xf32>
    %cst_57 = arith.constant 0.000000e+00 : f32
    %87 = vector.broadcast %cst_57 : f32 to vector<16x128xf32>
    %c0_58 = arith.constant 0 : index
    %c0_59 = arith.constant 0 : index
    %88 = vector.load %arg9[%c0_58, %c0_59] : memref<32x384xf32, #tpu.memory_space<vmem>>, vector<16x128xf32>
    tpu.vector_store %arg9[%c0_58, %c0_59], %87 {strides = array<i32>} : memref<32x384xf32, #tpu.memory_space<vmem>>, vector<16x128xf32>,
    %c0_60 = arith.constant 0 : index
    %c128_61 = arith.constant 128 : index
    %89 = vector.load %arg9[%c0_60, %c128_61] : memref<32x384xf32, #tpu.memory_space<vmem>>, vector<16x128xf32>
    tpu.vector_store %arg9[%c0_60, %c128_61], %86 {strides = array<i32>} : memref<32x384xf32, #tpu.memory_space<vmem>>, vector<16x128xf32>,
    %c0_62 = arith.constant 0 : index
    %c256_63 = arith.constant 256 : index
    %90 = vector.load %arg9[%c0_62, %c256_63] : memref<32x384xf32, #tpu.memory_space<vmem>>, vector<16x128xf32>
    tpu.vector_store %arg9[%c0_62, %c256_63], %87 {strides = array<i32>} : memref<32x384xf32, #tpu.memory_space<vmem>>, vector<16x128xf32>,
    %c0_64 = arith.constant 0 : index
    %c119_65 = arith.constant 119 : index
    %91 = vector.load %arg9[%c0_64, %c119_65] : memref<32x384xf32, #tpu.memory_space<vmem>>, vector<16x128xf32>
    %c0_66 = arith.constant 0 : index
    %c0_67 = arith.constant 0 : index
    %c0_68 = arith.constant 0 : index
    %92 = vector.load %arg1[%c0_66, %c0_67, %c0_68] : memref<9x1x128xf32, #tpu.memory_space<vmem>>, vector<1x1x128xf32>
    %93 = vector.shape_cast %92 : vector<1x1x128xf32> to vector<1x128xf32>
    %94 = vector.broadcast %93 : vector<1x128xf32> to vector<16x128xf32>
    %95 = arith.mulf %91, %94 : vector<16x128xf32>
    %96 = arith.truncf %95 : vector<16x128xf32> to vector<16x128xbf16>
    %c0_69 = arith.constant 0 : index
    %c0_70 = arith.constant 0 : index
    %97 = vector.load %arg10[%c0_69, %c0_70] : memref<288x128xbf16, #tpu.memory_space<vmem>>, vector<16x128xbf16>
    tpu.vector_store %arg10[%c0_69, %c0_70], %96 {strides = array<i32>} : memref<288x128xbf16, #tpu.memory_space<vmem>>, vector<16x128xbf16>,
    %c0_71 = arith.constant 0 : index
    %c120_72 = arith.constant 120 : index
    %98 = vector.load %arg9[%c0_71, %c120_72] : memref<32x384xf32, #tpu.memory_space<vmem>>, vector<16x128xf32>
    %c1_73 = arith.constant 1 : index
    %c0_74 = arith.constant 0 : index
    %c0_75 = arith.constant 0 : index
    %99 = vector.load %arg1[%c1_73, %c0_74, %c0_75] : memref<9x1x128xf32, #tpu.memory_space<vmem>>, vector<1x1x128xf32>
    %100 = vector.shape_cast %99 : vector<1x1x128xf32> to vector<1x128xf32>
    %101 = vector.broadcast %100 : vector<1x128xf32> to vector<16x128xf32>
    %102 = arith.mulf %98, %101 : vector<16x128xf32>
    %103 = arith.truncf %102 : vector<16x128xf32> to vector<16x128xbf16>
    %c16 = arith.constant 16 : index
    %c0_76 = arith.constant 0 : index
    %104 = vector.load %arg10[%c16, %c0_76] : memref<288x128xbf16, #tpu.memory_space<vmem>>, vector<16x128xbf16>
    tpu.vector_store %arg10[%c16, %c0_76], %103 {strides = array<i32>} : memref<288x128xbf16, #tpu.memory_space<vmem>>, vector<16x128xbf16>,
    %c0_77 = arith.constant 0 : index
    %c121_78 = arith.constant 121 : index
    %105 = vector.load %arg9[%c0_77, %c121_78] : memref<32x384xf32, #tpu.memory_space<vmem>>, vector<16x128xf32>
    %c2_79 = arith.constant 2 : index
    %c0_80 = arith.constant 0 : index
    %c0_81 = arith.constant 0 : index
    %106 = vector.load %arg1[%c2_79, %c0_80, %c0_81] : memref<9x1x128xf32, #tpu.memory_space<vmem>>, vector<1x1x128xf32>
    %107 = vector.shape_cast %106 : vector<1x1x128xf32> to vector<1x128xf32>
    %108 = vector.broadcast %107 : vector<1x128xf32> to vector<16x128xf32>
    %109 = arith.mulf %105, %108 : vector<16x128xf32>
    %110 = arith.truncf %109 : vector<16x128xf32> to vector<16x128xbf16>
    %c32_82 = arith.constant 32 : index
    %c0_83 = arith.constant 0 : index
    %111 = vector.load %arg10[%c32_82, %c0_83] : memref<288x128xbf16, #tpu.memory_space<vmem>>, vector<16x128xbf16>
    tpu.vector_store %arg10[%c32_82, %c0_83], %110 {strides = array<i32>} : memref<288x128xbf16, #tpu.memory_space<vmem>>, vector<16x128xbf16>,
    %c0_84 = arith.constant 0 : index
    %c127_85 = arith.constant 127 : index
    %112 = vector.load %arg9[%c0_84, %c127_85] : memref<32x384xf32, #tpu.memory_space<vmem>>, vector<16x128xf32>
    %c3_86 = arith.constant 3 : index
    %c0_87 = arith.constant 0 : index
    %c0_88 = arith.constant 0 : index
    %113 = vector.load %arg1[%c3_86, %c0_87, %c0_88] : memref<9x1x128xf32, #tpu.memory_space<vmem>>, vector<1x1x128xf32>
    %114 = vector.shape_cast %113 : vector<1x1x128xf32> to vector<1x128xf32>
    %115 = vector.broadcast %114 : vector<1x128xf32> to vector<16x128xf32>
    %116 = arith.mulf %112, %115 : vector<16x128xf32>
    %117 = arith.truncf %116 : vector<16x128xf32> to vector<16x128xbf16>
    %c48 = arith.constant 48 : index
    %c0_89 = arith.constant 0 : index
    %118 = vector.load %arg10[%c48, %c0_89] : memref<288x128xbf16, #tpu.memory_space<vmem>>, vector<16x128xbf16>
    tpu.vector_store %arg10[%c48, %c0_89], %117 {strides = array<i32>} : memref<288x128xbf16, #tpu.memory_space<vmem>>, vector<16x128xbf16>,
    %c0_90 = arith.constant 0 : index
    %c128_91 = arith.constant 128 : index
    %119 = vector.load %arg9[%c0_90, %c128_91] : memref<32x384xf32, #tpu.memory_space<vmem>>, vector<16x128xf32>
    %c4_92 = arith.constant 4 : index
    %c0_93 = arith.constant 0 : index
    %c0_94 = arith.constant 0 : index
    %120 = vector.load %arg1[%c4_92, %c0_93, %c0_94] : memref<9x1x128xf32, #tpu.memory_space<vmem>>, vector<1x1x128xf32>
    %121 = vector.shape_cast %120 : vector<1x1x128xf32> to vector<1x128xf32>
    %122 = vector.broadcast %121 : vector<1x128xf32> to vector<16x128xf32>
    %123 = arith.mulf %119, %122 : vector<16x128xf32>
    %124 = arith.truncf %123 : vector<16x128xf32> to vector<16x128xbf16>
    %c64_95 = arith.constant 64 : index
    %c0_96 = arith.constant 0 : index
    %125 = vector.load %arg10[%c64_95, %c0_96] : memref<288x128xbf16, #tpu.memory_space<vmem>>, vector<16x128xbf16>
    tpu.vector_store %arg10[%c64_95, %c0_96], %124 {strides = array<i32>} : memref<288x128xbf16, #tpu.memory_space<vmem>>, vector<16x128xbf16>,
    %c0_97 = arith.constant 0 : index
    %c129_98 = arith.constant 129 : index
    %126 = vector.load %arg9[%c0_97, %c129_98] : memref<32x384xf32, #tpu.memory_space<vmem>>, vector<16x128xf32>
    %c5_99 = arith.constant 5 : index
    %c0_100 = arith.constant 0 : index
    %c0_101 = arith.constant 0 : index
    %127 = vector.load %arg1[%c5_99, %c0_100, %c0_101] : memref<9x1x128xf32, #tpu.memory_space<vmem>>, vector<1x1x128xf32>
    %128 = vector.shape_cast %127 : vector<1x1x128xf32> to vector<1x128xf32>
    %129 = vector.broadcast %128 : vector<1x128xf32> to vector<16x128xf32>
    %130 = arith.mulf %126, %129 : vector<16x128xf32>
    %131 = arith.truncf %130 : vector<16x128xf32> to vector<16x128xbf16>
    %c80 = arith.constant 80 : index
    %c0_102 = arith.constant 0 : index
    %132 = vector.load %arg10[%c80, %c0_102] : memref<288x128xbf16, #tpu.memory_space<vmem>>, vector<16x128xbf16>
    tpu.vector_store %arg10[%c80, %c0_102], %131 {strides = array<i32>} : memref<288x128xbf16, #tpu.memory_space<vmem>>, vector<16x128xbf16>,
    %c0_103 = arith.constant 0 : index
    %c135_104 = arith.constant 135 : index
    %133 = vector.load %arg9[%c0_103, %c135_104] : memref<32x384xf32, #tpu.memory_space<vmem>>, vector<16x128xf32>
    %c6_105 = arith.constant 6 : index
    %c0_106 = arith.constant 0 : index
    %c0_107 = arith.constant 0 : index
    %134 = vector.load %arg1[%c6_105, %c0_106, %c0_107] : memref<9x1x128xf32, #tpu.memory_space<vmem>>, vector<1x1x128xf32>
    %135 = vector.shape_cast %134 : vector<1x1x128xf32> to vector<1x128xf32>
    %136 = vector.broadcast %135 : vector<1x128xf32> to vector<16x128xf32>
    %137 = arith.mulf %133, %136 : vector<16x128xf32>
    %138 = arith.truncf %137 : vector<16x128xf32> to vector<16x128xbf16>
    %c96_108 = arith.constant 96 : index
    %c0_109 = arith.constant 0 : index
    %139 = vector.load %arg10[%c96_108, %c0_109] : memref<288x128xbf16, #tpu.memory_space<vmem>>, vector<16x128xbf16>
    tpu.vector_store %arg10[%c96_108, %c0_109], %138 {strides = array<i32>} : memref<288x128xbf16, #tpu.memory_space<vmem>>, vector<16x128xbf16>,
    %c0_110 = arith.constant 0 : index
    %c136_111 = arith.constant 136 : index
    %140 = vector.load %arg9[%c0_110, %c136_111] : memref<32x384xf32, #tpu.memory_space<vmem>>, vector<16x128xf32>
    %c7_112 = arith.constant 7 : index
    %c0_113 = arith.constant 0 : index
    %c0_114 = arith.constant 0 : index
    %141 = vector.load %arg1[%c7_112, %c0_113, %c0_114] : memref<9x1x128xf32, #tpu.memory_space<vmem>>, vector<1x1x128xf32>
    %142 = vector.shape_cast %141 : vector<1x1x128xf32> to vector<1x128xf32>
    %143 = vector.broadcast %142 : vector<1x128xf32> to vector<16x128xf32>
    %144 = arith.mulf %140, %143 : vector<16x128xf32>
    %145 = arith.truncf %144 : vector<16x128xf32> to vector<16x128xbf16>
    %c112 = arith.constant 112 : index
    %c0_115 = arith.constant 0 : index
    %146 = vector.load %arg10[%c112, %c0_115] : memref<288x128xbf16, #tpu.memory_space<vmem>>, vector<16x128xbf16>
    tpu.vector_store %arg10[%c112, %c0_115], %145 {strides = array<i32>} : memref<288x128xbf16, #tpu.memory_space<vmem>>, vector<16x128xbf16>,
    %c0_116 = arith.constant 0 : index
    %c137_117 = arith.constant 137 : index
    %147 = vector.load %arg9[%c0_116, %c137_117] : memref<32x384xf32, #tpu.memory_space<vmem>>, vector<16x128xf32>
    %c8_118 = arith.constant 8 : index
    %c0_119 = arith.constant 0 : index
    %c0_120 = arith.constant 0 : index
    %148 = vector.load %arg1[%c8_118, %c0_119, %c0_120] : memref<9x1x128xf32, #tpu.memory_space<vmem>>, vector<1x1x128xf32>
    %149 = vector.shape_cast %148 : vector<1x1x128xf32> to vector<1x128xf32>
    %150 = vector.broadcast %149 : vector<1x128xf32> to vector<16x128xf32>
    %151 = arith.mulf %147, %150 : vector<16x128xf32>
    %152 = arith.truncf %151 : vector<16x128xf32> to vector<16x128xbf16>
    %c128_121 = arith.constant 128 : index
    %c0_122 = arith.constant 0 : index
    %153 = vector.load %arg10[%c128_121, %c0_122] : memref<288x128xbf16, #tpu.memory_space<vmem>>, vector<16x128xbf16>
    tpu.vector_store %arg10[%c128_121, %c0_122], %152 {strides = array<i32>} : memref<288x128xbf16, #tpu.memory_space<vmem>>, vector<16x128xbf16>,
    %c0_123 = arith.constant 0 : index
    %c0_124 = arith.constant 0 : index
    %154 = vector.load %arg4[%c0_123, %c0_124] : memref<32x144xbf16, #tpu.memory_space<vmem>>, vector<32x144xbf16>
    %c0_125 = arith.constant 0 : index
    %c0_126 = arith.constant 0 : index
    %155 = vector.load %arg10[%c0_125, %c0_126] : memref<288x128xbf16, #tpu.memory_space<vmem>>, vector<144x128xbf16>
    %cst_127 = arith.constant dense<0.000000e+00> : vector<32x128xf32>
    %156 = tpu.matmul %154, %155, %cst_127 {dimension_numbers = #tpu.dot_dimension_numbers<[1], [0], [0], [1], [0, 0, 1, 1], [], []>} : vector<32x144xbf16>, vector<144x128xbf16>, vector<32x128xf32> -> vector<32x128xf32>
    %c0_128 = arith.constant 0 : index
    %c0_129 = arith.constant 0 : index
    %157 = vector.load %arg5[%c0_128, %c0_129] : memref<32x1xf32, #tpu.memory_space<vmem>>, vector<32x1xf32>
    %158 = vector.broadcast %157 : vector<32x1xf32> to vector<32x128xf32>
    %159 = arith.addf %156, %158 : vector<32x128xf32>
    %cst_130 = arith.constant 5.000000e-01 : f32
    %160 = vector.broadcast %cst_130 : f32 to vector<32x128xf32>
    %161 = arith.mulf %160, %159 : vector<32x128xf32>
    %cst_131 = arith.constant 4.471500e-02 : f32
    %162 = vector.broadcast %cst_131 : f32 to vector<32x128xf32>
    %163 = arith.mulf %162, %159 : vector<32x128xf32>
    %164 = arith.mulf %163, %159 : vector<32x128xf32>
    %165 = arith.mulf %164, %159 : vector<32x128xf32>
    %166 = arith.addf %159, %165 : vector<32x128xf32>
    %cst_132 = arith.constant 0.797884583 : f32
    %167 = vector.broadcast %cst_132 : f32 to vector<32x128xf32>
    %168 = arith.mulf %167, %166 : vector<32x128xf32>
    %169 = math.tanh %168 : vector<32x128xf32>
    %cst_133 = arith.constant 1.000000e+00 : f32
    %170 = vector.broadcast %cst_133 : f32 to vector<32x128xf32>
    %171 = arith.addf %170, %169 : vector<32x128xf32>
    %172 = arith.mulf %161, %171 : vector<32x128xf32>
    %173 = arith.subf %172, %0 : vector<32x128xf32>
    %cst_134 = arith.constant 0.000000e+00 : f32
    %174 = vector.broadcast %cst_134 : f32 to vector<32x128xf32>
    %c0_135 = arith.constant 0 : index
    %c0_136 = arith.constant 0 : index
    %175 = vector.load %arg9[%c0_135, %c0_136] : memref<32x384xf32, #tpu.memory_space<vmem>>, vector<32x128xf32>
    tpu.vector_store %arg9[%c0_135, %c0_136], %174 {strides = array<i32>} : memref<32x384xf32, #tpu.memory_space<vmem>>, vector<32x128xf32>,
    %c0_137 = arith.constant 0 : index
    %c128_138 = arith.constant 128 : index
    %176 = vector.load %arg9[%c0_137, %c128_138] : memref<32x384xf32, #tpu.memory_space<vmem>>, vector<32x128xf32>
    tpu.vector_store %arg9[%c0_137, %c128_138], %173 {strides = array<i32>} : memref<32x384xf32, #tpu.memory_space<vmem>>, vector<32x128xf32>,
    %c0_139 = arith.constant 0 : index
    %c256_140 = arith.constant 256 : index
    %177 = vector.load %arg9[%c0_139, %c256_140] : memref<32x384xf32, #tpu.memory_space<vmem>>, vector<32x128xf32>
    tpu.vector_store %arg9[%c0_139, %c256_140], %174 {strides = array<i32>} : memref<32x384xf32, #tpu.memory_space<vmem>>, vector<32x128xf32>,
    %c0_141 = arith.constant 0 : index
    %c119_142 = arith.constant 119 : index
    %178 = vector.load %arg9[%c0_141, %c119_142] : memref<32x384xf32, #tpu.memory_space<vmem>>, vector<32x128xf32>
    %c0_143 = arith.constant 0 : index
    %c0_144 = arith.constant 0 : index
    %c0_145 = arith.constant 0 : index
    %179 = vector.load %arg1[%c0_143, %c0_144, %c0_145] : memref<9x1x128xf32, #tpu.memory_space<vmem>>, vector<1x1x128xf32>
    %180 = vector.shape_cast %179 : vector<1x1x128xf32> to vector<1x128xf32>
    %181 = vector.broadcast %180 : vector<1x128xf32> to vector<32x128xf32>
    %182 = arith.mulf %178, %181 : vector<32x128xf32>
    %183 = arith.truncf %182 : vector<32x128xf32> to vector<32x128xbf16>
    %c0_146 = arith.constant 0 : index
    %c0_147 = arith.constant 0 : index
    %184 = vector.load %arg10[%c0_146, %c0_147] : memref<288x128xbf16, #tpu.memory_space<vmem>>, vector<32x128xbf16>
    tpu.vector_store %arg10[%c0_146, %c0_147], %183 {strides = array<i32>} : memref<288x128xbf16, #tpu.memory_space<vmem>>, vector<32x128xbf16>,
    %c0_148 = arith.constant 0 : index
    %c120_149 = arith.constant 120 : index
    %185 = vector.load %arg9[%c0_148, %c120_149] : memref<32x384xf32, #tpu.memory_space<vmem>>, vector<32x128xf32>
    %c1_150 = arith.constant 1 : index
    %c0_151 = arith.constant 0 : index
    %c0_152 = arith.constant 0 : index
    %186 = vector.load %arg1[%c1_150, %c0_151, %c0_152] : memref<9x1x128xf32, #tpu.memory_space<vmem>>, vector<1x1x128xf32>
    %187 = vector.shape_cast %186 : vector<1x1x128xf32> to vector<1x128xf32>
    %188 = vector.broadcast %187 : vector<1x128xf32> to vector<32x128xf32>
    %189 = arith.mulf %185, %188 : vector<32x128xf32>
    %190 = arith.truncf %189 : vector<32x128xf32> to vector<32x128xbf16>
    %c32_153 = arith.constant 32 : index
    %c0_154 = arith.constant 0 : index
    %191 = vector.load %arg10[%c32_153, %c0_154] : memref<288x128xbf16, #tpu.memory_space<vmem>>, vector<32x128xbf16>
    tpu.vector_store %arg10[%c32_153, %c0_154], %190 {strides = array<i32>} : memref<288x128xbf16, #tpu.memory_space<vmem>>, vector<32x128xbf16>,
    %c0_155 = arith.constant 0 : index
    %c121_156 = arith.constant 121 : index
    %192 = vector.load %arg9[%c0_155, %c121_156] : memref<32x384xf32, #tpu.memory_space<vmem>>, vector<32x128xf32>
    %c2_157 = arith.constant 2 : index
    %c0_158 = arith.constant 0 : index
    %c0_159 = arith.constant 0 : index
    %193 = vector.load %arg1[%c2_157, %c0_158, %c0_159] : memref<9x1x128xf32, #tpu.memory_space<vmem>>, vector<1x1x128xf32>
    %194 = vector.shape_cast %193 : vector<1x1x128xf32> to vector<1x128xf32>
    %195 = vector.broadcast %194 : vector<1x128xf32> to vector<32x128xf32>
    %196 = arith.mulf %192, %195 : vector<32x128xf32>
    %197 = arith.truncf %196 : vector<32x128xf32> to vector<32x128xbf16>
    %c64_160 = arith.constant 64 : index
    %c0_161 = arith.constant 0 : index
    %198 = vector.load %arg10[%c64_160, %c0_161] : memref<288x128xbf16, #tpu.memory_space<vmem>>, vector<32x128xbf16>
    tpu.vector_store %arg10[%c64_160, %c0_161], %197 {strides = array<i32>} : memref<288x128xbf16, #tpu.memory_space<vmem>>, vector<32x128xbf16>,
    %c0_162 = arith.constant 0 : index
    %c127_163 = arith.constant 127 : index
    %199 = vector.load %arg9[%c0_162, %c127_163] : memref<32x384xf32, #tpu.memory_space<vmem>>, vector<32x128xf32>
    %c3_164 = arith.constant 3 : index
    %c0_165 = arith.constant 0 : index
    %c0_166 = arith.constant 0 : index
    %200 = vector.load %arg1[%c3_164, %c0_165, %c0_166] : memref<9x1x128xf32, #tpu.memory_space<vmem>>, vector<1x1x128xf32>
    %201 = vector.shape_cast %200 : vector<1x1x128xf32> to vector<1x128xf32>
    %202 = vector.broadcast %201 : vector<1x128xf32> to vector<32x128xf32>
    %203 = arith.mulf %199, %202 : vector<32x128xf32>
    %204 = arith.truncf %203 : vector<32x128xf32> to vector<32x128xbf16>
    %c96_167 = arith.constant 96 : index
    %c0_168 = arith.constant 0 : index
    %205 = vector.load %arg10[%c96_167, %c0_168] : memref<288x128xbf16, #tpu.memory_space<vmem>>, vector<32x128xbf16>
    tpu.vector_store %arg10[%c96_167, %c0_168], %204 {strides = array<i32>} : memref<288x128xbf16, #tpu.memory_space<vmem>>, vector<32x128xbf16>,
    %c0_169 = arith.constant 0 : index
    %c128_170 = arith.constant 128 : index
    %206 = vector.load %arg9[%c0_169, %c128_170] : memref<32x384xf32, #tpu.memory_space<vmem>>, vector<32x128xf32>
    %c4_171 = arith.constant 4 : index
    %c0_172 = arith.constant 0 : index
    %c0_173 = arith.constant 0 : index
    %207 = vector.load %arg1[%c4_171, %c0_172, %c0_173] : memref<9x1x128xf32, #tpu.memory_space<vmem>>, vector<1x1x128xf32>
    %208 = vector.shape_cast %207 : vector<1x1x128xf32> to vector<1x128xf32>
    %209 = vector.broadcast %208 : vector<1x128xf32> to vector<32x128xf32>
    %210 = arith.mulf %206, %209 : vector<32x128xf32>
    %211 = arith.truncf %210 : vector<32x128xf32> to vector<32x128xbf16>
    %c128_174 = arith.constant 128 : index
    %c0_175 = arith.constant 0 : index
    %212 = vector.load %arg10[%c128_174, %c0_175] : memref<288x128xbf16, #tpu.memory_space<vmem>>, vector<32x128xbf16>
    tpu.vector_store %arg10[%c128_174, %c0_175], %211 {strides = array<i32>} : memref<288x128xbf16, #tpu.memory_space<vmem>>, vector<32x128xbf16>,
    %c0_176 = arith.constant 0 : index
    %c129_177 = arith.constant 129 : index
    %213 = vector.load %arg9[%c0_176, %c129_177] : memref<32x384xf32, #tpu.memory_space<vmem>>, vector<32x128xf32>
    %c5_178 = arith.constant 5 : index
    %c0_179 = arith.constant 0 : index
    %c0_180 = arith.constant 0 : index
    %214 = vector.load %arg1[%c5_178, %c0_179, %c0_180] : memref<9x1x128xf32, #tpu.memory_space<vmem>>, vector<1x1x128xf32>
    %215 = vector.shape_cast %214 : vector<1x1x128xf32> to vector<1x128xf32>
    %216 = vector.broadcast %215 : vector<1x128xf32> to vector<32x128xf32>
    %217 = arith.mulf %213, %216 : vector<32x128xf32>
    %218 = arith.truncf %217 : vector<32x128xf32> to vector<32x128xbf16>
    %c160_181 = arith.constant 160 : index
    %c0_182 = arith.constant 0 : index
    %219 = vector.load %arg10[%c160_181, %c0_182] : memref<288x128xbf16, #tpu.memory_space<vmem>>, vector<32x128xbf16>
    tpu.vector_store %arg10[%c160_181, %c0_182], %218 {strides = array<i32>} : memref<288x128xbf16, #tpu.memory_space<vmem>>, vector<32x128xbf16>,
    %c0_183 = arith.constant 0 : index
    %c135_184 = arith.constant 135 : index
    %220 = vector.load %arg9[%c0_183, %c135_184] : memref<32x384xf32, #tpu.memory_space<vmem>>, vector<32x128xf32>
    %c6_185 = arith.constant 6 : index
    %c0_186 = arith.constant 0 : index
    %c0_187 = arith.constant 0 : index
    %221 = vector.load %arg1[%c6_185, %c0_186, %c0_187] : memref<9x1x128xf32, #tpu.memory_space<vmem>>, vector<1x1x128xf32>
    %222 = vector.shape_cast %221 : vector<1x1x128xf32> to vector<1x128xf32>
    %223 = vector.broadcast %222 : vector<1x128xf32> to vector<32x128xf32>
    %224 = arith.mulf %220, %223 : vector<32x128xf32>
    %225 = arith.truncf %224 : vector<32x128xf32> to vector<32x128xbf16>
    %c192_188 = arith.constant 192 : index
    %c0_189 = arith.constant 0 : index
    %226 = vector.load %arg10[%c192_188, %c0_189] : memref<288x128xbf16, #tpu.memory_space<vmem>>, vector<32x128xbf16>
    tpu.vector_store %arg10[%c192_188, %c0_189], %225 {strides = array<i32>} : memref<288x128xbf16, #tpu.memory_space<vmem>>, vector<32x128xbf16>,
    %c0_190 = arith.constant 0 : index
    %c136_191 = arith.constant 136 : index
    %227 = vector.load %arg9[%c0_190, %c136_191] : memref<32x384xf32, #tpu.memory_space<vmem>>, vector<32x128xf32>
    %c7_192 = arith.constant 7 : index
    %c0_193 = arith.constant 0 : index
    %c0_194 = arith.constant 0 : index
    %228 = vector.load %arg1[%c7_192, %c0_193, %c0_194] : memref<9x1x128xf32, #tpu.memory_space<vmem>>, vector<1x1x128xf32>
    %229 = vector.shape_cast %228 : vector<1x1x128xf32> to vector<1x128xf32>
    %230 = vector.broadcast %229 : vector<1x128xf32> to vector<32x128xf32>
    %231 = arith.mulf %227, %230 : vector<32x128xf32>
    %232 = arith.truncf %231 : vector<32x128xf32> to vector<32x128xbf16>
    %c224_195 = arith.constant 224 : index
    %c0_196 = arith.constant 0 : index
    %233 = vector.load %arg10[%c224_195, %c0_196] : memref<288x128xbf16, #tpu.memory_space<vmem>>, vector<32x128xbf16>
    tpu.vector_store %arg10[%c224_195, %c0_196], %232 {strides = array<i32>} : memref<288x128xbf16, #tpu.memory_space<vmem>>, vector<32x128xbf16>,
    %c0_197 = arith.constant 0 : index
    %c137_198 = arith.constant 137 : index
    %234 = vector.load %arg9[%c0_197, %c137_198] : memref<32x384xf32, #tpu.memory_space<vmem>>, vector<32x128xf32>
    %c8_199 = arith.constant 8 : index
    %c0_200 = arith.constant 0 : index
    %c0_201 = arith.constant 0 : index
    %235 = vector.load %arg1[%c8_199, %c0_200, %c0_201] : memref<9x1x128xf32, #tpu.memory_space<vmem>>, vector<1x1x128xf32>
    %236 = vector.shape_cast %235 : vector<1x1x128xf32> to vector<1x128xf32>
    %237 = vector.broadcast %236 : vector<1x128xf32> to vector<32x128xf32>
    %238 = arith.mulf %234, %237 : vector<32x128xf32>
    %239 = arith.truncf %238 : vector<32x128xf32> to vector<32x128xbf16>
    %c256_202 = arith.constant 256 : index
    %c0_203 = arith.constant 0 : index
    %240 = vector.load %arg10[%c256_202, %c0_203] : memref<288x128xbf16, #tpu.memory_space<vmem>>, vector<32x128xbf16>
    tpu.vector_store %arg10[%c256_202, %c0_203], %239 {strides = array<i32>} : memref<288x128xbf16, #tpu.memory_space<vmem>>, vector<32x128xbf16>,
    %c0_204 = arith.constant 0 : index
    %c0_205 = arith.constant 0 : index
    %241 = vector.load %arg6[%c0_204, %c0_205] : memref<16x288xbf16, #tpu.memory_space<vmem>>, vector<16x288xbf16>
    %c0_206 = arith.constant 0 : index
    %c0_207 = arith.constant 0 : index
    %242 = vector.load %arg10[%c0_206, %c0_207] : memref<288x128xbf16, #tpu.memory_space<vmem>>, vector<288x128xbf16>
    %cst_208 = arith.constant dense<0.000000e+00> : vector<16x128xf32>
    %243 = tpu.matmul %241, %242, %cst_208 {dimension_numbers = #tpu.dot_dimension_numbers<[1], [0], [0], [1], [0, 0, 1, 1], [], []>} : vector<16x288xbf16>, vector<288x128xbf16>, vector<16x128xf32> -> vector<16x128xf32>
    %c0_209 = arith.constant 0 : index
    %c0_210 = arith.constant 0 : index
    %244 = vector.load %arg7[%c0_209, %c0_210] : memref<16x1xf32, #tpu.memory_space<vmem>>, vector<16x1xf32>
    %245 = vector.broadcast %244 : vector<16x1xf32> to vector<16x128xf32>
    %246 = arith.addf %243, %245 : vector<16x128xf32>
    %cst_211 = arith.constant 5.000000e-01 : f32
    %247 = vector.broadcast %cst_211 : f32 to vector<16x128xf32>
    %248 = arith.mulf %247, %246 : vector<16x128xf32>
    %cst_212 = arith.constant 4.471500e-02 : f32
    %249 = vector.broadcast %cst_212 : f32 to vector<16x128xf32>
    %250 = arith.mulf %249, %246 : vector<16x128xf32>
    %251 = arith.mulf %250, %246 : vector<16x128xf32>
    %252 = arith.mulf %251, %246 : vector<16x128xf32>
    %253 = arith.addf %246, %252 : vector<16x128xf32>
    %cst_213 = arith.constant 0.797884583 : f32
    %254 = vector.broadcast %cst_213 : f32 to vector<16x128xf32>
    %255 = arith.mulf %254, %253 : vector<16x128xf32>
    %256 = math.tanh %255 : vector<16x128xf32>
    %cst_214 = arith.constant 1.000000e+00 : f32
    %257 = vector.broadcast %cst_214 : f32 to vector<16x128xf32>
    %258 = arith.addf %257, %256 : vector<16x128xf32>
    %259 = arith.mulf %248, %258 : vector<16x128xf32>
    %260 = arith.addf %86, %259 : vector<16x128xf32>
    %c0_215 = arith.constant 0 : index
    %c0_216 = arith.constant 0 : index
    %261 = vector.load %arg8[%c0_215, %c0_216] : memref<16x128xf32, #tpu.memory_space<vmem>>, vector<16x128xf32>
    tpu.vector_store %arg8[%c0_215, %c0_216], %260 {strides = array<i32>} : memref<16x128xf32, #tpu.memory_space<vmem>>, vector<16x128xf32>,
    return
  }
}

module attributes {stable_mosaic.version = 11 : i64} {
  func.func @kernel(%arg0: memref<16x128xf32, #tpu.memory_space<vmem>>, %arg1: memref<9x1x128xf32, #tpu.memory_space<vmem>>, %arg2: memref<16x1xf32, #tpu.memory_space<vmem>>, %arg3: memref<16x1xf32, #tpu.memory_space<vmem>>, %arg4: memref<48x16xbf16, #tpu.memory_space<vmem>>, %arg5: memref<9x48x1xf32, #tpu.memory_space<vmem>>, %arg6: memref<1x1x1xf32, #tpu.memory_space<vmem>>, %arg7: memref<16x16xbf16, #tpu.memory_space<vmem>>, %arg8: memref<16x1xf32, #tpu.memory_space<vmem>>, %arg9: memref<16x1xf32, #tpu.memory_space<vmem>>, %arg10: memref<96x16xbf16, #tpu.memory_space<vmem>>, %arg11: memref<9x96x1xf32, #tpu.memory_space<vmem>>, %arg12: memref<16x48xbf16, #tpu.memory_space<vmem>>, %arg13: memref<16x128xf32, #tpu.memory_space<vmem>>, %arg14: memref<96x384xf32, #tpu.memory_space<vmem>>, %arg15: memref<48x128xf32, #tpu.memory_space<vmem>>, %arg16: memref<16x128xf32, #tpu.memory_space<vmem>>) attributes {dimension_semantics = [], scalar_prefetch = 0 : i64, scratch_operands = 3 : i64, tpu.core_type = #tpu.core_type<tc>} {
    %c0 = arith.constant 0 : index
    %c0_0 = arith.constant 0 : index
    %0 = vector.load %arg0[%c0, %c0_0] : memref<16x128xf32, #tpu.memory_space<vmem>>, vector<16x128xf32>
    %cst = arith.constant dense<0.000000e+00> : vector<128xf32>
    %1 = vector.multi_reduction <add>, %0, %cst [0] : vector<16x128xf32> to vector<128xf32>
    %2 = vector.shape_cast %1 : vector<128xf32> to vector<1x128xf32>
    %cst_1 = arith.constant 1.600000e+01 : f32
    %3 = vector.broadcast %cst_1 : f32 to vector<1x128xf32>
    %4 = arith.divf %2, %3 : vector<1x128xf32>
    %5 = vector.broadcast %4 : vector<1x128xf32> to vector<16x128xf32>
    %6 = arith.subf %0, %5 : vector<16x128xf32>
    %7 = arith.mulf %6, %6 : vector<16x128xf32>
    %cst_2 = arith.constant dense<0.000000e+00> : vector<128xf32>
    %8 = vector.multi_reduction <add>, %7, %cst_2 [0] : vector<16x128xf32> to vector<128xf32>
    %9 = vector.shape_cast %8 : vector<128xf32> to vector<1x128xf32>
    %cst_3 = arith.constant 1.600000e+01 : f32
    %10 = vector.broadcast %cst_3 : f32 to vector<1x128xf32>
    %11 = arith.divf %9, %10 : vector<1x128xf32>
    %12 = vector.broadcast %4 : vector<1x128xf32> to vector<16x128xf32>
    %13 = arith.subf %0, %12 : vector<16x128xf32>
    %cst_4 = arith.constant 9.99999974E-6 : f32
    %14 = vector.broadcast %cst_4 : f32 to vector<1x128xf32>
    %15 = arith.addf %11, %14 : vector<1x128xf32>
    %16 = math.rsqrt %15 : vector<1x128xf32>
    %17 = vector.broadcast %16 : vector<1x128xf32> to vector<16x128xf32>
    %18 = arith.mulf %13, %17 : vector<16x128xf32>
    %c0_5 = arith.constant 0 : index
    %c0_6 = arith.constant 0 : index
    %19 = vector.load %arg2[%c0_5, %c0_6] : memref<16x1xf32, #tpu.memory_space<vmem>>, vector<16x1xf32>
    %20 = vector.broadcast %19 : vector<16x1xf32> to vector<16x128xf32>
    %21 = arith.mulf %18, %20 : vector<16x128xf32>
    %c0_7 = arith.constant 0 : index
    %c0_8 = arith.constant 0 : index
    %22 = vector.load %arg3[%c0_7, %c0_8] : memref<16x1xf32, #tpu.memory_space<vmem>>, vector<16x1xf32>
    %23 = vector.broadcast %22 : vector<16x1xf32> to vector<16x128xf32>
    %24 = arith.addf %21, %23 : vector<16x128xf32>
    %c0_9 = arith.constant 0 : index
    %c0_10 = arith.constant 0 : index
    %25 = vector.load %arg4[%c0_9, %c0_10] : memref<48x16xbf16, #tpu.memory_space<vmem>>, vector<48x16xbf16>
    %26 = arith.truncf %24 : vector<16x128xf32> to vector<16x128xbf16>
    %cst_11 = arith.constant dense<0.000000e+00> : vector<48x128xf32>
    %27 = tpu.matmul %25, %26, %cst_11 {dimension_numbers = #tpu.dot_dimension_numbers<[1], [0], [0], [1], [0, 0, 1, 1], [], []>} : vector<48x16xbf16>, vector<16x128xbf16>, vector<48x128xf32> -> vector<48x128xf32>
    %cst_12 = arith.constant 0.000000e+00 : f32
    %28 = vector.broadcast %cst_12 : f32 to vector<48x128xf32>
    %c0_13 = arith.constant 0 : index
    %c0_14 = arith.constant 0 : index
    %29 = vector.load %arg14[%c0_13, %c0_14] : memref<96x384xf32, #tpu.memory_space<vmem>>, vector<48x128xf32>
    tpu.vector_store %arg14[%c0_13, %c0_14], %28 {strides = array<i32>} : memref<96x384xf32, #tpu.memory_space<vmem>>, vector<48x128xf32>,
    %c0_15 = arith.constant 0 : index
    %c128 = arith.constant 128 : index
    %30 = vector.load %arg14[%c0_15, %c128] : memref<96x384xf32, #tpu.memory_space<vmem>>, vector<48x128xf32>
    tpu.vector_store %arg14[%c0_15, %c128], %27 {strides = array<i32>} : memref<96x384xf32, #tpu.memory_space<vmem>>, vector<48x128xf32>,
    %c0_16 = arith.constant 0 : index
    %c256 = arith.constant 256 : index
    %31 = vector.load %arg14[%c0_16, %c256] : memref<96x384xf32, #tpu.memory_space<vmem>>, vector<48x128xf32>
    tpu.vector_store %arg14[%c0_16, %c256], %28 {strides = array<i32>} : memref<96x384xf32, #tpu.memory_space<vmem>>, vector<48x128xf32>,
    %cst_17 = arith.constant 0.000000e+00 : f32
    %32 = vector.broadcast %cst_17 : f32 to vector<48x128xf32>
    %c0_18 = arith.constant 0 : index
    %c119 = arith.constant 119 : index
    %33 = vector.load %arg14[%c0_18, %c119] : memref<96x384xf32, #tpu.memory_space<vmem>>, vector<48x128xf32>
    %c0_19 = arith.constant 0 : index
    %c0_20 = arith.constant 0 : index
    %c0_21 = arith.constant 0 : index
    %34 = vector.load %arg1[%c0_19, %c0_20, %c0_21] : memref<9x1x128xf32, #tpu.memory_space<vmem>>, vector<1x1x128xf32>
    %35 = vector.shape_cast %34 : vector<1x1x128xf32> to vector<1x128xf32>
    %36 = vector.broadcast %35 : vector<1x128xf32> to vector<48x128xf32>
    %37 = arith.mulf %33, %36 : vector<48x128xf32>
    %c0_22 = arith.constant 0 : index
    %c0_23 = arith.constant 0 : index
    %c0_24 = arith.constant 0 : index
    %38 = vector.load %arg5[%c0_22, %c0_23, %c0_24] : memref<9x48x1xf32, #tpu.memory_space<vmem>>, vector<1x48x1xf32>
    %39 = vector.shape_cast %38 : vector<1x48x1xf32> to vector<48x1xf32>
    %40 = vector.broadcast %39 : vector<48x1xf32> to vector<48x128xf32>
    %41 = arith.mulf %37, %40 : vector<48x128xf32>
    %42 = arith.addf %32, %41 : vector<48x128xf32>
    %c0_25 = arith.constant 0 : index
    %c120 = arith.constant 120 : index
    %43 = vector.load %arg14[%c0_25, %c120] : memref<96x384xf32, #tpu.memory_space<vmem>>, vector<48x128xf32>
    %c1 = arith.constant 1 : index
    %c0_26 = arith.constant 0 : index
    %c0_27 = arith.constant 0 : index
    %44 = vector.load %arg1[%c1, %c0_26, %c0_27] : memref<9x1x128xf32, #tpu.memory_space<vmem>>, vector<1x1x128xf32>
    %45 = vector.shape_cast %44 : vector<1x1x128xf32> to vector<1x128xf32>
    %46 = vector.broadcast %45 : vector<1x128xf32> to vector<48x128xf32>
    %47 = arith.mulf %43, %46 : vector<48x128xf32>
    %c1_28 = arith.constant 1 : index
    %c0_29 = arith.constant 0 : index
    %c0_30 = arith.constant 0 : index
    %48 = vector.load %arg5[%c1_28, %c0_29, %c0_30] : memref<9x48x1xf32, #tpu.memory_space<vmem>>, vector<1x48x1xf32>
    %49 = vector.shape_cast %48 : vector<1x48x1xf32> to vector<48x1xf32>
    %50 = vector.broadcast %49 : vector<48x1xf32> to vector<48x128xf32>
    %51 = arith.mulf %47, %50 : vector<48x128xf32>
    %52 = arith.addf %42, %51 : vector<48x128xf32>
    %c0_31 = arith.constant 0 : index
    %c121 = arith.constant 121 : index
    %53 = vector.load %arg14[%c0_31, %c121] : memref<96x384xf32, #tpu.memory_space<vmem>>, vector<48x128xf32>
    %c2 = arith.constant 2 : index
    %c0_32 = arith.constant 0 : index
    %c0_33 = arith.constant 0 : index
    %54 = vector.load %arg1[%c2, %c0_32, %c0_33] : memref<9x1x128xf32, #tpu.memory_space<vmem>>, vector<1x1x128xf32>
    %55 = vector.shape_cast %54 : vector<1x1x128xf32> to vector<1x128xf32>
    %56 = vector.broadcast %55 : vector<1x128xf32> to vector<48x128xf32>
    %57 = arith.mulf %53, %56 : vector<48x128xf32>
    %c2_34 = arith.constant 2 : index
    %c0_35 = arith.constant 0 : index
    %c0_36 = arith.constant 0 : index
    %58 = vector.load %arg5[%c2_34, %c0_35, %c0_36] : memref<9x48x1xf32, #tpu.memory_space<vmem>>, vector<1x48x1xf32>
    %59 = vector.shape_cast %58 : vector<1x48x1xf32> to vector<48x1xf32>
    %60 = vector.broadcast %59 : vector<48x1xf32> to vector<48x128xf32>
    %61 = arith.mulf %57, %60 : vector<48x128xf32>
    %62 = arith.addf %52, %61 : vector<48x128xf32>
    %c0_37 = arith.constant 0 : index
    %c127 = arith.constant 127 : index
    %63 = vector.load %arg14[%c0_37, %c127] : memref<96x384xf32, #tpu.memory_space<vmem>>, vector<48x128xf32>
    %c3 = arith.constant 3 : index
    %c0_38 = arith.constant 0 : index
    %c0_39 = arith.constant 0 : index
    %64 = vector.load %arg1[%c3, %c0_38, %c0_39] : memref<9x1x128xf32, #tpu.memory_space<vmem>>, vector<1x1x128xf32>
    %65 = vector.shape_cast %64 : vector<1x1x128xf32> to vector<1x128xf32>
    %66 = vector.broadcast %65 : vector<1x128xf32> to vector<48x128xf32>
    %67 = arith.mulf %63, %66 : vector<48x128xf32>
    %c3_40 = arith.constant 3 : index
    %c0_41 = arith.constant 0 : index
    %c0_42 = arith.constant 0 : index
    %68 = vector.load %arg5[%c3_40, %c0_41, %c0_42] : memref<9x48x1xf32, #tpu.memory_space<vmem>>, vector<1x48x1xf32>
    %69 = vector.shape_cast %68 : vector<1x48x1xf32> to vector<48x1xf32>
    %70 = vector.broadcast %69 : vector<48x1xf32> to vector<48x128xf32>
    %71 = arith.mulf %67, %70 : vector<48x128xf32>
    %72 = arith.addf %62, %71 : vector<48x128xf32>
    %c0_43 = arith.constant 0 : index
    %c128_44 = arith.constant 128 : index
    %73 = vector.load %arg14[%c0_43, %c128_44] : memref<96x384xf32, #tpu.memory_space<vmem>>, vector<48x128xf32>
    %c4 = arith.constant 4 : index
    %c0_45 = arith.constant 0 : index
    %c0_46 = arith.constant 0 : index
    %74 = vector.load %arg1[%c4, %c0_45, %c0_46] : memref<9x1x128xf32, #tpu.memory_space<vmem>>, vector<1x1x128xf32>
    %75 = vector.shape_cast %74 : vector<1x1x128xf32> to vector<1x128xf32>
    %76 = vector.broadcast %75 : vector<1x128xf32> to vector<48x128xf32>
    %77 = arith.mulf %73, %76 : vector<48x128xf32>
    %c4_47 = arith.constant 4 : index
    %c0_48 = arith.constant 0 : index
    %c0_49 = arith.constant 0 : index
    %78 = vector.load %arg5[%c4_47, %c0_48, %c0_49] : memref<9x48x1xf32, #tpu.memory_space<vmem>>, vector<1x48x1xf32>
    %79 = vector.shape_cast %78 : vector<1x48x1xf32> to vector<48x1xf32>
    %80 = vector.broadcast %79 : vector<48x1xf32> to vector<48x128xf32>
    %81 = arith.mulf %77, %80 : vector<48x128xf32>
    %82 = arith.addf %72, %81 : vector<48x128xf32>
    %c0_50 = arith.constant 0 : index
    %c129 = arith.constant 129 : index
    %83 = vector.load %arg14[%c0_50, %c129] : memref<96x384xf32, #tpu.memory_space<vmem>>, vector<48x128xf32>
    %c5 = arith.constant 5 : index
    %c0_51 = arith.constant 0 : index
    %c0_52 = arith.constant 0 : index
    %84 = vector.load %arg1[%c5, %c0_51, %c0_52] : memref<9x1x128xf32, #tpu.memory_space<vmem>>, vector<1x1x128xf32>
    %85 = vector.shape_cast %84 : vector<1x1x128xf32> to vector<1x128xf32>
    %86 = vector.broadcast %85 : vector<1x128xf32> to vector<48x128xf32>
    %87 = arith.mulf %83, %86 : vector<48x128xf32>
    %c5_53 = arith.constant 5 : index
    %c0_54 = arith.constant 0 : index
    %c0_55 = arith.constant 0 : index
    %88 = vector.load %arg5[%c5_53, %c0_54, %c0_55] : memref<9x48x1xf32, #tpu.memory_space<vmem>>, vector<1x48x1xf32>
    %89 = vector.shape_cast %88 : vector<1x48x1xf32> to vector<48x1xf32>
    %90 = vector.broadcast %89 : vector<48x1xf32> to vector<48x128xf32>
    %91 = arith.mulf %87, %90 : vector<48x128xf32>
    %92 = arith.addf %82, %91 : vector<48x128xf32>
    %c0_56 = arith.constant 0 : index
    %c135 = arith.constant 135 : index
    %93 = vector.load %arg14[%c0_56, %c135] : memref<96x384xf32, #tpu.memory_space<vmem>>, vector<48x128xf32>
    %c6 = arith.constant 6 : index
    %c0_57 = arith.constant 0 : index
    %c0_58 = arith.constant 0 : index
    %94 = vector.load %arg1[%c6, %c0_57, %c0_58] : memref<9x1x128xf32, #tpu.memory_space<vmem>>, vector<1x1x128xf32>
    %95 = vector.shape_cast %94 : vector<1x1x128xf32> to vector<1x128xf32>
    %96 = vector.broadcast %95 : vector<1x128xf32> to vector<48x128xf32>
    %97 = arith.mulf %93, %96 : vector<48x128xf32>
    %c6_59 = arith.constant 6 : index
    %c0_60 = arith.constant 0 : index
    %c0_61 = arith.constant 0 : index
    %98 = vector.load %arg5[%c6_59, %c0_60, %c0_61] : memref<9x48x1xf32, #tpu.memory_space<vmem>>, vector<1x48x1xf32>
    %99 = vector.shape_cast %98 : vector<1x48x1xf32> to vector<48x1xf32>
    %100 = vector.broadcast %99 : vector<48x1xf32> to vector<48x128xf32>
    %101 = arith.mulf %97, %100 : vector<48x128xf32>
    %102 = arith.addf %92, %101 : vector<48x128xf32>
    %c0_62 = arith.constant 0 : index
    %c136 = arith.constant 136 : index
    %103 = vector.load %arg14[%c0_62, %c136] : memref<96x384xf32, #tpu.memory_space<vmem>>, vector<48x128xf32>
    %c7 = arith.constant 7 : index
    %c0_63 = arith.constant 0 : index
    %c0_64 = arith.constant 0 : index
    %104 = vector.load %arg1[%c7, %c0_63, %c0_64] : memref<9x1x128xf32, #tpu.memory_space<vmem>>, vector<1x1x128xf32>
    %105 = vector.shape_cast %104 : vector<1x1x128xf32> to vector<1x128xf32>
    %106 = vector.broadcast %105 : vector<1x128xf32> to vector<48x128xf32>
    %107 = arith.mulf %103, %106 : vector<48x128xf32>
    %c7_65 = arith.constant 7 : index
    %c0_66 = arith.constant 0 : index
    %c0_67 = arith.constant 0 : index
    %108 = vector.load %arg5[%c7_65, %c0_66, %c0_67] : memref<9x48x1xf32, #tpu.memory_space<vmem>>, vector<1x48x1xf32>
    %109 = vector.shape_cast %108 : vector<1x48x1xf32> to vector<48x1xf32>
    %110 = vector.broadcast %109 : vector<48x1xf32> to vector<48x128xf32>
    %111 = arith.mulf %107, %110 : vector<48x128xf32>
    %112 = arith.addf %102, %111 : vector<48x128xf32>
    %c0_68 = arith.constant 0 : index
    %c137 = arith.constant 137 : index
    %113 = vector.load %arg14[%c0_68, %c137] : memref<96x384xf32, #tpu.memory_space<vmem>>, vector<48x128xf32>
    %c8 = arith.constant 8 : index
    %c0_69 = arith.constant 0 : index
    %c0_70 = arith.constant 0 : index
    %114 = vector.load %arg1[%c8, %c0_69, %c0_70] : memref<9x1x128xf32, #tpu.memory_space<vmem>>, vector<1x1x128xf32>
    %115 = vector.shape_cast %114 : vector<1x1x128xf32> to vector<1x128xf32>
    %116 = vector.broadcast %115 : vector<1x128xf32> to vector<48x128xf32>
    %117 = arith.mulf %113, %116 : vector<48x128xf32>
    %c8_71 = arith.constant 8 : index
    %c0_72 = arith.constant 0 : index
    %c0_73 = arith.constant 0 : index
    %118 = vector.load %arg5[%c8_71, %c0_72, %c0_73] : memref<9x48x1xf32, #tpu.memory_space<vmem>>, vector<1x48x1xf32>
    %119 = vector.shape_cast %118 : vector<1x48x1xf32> to vector<48x1xf32>
    %120 = vector.broadcast %119 : vector<48x1xf32> to vector<48x128xf32>
    %121 = arith.mulf %117, %120 : vector<48x128xf32>
    %122 = arith.addf %112, %121 : vector<48x128xf32>
    %c0_74 = arith.constant 0 : index
    %c0_75 = arith.constant 0 : index
    %123 = vector.load %arg15[%c0_74, %c0_75] : memref<48x128xf32, #tpu.memory_space<vmem>>, vector<48x128xf32>
    tpu.vector_store %arg15[%c0_74, %c0_75], %122 {strides = array<i32>} : memref<48x128xf32, #tpu.memory_space<vmem>>, vector<48x128xf32>,
    %c0_76 = arith.constant 0 : index
    %c0_77 = arith.constant 0 : index
    %124 = vector.load %arg15[%c0_76, %c0_77] : memref<48x128xf32, #tpu.memory_space<vmem>>, vector<16x64xf32>
    %c16 = arith.constant 16 : index
    %c0_78 = arith.constant 0 : index
    %125 = vector.load %arg15[%c16, %c0_78] : memref<48x128xf32, #tpu.memory_space<vmem>>, vector<16x64xf32>
    %c32 = arith.constant 32 : index
    %c0_79 = arith.constant 0 : index
    %126 = vector.load %arg15[%c32, %c0_79] : memref<48x128xf32, #tpu.memory_space<vmem>>, vector<16x64xf32>
    %127 = arith.mulf %124, %124 : vector<16x64xf32>
    %cst_80 = arith.constant dense<0.000000e+00> : vector<16xf32>
    %128 = vector.multi_reduction <add>, %127, %cst_80 [1] : vector<16x64xf32> to vector<16xf32>
    %129 = vector.shape_cast %128 : vector<16xf32> to vector<16x1xf32>
    %cst_81 = arith.constant 1.000000e-24 : f32
    %130 = vector.broadcast %cst_81 : f32 to vector<16x1xf32>
    %131 = arith.maximumf %129, %130 : vector<16x1xf32>
    %132 = math.rsqrt %131 : vector<16x1xf32>
    %133 = vector.broadcast %132 : vector<16x1xf32> to vector<16x64xf32>
    %134 = arith.mulf %124, %133 : vector<16x64xf32>
    %135 = arith.mulf %125, %125 : vector<16x64xf32>
    %cst_82 = arith.constant dense<0.000000e+00> : vector<16xf32>
    %136 = vector.multi_reduction <add>, %135, %cst_82 [1] : vector<16x64xf32> to vector<16xf32>
    %137 = vector.shape_cast %136 : vector<16xf32> to vector<16x1xf32>
    %cst_83 = arith.constant 1.000000e-24 : f32
    %138 = vector.broadcast %cst_83 : f32 to vector<16x1xf32>
    %139 = arith.maximumf %137, %138 : vector<16x1xf32>
    %140 = math.rsqrt %139 : vector<16x1xf32>
    %141 = vector.broadcast %140 : vector<16x1xf32> to vector<16x64xf32>
    %142 = arith.mulf %125, %141 : vector<16x64xf32>
    %143 = arith.truncf %134 : vector<16x64xf32> to vector<16x64xbf16>
    %144 = arith.truncf %142 : vector<16x64xf32> to vector<16x64xbf16>
    %cst_84 = arith.constant dense<0.000000e+00> : vector<16x16xf32>
    %145 = tpu.matmul %143, %144, %cst_84 {dimension_numbers = #tpu.dot_dimension_numbers<[1], [1], [0], [0], [0, 0, 1, 0], [], []>} : vector<16x64xbf16>, vector<16x64xbf16>, vector<16x16xf32> -> vector<16x16xf32>
    %c0_85 = arith.constant 0 : index
    %c0_86 = arith.constant 0 : index
    %c0_87 = arith.constant 0 : index
    %146 = vector.load %arg6[%c0_85, %c0_86, %c0_87] : memref<1x1x1xf32, #tpu.memory_space<vmem>>, vector<1x1x1xf32>
    %147 = vector.shape_cast %146 : vector<1x1x1xf32> to vector<1x1xf32>
    %148 = vector.broadcast %147 : vector<1x1xf32> to vector<16x16xf32>
    %149 = arith.mulf %145, %148 : vector<16x16xf32>
    %cst_88 = arith.constant dense<0xFF800000> : vector<16xf32>
    %150 = vector.multi_reduction <maximumf>, %149, %cst_88 [1] : vector<16x16xf32> to vector<16xf32>
    %151 = vector.shape_cast %150 : vector<16xf32> to vector<16x1xf32>
    %152 = vector.broadcast %151 : vector<16x1xf32> to vector<16x16xf32>
    %153 = arith.subf %149, %152 : vector<16x16xf32>
    %154 = math.exp %153 : vector<16x16xf32>
    %cst_89 = arith.constant dense<0.000000e+00> : vector<16xf32>
    %155 = vector.multi_reduction <add>, %154, %cst_89 [1] : vector<16x16xf32> to vector<16xf32>
    %156 = vector.shape_cast %155 : vector<16xf32> to vector<16x1xf32>
    %157 = vector.broadcast %156 : vector<16x1xf32> to vector<16x16xf32>
    %158 = arith.divf %154, %157 : vector<16x16xf32>
    %159 = arith.truncf %158 : vector<16x16xf32> to vector<16x16xbf16>
    %160 = arith.truncf %126 : vector<16x64xf32> to vector<16x64xbf16>
    %cst_90 = arith.constant dense<0.000000e+00> : vector<16x64xf32>
    %161 = tpu.matmul %159, %160, %cst_90 {dimension_numbers = #tpu.dot_dimension_numbers<[1], [0], [0], [1], [0, 0, 1, 1], [], []>} : vector<16x16xbf16>, vector<16x64xbf16>, vector<16x64xf32> -> vector<16x64xf32>
    %c0_91 = arith.constant 0 : index
    %c0_92 = arith.constant 0 : index
    %162 = vector.load %arg16[%c0_91, %c0_92] : memref<16x128xf32, #tpu.memory_space<vmem>>, vector<16x64xf32>
    tpu.vector_store %arg16[%c0_91, %c0_92], %161 {strides = array<i32>} : memref<16x128xf32, #tpu.memory_space<vmem>>, vector<16x64xf32>,
    %c0_93 = arith.constant 0 : index
    %c64 = arith.constant 64 : index
    %163 = vector.load %arg15[%c0_93, %c64] : memref<48x128xf32, #tpu.memory_space<vmem>>, vector<16x64xf32>
    %c16_94 = arith.constant 16 : index
    %c64_95 = arith.constant 64 : index
    %164 = vector.load %arg15[%c16_94, %c64_95] : memref<48x128xf32, #tpu.memory_space<vmem>>, vector<16x64xf32>
    %c32_96 = arith.constant 32 : index
    %c64_97 = arith.constant 64 : index
    %165 = vector.load %arg15[%c32_96, %c64_97] : memref<48x128xf32, #tpu.memory_space<vmem>>, vector<16x64xf32>
    %166 = arith.mulf %163, %163 : vector<16x64xf32>
    %cst_98 = arith.constant dense<0.000000e+00> : vector<16xf32>
    %167 = vector.multi_reduction <add>, %166, %cst_98 [1] : vector<16x64xf32> to vector<16xf32>
    %168 = vector.shape_cast %167 : vector<16xf32> to vector<16x1xf32>
    %cst_99 = arith.constant 1.000000e-24 : f32
    %169 = vector.broadcast %cst_99 : f32 to vector<16x1xf32>
    %170 = arith.maximumf %168, %169 : vector<16x1xf32>
    %171 = math.rsqrt %170 : vector<16x1xf32>
    %172 = vector.broadcast %171 : vector<16x1xf32> to vector<16x64xf32>
    %173 = arith.mulf %163, %172 : vector<16x64xf32>
    %174 = arith.mulf %164, %164 : vector<16x64xf32>
    %cst_100 = arith.constant dense<0.000000e+00> : vector<16xf32>
    %175 = vector.multi_reduction <add>, %174, %cst_100 [1] : vector<16x64xf32> to vector<16xf32>
    %176 = vector.shape_cast %175 : vector<16xf32> to vector<16x1xf32>
    %cst_101 = arith.constant 1.000000e-24 : f32
    %177 = vector.broadcast %cst_101 : f32 to vector<16x1xf32>
    %178 = arith.maximumf %176, %177 : vector<16x1xf32>
    %179 = math.rsqrt %178 : vector<16x1xf32>
    %180 = vector.broadcast %179 : vector<16x1xf32> to vector<16x64xf32>
    %181 = arith.mulf %164, %180 : vector<16x64xf32>
    %182 = arith.truncf %173 : vector<16x64xf32> to vector<16x64xbf16>
    %183 = arith.truncf %181 : vector<16x64xf32> to vector<16x64xbf16>
    %cst_102 = arith.constant dense<0.000000e+00> : vector<16x16xf32>
    %184 = tpu.matmul %182, %183, %cst_102 {dimension_numbers = #tpu.dot_dimension_numbers<[1], [1], [0], [0], [0, 0, 1, 0], [], []>} : vector<16x64xbf16>, vector<16x64xbf16>, vector<16x16xf32> -> vector<16x16xf32>
    %c0_103 = arith.constant 0 : index
    %c0_104 = arith.constant 0 : index
    %c0_105 = arith.constant 0 : index
    %185 = vector.load %arg6[%c0_103, %c0_104, %c0_105] : memref<1x1x1xf32, #tpu.memory_space<vmem>>, vector<1x1x1xf32>
    %186 = vector.shape_cast %185 : vector<1x1x1xf32> to vector<1x1xf32>
    %187 = vector.broadcast %186 : vector<1x1xf32> to vector<16x16xf32>
    %188 = arith.mulf %184, %187 : vector<16x16xf32>
    %cst_106 = arith.constant dense<0xFF800000> : vector<16xf32>
    %189 = vector.multi_reduction <maximumf>, %188, %cst_106 [1] : vector<16x16xf32> to vector<16xf32>
    %190 = vector.shape_cast %189 : vector<16xf32> to vector<16x1xf32>
    %191 = vector.broadcast %190 : vector<16x1xf32> to vector<16x16xf32>
    %192 = arith.subf %188, %191 : vector<16x16xf32>
    %193 = math.exp %192 : vector<16x16xf32>
    %cst_107 = arith.constant dense<0.000000e+00> : vector<16xf32>
    %194 = vector.multi_reduction <add>, %193, %cst_107 [1] : vector<16x16xf32> to vector<16xf32>
    %195 = vector.shape_cast %194 : vector<16xf32> to vector<16x1xf32>
    %196 = vector.broadcast %195 : vector<16x1xf32> to vector<16x16xf32>
    %197 = arith.divf %193, %196 : vector<16x16xf32>
    %198 = arith.truncf %197 : vector<16x16xf32> to vector<16x16xbf16>
    %199 = arith.truncf %165 : vector<16x64xf32> to vector<16x64xbf16>
    %cst_108 = arith.constant dense<0.000000e+00> : vector<16x64xf32>
    %200 = tpu.matmul %198, %199, %cst_108 {dimension_numbers = #tpu.dot_dimension_numbers<[1], [0], [0], [1], [0, 0, 1, 1], [], []>} : vector<16x16xbf16>, vector<16x64xbf16>, vector<16x64xf32> -> vector<16x64xf32>
    %c0_109 = arith.constant 0 : index
    %c64_110 = arith.constant 64 : index
    %201 = vector.load %arg16[%c0_109, %c64_110] : memref<16x128xf32, #tpu.memory_space<vmem>>, vector<16x64xf32>
    tpu.vector_store %arg16[%c0_109, %c64_110], %200 {strides = array<i32>} : memref<16x128xf32, #tpu.memory_space<vmem>>, vector<16x64xf32>,
    %c0_111 = arith.constant 0 : index
    %c0_112 = arith.constant 0 : index
    %202 = vector.load %arg7[%c0_111, %c0_112] : memref<16x16xbf16, #tpu.memory_space<vmem>>, vector<16x16xbf16>
    %c0_113 = arith.constant 0 : index
    %c0_114 = arith.constant 0 : index
    %203 = vector.load %arg16[%c0_113, %c0_114] : memref<16x128xf32, #tpu.memory_space<vmem>>, vector<16x128xf32>
    %204 = arith.truncf %203 : vector<16x128xf32> to vector<16x128xbf16>
    %cst_115 = arith.constant dense<0.000000e+00> : vector<16x128xf32>
    %205 = tpu.matmul %202, %204, %cst_115 {dimension_numbers = #tpu.dot_dimension_numbers<[1], [0], [0], [1], [0, 0, 1, 1], [], []>} : vector<16x16xbf16>, vector<16x128xbf16>, vector<16x128xf32> -> vector<16x128xf32>
    %206 = arith.addf %0, %205 : vector<16x128xf32>
    %cst_116 = arith.constant dense<0.000000e+00> : vector<128xf32>
    %207 = vector.multi_reduction <add>, %206, %cst_116 [0] : vector<16x128xf32> to vector<128xf32>
    %208 = vector.shape_cast %207 : vector<128xf32> to vector<1x128xf32>
    %cst_117 = arith.constant 1.600000e+01 : f32
    %209 = vector.broadcast %cst_117 : f32 to vector<1x128xf32>
    %210 = arith.divf %208, %209 : vector<1x128xf32>
    %211 = vector.broadcast %210 : vector<1x128xf32> to vector<16x128xf32>
    %212 = arith.subf %206, %211 : vector<16x128xf32>
    %213 = arith.mulf %212, %212 : vector<16x128xf32>
    %cst_118 = arith.constant dense<0.000000e+00> : vector<128xf32>
    %214 = vector.multi_reduction <add>, %213, %cst_118 [0] : vector<16x128xf32> to vector<128xf32>
    %215 = vector.shape_cast %214 : vector<128xf32> to vector<1x128xf32>
    %cst_119 = arith.constant 1.600000e+01 : f32
    %216 = vector.broadcast %cst_119 : f32 to vector<1x128xf32>
    %217 = arith.divf %215, %216 : vector<1x128xf32>
    %218 = vector.broadcast %210 : vector<1x128xf32> to vector<16x128xf32>
    %219 = arith.subf %206, %218 : vector<16x128xf32>
    %cst_120 = arith.constant 9.99999974E-6 : f32
    %220 = vector.broadcast %cst_120 : f32 to vector<1x128xf32>
    %221 = arith.addf %217, %220 : vector<1x128xf32>
    %222 = math.rsqrt %221 : vector<1x128xf32>
    %223 = vector.broadcast %222 : vector<1x128xf32> to vector<16x128xf32>
    %224 = arith.mulf %219, %223 : vector<16x128xf32>
    %c0_121 = arith.constant 0 : index
    %c0_122 = arith.constant 0 : index
    %225 = vector.load %arg8[%c0_121, %c0_122] : memref<16x1xf32, #tpu.memory_space<vmem>>, vector<16x1xf32>
    %226 = vector.broadcast %225 : vector<16x1xf32> to vector<16x128xf32>
    %227 = arith.mulf %224, %226 : vector<16x128xf32>
    %c0_123 = arith.constant 0 : index
    %c0_124 = arith.constant 0 : index
    %228 = vector.load %arg9[%c0_123, %c0_124] : memref<16x1xf32, #tpu.memory_space<vmem>>, vector<16x1xf32>
    %229 = vector.broadcast %228 : vector<16x1xf32> to vector<16x128xf32>
    %230 = arith.addf %227, %229 : vector<16x128xf32>
    %c0_125 = arith.constant 0 : index
    %c0_126 = arith.constant 0 : index
    %231 = vector.load %arg10[%c0_125, %c0_126] : memref<96x16xbf16, #tpu.memory_space<vmem>>, vector<96x16xbf16>
    %232 = arith.truncf %230 : vector<16x128xf32> to vector<16x128xbf16>
    %cst_127 = arith.constant dense<0.000000e+00> : vector<96x128xf32>
    %233 = tpu.matmul %231, %232, %cst_127 {dimension_numbers = #tpu.dot_dimension_numbers<[1], [0], [0], [1], [0, 0, 1, 1], [], []>} : vector<96x16xbf16>, vector<16x128xbf16>, vector<96x128xf32> -> vector<96x128xf32>
    %cst_128 = arith.constant 0.000000e+00 : f32
    %234 = vector.broadcast %cst_128 : f32 to vector<96x128xf32>
    %c0_129 = arith.constant 0 : index
    %c0_130 = arith.constant 0 : index
    %235 = vector.load %arg14[%c0_129, %c0_130] : memref<96x384xf32, #tpu.memory_space<vmem>>, vector<96x128xf32>
    tpu.vector_store %arg14[%c0_129, %c0_130], %234 {strides = array<i32>} : memref<96x384xf32, #tpu.memory_space<vmem>>, vector<96x128xf32>,
    %c0_131 = arith.constant 0 : index
    %c128_132 = arith.constant 128 : index
    %236 = vector.load %arg14[%c0_131, %c128_132] : memref<96x384xf32, #tpu.memory_space<vmem>>, vector<96x128xf32>
    tpu.vector_store %arg14[%c0_131, %c128_132], %233 {strides = array<i32>} : memref<96x384xf32, #tpu.memory_space<vmem>>, vector<96x128xf32>,
    %c0_133 = arith.constant 0 : index
    %c256_134 = arith.constant 256 : index
    %237 = vector.load %arg14[%c0_133, %c256_134] : memref<96x384xf32, #tpu.memory_space<vmem>>, vector<96x128xf32>
    tpu.vector_store %arg14[%c0_133, %c256_134], %234 {strides = array<i32>} : memref<96x384xf32, #tpu.memory_space<vmem>>, vector<96x128xf32>,
    %cst_135 = arith.constant 0.000000e+00 : f32
    %238 = vector.broadcast %cst_135 : f32 to vector<96x128xf32>
    %c0_136 = arith.constant 0 : index
    %c119_137 = arith.constant 119 : index
    %239 = vector.load %arg14[%c0_136, %c119_137] : memref<96x384xf32, #tpu.memory_space<vmem>>, vector<96x128xf32>
    %c0_138 = arith.constant 0 : index
    %c0_139 = arith.constant 0 : index
    %c0_140 = arith.constant 0 : index
    %240 = vector.load %arg1[%c0_138, %c0_139, %c0_140] : memref<9x1x128xf32, #tpu.memory_space<vmem>>, vector<1x1x128xf32>
    %241 = vector.shape_cast %240 : vector<1x1x128xf32> to vector<1x128xf32>
    %242 = vector.broadcast %241 : vector<1x128xf32> to vector<96x128xf32>
    %243 = arith.mulf %239, %242 : vector<96x128xf32>
    %c0_141 = arith.constant 0 : index
    %c0_142 = arith.constant 0 : index
    %c0_143 = arith.constant 0 : index
    %244 = vector.load %arg11[%c0_141, %c0_142, %c0_143] : memref<9x96x1xf32, #tpu.memory_space<vmem>>, vector<1x96x1xf32>
    %245 = vector.shape_cast %244 : vector<1x96x1xf32> to vector<96x1xf32>
    %246 = vector.broadcast %245 : vector<96x1xf32> to vector<96x128xf32>
    %247 = arith.mulf %243, %246 : vector<96x128xf32>
    %248 = arith.addf %238, %247 : vector<96x128xf32>
    %c0_144 = arith.constant 0 : index
    %c120_145 = arith.constant 120 : index
    %249 = vector.load %arg14[%c0_144, %c120_145] : memref<96x384xf32, #tpu.memory_space<vmem>>, vector<96x128xf32>
    %c1_146 = arith.constant 1 : index
    %c0_147 = arith.constant 0 : index
    %c0_148 = arith.constant 0 : index
    %250 = vector.load %arg1[%c1_146, %c0_147, %c0_148] : memref<9x1x128xf32, #tpu.memory_space<vmem>>, vector<1x1x128xf32>
    %251 = vector.shape_cast %250 : vector<1x1x128xf32> to vector<1x128xf32>
    %252 = vector.broadcast %251 : vector<1x128xf32> to vector<96x128xf32>
    %253 = arith.mulf %249, %252 : vector<96x128xf32>
    %c1_149 = arith.constant 1 : index
    %c0_150 = arith.constant 0 : index
    %c0_151 = arith.constant 0 : index
    %254 = vector.load %arg11[%c1_149, %c0_150, %c0_151] : memref<9x96x1xf32, #tpu.memory_space<vmem>>, vector<1x96x1xf32>
    %255 = vector.shape_cast %254 : vector<1x96x1xf32> to vector<96x1xf32>
    %256 = vector.broadcast %255 : vector<96x1xf32> to vector<96x128xf32>
    %257 = arith.mulf %253, %256 : vector<96x128xf32>
    %258 = arith.addf %248, %257 : vector<96x128xf32>
    %c0_152 = arith.constant 0 : index
    %c121_153 = arith.constant 121 : index
    %259 = vector.load %arg14[%c0_152, %c121_153] : memref<96x384xf32, #tpu.memory_space<vmem>>, vector<96x128xf32>
    %c2_154 = arith.constant 2 : index
    %c0_155 = arith.constant 0 : index
    %c0_156 = arith.constant 0 : index
    %260 = vector.load %arg1[%c2_154, %c0_155, %c0_156] : memref<9x1x128xf32, #tpu.memory_space<vmem>>, vector<1x1x128xf32>
    %261 = vector.shape_cast %260 : vector<1x1x128xf32> to vector<1x128xf32>
    %262 = vector.broadcast %261 : vector<1x128xf32> to vector<96x128xf32>
    %263 = arith.mulf %259, %262 : vector<96x128xf32>
    %c2_157 = arith.constant 2 : index
    %c0_158 = arith.constant 0 : index
    %c0_159 = arith.constant 0 : index
    %264 = vector.load %arg11[%c2_157, %c0_158, %c0_159] : memref<9x96x1xf32, #tpu.memory_space<vmem>>, vector<1x96x1xf32>
    %265 = vector.shape_cast %264 : vector<1x96x1xf32> to vector<96x1xf32>
    %266 = vector.broadcast %265 : vector<96x1xf32> to vector<96x128xf32>
    %267 = arith.mulf %263, %266 : vector<96x128xf32>
    %268 = arith.addf %258, %267 : vector<96x128xf32>
    %c0_160 = arith.constant 0 : index
    %c127_161 = arith.constant 127 : index
    %269 = vector.load %arg14[%c0_160, %c127_161] : memref<96x384xf32, #tpu.memory_space<vmem>>, vector<96x128xf32>
    %c3_162 = arith.constant 3 : index
    %c0_163 = arith.constant 0 : index
    %c0_164 = arith.constant 0 : index
    %270 = vector.load %arg1[%c3_162, %c0_163, %c0_164] : memref<9x1x128xf32, #tpu.memory_space<vmem>>, vector<1x1x128xf32>
    %271 = vector.shape_cast %270 : vector<1x1x128xf32> to vector<1x128xf32>
    %272 = vector.broadcast %271 : vector<1x128xf32> to vector<96x128xf32>
    %273 = arith.mulf %269, %272 : vector<96x128xf32>
    %c3_165 = arith.constant 3 : index
    %c0_166 = arith.constant 0 : index
    %c0_167 = arith.constant 0 : index
    %274 = vector.load %arg11[%c3_165, %c0_166, %c0_167] : memref<9x96x1xf32, #tpu.memory_space<vmem>>, vector<1x96x1xf32>
    %275 = vector.shape_cast %274 : vector<1x96x1xf32> to vector<96x1xf32>
    %276 = vector.broadcast %275 : vector<96x1xf32> to vector<96x128xf32>
    %277 = arith.mulf %273, %276 : vector<96x128xf32>
    %278 = arith.addf %268, %277 : vector<96x128xf32>
    %c0_168 = arith.constant 0 : index
    %c128_169 = arith.constant 128 : index
    %279 = vector.load %arg14[%c0_168, %c128_169] : memref<96x384xf32, #tpu.memory_space<vmem>>, vector<96x128xf32>
    %c4_170 = arith.constant 4 : index
    %c0_171 = arith.constant 0 : index
    %c0_172 = arith.constant 0 : index
    %280 = vector.load %arg1[%c4_170, %c0_171, %c0_172] : memref<9x1x128xf32, #tpu.memory_space<vmem>>, vector<1x1x128xf32>
    %281 = vector.shape_cast %280 : vector<1x1x128xf32> to vector<1x128xf32>
    %282 = vector.broadcast %281 : vector<1x128xf32> to vector<96x128xf32>
    %283 = arith.mulf %279, %282 : vector<96x128xf32>
    %c4_173 = arith.constant 4 : index
    %c0_174 = arith.constant 0 : index
    %c0_175 = arith.constant 0 : index
    %284 = vector.load %arg11[%c4_173, %c0_174, %c0_175] : memref<9x96x1xf32, #tpu.memory_space<vmem>>, vector<1x96x1xf32>
    %285 = vector.shape_cast %284 : vector<1x96x1xf32> to vector<96x1xf32>
    %286 = vector.broadcast %285 : vector<96x1xf32> to vector<96x128xf32>
    %287 = arith.mulf %283, %286 : vector<96x128xf32>
    %288 = arith.addf %278, %287 : vector<96x128xf32>
    %c0_176 = arith.constant 0 : index
    %c129_177 = arith.constant 129 : index
    %289 = vector.load %arg14[%c0_176, %c129_177] : memref<96x384xf32, #tpu.memory_space<vmem>>, vector<96x128xf32>
    %c5_178 = arith.constant 5 : index
    %c0_179 = arith.constant 0 : index
    %c0_180 = arith.constant 0 : index
    %290 = vector.load %arg1[%c5_178, %c0_179, %c0_180] : memref<9x1x128xf32, #tpu.memory_space<vmem>>, vector<1x1x128xf32>
    %291 = vector.shape_cast %290 : vector<1x1x128xf32> to vector<1x128xf32>
    %292 = vector.broadcast %291 : vector<1x128xf32> to vector<96x128xf32>
    %293 = arith.mulf %289, %292 : vector<96x128xf32>
    %c5_181 = arith.constant 5 : index
    %c0_182 = arith.constant 0 : index
    %c0_183 = arith.constant 0 : index
    %294 = vector.load %arg11[%c5_181, %c0_182, %c0_183] : memref<9x96x1xf32, #tpu.memory_space<vmem>>, vector<1x96x1xf32>
    %295 = vector.shape_cast %294 : vector<1x96x1xf32> to vector<96x1xf32>
    %296 = vector.broadcast %295 : vector<96x1xf32> to vector<96x128xf32>
    %297 = arith.mulf %293, %296 : vector<96x128xf32>
    %298 = arith.addf %288, %297 : vector<96x128xf32>
    %c0_184 = arith.constant 0 : index
    %c135_185 = arith.constant 135 : index
    %299 = vector.load %arg14[%c0_184, %c135_185] : memref<96x384xf32, #tpu.memory_space<vmem>>, vector<96x128xf32>
    %c6_186 = arith.constant 6 : index
    %c0_187 = arith.constant 0 : index
    %c0_188 = arith.constant 0 : index
    %300 = vector.load %arg1[%c6_186, %c0_187, %c0_188] : memref<9x1x128xf32, #tpu.memory_space<vmem>>, vector<1x1x128xf32>
    %301 = vector.shape_cast %300 : vector<1x1x128xf32> to vector<1x128xf32>
    %302 = vector.broadcast %301 : vector<1x128xf32> to vector<96x128xf32>
    %303 = arith.mulf %299, %302 : vector<96x128xf32>
    %c6_189 = arith.constant 6 : index
    %c0_190 = arith.constant 0 : index
    %c0_191 = arith.constant 0 : index
    %304 = vector.load %arg11[%c6_189, %c0_190, %c0_191] : memref<9x96x1xf32, #tpu.memory_space<vmem>>, vector<1x96x1xf32>
    %305 = vector.shape_cast %304 : vector<1x96x1xf32> to vector<96x1xf32>
    %306 = vector.broadcast %305 : vector<96x1xf32> to vector<96x128xf32>
    %307 = arith.mulf %303, %306 : vector<96x128xf32>
    %308 = arith.addf %298, %307 : vector<96x128xf32>
    %c0_192 = arith.constant 0 : index
    %c136_193 = arith.constant 136 : index
    %309 = vector.load %arg14[%c0_192, %c136_193] : memref<96x384xf32, #tpu.memory_space<vmem>>, vector<96x128xf32>
    %c7_194 = arith.constant 7 : index
    %c0_195 = arith.constant 0 : index
    %c0_196 = arith.constant 0 : index
    %310 = vector.load %arg1[%c7_194, %c0_195, %c0_196] : memref<9x1x128xf32, #tpu.memory_space<vmem>>, vector<1x1x128xf32>
    %311 = vector.shape_cast %310 : vector<1x1x128xf32> to vector<1x128xf32>
    %312 = vector.broadcast %311 : vector<1x128xf32> to vector<96x128xf32>
    %313 = arith.mulf %309, %312 : vector<96x128xf32>
    %c7_197 = arith.constant 7 : index
    %c0_198 = arith.constant 0 : index
    %c0_199 = arith.constant 0 : index
    %314 = vector.load %arg11[%c7_197, %c0_198, %c0_199] : memref<9x96x1xf32, #tpu.memory_space<vmem>>, vector<1x96x1xf32>
    %315 = vector.shape_cast %314 : vector<1x96x1xf32> to vector<96x1xf32>
    %316 = vector.broadcast %315 : vector<96x1xf32> to vector<96x128xf32>
    %317 = arith.mulf %313, %316 : vector<96x128xf32>
    %318 = arith.addf %308, %317 : vector<96x128xf32>
    %c0_200 = arith.constant 0 : index
    %c137_201 = arith.constant 137 : index
    %319 = vector.load %arg14[%c0_200, %c137_201] : memref<96x384xf32, #tpu.memory_space<vmem>>, vector<96x128xf32>
    %c8_202 = arith.constant 8 : index
    %c0_203 = arith.constant 0 : index
    %c0_204 = arith.constant 0 : index
    %320 = vector.load %arg1[%c8_202, %c0_203, %c0_204] : memref<9x1x128xf32, #tpu.memory_space<vmem>>, vector<1x1x128xf32>
    %321 = vector.shape_cast %320 : vector<1x1x128xf32> to vector<1x128xf32>
    %322 = vector.broadcast %321 : vector<1x128xf32> to vector<96x128xf32>
    %323 = arith.mulf %319, %322 : vector<96x128xf32>
    %c8_205 = arith.constant 8 : index
    %c0_206 = arith.constant 0 : index
    %c0_207 = arith.constant 0 : index
    %324 = vector.load %arg11[%c8_205, %c0_206, %c0_207] : memref<9x96x1xf32, #tpu.memory_space<vmem>>, vector<1x96x1xf32>
    %325 = vector.shape_cast %324 : vector<1x96x1xf32> to vector<96x1xf32>
    %326 = vector.broadcast %325 : vector<96x1xf32> to vector<96x128xf32>
    %327 = arith.mulf %323, %326 : vector<96x128xf32>
    %328 = arith.addf %318, %327 : vector<96x128xf32>
    %329 = vector.extract_strided_slice %328 {offsets = [0, 0], sizes = [48, 128], strides = [1, 1]} : vector<96x128xf32> to vector<48x128xf32>
    %cst_208 = arith.constant 5.000000e-01 : f32
    %330 = vector.broadcast %cst_208 : f32 to vector<48x128xf32>
    %331 = arith.mulf %330, %329 : vector<48x128xf32>
    %cst_209 = arith.constant 4.471500e-02 : f32
    %332 = vector.broadcast %cst_209 : f32 to vector<48x128xf32>
    %333 = arith.mulf %332, %329 : vector<48x128xf32>
    %334 = arith.mulf %333, %329 : vector<48x128xf32>
    %335 = arith.mulf %334, %329 : vector<48x128xf32>
    %336 = arith.addf %329, %335 : vector<48x128xf32>
    %cst_210 = arith.constant 0.797884583 : f32
    %337 = vector.broadcast %cst_210 : f32 to vector<48x128xf32>
    %338 = arith.mulf %337, %336 : vector<48x128xf32>
    %339 = math.tanh %338 : vector<48x128xf32>
    %cst_211 = arith.constant 1.000000e+00 : f32
    %340 = vector.broadcast %cst_211 : f32 to vector<48x128xf32>
    %341 = arith.addf %340, %339 : vector<48x128xf32>
    %342 = arith.mulf %331, %341 : vector<48x128xf32>
    %343 = vector.extract_strided_slice %328 {offsets = [48, 0], sizes = [48, 128], strides = [1, 1]} : vector<96x128xf32> to vector<48x128xf32>
    %344 = arith.mulf %342, %343 : vector<48x128xf32>
    %c0_212 = arith.constant 0 : index
    %c0_213 = arith.constant 0 : index
    %345 = vector.load %arg12[%c0_212, %c0_213] : memref<16x48xbf16, #tpu.memory_space<vmem>>, vector<16x48xbf16>
    %346 = arith.truncf %344 : vector<48x128xf32> to vector<48x128xbf16>
    %cst_214 = arith.constant dense<0.000000e+00> : vector<16x128xf32>
    %347 = tpu.matmul %345, %346, %cst_214 {dimension_numbers = #tpu.dot_dimension_numbers<[1], [0], [0], [1], [0, 0, 1, 1], [], []>} : vector<16x48xbf16>, vector<48x128xbf16>, vector<16x128xf32> -> vector<16x128xf32>
    %348 = arith.addf %206, %347 : vector<16x128xf32>
    %c0_215 = arith.constant 0 : index
    %c0_216 = arith.constant 0 : index
    %349 = vector.load %arg13[%c0_215, %c0_216] : memref<16x128xf32, #tpu.memory_space<vmem>>, vector<16x128xf32>
    tpu.vector_store %arg13[%c0_215, %c0_216], %348 {strides = array<i32>} : memref<16x128xf32, #tpu.memory_space<vmem>>, vector<16x128xf32>,
    return
  }
}

</mosaic_0001>

<llo_original>
// kernel: tile.14
$region0: #{tile.14}
  %s0 = inlined_call_operand.vmem [shape: f32[16,2,64], index: 0, kind: input, shape index: {}]
  %s1 = inlined_call_operand.vmem [shape: f32[16,128], index: 1, kind: output, shape index: {}]
  $region1: #{tile.14} parent=0
    #allocation0 [shape = 'u8[65536]{0}', space=vmem, size = 0x10000, scoped, tag = 'scoped mem for input reshape']
    %s3 = sshllo.u32 0, 2
    %s4 = smul.addr 2, 15
    %s5 = scalar_lea.vmem %s0, %s4
    %v6 = vld [vmem:[%s5] sm:%s3]
    %s7 = scalar_lea.vmem [#allocation0], 120
    %8 = vst [vmem:[%s7] sm:%s3] %v6
    %s9 = smul.addr 2, 14
    %s10 = scalar_lea.vmem %s0, %s9
    %v11 = vld [vmem:[%s10] sm:%s3]
    %s12 = scalar_lea.vmem [#allocation0], 112
    %13 = vst [vmem:[%s12] sm:%s3] %v11
    %s14 = smul.addr 2, 13
    %s15 = scalar_lea.vmem %s0, %s14
    %v16 = vld [vmem:[%s15] sm:%s3]
    %s17 = scalar_lea.vmem [#allocation0], 104
    %18 = vst [vmem:[%s17] sm:%s3] %v16
    %s19 = smul.addr 2, 12
    %s20 = scalar_lea.vmem %s0, %s19
    %v21 = vld [vmem:[%s20] sm:%s3]
    %s22 = scalar_lea.vmem [#allocation0], 96
    %23 = vst [vmem:[%s22] sm:%s3] %v21
    %s24 = smul.addr 2, 11
    %s25 = scalar_lea.vmem %s0, %s24
    %v26 = vld [vmem:[%s25] sm:%s3]
    %s27 = scalar_lea.vmem [#allocation0], 88
    %28 = vst [vmem:[%s27] sm:%s3] %v26
    %s29 = smul.addr 2, 10
    %s30 = scalar_lea.vmem %s0, %s29
    %v31 = vld [vmem:[%s30] sm:%s3]
    %s32 = scalar_lea.vmem [#allocation0], 80
    %33 = vst [vmem:[%s32] sm:%s3] %v31
    %s34 = smul.addr 2, 9
    %s35 = scalar_lea.vmem %s0, %s34
    %v36 = vld [vmem:[%s35] sm:%s3]
    %s37 = scalar_lea.vmem [#allocation0], 72
    %38 = vst [vmem:[%s37] sm:%s3] %v36
    %s39 = smul.addr 2, 8
    %s40 = scalar_lea.vmem %s0, %s39
    %v41 = vld [vmem:[%s40] sm:%s3]
    %s42 = scalar_lea.vmem [#allocation0], 64
    %43 = vst [vmem:[%s42] sm:%s3] %v41
    %s44 = smul.addr 2, 7
    %s45 = scalar_lea.vmem %s0, %s44
    %v46 = vld [vmem:[%s45] sm:%s3]
    %s47 = scalar_lea.vmem [#allocation0], 56
    %48 = vst [vmem:[%s47] sm:%s3] %v46
    %s49 = smul.addr 2, 6
    %s50 = scalar_lea.vmem %s0, %s49
    %v51 = vld [vmem:[%s50] sm:%s3]
    %s52 = scalar_lea.vmem [#allocation0], 48
    %53 = vst [vmem:[%s52] sm:%s3] %v51
    %s54 = smul.addr 2, 5
    %s55 = scalar_lea.vmem %s0, %s54
    %v56 = vld [vmem:[%s55] sm:%s3]
    %s57 = scalar_lea.vmem [#allocation0], 40
    %58 = vst [vmem:[%s57] sm:%s3] %v56
    %s59 = smul.addr 2, 4
    %s60 = scalar_lea.vmem %s0, %s59
    %v61 = vld [vmem:[%s60] sm:%s3]
    %s62 = scalar_lea.vmem [#allocation0], 32
    %63 = vst [vmem:[%s62] sm:%s3] %v61
    %s64 = smul.addr 2, 3
    %s65 = scalar_lea.vmem %s0, %s64
    %v66 = vld [vmem:[%s65] sm:%s3]
    %s67 = scalar_lea.vmem [#allocation0], 24
    %68 = vst [vmem:[%s67] sm:%s3] %v66
    %s69 = smul.addr 2, 2
    %s70 = scalar_lea.vmem %s0, %s69
    %v71 = vld [vmem:[%s70] sm:%s3]
    %s72 = scalar_lea.vmem [#allocation0], 16
    %73 = vst [vmem:[%s72] sm:%s3] %v71
    %s74 = scalar_lea.vmem %s0, 2
    %v75 = vld [vmem:[%s74] sm:%s3]
    %s76 = scalar_lea.vmem [#allocation0], 8
    %77 = vst [vmem:[%s76] sm:%s3] %v75
    %v78 = vld [vmem:[%s0] sm:%s3]
    %79 = vst [vmem:[#allocation0] sm:%s3] %v78
    %v80 = vld [vmem:[#allocation0] ss:$8 sm:$0xf]
    %v81 = vld [vmem:[#allocation0] ss:$8 sm:$0xf0]
    %vm82 = vcmask 1047556
    %v83 = vsel %vm82, %v81, %v80
    %vm84 = vcmask 523264
    %85 = vst.msk [vmem:[%s1] sm:$0xff] %vm84, %v83
    %s86 = scalar_lea.vmem [#allocation0], 64
    %v87 = vld [vmem:[%s86] ss:$8 sm:$0xf]
    %s88 = scalar_lea.vmem [#allocation0], 64
    %v89 = vld [vmem:[%s88] ss:$8 sm:$0xf0]
    %vm90 = vcmask 1047556
    %v91 = vsel %vm90, %v89, %v87
    %vm92 = vcmask 523264
    %s93 = scalar_lea.vmem %s1, 8
    %94 = vst.msk [vmem:[%s93] sm:$0xff] %vm92, %v91
    %s95 = scalar_lea.vmem [#allocation0], 1
    %v96 = vld [vmem:[%s95] ss:$8 sm:$0xf]
    %s97 = scalar_lea.vmem [#allocation0], 1
    %v98 = vld [vmem:[%s97] ss:$8 sm:$0xf0]
    %vm99 = vcmask 1047556
    %v100 = vsel %vm99, %v98, %v96
    %101 = vrot.lane.b32.xlu0 %v100, 64
    %v102 = vpop.permute.xlu0 %101
    %vm103 = vcmask 1048064
    %104 = vst.msk [vmem:[%s1] sm:$0xff] %vm103, %v102
    %s105 = scalar_lea.vmem [#allocation0], 65
    %v106 = vld [vmem:[%s105] ss:$8 sm:$0xf]
    %s107 = scalar_lea.vmem [#allocation0], 65
    %v108 = vld [vmem:[%s107] ss:$8 sm:$0xf0]
    %vm109 = vcmask 1047556
    %v110 = vsel %vm109, %v108, %v106
    %111 = vrot.lane.b32.xlu0 %v110, 64
    %v112 = vpop.permute.xlu0 %111
    %vm113 = vcmask 1048064
    %s114 = scalar_lea.vmem %s1, 8
    %115 = vst.msk [vmem:[%s114] sm:$0xff] %vm113, %v112

// kernel: far_moduls_forward.5
$region0: #{far_moduls_forward.5}
  #allocation0 [shape = 'u32[]', space=smem, size = 0x4, offset = 0x4, fixed_abs, tag = 'smem constant byte address 0x4 - core index']
  #allocation1 [shape = 'u32[144,128]{1,0:T(1,128)}', space=vmem, size = 0x12000, scoped, tag = 'internal scratch']
  #allocation2 [shape = 'f32[32,384]{1,0:T(8,128)}', space=vmem, size = 0xc000, scoped, tag = 'scratch operand']
  #allocation3 [shape = 'bf16[288,128]{1,0:T(16,128)(2,1)}', space=vmem, size = 0x12000, scoped, tag = 'scratch operand']
  %s0 = inlined_call_operand.vmem [shape: f32[32,128], index: 0, kind: input, shape index: {}]
  %s1 = inlined_call_operand.hbm [shape: f32[9,1,128], index: 1, kind: input, shape index: {}]
  %s2 = inlined_call_operand.hbm [shape: bf16[16,288], index: 2, kind: input, shape index: {}]
  %s3 = inlined_call_operand.vmem [shape: bf16[216,144], index: 3, kind: input, shape index: {}]
  %s4 = inlined_call_operand.vmem [shape: f32[216,128], index: 4, kind: output, shape index: {}]
  %s5 = sld [smem:[#allocation0]]
  $region34: #{far_moduls_forward.5} parent=0
    _
  %s7 = ssub.s32 1, %s5
  %s8 = scalar_select 0, %s7, %s5
  $region1: #{far_moduls_forward.5} parent=0
    #allocation4 [shape = 'u8[4608]{0}', space=vmem, size = 0x1400, scoped, tag = 'input window, operand 1, single buffered']
    #allocation5 [shape = 's32[1]{0}', space=sflag, size = 0x4, scoped, tag = 'scoped memory for far_moduls_forward.5']
    #allocation6 [shape = 'u8[12288]{0}', space=vmem, size = 0x3000, scoped, tag = 'input window, operand 2, single buffered']
    #allocation7 [shape = 's32[1]{0}', space=sflag, size = 0x4, scoped, tag = 'scoped memory for far_moduls_forward.5']
    %9 = vsyncpa [#allocation5], 0
    %10 = vsyncpa [#allocation7], 0
    // Predicated region
    $region2: #{far_moduls_forward.5} parent=1 // pred_check
      _
    $region3: #{far_moduls_forward.5} parent=1 // pred_check_branch
      %12 = sbr.rel (0) target = $region5
    $region4: #{far_moduls_forward.5} parent=1 // pred_region
      _
    $region5: #{far_moduls_forward.5} parent=1 // pred_fallthru
      _
    // Predicated region
    $region6: #{far_moduls_forward.5} parent=1 // pred_check
      _
    $region7: #{far_moduls_forward.5} parent=1 // pred_check_branch
      %14 = sbr.rel (0) target = $region9
    $region8: #{far_moduls_forward.5} parent=1 // pred_region
      %s16 = ssub.s32 144, 144
      %17 = vsyncadd [#allocation5], %s16
      %s18 = sshll.u32 [#allocation4], 4
      %s19 = int_to_ptr.vmem [resolvable:$true] %s18
      %24 = dma.hbm_to_vmem [thread:$0]  %s1, 144, %s19, [#allocation5], 16, 16, 1
    $region9: #{far_moduls_forward.5} parent=1 // pred_fallthru
      _
    // Predicated region
    $region10: #{far_moduls_forward.5} parent=1 // pred_check
      _
    $region11: #{far_moduls_forward.5} parent=1 // pred_check_branch
      %26 = sbr.rel (0) target = $region13
    $region12: #{far_moduls_forward.5} parent=1 // pred_region
      %s28 = ssub.s32 384, 384
      %29 = vsyncadd [#allocation7], %s28
      %s30 = sshll.u32 [#allocation6], 4
      %s31 = int_to_ptr.vmem [resolvable:$true] %s30
      %36 = dma.hbm_to_vmem [thread:$0]  %s2, 384, %s31, [#allocation7], 192, 192, 12
    $region13: #{far_moduls_forward.5} parent=1 // pred_fallthru
      _
    // Predicated region
    $region14: #{far_moduls_forward.5} parent=1 // pred_check
      _
    $region15: #{far_moduls_forward.5} parent=1 // pred_check_branch
      %38 = sbr.rel (0) target = $region17
    $region16: #{far_moduls_forward.5} parent=1 // pred_region
      _
    $region17: #{far_moduls_forward.5} parent=1 // pred_fallthru
      _
    // Predicated region
    $region18: #{far_moduls_forward.5} parent=1 // pred_check
      _
    $region19: #{far_moduls_forward.5} parent=1 // pred_check_branch
      %40 = sbr.rel (0) target = $region21
    $region20: #{far_moduls_forward.5} parent=1 // pred_region
      %41 = dma.done [#allocation5], 144
    $region21: #{far_moduls_forward.5} parent=1 // pred_fallthru
      _
    // Predicated region
    $region22: #{far_moduls_forward.5} parent=1 // pred_check
      _
    $region23: #{far_moduls_forward.5} parent=1 // pred_check_branch
      %43 = sbr.rel (0) target = $region25
    $region24: #{far_moduls_forward.5} parent=1 // pred_region
      %44 = dma.done [#allocation7], 384
    $region25: #{far_moduls_forward.5} parent=1 // pred_fallthru
      _
    %v46 = vld [vmem:[%s0] sm:$0xff]
    %v47 = vld [vmem:[%s0 + $0x8] sm:$0xff]
    %v48 = vld [vmem:[%s0 + $0x10] sm:$0xff]
    %v49 = vld [vmem:[%s0 + $0x18] sm:$0xff]
    %50 = vst [vmem:[#allocation2] sm:$0xff] 0.0
    %51 = vst [vmem:[#allocation2 + $0x18] sm:$0xff] 0.0
    %52 = vst [vmem:[#allocation2 + $0x30] sm:$0xff] 0.0
    %53 = vst [vmem:[#allocation2 + $0x48] sm:$0xff] 0.0
    %54 = vst [vmem:[#allocation2 + $0x8] sm:$0xff] %v46
    %55 = vst [vmem:[#allocation2 + $0x20] sm:$0xff] %v47
    %56 = vst [vmem:[#allocation2 + $0x38] sm:$0xff] %v48
    %57 = vst [vmem:[#allocation2 + $0x50] sm:$0xff] %v49
    %58 = vst [vmem:[#allocation2 + $0x10] sm:$0xff] 0.0
    %59 = vst [vmem:[#allocation2 + $0x28] sm:$0xff] 0.0
    %60 = vst [vmem:[#allocation2 + $0x40] sm:$0xff] 0.0
    %61 = vst [vmem:[#allocation2 + $0x58] sm:$0xff] 0.0
    %v62 = vld [vmem:[#allocation2] sm:$0xff]
    %v63 = vld [vmem:[#allocation2 + $0x8] sm:$0xff]
    %v64 = vld [vmem:[#allocation2 + $0x18] sm:$0xff]
    %v65 = vld [vmem:[#allocation2 + $0x20] sm:$0xff]
    %v66 = vld [vmem:[#allocation2 + $0x30] sm:$0xff]
    %v67 = vld [vmem:[#allocation2 + $0x38] sm:$0xff]
    %v68 = vld [vmem:[#allocation2 + $0x48] sm:$0xff]
    %v69 = vld [vmem:[#allocation2 + $0x50] sm:$0xff]
    %v70 = vld [vmem:[#allocation4] sm:$0x1]
    %v72 = vlaneseq
    %v73 = vshrl.u32 %v72, 7
    %v74 = vsub.s32 0, %v73
    %v75 = vrot.slane %v70, %v74
    %76 = vrot.lane.b32.xlu0 %v75, 119
    %v77 = vpop.permute.xlu0 %76
    %v79 = vmul.f32 %v62, %v77
    %v80 = vmul.f32 %v63, %v77
    %v81 = vmul.f32 %v64, %v77
    %v82 = vmul.f32 %v65, %v77
    %v83 = vmul.f32 %v66, %v77
    %v84 = vmul.f32 %v67, %v77
    %v85 = vmul.f32 %v68, %v77
    %v86 = vmul.f32 %v69, %v77
    %v87 = vpack.c.bf16 %v81, %v79
    %v88 = vpack.c.bf16 %v82, %v80
    %v89 = vpack.c.bf16 %v85, %v83
    %v90 = vpack.c.bf16 %v86, %v84
    %95 = vrot.lane.b32.xlu0 %v87, 9
    %v96 = vpop.permute.xlu0 %95
    %97 = vrot.lane.b32.xlu0 %v88, 9
    %v98 = vpop.permute.xlu0 %97
    %99 = vrot.lane.b32.xlu0 %v89, 9
    %v100 = vpop.permute.xlu0 %99
    %101 = vrot.lane.b32.xlu0 %v90, 9
    %v102 = vpop.permute.xlu0 %101
    %vm103 = vcmask 72704
    %v104 = vsel %vm103, %v96, %v98
    %v105 = vsel %vm103, %v100, %v102
    %108 = vst [vmem:[#allocation3] sm:$0xff] %v104
    %109 = vst [vmem:[#allocation3 + $0x8] sm:$0xff] %v105
    %v110 = vld [vmem:[#allocation2] sm:$0xff]
    %v111 = vld [vmem:[#allocation2 + $0x8] sm:$0xff]
    %v112 = vld [vmem:[#allocation2 + $0x18] sm:$0xff]
    %v113 = vld [vmem:[#allocation2 + $0x20] sm:$0xff]
    %v114 = vld [vmem:[#allocation2 + $0x30] sm:$0xff]
    %v115 = vld [vmem:[#allocation2 + $0x38] sm:$0xff]
    %v116 = vld [vmem:[#allocation2 + $0x48] sm:$0xff]
    %v117 = vld [vmem:[#allocation2 + $0x50] sm:$0xff]
    %s118 = scalar_lea.vmem [#allocation4], 1
    %v119 = vld [vmem:[%s118] sm:$0x1]
    %v121 = vlaneseq
    %v122 = vshrl.u32 %v121, 7
    %v123 = vsub.s32 0, %v122
    %v124 = vrot.slane %v119, %v123
    %125 = vrot.lane.b32.xlu0 %v124, 120
    %v126 = vpop.permute.xlu0 %125
    %v128 = vmul.f32 %v110, %v126
    %v129 = vmul.f32 %v111, %v126
    %v130 = vmul.f32 %v112, %v126
    %v131 = vmul.f32 %v113, %v126
    %v132 = vmul.f32 %v114, %v126
    %v133 = vmul.f32 %v115, %v126
    %v134 = vmul.f32 %v116, %v126
    %v135 = vmul.f32 %v117, %v126
    %v136 = vpack.c.bf16 %v130, %v128
    %v137 = vpack.c.bf16 %v131, %v129
    %v138 = vpack.c.bf16 %v134, %v132
    %v139 = vpack.c.bf16 %v135, %v133
    %144 = vrot.lane.b32.xlu0 %v136, 8
    %v145 = vpop.permute.xlu0 %144
    %146 = vrot.lane.b32.xlu0 %v137, 8
    %v147 = vpop.permute.xlu0 %146
    %148 = vrot.lane.b32.xlu0 %v138, 8
    %v149 = vpop.permute.xlu0 %148
    %150 = vrot.lane.b32.xlu0 %v139, 8
    %v151 = vpop.permute.xlu0 %150
    %vm152 = vcmask 64512
    %v153 = vsel %vm152, %v145, %v147
    %v154 = vsel %vm152, %v149, %v151
    %157 = vst [vmem:[#allocation3 + $0x10] sm:$0xff] %v153
    %158 = vst [vmem:[#allocation3 + $0x18] sm:$0xff] %v154
    %v159 = vld [vmem:[#allocation2] sm:$0xff]
    %v160 = vld [vmem:[#allocation2 + $0x8] sm:$0xff]
    %v161 = vld [vmem:[#allocation2 + $0x18] sm:$0xff]
    %v162 = vld [vmem:[#allocation2 + $0x20] sm:$0xff]
    %v163 = vld [vmem:[#allocation2 + $0x30] sm:$0xff]
    %v164 = vld [vmem:[#allocation2 + $0x38] sm:$0xff]
    %v165 = vld [vmem:[#allocation2 + $0x48] sm:$0xff]
    %v166 = vld [vmem:[#allocation2 + $0x50] sm:$0xff]
    %s167 = scalar_lea.vmem [#allocation4], 2
    %v168 = vld [vmem:[%s167] sm:$0x1]
    %v170 = vlaneseq
    %v171 = vshrl.u32 %v170, 7
    %v172 = vsub.s32 0, %v171
    %v173 = vrot.slane %v168, %v172
    %174 = vrot.lane.b32.xlu0 %v173, 121
    %v175 = vpop.permute.xlu0 %174
    %v177 = vmul.f32 %v159, %v175
    %v178 = vmul.f32 %v160, %v175
    %v179 = vmul.f32 %v161, %v175
    %v180 = vmul.f32 %v162, %v175
    %v181 = vmul.f32 %v163, %v175
    %v182 = vmul.f32 %v164, %v175
    %v183 = vmul.f32 %v165, %v175
    %v184 = vmul.f32 %v166, %v175
    %v185 = vpack.c.bf16 %v179, %v177
    %v186 = vpack.c.bf16 %v180, %v178
    %v187 = vpack.c.bf16 %v183, %v181
    %v188 = vpack.c.bf16 %v184, %v182
    %193 = vrot.lane.b32.xlu0 %v185, 7
    %v194 = vpop.permute.xlu0 %193
    %195 = vrot.lane.b32.xlu0 %v186, 7
    %v196 = vpop.permute.xlu0 %195
    %197 = vrot.lane.b32.xlu0 %v187, 7
    %v198 = vpop.permute.xlu0 %197
    %199 = vrot.lane.b32.xlu0 %v188, 7
    %v200 = vpop.permute.xlu0 %199
    %vm201 = vcmask 56320
    %v202 = vsel %vm201, %v194, %v196
    %v203 = vsel %vm201, %v198, %v200
    %206 = vst [vmem:[#allocation3 + $0x20] sm:$0xff] %v202
    %207 = vst [vmem:[#allocation3 + $0x28] sm:$0xff] %v203
    %v208 = vld [vmem:[#allocation2] sm:$0xff]
    %v209 = vld [vmem:[#allocation2 + $0x8] sm:$0xff]
    %v210 = vld [vmem:[#allocation2 + $0x18] sm:$0xff]
    %v211 = vld [vmem:[#allocation2 + $0x20] sm:$0xff]
    %v212 = vld [vmem:[#allocation2 + $0x30] sm:$0xff]
    %v213 = vld [vmem:[#allocation2 + $0x38] sm:$0xff]
    %v214 = vld [vmem:[#allocation2 + $0x48] sm:$0xff]
    %v215 = vld [vmem:[#allocation2 + $0x50] sm:$0xff]
    %s216 = scalar_lea.vmem [#allocation4], 3
    %v217 = vld [vmem:[%s216] sm:$0x1]
    %v219 = vlaneseq
    %v220 = vshrl.u32 %v219, 7
    %v221 = vsub.s32 0, %v220
    %v222 = vrot.slane %v217, %v221
    %223 = vrot.lane.b32.xlu0 %v222, 127
    %v224 = vpop.permute.xlu0 %223
    %v226 = vmul.f32 %v208, %v224
    %v227 = vmul.f32 %v209, %v224
    %v228 = vmul.f32 %v210, %v224
    %v229 = vmul.f32 %v211, %v224
    %v230 = vmul.f32 %v212, %v224
    %v231 = vmul.f32 %v213, %v224
    %v232 = vmul.f32 %v214, %v224
    %v233 = vmul.f32 %v215, %v224
    %v234 = vpack.c.bf16 %v228, %v226
    %v235 = vpack.c.bf16 %v229, %v227
    %v236 = vpack.c.bf16 %v232, %v230
    %v237 = vpack.c.bf16 %v233, %v231
    %242 = vrot.lane.b32.xlu0 %v234, 1
    %v243 = vpop.permute.xlu0 %242
    %244 = vrot.lane.b32.xlu0 %v235, 1
    %v245 = vpop.permute.xlu0 %244
    %246 = vrot.lane.b32.xlu0 %v236, 1
    %v247 = vpop.permute.xlu0 %246
    %248 = vrot.lane.b32.xlu0 %v237, 1
    %v249 = vpop.permute.xlu0 %248
    %vm250 = vcmask 7168
    %v251 = vsel %vm250, %v243, %v245
    %v252 = vsel %vm250, %v247, %v249
    %255 = vst [vmem:[#allocation3 + $0x30] sm:$0xff] %v251
    %256 = vst [vmem:[#allocation3 + $0x38] sm:$0xff] %v252
    %v257 = vld [vmem:[#allocation2 + $0x8] sm:$0xff]
    %v258 = vld [vmem:[#allocation2 + $0x20] sm:$0xff]
    %v259 = vld [vmem:[#allocation2 + $0x38] sm:$0xff]
    %v260 = vld [vmem:[#allocation2 + $0x50] sm:$0xff]
    %s261 = scalar_lea.vmem [#allocation4], 4
    %v262 = vld [vmem:[%s261] sm:$0x1]
    %v264 = vlaneseq
    %v265 = vshrl.u32 %v264, 7
    %v266 = vsub.s32 0, %v265
    %v267 = vrot.slane %v262, %v266
    %v269 = vmul.f32 %v257, %v267
    %v270 = vmul.f32 %v258, %v267
    %v271 = vmul.f32 %v259, %v267
    %v272 = vmul.f32 %v260, %v267
    %v273 = vpack.c.bf16 %v270, %v269
    %v274 = vpack.c.bf16 %v272, %v271
    %275 = vst [vmem:[#allocation3 + $0x40] sm:$0xff] %v273
    %276 = vst [vmem:[#allocation3 + $0x48] sm:$0xff] %v274
    %v277 = vld [vmem:[#allocation2 + $0x8] sm:$0xff]
    %v278 = vld [vmem:[#allocation2 + $0x10] sm:$0xff]
    %v279 = vld [vmem:[#allocation2 + $0x20] sm:$0xff]
    %v280 = vld [vmem:[#allocation2 + $0x28] sm:$0xff]
    %v281 = vld [vmem:[#allocation2 + $0x38] sm:$0xff]
    %v282 = vld [vmem:[#allocation2 + $0x40] sm:$0xff]
    %v283 = vld [vmem:[#allocation2 + $0x50] sm:$0xff]
    %v284 = vld [vmem:[#allocation2 + $0x58] sm:$0xff]
    %s285 = scalar_lea.vmem [#allocation4], 5
    %v286 = vld [vmem:[%s285] sm:$0x1]
    %v288 = vlaneseq
    %v289 = vshrl.u32 %v288, 7
    %v290 = vsub.s32 0, %v289
    %v291 = vrot.slane %v286, %v290
    %292 = vrot.lane.b32.xlu0 %v291, 1
    %v293 = vpop.permute.xlu0 %292
    %v295 = vmul.f32 %v277, %v293
    %v296 = vmul.f32 %v278, %v293
    %v297 = vmul.f32 %v279, %v293
    %v298 = vmul.f32 %v280, %v293
    %v299 = vmul.f32 %v281, %v293
    %v300 = vmul.f32 %v282, %v293
    %v301 = vmul.f32 %v283, %v293
    %v302 = vmul.f32 %v284, %v293
    %v303 = vpack.c.bf16 %v297, %v295
    %v304 = vpack.c.bf16 %v298, %v296
    %v305 = vpack.c.bf16 %v301, %v299
    %v306 = vpack.c.bf16 %v302, %v300
    %311 = vrot.lane.b32.xlu0 %v303, 127
    %v312 = vpop.permute.xlu0 %311
    %313 = vrot.lane.b32.xlu0 %v304, 127
    %v314 = vpop.permute.xlu0 %313
    %315 = vrot.lane.b32.xlu0 %v305, 127
    %v316 = vpop.permute.xlu0 %315
    %317 = vrot.lane.b32.xlu0 %v306, 127
    %v318 = vpop.permute.xlu0 %317
    %vm319 = vcmask 1039360
    %v320 = vsel %vm319, %v312, %v314
    %v321 = vsel %vm319, %v316, %v318
    %324 = vst [vmem:[#allocation3 + $0x50] sm:$0xff] %v320
    %325 = vst [vmem:[#allocation3 + $0x58] sm:$0xff] %v321
    %v326 = vld [vmem:[#allocation2 + $0x8] sm:$0xff]
    %v327 = vld [vmem:[#allocation2 + $0x10] sm:$0xff]
    %v328 = vld [vmem:[#allocation2 + $0x20] sm:$0xff]
    %v329 = vld [vmem:[#allocation2 + $0x28] sm:$0xff]
    %v330 = vld [vmem:[#allocation2 + $0x38] sm:$0xff]
    %v331 = vld [vmem:[#allocation2 + $0x40] sm:$0xff]
    %v332 = vld [vmem:[#allocation2 + $0x50] sm:$0xff]
    %v333 = vld [vmem:[#allocation2 + $0x58] sm:$0xff]
    %s334 = scalar_lea.vmem [#allocation4], 6
    %v335 = vld [vmem:[%s334] sm:$0x1]
    %v337 = vlaneseq
    %v338 = vshrl.u32 %v337, 7
    %v339 = vsub.s32 0, %v338
    %v340 = vrot.slane %v335, %v339
    %341 = vrot.lane.b32.xlu0 %v340, 7
    %v342 = vpop.permute.xlu0 %341
    %v344 = vmul.f32 %v326, %v342
    %v345 = vmul.f32 %v327, %v342
    %v346 = vmul.f32 %v328, %v342
    %v347 = vmul.f32 %v329, %v342
    %v348 = vmul.f32 %v330, %v342
    %v349 = vmul.f32 %v331, %v342
    %v350 = vmul.f32 %v332, %v342
    %v351 = vmul.f32 %v333, %v342
    %v352 = vpack.c.bf16 %v346, %v344
    %v353 = vpack.c.bf16 %v347, %v345
    %v354 = vpack.c.bf16 %v350, %v348
    %v355 = vpack.c.bf16 %v351, %v349
    %360 = vrot.lane.b32.xlu0 %v352, 121
    %v361 = vpop.permute.xlu0 %360
    %362 = vrot.lane.b32.xlu0 %v353, 121
    %v363 = vpop.permute.xlu0 %362
    %364 = vrot.lane.b32.xlu0 %v354, 121
    %v365 = vpop.permute.xlu0 %364
    %366 = vrot.lane.b32.xlu0 %v355, 121
    %v367 = vpop.permute.xlu0 %366
    %vm368 = vcmask 990208
    %v369 = vsel %vm368, %v361, %v363
    %v370 = vsel %vm368, %v365, %v367
    %373 = vst [vmem:[#allocation3 + $0x60] sm:$0xff] %v369
    %374 = vst [vmem:[#allocation3 + $0x68] sm:$0xff] %v370
    %v375 = vld [vmem:[#allocation2 + $0x8] sm:$0xff]
    %v376 = vld [vmem:[#allocation2 + $0x10] sm:$0xff]
    %v377 = vld [vmem:[#allocation2 + $0x20] sm:$0xff]
    %v378 = vld [vmem:[#allocation2 + $0x28] sm:$0xff]
    %v379 = vld [vmem:[#allocation2 + $0x38] sm:$0xff]
    %v380 = vld [vmem:[#allocation2 + $0x40] sm:$0xff]
    %v381 = vld [vmem:[#allocation2 + $0x50] sm:$0xff]
    %v382 = vld [vmem:[#allocation2 + $0x58] sm:$0xff]
    %s383 = scalar_lea.vmem [#allocation4], 7
    %v384 = vld [vmem:[%s383] sm:$0x1]
    %v386 = vlaneseq
    %v387 = vshrl.u32 %v386, 7
    %v388 = vsub.s32 0, %v387
    %v389 = vrot.slane %v384, %v388
    %390 = vrot.lane.b32.xlu0 %v389, 8
    %v391 = vpop.permute.xlu0 %390
    %v393 = vmul.f32 %v375, %v391
    %v394 = vmul.f32 %v376, %v391
    %v395 = vmul.f32 %v377, %v391
    %v396 = vmul.f32 %v378, %v391
    %v397 = vmul.f32 %v379, %v391
    %v398 = vmul.f32 %v380, %v391
    %v399 = vmul.f32 %v381, %v391
    %v400 = vmul.f32 %v382, %v391
    %v401 = vpack.c.bf16 %v395, %v393
    %v402 = vpack.c.bf16 %v396, %v394
    %v403 = vpack.c.bf16 %v399, %v397
    %v404 = vpack.c.bf16 %v400, %v398
    %409 = vrot.lane.b32.xlu0 %v401, 120
    %v410 = vpop.permute.xlu0 %409
    %411 = vrot.lane.b32.xlu0 %v402, 120
    %v412 = vpop.permute.xlu0 %411
    %413 = vrot.lane.b32.xlu0 %v403, 120
    %v414 = vpop.permute.xlu0 %413
    %415 = vrot.lane.b32.xlu0 %v404, 120
    %v416 = vpop.permute.xlu0 %415
    %vm417 = vcmask 982016
    %v418 = vsel %vm417, %v410, %v412
    %v419 = vsel %vm417, %v414, %v416
    %422 = vst [vmem:[#allocation3 + $0x70] sm:$0xff] %v418
    %423 = vst [vmem:[#allocation3 + $0x78] sm:$0xff] %v419
    %v424 = vld [vmem:[#allocation2 + $0x8] sm:$0xff]
    %v425 = vld [vmem:[#allocation2 + $0x10] sm:$0xff]
    %v426 = vld [vmem:[#allocation2 + $0x20] sm:$0xff]
    %v427 = vld [vmem:[#allocation2 + $0x28] sm:$0xff]
    %v428 = vld [vmem:[#allocation2 + $0x38] sm:$0xff]
    %v429 = vld [vmem:[#allocation2 + $0x40] sm:$0xff]
    %v430 = vld [vmem:[#allocation2 + $0x50] sm:$0xff]
    %v431 = vld [vmem:[#allocation2 + $0x58] sm:$0xff]
    %s432 = scalar_lea.vmem [#allocation4], 8
    %v433 = vld [vmem:[%s432] sm:$0x1]
    %v435 = vlaneseq
    %v436 = vshrl.u32 %v435, 7
    %v437 = vsub.s32 0, %v436
    %v438 = vrot.slane %v433, %v437
    %439 = vrot.lane.b32.xlu0 %v438, 9
    %v440 = vpop.permute.xlu0 %439
    %v442 = vmul.f32 %v424, %v440
    %v443 = vmul.f32 %v425, %v440
    %v444 = vmul.f32 %v426, %v440
    %v445 = vmul.f32 %v427, %v440
    %v446 = vmul.f32 %v428, %v440
    %v447 = vmul.f32 %v429, %v440
    %v448 = vmul.f32 %v430, %v440
    %v449 = vmul.f32 %v431, %v440
    %v450 = vpack.c.bf16 %v444, %v442
    %v451 = vpack.c.bf16 %v445, %v443
    %v452 = vpack.c.bf16 %v448, %v446
    %v453 = vpack.c.bf16 %v449, %v447
    %458 = vrot.lane.b32.xlu0 %v450, 119
    %v459 = vpop.permute.xlu0 %458
    %460 = vrot.lane.b32.xlu0 %v451, 119
    %v461 = vpop.permute.xlu0 %460
    %462 = vrot.lane.b32.xlu0 %v452, 119
    %v463 = vpop.permute.xlu0 %462
    %464 = vrot.lane.b32.xlu0 %v453, 119
    %v465 = vpop.permute.xlu0 %464
    %vm466 = vcmask 973824
    %v467 = vsel %vm466, %v459, %v461
    %v468 = vsel %vm466, %v463, %v465
    %471 = vst [vmem:[#allocation3 + $0x80] sm:$0xff] %v467
    %472 = vst [vmem:[#allocation3 + $0x88] sm:$0xff] %v468
    %v473 = vld [vmem:[#allocation6] sm:$0xff]
    %v474 = vld [vmem:[#allocation6 + $0x8] sm:$0xf]
    %v475 = vld [vmem:[#allocation6 + $0xc] sm:$0xff]
    %v476 = vld [vmem:[#allocation6 + $0x14] sm:$0xf]
    %v477 = vld [vmem:[#allocation3] sm:$0xff]
    %v478 = vld [vmem:[#allocation3 + $0x8] sm:$0xff]
    %v479 = vld [vmem:[#allocation3 + $0x10] sm:$0xff]
    %v480 = vld [vmem:[#allocation3 + $0x18] sm:$0xff]
    %v481 = vld [vmem:[#allocation3 + $0x20] sm:$0xff]
    %v482 = vld [vmem:[#allocation3 + $0x28] sm:$0xff]
    %v483 = vld [vmem:[#allocation3 + $0x30] sm:$0xff]
    %v484 = vld [vmem:[#allocation3 + $0x38] sm:$0xff]
    %v485 = vld [vmem:[#allocation3 + $0x40] sm:$0xff]
    %v486 = vld [vmem:[#allocation3 + $0x48] sm:$0xff]
    %v487 = vld [vmem:[#allocation3 + $0x50] sm:$0xff]
    %v488 = vld [vmem:[#allocation3 + $0x58] sm:$0xff]
    %v489 = vld [vmem:[#allocation3 + $0x60] sm:$0xff]
    %v490 = vld [vmem:[#allocation3 + $0x68] sm:$0xff]
    %v491 = vld [vmem:[#allocation3 + $0x70] sm:$0xff]
    %v492 = vld [vmem:[#allocation3 + $0x78] sm:$0xff]
    %v493 = vld [vmem:[#allocation3 + $0x80] sm:$0xff]
    %v494 = vld [vmem:[#allocation3 + $0x88] sm:$0xff]
    %v499 = vunpack.c.l.b16 %v473
    %v500 = vunpack.c.h.b16 %v473
    %v501 = vunpack.c.l.b16 %v474
    %v502 = vunpack.c.l.b16 %v475
    %v503 = vunpack.c.h.b16 %v475
    %v504 = vunpack.c.l.b16 %v476
    %v505 = vpack.c.b16 %v502, %v499
    %v506 = vpack.c.b16 %v503, %v500
    %v507 = vpack.c.b16 %v504, %v501
    %vm510 = vcmask 261120
    %v512 = vsel %vm510, %v507, 0
    %514 = vmatprep.subr.bf16.mxu0 0
    %515 = vmatpush1.bf16.msra.mxu0 %v477
    %516 = vmatprep.subr.bf16.mxu0 0
    %517 = vmatpush1.bf16.msra.mxu0 %v478
    %518 = vmatprep.subr.bf16.mxu0 0
    %519 = vmatpush1.bf16.msra.mxu0 %v479
    %520 = vmatprep.subr.bf16.mxu0 0
    %521 = vmatpush1.bf16.msra.mxu0 %v480
    %522 = vmatprep.subr.bf16.mxu0 0
    %523 = vmatpush1.bf16.msra.mxu0 %v481
    %524 = vmatprep.subr.bf16.mxu0 0
    %525 = vmatpush1.bf16.msra.mxu0 %v482
    %526 = vmatprep.subr.bf16.mxu0 0
    %527 = vmatpush1.bf16.msra.mxu0 %v483
    %528 = vmatprep.subr.bf16.mxu0 0
    %529 = vmatpush1.bf16.msra.mxu0 %v484
    %530 = vmatprep.subr.bf16.mxu0 0
    %531 = vmatpush1.bf16.msra.mxu0 %v485
    %532 = vmatprep.subr.bf16.mxu0 0
    %533 = vmatpush1.bf16.msra.mxu0 %v486
    %534 = vmatprep.subr.bf16.mxu0 0
    %535 = vmatpush1.bf16.msra.mxu0 %v487
    %536 = vmatprep.subr.bf16.mxu0 0
    %537 = vmatpush1.bf16.msra.mxu0 %v488
    %538 = vmatprep.subr.bf16.mxu0 0
    %539 = vmatpush1.bf16.msra.mxu0 %v489
    %540 = vmatprep.subr.bf16.mxu0 0
    %541 = vmatpush1.bf16.msra.mxu0 %v490
    %542 = vmatprep.subr.bf16.mxu0 0
    %543 = vmatpush1.bf16.msra.mxu0 %v491
    %544 = vmatprep.subr.bf16.mxu0 0
    %545 = vmatpush1.bf16.msra.mxu0 %v492
    %546 = vmatprep.mubr.bf16.mxu0 %v506
    %547 = vmatmul.mubr.bf16.gmra.mrb[0].mxu0 %v505
    %v548 = vpop.f32.mrb[0].mxu0
    %v549 = vadd.f32 0.0, %v548
    %v550 = vpop.f32.mrb[0].mxu0
    %v551 = vpop.f32.mrb[0].mxu0
    %v552 = vadd.f32 0.0, %v551
    %v553 = vpop.f32.mrb[0].mxu0
    %554 = vdwg.mxu0
    %555 = vmatprep.subr.bf16.mxu0 0
    %556 = vmatpush1.bf16.msra.mxu0 %v493
    %557 = vmatprep.subr.bf16.mxu0 0
    %558 = vmatpush1.bf16.msra.mxu0 %v494
    %559 = vmatprep.subr.bf16.mxu0 0
    %560 = vmatpush1.bf16.msra.mxu0 0
    %561 = vmatprep.subr.bf16.mxu0 0
    %562 = vmatpush1.bf16.msra.mxu0 0
    %563 = vmatprep.subr.bf16.mxu0 0
    %564 = vmatpush1.bf16.msra.mxu0 0
    %565 = vmatprep.subr.bf16.mxu0 0
    %566 = vmatpush1.bf16.msra.mxu0 0
    %567 = vmatprep.subr.bf16.mxu0 0
    %568 = vmatpush1.bf16.msra.mxu0 0
    %569 = vmatprep.subr.bf16.mxu0 0
    %570 = vmatpush1.bf16.msra.mxu0 0
    %571 = vmatprep.subr.bf16.mxu0 0
    %572 = vmatpush1.bf16.msra.mxu0 0
    %573 = vmatprep.subr.bf16.mxu0 0
    %574 = vmatpush1.bf16.msra.mxu0 0
    %575 = vmatprep.subr.bf16.mxu0 0
    %576 = vmatpush1.bf16.msra.mxu0 0
    %577 = vmatprep.subr.bf16.mxu0 0
    %578 = vmatpush1.bf16.msra.mxu0 0
    %579 = vmatprep.subr.bf16.mxu0 0
    %580 = vmatpush1.bf16.msra.mxu0 0
    %581 = vmatprep.subr.bf16.mxu0 0
    %582 = vmatpush1.bf16.msra.mxu0 0
    %583 = vmatprep.subr.bf16.mxu0 0
    %584 = vmatpush1.bf16.msra.mxu0 0
    %585 = vmatprep.subr.bf16.mxu0 0
    %586 = vmatpush1.bf16.msra.mxu0 0
    %587 = vmatprep.mubr.bf16.mxu0 0
    %588 = vmatmul.mubr.bf16.gmra.mrb[0].mxu0 %v512
    %v589 = vpop.f32.mrb[0].mxu0
    %v590 = vadd.f32 %v549, %v589
    %v591 = vpop.f32.mrb[0].mxu0
    %v592 = vpop.f32.mrb[0].mxu0
    %v593 = vadd.f32 %v552, %v592
    %v594 = vpop.f32.mrb[0].mxu0
    %595 = vdwg.mxu0
    %v596 = vmul.f32 %v590, 0.5
    %v597 = vmul.f32 %v593, 0.5
    %v598 = vmul.f32 %v590, 0.044715
    %v599 = vmul.f32 %v593, 0.044715
    %v600 = vmul.f32 %v598, %v590
    %v601 = vmul.f32 %v599, %v593
    %v602 = vmul.f32 %v600, %v590
    %v603 = vmul.f32 %v601, %v593
    %v604 = vadd.f32 %v590, %v602
    %v605 = vadd.f32 %v593, %v603
    %v606 = vmul.f32 %v604, 0.7978846
    %v607 = vmul.f32 %v605, 0.7978846
    %v608 = vtanh.pop %v606
    %v609 = vtanh.pop %v607
    %v610 = vadd.f32 %v608, 1.0
    %v611 = vadd.f32 %v609, 1.0
    %v612 = vmul.f32 %v596, %v610
    %v613 = vmul.f32 %v597, %v611
    %614 = vst [vmem:[#allocation2] sm:$0xff] 0.0
    %615 = vst [vmem:[#allocation2 + $0x18] sm:$0xff] 0.0
    %616 = vst [vmem:[#allocation2 + $0x8] sm:$0xff] %v612
    %617 = vst [vmem:[#allocation2 + $0x20] sm:$0xff] %v613
    %618 = vst [vmem:[#allocation2 + $0x10] sm:$0xff] 0.0
    %619 = vst [vmem:[#allocation2 + $0x28] sm:$0xff] 0.0
    %v620 = vld [vmem:[#allocation2] sm:$0xff]
    %v621 = vld [vmem:[#allocation2 + $0x8] sm:$0xff]
    %v622 = vld [vmem:[#allocation2 + $0x18] sm:$0xff]
    %v623 = vld [vmem:[#allocation2 + $0x20] sm:$0xff]
    %v624 = vld [vmem:[#allocation4] sm:$0x1]
    %v626 = vlaneseq
    %v627 = vshrl.u32 %v626, 7
    %v628 = vsub.s32 0, %v627
    %v629 = vrot.slane %v624, %v628
    %630 = vrot.lane.b32.xlu0 %v629, 119
    %v631 = vpop.permute.xlu0 %630
    %v633 = vmul.f32 %v620, %v631
    %v634 = vmul.f32 %v621, %v631
    %v635 = vmul.f32 %v622, %v631
    %v636 = vmul.f32 %v623, %v631
    %v637 = vpack.c.bf16 %v635, %v633
    %v638 = vpack.c.bf16 %v636, %v634
    %641 = vrot.lane.b32.xlu0 %v637, 9
    %v642 = vpop.permute.xlu0 %641
    %643 = vrot.lane.b32.xlu0 %v638, 9
    %v644 = vpop.permute.xlu0 %643
    %v645 = vsel %vm103, %v642, %v644
    %647 = vst [vmem:[#allocation3] sm:$0xff] %v645
    %v648 = vld [vmem:[#allocation2] sm:$0xff]
    %v649 = vld [vmem:[#allocation2 + $0x8] sm:$0xff]
    %v650 = vld [vmem:[#allocation2 + $0x18] sm:$0xff]
    %v651 = vld [vmem:[#allocation2 + $0x20] sm:$0xff]
    %v652 = vld [vmem:[%s118] sm:$0x1]
    %v654 = vlaneseq
    %v655 = vshrl.u32 %v654, 7
    %v656 = vsub.s32 0, %v655
    %v657 = vrot.slane %v652, %v656
    %658 = vrot.lane.b32.xlu0 %v657, 120
    %v659 = vpop.permute.xlu0 %658
    %v661 = vmul.f32 %v648, %v659
    %v662 = vmul.f32 %v649, %v659
    %v663 = vmul.f32 %v650, %v659
    %v664 = vmul.f32 %v651, %v659
    %v665 = vpack.c.bf16 %v663, %v661
    %v666 = vpack.c.bf16 %v664, %v662
    %669 = vrot.lane.b32.xlu0 %v665, 8
    %v670 = vpop.permute.xlu0 %669
    %671 = vrot.lane.b32.xlu0 %v666, 8
    %v672 = vpop.permute.xlu0 %671
    %v673 = vsel %vm152, %v670, %v672
    %675 = vst [vmem:[#allocation3 + $0x8] sm:$0xff] %v673
    %v676 = vld [vmem:[#allocation2] sm:$0xff]
    %v677 = vld [vmem:[#allocation2 + $0x8] sm:$0xff]
    %v678 = vld [vmem:[#allocation2 + $0x18] sm:$0xff]
    %v679 = vld [vmem:[#allocation2 + $0x20] sm:$0xff]
    %v680 = vld [vmem:[%s167] sm:$0x1]
    %v682 = vlaneseq
    %v683 = vshrl.u32 %v682, 7
    %v684 = vsub.s32 0, %v683
    %v685 = vrot.slane %v680, %v684
    %686 = vrot.lane.b32.xlu0 %v685, 121
    %v687 = vpop.permute.xlu0 %686
    %v689 = vmul.f32 %v676, %v687
    %v690 = vmul.f32 %v677, %v687
    %v691 = vmul.f32 %v678, %v687
    %v692 = vmul.f32 %v679, %v687
    %v693 = vpack.c.bf16 %v691, %v689
    %v694 = vpack.c.bf16 %v692, %v690
    %697 = vrot.lane.b32.xlu0 %v693, 7
    %v698 = vpop.permute.xlu0 %697
    %699 = vrot.lane.b32.xlu0 %v694, 7
    %v700 = vpop.permute.xlu0 %699
    %v701 = vsel %vm201, %v698, %v700
    %703 = vst [vmem:[#allocation3 + $0x10] sm:$0xff] %v701
    %v704 = vld [vmem:[#allocation2] sm:$0xff]
    %v705 = vld [vmem:[#allocation2 + $0x8] sm:$0xff]
    %v706 = vld [vmem:[#allocation2 + $0x18] sm:$0xff]
    %v707 = vld [vmem:[#allocation2 + $0x20] sm:$0xff]
    %v708 = vld [vmem:[%s216] sm:$0x1]
    %v710 = vlaneseq
    %v711 = vshrl.u32 %v710, 7
    %v712 = vsub.s32 0, %v711
    %v713 = vrot.slane %v708, %v712
    %714 = vrot.lane.b32.xlu0 %v713, 127
    %v715 = vpop.permute.xlu0 %714
    %v717 = vmul.f32 %v704, %v715
    %v718 = vmul.f32 %v705, %v715
    %v719 = vmul.f32 %v706, %v715
    %v720 = vmul.f32 %v707, %v715
    %v721 = vpack.c.bf16 %v719, %v717
    %v722 = vpack.c.bf16 %v720, %v718
    %725 = vrot.lane.b32.xlu0 %v721, 1
    %v726 = vpop.permute.xlu0 %725
    %727 = vrot.lane.b32.xlu0 %v722, 1
    %v728 = vpop.permute.xlu0 %727
    %v729 = vsel %vm250, %v726, %v728
    %731 = vst [vmem:[#allocation3 + $0x18] sm:$0xff] %v729
    %v732 = vld [vmem:[#allocation2 + $0x8] sm:$0xff]
    %v733 = vld [vmem:[#allocation2 + $0x20] sm:$0xff]
    %v734 = vld [vmem:[%s261] sm:$0x1]
    %v736 = vlaneseq
    %v737 = vshrl.u32 %v736, 7
    %v738 = vsub.s32 0, %v737
    %v739 = vrot.slane %v734, %v738
    %v741 = vmul.f32 %v732, %v739
    %v742 = vmul.f32 %v733, %v739
    %v743 = vpack.c.bf16 %v742, %v741
    %744 = vst [vmem:[#allocation3 + $0x20] sm:$0xff] %v743
    %v745 = vld [vmem:[#allocation2 + $0x8] sm:$0xff]
    %v746 = vld [vmem:[#allocation2 + $0x10] sm:$0xff]
    %v747 = vld [vmem:[#allocation2 + $0x20] sm:$0xff]
    %v748 = vld [vmem:[#allocation2 + $0x28] sm:$0xff]
    %v749 = vld [vmem:[%s285] sm:$0x1]
    %v751 = vlaneseq
    %v752 = vshrl.u32 %v751, 7
    %v753 = vsub.s32 0, %v752
    %v754 = vrot.slane %v749, %v753
    %755 = vrot.lane.b32.xlu0 %v754, 1
    %v756 = vpop.permute.xlu0 %755
    %v758 = vmul.f32 %v745, %v756
    %v759 = vmul.f32 %v746, %v756
    %v760 = vmul.f32 %v747, %v756
    %v761 = vmul.f32 %v748, %v756
    %v762 = vpack.c.bf16 %v760, %v758
    %v763 = vpack.c.bf16 %v761, %v759
    %766 = vrot.lane.b32.xlu0 %v762, 127
    %v767 = vpop.permute.xlu0 %766
    %768 = vrot.lane.b32.xlu0 %v763, 127
    %v769 = vpop.permute.xlu0 %768
    %v770 = vsel %vm319, %v767, %v769
    %772 = vst [vmem:[#allocation3 + $0x28] sm:$0xff] %v770
    %v773 = vld [vmem:[#allocation2 + $0x8] sm:$0xff]
    %v774 = vld [vmem:[#allocation2 + $0x10] sm:$0xff]
    %v775 = vld [vmem:[#allocation2 + $0x20] sm:$0xff]
    %v776 = vld [vmem:[#allocation2 + $0x28] sm:$0xff]
    %v777 = vld [vmem:[%s334] sm:$0x1]
    %v779 = vlaneseq
    %v780 = vshrl.u32 %v779, 7
    %v781 = vsub.s32 0, %v780
    %v782 = vrot.slane %v777, %v781
    %783 = vrot.lane.b32.xlu0 %v782, 7
    %v784 = vpop.permute.xlu0 %783
    %v786 = vmul.f32 %v773, %v784
    %v787 = vmul.f32 %v774, %v784
    %v788 = vmul.f32 %v775, %v784
    %v789 = vmul.f32 %v776, %v784
    %v790 = vpack.c.bf16 %v788, %v786
    %v791 = vpack.c.bf16 %v789, %v787
    %794 = vrot.lane.b32.xlu0 %v790, 121
    %v795 = vpop.permute.xlu0 %794
    %796 = vrot.lane.b32.xlu0 %v791, 121
    %v797 = vpop.permute.xlu0 %796
    %v798 = vsel %vm368, %v795, %v797
    %800 = vst [vmem:[#allocation3 + $0x30] sm:$0xff] %v798
    %v801 = vld [vmem:[#allocation2 + $0x8] sm:$0xff]
    %v802 = vld [vmem:[#allocation2 + $0x10] sm:$0xff]
    %v803 = vld [vmem:[#allocation2 + $0x20] sm:$0xff]
    %v804 = vld [vmem:[#allocation2 + $0x28] sm:$0xff]
    %v805 = vld [vmem:[%s383] sm:$0x1]
    %v807 = vlaneseq
    %v808 = vshrl.u32 %v807, 7
    %v809 = vsub.s32 0, %v808
    %v810 = vrot.slane %v805, %v809
    %811 = vrot.lane.b32.xlu0 %v810, 8
    %v812 = vpop.permute.xlu0 %811
    %v814 = vmul.f32 %v801, %v812
    %v815 = vmul.f32 %v802, %v812
    %v816 = vmul.f32 %v803, %v812
    %v817 = vmul.f32 %v804, %v812
    %v818 = vpack.c.bf16 %v816, %v814
    %v819 = vpack.c.bf16 %v817, %v815
    %822 = vrot.lane.b32.xlu0 %v818, 120
    %v823 = vpop.permute.xlu0 %822
    %824 = vrot.lane.b32.xlu0 %v819, 120
    %v825 = vpop.permute.xlu0 %824
    %v826 = vsel %vm417, %v823, %v825
    %828 = vst [vmem:[#allocation3 + $0x38] sm:$0xff] %v826
    %v829 = vld [vmem:[#allocation2 + $0x8] sm:$0xff]
    %v830 = vld [vmem:[#allocation2 + $0x10] sm:$0xff]
    %v831 = vld [vmem:[#allocation2 + $0x20] sm:$0xff]
    %v832 = vld [vmem:[#allocation2 + $0x28] sm:$0xff]
    %v833 = vld [vmem:[%s432] sm:$0x1]
    %v835 = vlaneseq
    %v836 = vshrl.u32 %v835, 7
    %v837 = vsub.s32 0, %v836
    %v838 = vrot.slane %v833, %v837
    %839 = vrot.lane.b32.xlu0 %v838, 9
    %v840 = vpop.permute.xlu0 %839
    %v842 = vmul.f32 %v829, %v840
    %v843 = vmul.f32 %v830, %v840
    %v844 = vmul.f32 %v831, %v840
    %v845 = vmul.f32 %v832, %v840
    %v846 = vpack.c.bf16 %v844, %v842
    %v847 = vpack.c.bf16 %v845, %v843
    %850 = vrot.lane.b32.xlu0 %v846, 119
    %v851 = vpop.permute.xlu0 %850
    %852 = vrot.lane.b32.xlu0 %v847, 119
    %v853 = vpop.permute.xlu0 %852
    %v854 = vsel %vm466, %v851, %v853
    %856 = vst [vmem:[#allocation3 + $0x40] sm:$0xff] %v854
    %v857 = vld [vmem:[%s3] sm:$0xff]
    %v858 = vld [vmem:[%s3 + $0x8] sm:$0xff]
    %v859 = vld [vmem:[%s3 + $0x10] sm:$0xff]
    %v860 = vld [vmem:[%s3 + $0x18] sm:$0xff]
    %v861 = vld [vmem:[%s3 + $0x20] sm:$0xff]
    %v862 = vld [vmem:[%s3 + $0x28] sm:$0xff]
    %v863 = vld [vmem:[%s3 + $0x30] sm:$0xff]
    %v864 = vld [vmem:[%s3 + $0x38] sm:$0xff]
    %v865 = vld [vmem:[%s3 + $0x40] sm:$0xff]
    %v866 = vld [vmem:[%s3 + $0x48] sm:$0xff]
    %v867 = vld [vmem:[%s3 + $0x50] sm:$0xff]
    %v868 = vld [vmem:[%s3 + $0x58] sm:$0xff]
    %v869 = vld [vmem:[%s3 + $0x60] sm:$0xff]
    %v870 = vld [vmem:[%s3 + $0x68] sm:$0xff]
    %v871 = vld [vmem:[%s3 + $0x70] sm:$0xff]
    %v872 = vld [vmem:[%s3 + $0x78] sm:$0xff]
    %v873 = vld [vmem:[%s3 + $0x80] sm:$0xff]
    %v874 = vld [vmem:[%s3 + $0x88] sm:$0xff]
    %v875 = vld [vmem:[%s3 + $0x90] sm:$0xff]
    %v876 = vld [vmem:[%s3 + $0x98] sm:$0xff]
    %v877 = vld [vmem:[%s3 + $0xa0] sm:$0xff]
    %v878 = vld [vmem:[%s3 + $0xa8] sm:$0xff]
    %v879 = vld [vmem:[%s3 + $0xb0] sm:$0xff]
    %v880 = vld [vmem:[%s3 + $0xb8] sm:$0xff]
    %v881 = vld [vmem:[%s3 + $0xc0] sm:$0xff]
    %v882 = vld [vmem:[%s3 + $0xc8] sm:$0xff]
    %v883 = vld [vmem:[%s3 + $0xd0] sm:$0xff]
    %v884 = vld [vmem:[#allocation3] sm:$0xff]
    %v885 = vld [vmem:[#allocation3 + $0x8] sm:$0xff]
    %v886 = vld [vmem:[#allocation3 + $0x10] sm:$0xff]
    %v887 = vld [vmem:[#allocation3 + $0x18] sm:$0xff]
    %v888 = vld [vmem:[#allocation3 + $0x20] sm:$0xff]
    %v889 = vld [vmem:[#allocation3 + $0x28] sm:$0xff]
    %v890 = vld [vmem:[#allocation3 + $0x30] sm:$0xff]
    %v891 = vld [vmem:[#allocation3 + $0x38] sm:$0xff]
    %v892 = vld [vmem:[#allocation3 + $0x40] sm:$0xff]
    %v920 = vunpack.c.l.b16 %v857
    %v921 = vunpack.c.h.b16 %v857
    %v922 = vunpack.c.l.b16 %v858
    %v923 = vunpack.c.h.b16 %v858
    %v924 = vunpack.c.l.b16 %v859
    %v925 = vunpack.c.h.b16 %v859
    %v926 = vunpack.c.l.b16 %v860
    %v927 = vunpack.c.h.b16 %v860
    %v928 = vunpack.c.l.b16 %v861
    %v929 = vunpack.c.h.b16 %v861
    %v930 = vunpack.c.l.b16 %v862
    %v931 = vunpack.c.h.b16 %v862
    %v932 = vunpack.c.l.b16 %v863
    %v933 = vunpack.c.h.b16 %v863
    %v934 = vunpack.c.l.b16 %v864
    %v935 = vunpack.c.h.b16 %v864
    %v936 = vunpack.c.l.b16 %v865
    %v937 = vunpack.c.h.b16 %v865
    %v938 = vunpack.c.l.b16 %v866
    %v939 = vunpack.c.h.b16 %v866
    %v940 = vunpack.c.l.b16 %v867
    %v941 = vunpack.c.h.b16 %v867
    %v942 = vunpack.c.l.b16 %v868
    %v943 = vunpack.c.h.b16 %v868
    %v944 = vunpack.c.l.b16 %v869
    %v945 = vunpack.c.h.b16 %v869
    %v946 = vunpack.c.l.b16 %v870
    %v947 = vunpack.c.h.b16 %v870
    %v948 = vunpack.c.l.b16 %v871
    %v949 = vunpack.c.h.b16 %v871
    %v950 = vunpack.c.l.b16 %v872
    %v951 = vunpack.c.h.b16 %v872
    %v952 = vunpack.c.l.b16 %v873
    %v953 = vunpack.c.h.b16 %v873
    %v954 = vunpack.c.l.b16 %v874
    %v955 = vunpack.c.h.b16 %v874
    %v956 = vunpack.c.l.b16 %v875
    %v957 = vunpack.c.h.b16 %v875
    %v958 = vunpack.c.l.b16 %v876
    %v959 = vunpack.c.h.b16 %v876
    %v960 = vunpack.c.l.b16 %v877
    %v961 = vunpack.c.h.b16 %v877
    %v962 = vunpack.c.l.b16 %v878
    %v963 = vunpack.c.h.b16 %v878
    %v964 = vunpack.c.l.b16 %v879
    %v965 = vunpack.c.h.b16 %v879
    %v966 = vunpack.c.l.b16 %v880
    %v967 = vunpack.c.h.b16 %v880
    %v968 = vunpack.c.l.b16 %v881
    %v969 = vunpack.c.h.b16 %v881
    %v970 = vunpack.c.l.b16 %v882
    %v971 = vunpack.c.h.b16 %v882
    %v972 = vunpack.c.l.b16 %v883
    %v973 = vunpack.c.h.b16 %v883
    %v974 = vpack.c.b16 %v922, %v920
    %v975 = vpack.c.b16 %v923, %v921
    %v976 = vpack.c.b16 %v926, %v924
    %v977 = vpack.c.b16 %v927, %v925
    %v978 = vpack.c.b16 %v930, %v928
    %v979 = vpack.c.b16 %v931, %v929
    %v980 = vpack.c.b16 %v934, %v932
    %v981 = vpack.c.b16 %v935, %v933
    %v982 = vpack.c.b16 %v938, %v936
    %v983 = vpack.c.b16 %v939, %v937
    %v984 = vpack.c.b16 %v942, %v940
    %v985 = vpack.c.b16 %v943, %v941
    %v986 = vpack.c.b16 %v946, %v944
    %v987 = vpack.c.b16 %v947, %v945
    %v988 = vpack.c.b16 %v950, %v948
    %v989 = vpack.c.b16 %v951, %v949
    %v990 = vpack.c.b16 %v954, %v952
    %v991 = vpack.c.b16 %v955, %v953
    %v992 = vpack.c.b16 %v958, %v956
    %v993 = vpack.c.b16 %v959, %v957
    %v994 = vpack.c.b16 %v962, %v960
    %v995 = vpack.c.b16 %v963, %v961
    %v996 = vpack.c.b16 %v966, %v964
    %v997 = vpack.c.b16 %v967, %v965
    %v998 = vpack.c.b16 %v970, %v968
    %v999 = vpack.c.b16 %v971, %v969
    %v1000 = vpack.c.b16 %v972, %v972
    %v1001 = vpack.c.b16 %v973, %v973
    %vm1016 = vcmask 130048
    %v1018 = vsel %vm1016, %v975, 0
    %v1021 = vsel %vm1016, %v977, 0
    %v1024 = vsel %vm1016, %v979, 0
    %v1027 = vsel %vm1016, %v981, 0
    %v1030 = vsel %vm1016, %v983, 0
    %v1033 = vsel %vm1016, %v985, 0
    %v1036 = vsel %vm1016, %v987, 0
    %v1039 = vsel %vm1016, %v989, 0
    %v1042 = vsel %vm1016, %v991, 0
    %v1045 = vsel %vm1016, %v993, 0
    %v1048 = vsel %vm1016, %v995, 0
    %v1051 = vsel %vm1016, %v997, 0
    %v1054 = vsel %vm1016, %v999, 0
    %v1057 = vsel %vm1016, %v1001, 0
    %1059 = vmatprep.subr.bf16.mxu0 0
    %1060 = vmatpush1.bf16.msra.mxu0 %v884
    %1061 = vmatprep.subr.bf16.mxu0 0
    %1062 = vmatpush1.bf16.msra.mxu0 %v885
    %1063 = vmatprep.subr.bf16.mxu0 0
    %1064 = vmatpush1.bf16.msra.mxu0 %v886
    %1065 = vmatprep.subr.bf16.mxu0 0
    %1066 = vmatpush1.bf16.msra.mxu0 %v887
    %1067 = vmatprep.subr.bf16.mxu0 0
    %1068 = vmatpush1.bf16.msra.mxu0 %v888
    %1069 = vmatprep.subr.bf16.mxu0 0
    %1070 = vmatpush1.bf16.msra.mxu0 %v889
    %1071 = vmatprep.subr.bf16.mxu0 0
    %1072 = vmatpush1.bf16.msra.mxu0 %v890
    %1073 = vmatprep.subr.bf16.mxu0 0
    %1074 = vmatpush1.bf16.msra.mxu0 %v891
    %1075 = vmatprep.subr.bf16.mxu0 0
    %1076 = vmatpush1.bf16.msra.mxu0 %v892
    %1077 = vmatprep.subr.bf16.mxu0 0
    %1078 = vmatpush1.bf16.msra.mxu0 0
    %1079 = vmatprep.subr.bf16.mxu0 0
    %1080 = vmatpush1.bf16.msra.mxu0 0
    %1081 = vmatprep.subr.bf16.mxu0 0
    %1082 = vmatpush1.bf16.msra.mxu0 0
    %1083 = vmatprep.subr.bf16.mxu0 0
    %1084 = vmatpush1.bf16.msra.mxu0 0
    %1085 = vmatprep.subr.bf16.mxu0 0
    %1086 = vmatpush1.bf16.msra.mxu0 0
    %1087 = vmatprep.subr.bf16.mxu0 0
    %1088 = vmatpush1.bf16.msra.mxu0 0
    %1089 = vmatprep.subr.bf16.mxu0 0
    %1090 = vmatpush1.bf16.msra.mxu0 0
    %1091 = vmatprep.mubr.bf16.mxu0 %v1018
    %1092 = vmatmul.mubr.bf16.gmra.mrb[0].mxu0 %v974
    %v1093 = vpop.f32.mrb[0].mxu0
    %v1094 = vadd.f32 0.0, %v1093
    %v1095 = vpop.f32.mrb[0].mxu0
    %v1096 = vpop.f32.mrb[0].mxu0
    %v1097 = vadd.f32 0.0, %v1096
    %v1098 = vpop.f32.mrb[0].mxu0
    %1099 = vmatprep.mubr.bf16.mxu0 %v1021
    %1100 = vmatmul.mubr.bf16.gmra.mrb[0].mxu0 %v976
    %v1101 = vpop.f32.mrb[0].mxu0
    %v1102 = vadd.f32 0.0, %v1101
    %v1103 = vpop.f32.mrb[0].mxu0
    %v1104 = vpop.f32.mrb[0].mxu0
    %v1105 = vadd.f32 0.0, %v1104
    %v1106 = vpop.f32.mrb[0].mxu0
    %1107 = vmatprep.mubr.bf16.mxu0 %v1024
    %1108 = vmatmul.mubr.bf16.gmra.mrb[0].mxu0 %v978
    %v1109 = vpop.f32.mrb[0].mxu0
    %v1110 = vadd.f32 0.0, %v1109
    %v1111 = vpop.f32.mrb[0].mxu0
    %v1112 = vpop.f32.mrb[0].mxu0
    %v1113 = vadd.f32 0.0, %v1112
    %v1114 = vpop.f32.mrb[0].mxu0
    %1115 = vmatprep.mubr.bf16.mxu0 %v1027
    %1116 = vmatmul.mubr.bf16.gmra.mrb[0].mxu0 %v980
    %v1117 = vpop.f32.mrb[0].mxu0
    %v1118 = vadd.f32 0.0, %v1117
    %v1119 = vpop.f32.mrb[0].mxu0
    %v1120 = vpop.f32.mrb[0].mxu0
    %v1121 = vadd.f32 0.0, %v1120
    %v1122 = vpop.f32.mrb[0].mxu0
    %1123 = vmatprep.mubr.bf16.mxu0 %v1030
    %1124 = vmatmul.mubr.bf16.gmra.mrb[0].mxu0 %v982
    %v1125 = vpop.f32.mrb[0].mxu0
    %v1126 = vadd.f32 0.0, %v1125
    %v1127 = vpop.f32.mrb[0].mxu0
    %v1128 = vpop.f32.mrb[0].mxu0
    %v1129 = vadd.f32 0.0, %v1128
    %v1130 = vpop.f32.mrb[0].mxu0
    %1131 = vmatprep.mubr.bf16.mxu0 %v1033
    %1132 = vmatmul.mubr.bf16.gmra.mrb[0].mxu0 %v984
    %v1133 = vpop.f32.mrb[0].mxu0
    %v1134 = vadd.f32 0.0, %v1133
    %v1135 = vpop.f32.mrb[0].mxu0
    %v1136 = vpop.f32.mrb[0].mxu0
    %v1137 = vadd.f32 0.0, %v1136
    %v1138 = vpop.f32.mrb[0].mxu0
    %1139 = vmatprep.mubr.bf16.mxu0 %v1036
    %1140 = vmatmul.mubr.bf16.gmra.mrb[0].mxu0 %v986
    %v1141 = vpop.f32.mrb[0].mxu0
    %v1142 = vadd.f32 0.0, %v1141
    %v1143 = vpop.f32.mrb[0].mxu0
    %v1144 = vpop.f32.mrb[0].mxu0
    %v1145 = vadd.f32 0.0, %v1144
    %v1146 = vpop.f32.mrb[0].mxu0
    %1147 = vmatprep.mubr.bf16.mxu0 %v1039
    %1148 = vmatmul.mubr.bf16.gmra.mrb[0].mxu0 %v988
    %v1149 = vpop.f32.mrb[0].mxu0
    %v1150 = vadd.f32 0.0, %v1149
    %v1151 = vpop.f32.mrb[0].mxu0
    %v1152 = vpop.f32.mrb[0].mxu0
    %v1153 = vadd.f32 0.0, %v1152
    %v1154 = vpop.f32.mrb[0].mxu0
    %1155 = vmatprep.mubr.bf16.mxu0 %v1042
    %1156 = vmatmul.mubr.bf16.gmra.mrb[0].mxu0 %v990
    %v1157 = vpop.f32.mrb[0].mxu0
    %v1158 = vadd.f32 0.0, %v1157
    %v1159 = vpop.f32.mrb[0].mxu0
    %v1160 = vpop.f32.mrb[0].mxu0
    %v1161 = vadd.f32 0.0, %v1160
    %v1162 = vpop.f32.mrb[0].mxu0
    %1163 = vmatprep.mubr.bf16.mxu0 %v1045
    %1164 = vmatmul.mubr.bf16.gmra.mrb[0].mxu0 %v992
    %v1165 = vpop.f32.mrb[0].mxu0
    %v1166 = vadd.f32 0.0, %v1165
    %v1167 = vpop.f32.mrb[0].mxu0
    %v1168 = vpop.f32.mrb[0].mxu0
    %v1169 = vadd.f32 0.0, %v1168
    %v1170 = vpop.f32.mrb[0].mxu0
    %1171 = vmatprep.mubr.bf16.mxu0 %v1048
    %1172 = vmatmul.mubr.bf16.gmra.mrb[0].mxu0 %v994
    %v1173 = vpop.f32.mrb[0].mxu0
    %v1174 = vadd.f32 0.0, %v1173
    %v1175 = vpop.f32.mrb[0].mxu0
    %v1176 = vpop.f32.mrb[0].mxu0
    %v1177 = vadd.f32 0.0, %v1176
    %v1178 = vpop.f32.mrb[0].mxu0
    %1179 = vmatprep.mubr.bf16.mxu0 %v1051
    %1180 = vmatmul.mubr.bf16.gmra.mrb[0].mxu0 %v996
    %v1181 = vpop.f32.mrb[0].mxu0
    %v1182 = vadd.f32 0.0, %v1181
    %v1183 = vpop.f32.mrb[0].mxu0
    %v1184 = vpop.f32.mrb[0].mxu0
    %v1185 = vadd.f32 0.0, %v1184
    %v1186 = vpop.f32.mrb[0].mxu0
    %1187 = vmatprep.mubr.bf16.mxu0 %v1054
    %1188 = vmatmul.mubr.bf16.gmra.mrb[0].mxu0 %v998
    %v1189 = vpop.f32.mrb[0].mxu0
    %v1190 = vadd.f32 0.0, %v1189
    %v1191 = vpop.f32.mrb[0].mxu0
    %v1192 = vpop.f32.mrb[0].mxu0
    %v1193 = vadd.f32 0.0, %v1192
    %v1194 = vpop.f32.mrb[0].mxu0
    %1195 = vmatprep.mubr.bf16.mxu0 %v1057
    %1196 = vmatmul.mubr.bf16.gmra.mrb[0].mxu0 %v1000
    %v1197 = vpop.f32.mrb[0].mxu0
    %v1198 = vadd.f32 0.0, %v1197
    %v1199 = vpop.f32.mrb[0].mxu0
    %v1200 = vpop.f32.mrb[0].mxu0
    %v1201 = vpop.f32.mrb[0].mxu0
    %1202 = vdwg.mxu0
    %1203 = vst [vmem:[%s4] sm:$0xff] %v1094
    %1204 = vst [vmem:[%s4 + $0x8] sm:$0xff] %v1097
    %1205 = vst [vmem:[%s4 + $0x10] sm:$0xff] %v1102
    %1206 = vst [vmem:[%s4 + $0x18] sm:$0xff] %v1105
    %1207 = vst [vmem:[%s4 + $0x20] sm:$0xff] %v1110
    %1208 = vst [vmem:[%s4 + $0x28] sm:$0xff] %v1113
    %1209 = vst [vmem:[%s4 + $0x30] sm:$0xff] %v1118
    %1210 = vst [vmem:[%s4 + $0x38] sm:$0xff] %v1121
    %1211 = vst [vmem:[%s4 + $0x40] sm:$0xff] %v1126
    %1212 = vst [vmem:[%s4 + $0x48] sm:$0xff] %v1129
    %1213 = vst [vmem:[%s4 + $0x50] sm:$0xff] %v1134
    %1214 = vst [vmem:[%s4 + $0x58] sm:$0xff] %v1137
    %1215 = vst [vmem:[%s4 + $0x60] sm:$0xff] %v1142
    %1216 = vst [vmem:[%s4 + $0x68] sm:$0xff] %v1145
    %1217 = vst [vmem:[%s4 + $0x70] sm:$0xff] %v1150
    %1218 = vst [vmem:[%s4 + $0x78] sm:$0xff] %v1153
    %1219 = vst [vmem:[%s4 + $0x80] sm:$0xff] %v1158
    %1220 = vst [vmem:[%s4 + $0x88] sm:$0xff] %v1161
    %1221 = vst [vmem:[%s4 + $0x90] sm:$0xff] %v1166
    %1222 = vst [vmem:[%s4 + $0x98] sm:$0xff] %v1169
    %1223 = vst [vmem:[%s4 + $0xa0] sm:$0xff] %v1174
    %1224 = vst [vmem:[%s4 + $0xa8] sm:$0xff] %v1177
    %1225 = vst [vmem:[%s4 + $0xb0] sm:$0xff] %v1182
    %1226 = vst [vmem:[%s4 + $0xb8] sm:$0xff] %v1185
    %1227 = vst [vmem:[%s4 + $0xc0] sm:$0xff] %v1190
    %1228 = vst [vmem:[%s4 + $0xc8] sm:$0xff] %v1193
    %1229 = vst [vmem:[%s4 + $0xd0] sm:$0xff] %v1198
    // Predicated region
    $region26: #{far_moduls_forward.5} parent=1 // pred_check
      _
    $region27: #{far_moduls_forward.5} parent=1 // pred_check_branch
      %1231 = sbr.rel (0) target = $region29
    $region28: #{far_moduls_forward.5} parent=1 // pred_region
      _
    $region29: #{far_moduls_forward.5} parent=1 // pred_fallthru
      _
    // Predicated region
    $region30: #{far_moduls_forward.5} parent=1 // pred_check
      _
    $region31: #{far_moduls_forward.5} parent=1 // pred_check_branch
      %1233 = sbr.rel (0) target = $region33
    $region32: #{far_moduls_forward.5} parent=1 // pred_region
      _
    $region33: #{far_moduls_forward.5} parent=1 // pred_fallthru
      _
    %1234 = vsyncpa [#allocation5], 1
    %1235 = vsyncpa [#allocation7], 1

// kernel: far_moduls_forward.6
$region0: #{far_moduls_forward.6}
  #allocation0 [shape = 'u32[]', space=smem, size = 0x4, offset = 0x4, fixed_abs, tag = 'smem constant byte address 0x4 - core index']
  #allocation1 [shape = 'u32[144,128]{1,0:T(1,128)}', space=vmem, size = 0x12000, scoped, tag = 'internal scratch']
  %s0 = inlined_call_operand.vmem [shape: f32[144,128], index: 0, kind: input, shape index: {}]
  %s1 = inlined_call_operand.vmem [shape: bf16[16,144], index: 1, kind: input, shape index: {}]
  %s2 = inlined_call_operand.vmem [shape: f32[16,1], index: 2, kind: input, shape index: {}]
  %s3 = inlined_call_operand.vmem [shape: f32[16,128], index: 3, kind: output, shape index: {}]
  %s4 = sld [smem:[#allocation0]]
  $region22: #{far_moduls_forward.6} parent=0
    _
  %s6 = ssub.s32 1, %s4
  %s7 = scalar_select 0, %s6, %s4
  // Predicated region
  $region2: #{far_moduls_forward.6} parent=0 // pred_check
    _
  $region3: #{far_moduls_forward.6} parent=0 // pred_check_branch
    %9 = sbr.rel (0) target = $region5
  $region4: #{far_moduls_forward.6} parent=0 // pred_region
    _
  $region5: #{far_moduls_forward.6} parent=0 // pred_fallthru
    _
  // Predicated region
  $region6: #{far_moduls_forward.6} parent=0 // pred_check
    _
  $region7: #{far_moduls_forward.6} parent=0 // pred_check_branch
    %11 = sbr.rel (0) target = $region9
  $region8: #{far_moduls_forward.6} parent=0 // pred_region
    _
  $region9: #{far_moduls_forward.6} parent=0 // pred_fallthru
    _
  // Predicated region
  $region10: #{far_moduls_forward.6} parent=0 // pred_check
    _
  $region11: #{far_moduls_forward.6} parent=0 // pred_check_branch
    %13 = sbr.rel (0) target = $region13
  $region12: #{far_moduls_forward.6} parent=0 // pred_region
    _
  $region13: #{far_moduls_forward.6} parent=0 // pred_fallthru
    _
  %v15 = vld [vmem:[%s1] sm:$0xff]
  %v16 = vld [vmem:[%s1 + $0x8] sm:$0xff]
  %v17 = vld [vmem:[%s0] sm:$0xff]
  %v18 = vld [vmem:[%s0 + $0x8] sm:$0xff]
  %v19 = vld [vmem:[%s0 + $0x10] sm:$0xff]
  %v20 = vld [vmem:[%s0 + $0x18] sm:$0xff]
  %v21 = vld [vmem:[%s0 + $0x20] sm:$0xff]
  %v22 = vld [vmem:[%s0 + $0x28] sm:$0xff]
  %v23 = vld [vmem:[%s0 + $0x30] sm:$0xff]
  %v24 = vld [vmem:[%s0 + $0x38] sm:$0xff]
  %v25 = vld [vmem:[%s0 + $0x40] sm:$0xff]
  %v26 = vld [vmem:[%s0 + $0x48] sm:$0xff]
  %v27 = vld [vmem:[%s0 + $0x50] sm:$0xff]
  %v28 = vld [vmem:[%s0 + $0x58] sm:$0xff]
  %v29 = vld [vmem:[%s0 + $0x60] sm:$0xff]
  %v30 = vld [vmem:[%s0 + $0x68] sm:$0xff]
  %v31 = vld [vmem:[%s0 + $0x70] sm:$0xff]
  %v32 = vld [vmem:[%s0 + $0x78] sm:$0xff]
  %v33 = vld [vmem:[%s0 + $0x80] sm:$0xff]
  %v34 = vld [vmem:[%s0 + $0x88] sm:$0xff]
  %v35 = vpack.c.bf16 %v18, %v17
  %v36 = vpack.c.bf16 %v20, %v19
  %v37 = vpack.c.bf16 %v22, %v21
  %v38 = vpack.c.bf16 %v24, %v23
  %v39 = vpack.c.bf16 %v26, %v25
  %v40 = vpack.c.bf16 %v28, %v27
  %v41 = vpack.c.bf16 %v30, %v29
  %v42 = vpack.c.bf16 %v32, %v31
  %v43 = vpack.c.bf16 %v34, %v33
  %v44 = vld [vmem:[%s2] sm:$0xff]
  %v45 = vld [vmem:[%s2 + $0x8] sm:$0xff]
  %47 = vset.pattern.permute.xlu0 0
  %48 = vperm.xlu0 %47, %v44
  %v49 = vpop.permute.xlu0 %48
  %52 = vset.pattern.permute.xlu0 0
  %53 = vperm.xlu0 %52, %v45
  %v54 = vpop.permute.xlu0 %53
  %v58 = vunpack.c.l.b16 %v15
  %v59 = vunpack.c.h.b16 %v15
  %v60 = vunpack.c.l.b16 %v16
  %v61 = vunpack.c.h.b16 %v16
  %v62 = vpack.c.b16 %v60, %v58
  %v63 = vpack.c.b16 %v61, %v59
  %vm65 = vcmask 130048
  %v67 = vsel %vm65, %v63, 0
  %69 = vmatprep.subr.bf16.mxu0 0
  %70 = vmatpush1.bf16.msra.mxu0 %v35
  %71 = vmatprep.subr.bf16.mxu0 0
  %72 = vmatpush1.bf16.msra.mxu0 %v36
  %73 = vmatprep.subr.bf16.mxu0 0
  %74 = vmatpush1.bf16.msra.mxu0 %v37
  %75 = vmatprep.subr.bf16.mxu0 0
  %76 = vmatpush1.bf16.msra.mxu0 %v38
  %77 = vmatprep.subr.bf16.mxu0 0
  %78 = vmatpush1.bf16.msra.mxu0 %v39
  %79 = vmatprep.subr.bf16.mxu0 0
  %80 = vmatpush1.bf16.msra.mxu0 %v40
  %81 = vmatprep.subr.bf16.mxu0 0
  %82 = vmatpush1.bf16.msra.mxu0 %v41
  %83 = vmatprep.subr.bf16.mxu0 0
  %84 = vmatpush1.bf16.msra.mxu0 %v42
  %85 = vmatprep.subr.bf16.mxu0 0
  %86 = vmatpush1.bf16.msra.mxu0 %v43
  %87 = vmatprep.subr.bf16.mxu0 0
  %88 = vmatpush1.bf16.msra.mxu0 0
  %89 = vmatprep.subr.bf16.mxu0 0
  %90 = vmatpush1.bf16.msra.mxu0 0
  %91 = vmatprep.subr.bf16.mxu0 0
  %92 = vmatpush1.bf16.msra.mxu0 0
  %93 = vmatprep.subr.bf16.mxu0 0
  %94 = vmatpush1.bf16.msra.mxu0 0
  %95 = vmatprep.subr.bf16.mxu0 0
  %96 = vmatpush1.bf16.msra.mxu0 0
  %97 = vmatprep.subr.bf16.mxu0 0
  %98 = vmatpush1.bf16.msra.mxu0 0
  %99 = vmatprep.subr.bf16.mxu0 0
  %100 = vmatpush1.bf16.msra.mxu0 0
  %101 = vmatprep.mubr.bf16.mxu0 %v67
  %102 = vmatmul.mubr.bf16.gmra.mrb[0].mxu0 %v62
  %v103 = vpop.f32.mrb[0].mxu0
  %v104 = vadd.f32 %v49, %v103
  %v105 = vpop.f32.mrb[0].mxu0
  %v106 = vpop.f32.mrb[0].mxu0
  %v107 = vadd.f32 %v54, %v106
  %v108 = vpop.f32.mrb[0].mxu0
  %109 = vdwg.mxu0
  %110 = vst [vmem:[%s3] sm:$0xff] %v104
  %111 = vst [vmem:[%s3 + $0x8] sm:$0xff] %v107
  // Predicated region
  $region14: #{far_moduls_forward.6} parent=0 // pred_check
    _
  $region15: #{far_moduls_forward.6} parent=0 // pred_check_branch
    %113 = sbr.rel (0) target = $region17
  $region16: #{far_moduls_forward.6} parent=0 // pred_region
    _
  $region17: #{far_moduls_forward.6} parent=0 // pred_fallthru
    _
  // Predicated region
  $region18: #{far_moduls_forward.6} parent=0 // pred_check
    _
  $region19: #{far_moduls_forward.6} parent=0 // pred_check_branch
    %115 = sbr.rel (0) target = $region21
  $region20: #{far_moduls_forward.6} parent=0 // pred_region
    _
  $region21: #{far_moduls_forward.6} parent=0 // pred_fallthru
    _

// kernel: far_moduls_forward.9
$region0: #{far_moduls_forward.9}
  #allocation0 [shape = 'u32[]', space=smem, size = 0x4, offset = 0x4, fixed_abs, tag = 'smem constant byte address 0x4 - core index']
  #allocation1 [shape = 'u32[144,128]{1,0:T(1,128)}', space=vmem, size = 0x12000, scoped, tag = 'internal scratch']
  #allocation2 [shape = 'f32[32,384]{1,0:T(8,128)}', space=vmem, size = 0xc000, scoped, tag = 'scratch operand']
  #allocation3 [shape = 'bf16[288,128]{1,0:T(16,128)(2,1)}', space=vmem, size = 0x12000, scoped, tag = 'scratch operand']
  %s0 = inlined_call_operand.vmem [shape: f32[32,128], index: 0, kind: input, shape index: {}]
  %s1 = inlined_call_operand.vmem [shape: f32[9,1,128], index: 1, kind: input, shape index: {}]
  %s2 = inlined_call_operand.vmem [shape: bf16[16,288], index: 2, kind: input, shape index: {}]
  %s3 = inlined_call_operand.vmem [shape: f32[16,1], index: 3, kind: input, shape index: {}]
  %s4 = inlined_call_operand.vmem [shape: bf16[32,144], index: 4, kind: input, shape index: {}]
  %s5 = inlined_call_operand.vmem [shape: f32[32,1], index: 5, kind: input, shape index: {}]
  %s6 = inlined_call_operand.vmem [shape: bf16[16,288], index: 6, kind: input, shape index: {}]
  %s7 = inlined_call_operand.vmem [shape: f32[16,1], index: 7, kind: input, shape index: {}]
  %s8 = inlined_call_operand.vmem [shape: f32[16,128], index: 8, kind: output, shape index: {}]
  %s9 = sld [smem:[#allocation0]]
  $region42: #{far_moduls_forward.9} parent=0
    _
  %s11 = ssub.s32 1, %s9
  %s12 = scalar_select 0, %s11, %s9
  // Predicated region
  $region2: #{far_moduls_forward.9} parent=0 // pred_check
    _
  $region3: #{far_moduls_forward.9} parent=0 // pred_check_branch
    %14 = sbr.rel (0) target = $region5
  $region4: #{far_moduls_forward.9} parent=0 // pred_region
    _
  $region5: #{far_moduls_forward.9} parent=0 // pred_fallthru
    _
  // Predicated region
  $region6: #{far_moduls_forward.9} parent=0 // pred_check
    _
  $region7: #{far_moduls_forward.9} parent=0 // pred_check_branch
    %16 = sbr.rel (0) target = $region9
  $region8: #{far_moduls_forward.9} parent=0 // pred_region
    _
  $region9: #{far_moduls_forward.9} parent=0 // pred_fallthru
    _
  // Predicated region
  $region10: #{far_moduls_forward.9} parent=0 // pred_check
    _
  $region11: #{far_moduls_forward.9} parent=0 // pred_check_branch
    %18 = sbr.rel (0) target = $region13
  $region12: #{far_moduls_forward.9} parent=0 // pred_region
    _
  $region13: #{far_moduls_forward.9} parent=0 // pred_fallthru
    _
  // Predicated region
  $region14: #{far_moduls_forward.9} parent=0 // pred_check
    _
  $region15: #{far_moduls_forward.9} parent=0 // pred_check_branch
    %20 = sbr.rel (0) target = $region17
  $region16: #{far_moduls_forward.9} parent=0 // pred_region
    _
  $region17: #{far_moduls_forward.9} parent=0 // pred_fallthru
    _
  // Predicated region
  $region18: #{far_moduls_forward.9} parent=0 // pred_check
    _
  $region19: #{far_moduls_forward.9} parent=0 // pred_check_branch
    %22 = sbr.rel (0) target = $region21
  $region20: #{far_moduls_forward.9} parent=0 // pred_region
    _
  $region21: #{far_moduls_forward.9} parent=0 // pred_fallthru
    _
  // Predicated region
  $region22: #{far_moduls_forward.9} parent=0 // pred_check
    _
  $region23: #{far_moduls_forward.9} parent=0 // pred_check_branch
    %24 = sbr.rel (0) target = $region25
  $region24: #{far_moduls_forward.9} parent=0 // pred_region
    _
  $region25: #{far_moduls_forward.9} parent=0 // pred_fallthru
    _
  // Predicated region
  $region26: #{far_moduls_forward.9} parent=0 // pred_check
    _
  $region27: #{far_moduls_forward.9} parent=0 // pred_check_branch
    %26 = sbr.rel (0) target = $region29
  $region28: #{far_moduls_forward.9} parent=0 // pred_region
    _
  $region29: #{far_moduls_forward.9} parent=0 // pred_fallthru
    _
  // Predicated region
  $region30: #{far_moduls_forward.9} parent=0 // pred_check
    _
  $region31: #{far_moduls_forward.9} parent=0 // pred_check_branch
    %28 = sbr.rel (0) target = $region33
  $region32: #{far_moduls_forward.9} parent=0 // pred_region
    _
  $region33: #{far_moduls_forward.9} parent=0 // pred_fallthru
    _
  %v30 = vld [vmem:[%s0] sm:$0xff]
  %v31 = vld [vmem:[%s0 + $0x8] sm:$0xff]
  %v32 = vld [vmem:[%s0 + $0x10] sm:$0xff]
  %v33 = vld [vmem:[%s0 + $0x18] sm:$0xff]
  %34 = vst [vmem:[#allocation2] sm:$0xff] 0.0
  %35 = vst [vmem:[#allocation2 + $0x18] sm:$0xff] 0.0
  %36 = vst [vmem:[#allocation2 + $0x30] sm:$0xff] 0.0
  %37 = vst [vmem:[#allocation2 + $0x48] sm:$0xff] 0.0
  %38 = vst [vmem:[#allocation2 + $0x8] sm:$0xff] %v30
  %39 = vst [vmem:[#allocation2 + $0x20] sm:$0xff] %v31
  %40 = vst [vmem:[#allocation2 + $0x38] sm:$0xff] %v32
  %41 = vst [vmem:[#allocation2 + $0x50] sm:$0xff] %v33
  %42 = vst [vmem:[#allocation2 + $0x10] sm:$0xff] 0.0
  %43 = vst [vmem:[#allocation2 + $0x28] sm:$0xff] 0.0
  %44 = vst [vmem:[#allocation2 + $0x40] sm:$0xff] 0.0
  %45 = vst [vmem:[#allocation2 + $0x58] sm:$0xff] 0.0
  %v46 = vld [vmem:[#allocation2] sm:$0xff]
  %v47 = vld [vmem:[#allocation2 + $0x8] sm:$0xff]
  %v48 = vld [vmem:[#allocation2 + $0x18] sm:$0xff]
  %v49 = vld [vmem:[#allocation2 + $0x20] sm:$0xff]
  %v50 = vld [vmem:[#allocation2 + $0x30] sm:$0xff]
  %v51 = vld [vmem:[#allocation2 + $0x38] sm:$0xff]
  %v52 = vld [vmem:[#allocation2 + $0x48] sm:$0xff]
  %v53 = vld [vmem:[#allocation2 + $0x50] sm:$0xff]
  %v54 = vld [vmem:[%s1] sm:$0x1]
  %v56 = vlaneseq
  %v57 = vshrl.u32 %v56, 7
  %v58 = vsub.s32 0, %v57
  %v59 = vrot.slane %v54, %v58
  %60 = vrot.lane.b32.xlu0 %v59, 119
  %v61 = vpop.permute.xlu0 %60
  %v63 = vmul.f32 %v46, %v61
  %v64 = vmul.f32 %v47, %v61
  %v65 = vmul.f32 %v48, %v61
  %v66 = vmul.f32 %v49, %v61
  %v67 = vmul.f32 %v50, %v61
  %v68 = vmul.f32 %v51, %v61
  %v69 = vmul.f32 %v52, %v61
  %v70 = vmul.f32 %v53, %v61
  %v71 = vpack.c.bf16 %v65, %v63
  %v72 = vpack.c.bf16 %v66, %v64
  %v73 = vpack.c.bf16 %v69, %v67
  %v74 = vpack.c.bf16 %v70, %v68
  %79 = vrot.lane.b32.xlu0 %v71, 9
  %v80 = vpop.permute.xlu0 %79
  %81 = vrot.lane.b32.xlu0 %v72, 9
  %v82 = vpop.permute.xlu0 %81
  %83 = vrot.lane.b32.xlu0 %v73, 9
  %v84 = vpop.permute.xlu0 %83
  %85 = vrot.lane.b32.xlu0 %v74, 9
  %v86 = vpop.permute.xlu0 %85
  %vm87 = vcmask 72704
  %v88 = vsel %vm87, %v80, %v82
  %v89 = vsel %vm87, %v84, %v86
  %92 = vst [vmem:[#allocation3] sm:$0xff] %v88
  %93 = vst [vmem:[#allocation3 + $0x8] sm:$0xff] %v89
  %v94 = vld [vmem:[#allocation2] sm:$0xff]
  %v95 = vld [vmem:[#allocation2 + $0x8] sm:$0xff]
  %v96 = vld [vmem:[#allocation2 + $0x18] sm:$0xff]
  %v97 = vld [vmem:[#allocation2 + $0x20] sm:$0xff]
  %v98 = vld [vmem:[#allocation2 + $0x30] sm:$0xff]
  %v99 = vld [vmem:[#allocation2 + $0x38] sm:$0xff]
  %v100 = vld [vmem:[#allocation2 + $0x48] sm:$0xff]
  %v101 = vld [vmem:[#allocation2 + $0x50] sm:$0xff]
  %s102 = scalar_lea.vmem %s1, 1
  %v103 = vld [vmem:[%s102] sm:$0x1]
  %v105 = vlaneseq
  %v106 = vshrl.u32 %v105, 7
  %v107 = vsub.s32 0, %v106
  %v108 = vrot.slane %v103, %v107
  %109 = vrot.lane.b32.xlu0 %v108, 120
  %v110 = vpop.permute.xlu0 %109
  %v112 = vmul.f32 %v94, %v110
  %v113 = vmul.f32 %v95, %v110
  %v114 = vmul.f32 %v96, %v110
  %v115 = vmul.f32 %v97, %v110
  %v116 = vmul.f32 %v98, %v110
  %v117 = vmul.f32 %v99, %v110
  %v118 = vmul.f32 %v100, %v110
  %v119 = vmul.f32 %v101, %v110
  %v120 = vpack.c.bf16 %v114, %v112
  %v121 = vpack.c.bf16 %v115, %v113
  %v122 = vpack.c.bf16 %v118, %v116
  %v123 = vpack.c.bf16 %v119, %v117
  %128 = vrot.lane.b32.xlu0 %v120, 8
  %v129 = vpop.permute.xlu0 %128
  %130 = vrot.lane.b32.xlu0 %v121, 8
  %v131 = vpop.permute.xlu0 %130
  %132 = vrot.lane.b32.xlu0 %v122, 8
  %v133 = vpop.permute.xlu0 %132
  %134 = vrot.lane.b32.xlu0 %v123, 8
  %v135 = vpop.permute.xlu0 %134
  %vm136 = vcmask 64512
  %v137 = vsel %vm136, %v129, %v131
  %v138 = vsel %vm136, %v133, %v135
  %141 = vst [vmem:[#allocation3 + $0x10] sm:$0xff] %v137
  %142 = vst [vmem:[#allocation3 + $0x18] sm:$0xff] %v138
  %v143 = vld [vmem:[#allocation2] sm:$0xff]
  %v144 = vld [vmem:[#allocation2 + $0x8] sm:$0xff]
  %v145 = vld [vmem:[#allocation2 + $0x18] sm:$0xff]
  %v146 = vld [vmem:[#allocation2 + $0x20] sm:$0xff]
  %v147 = vld [vmem:[#allocation2 + $0x30] sm:$0xff]
  %v148 = vld [vmem:[#allocation2 + $0x38] sm:$0xff]
  %v149 = vld [vmem:[#allocation2 + $0x48] sm:$0xff]
  %v150 = vld [vmem:[#allocation2 + $0x50] sm:$0xff]
  %s151 = scalar_lea.vmem %s1, 2
  %v152 = vld [vmem:[%s151] sm:$0x1]
  %v154 = vlaneseq
  %v155 = vshrl.u32 %v154, 7
  %v156 = vsub.s32 0, %v155
  %v157 = vrot.slane %v152, %v156
  %158 = vrot.lane.b32.xlu0 %v157, 121
  %v159 = vpop.permute.xlu0 %158
  %v161 = vmul.f32 %v143, %v159
  %v162 = vmul.f32 %v144, %v159
  %v163 = vmul.f32 %v145, %v159
  %v164 = vmul.f32 %v146, %v159
  %v165 = vmul.f32 %v147, %v159
  %v166 = vmul.f32 %v148, %v159
  %v167 = vmul.f32 %v149, %v159
  %v168 = vmul.f32 %v150, %v159
  %v169 = vpack.c.bf16 %v163, %v161
  %v170 = vpack.c.bf16 %v164, %v162
  %v171 = vpack.c.bf16 %v167, %v165
  %v172 = vpack.c.bf16 %v168, %v166
  %177 = vrot.lane.b32.xlu0 %v169, 7
  %v178 = vpop.permute.xlu0 %177
  %179 = vrot.lane.b32.xlu0 %v170, 7
  %v180 = vpop.permute.xlu0 %179
  %181 = vrot.lane.b32.xlu0 %v171, 7
  %v182 = vpop.permute.xlu0 %181
  %183 = vrot.lane.b32.xlu0 %v172, 7
  %v184 = vpop.permute.xlu0 %183
  %vm185 = vcmask 56320
  %v186 = vsel %vm185, %v178, %v180
  %v187 = vsel %vm185, %v182, %v184
  %190 = vst [vmem:[#allocation3 + $0x20] sm:$0xff] %v186
  %191 = vst [vmem:[#allocation3 + $0x28] sm:$0xff] %v187
  %v192 = vld [vmem:[#allocation2] sm:$0xff]
  %v193 = vld [vmem:[#allocation2 + $0x8] sm:$0xff]
  %v194 = vld [vmem:[#allocation2 + $0x18] sm:$0xff]
  %v195 = vld [vmem:[#allocation2 + $0x20] sm:$0xff]
  %v196 = vld [vmem:[#allocation2 + $0x30] sm:$0xff]
  %v197 = vld [vmem:[#allocation2 + $0x38] sm:$0xff]
  %v198 = vld [vmem:[#allocation2 + $0x48] sm:$0xff]
  %v199 = vld [vmem:[#allocation2 + $0x50] sm:$0xff]
  %s200 = scalar_lea.vmem %s1, 3
  %v201 = vld [vmem:[%s200] sm:$0x1]
  %v203 = vlaneseq
  %v204 = vshrl.u32 %v203, 7
  %v205 = vsub.s32 0, %v204
  %v206 = vrot.slane %v201, %v205
  %207 = vrot.lane.b32.xlu0 %v206, 127
  %v208 = vpop.permute.xlu0 %207
  %v210 = vmul.f32 %v192, %v208
  %v211 = vmul.f32 %v193, %v208
  %v212 = vmul.f32 %v194, %v208
  %v213 = vmul.f32 %v195, %v208
  %v214 = vmul.f32 %v196, %v208
  %v215 = vmul.f32 %v197, %v208
  %v216 = vmul.f32 %v198, %v208
  %v217 = vmul.f32 %v199, %v208
  %v218 = vpack.c.bf16 %v212, %v210
  %v219 = vpack.c.bf16 %v213, %v211
  %v220 = vpack.c.bf16 %v216, %v214
  %v221 = vpack.c.bf16 %v217, %v215
  %226 = vrot.lane.b32.xlu0 %v218, 1
  %v227 = vpop.permute.xlu0 %226
  %228 = vrot.lane.b32.xlu0 %v219, 1
  %v229 = vpop.permute.xlu0 %228
  %230 = vrot.lane.b32.xlu0 %v220, 1
  %v231 = vpop.permute.xlu0 %230
  %232 = vrot.lane.b32.xlu0 %v221, 1
  %v233 = vpop.permute.xlu0 %232
  %vm234 = vcmask 7168
  %v235 = vsel %vm234, %v227, %v229
  %v236 = vsel %vm234, %v231, %v233
  %239 = vst [vmem:[#allocation3 + $0x30] sm:$0xff] %v235
  %240 = vst [vmem:[#allocation3 + $0x38] sm:$0xff] %v236
  %v241 = vld [vmem:[#allocation2 + $0x8] sm:$0xff]
  %v242 = vld [vmem:[#allocation2 + $0x20] sm:$0xff]
  %v243 = vld [vmem:[#allocation2 + $0x38] sm:$0xff]
  %v244 = vld [vmem:[#allocation2 + $0x50] sm:$0xff]
  %s245 = scalar_lea.vmem %s1, 4
  %v246 = vld [vmem:[%s245] sm:$0x1]
  %v248 = vlaneseq
  %v249 = vshrl.u32 %v248, 7
  %v250 = vsub.s32 0, %v249
  %v251 = vrot.slane %v246, %v250
  %v253 = vmul.f32 %v241, %v251
  %v254 = vmul.f32 %v242, %v251
  %v255 = vmul.f32 %v243, %v251
  %v256 = vmul.f32 %v244, %v251
  %v257 = vpack.c.bf16 %v254, %v253
  %v258 = vpack.c.bf16 %v256, %v255
  %259 = vst [vmem:[#allocation3 + $0x40] sm:$0xff] %v257
  %260 = vst [vmem:[#allocation3 + $0x48] sm:$0xff] %v258
  %v261 = vld [vmem:[#allocation2 + $0x8] sm:$0xff]
  %v262 = vld [vmem:[#allocation2 + $0x10] sm:$0xff]
  %v263 = vld [vmem:[#allocation2 + $0x20] sm:$0xff]
  %v264 = vld [vmem:[#allocation2 + $0x28] sm:$0xff]
  %v265 = vld [vmem:[#allocation2 + $0x38] sm:$0xff]
  %v266 = vld [vmem:[#allocation2 + $0x40] sm:$0xff]
  %v267 = vld [vmem:[#allocation2 + $0x50] sm:$0xff]
  %v268 = vld [vmem:[#allocation2 + $0x58] sm:$0xff]
  %s269 = scalar_lea.vmem %s1, 5
  %v270 = vld [vmem:[%s269] sm:$0x1]
  %v272 = vlaneseq
  %v273 = vshrl.u32 %v272, 7
  %v274 = vsub.s32 0, %v273
  %v275 = vrot.slane %v270, %v274
  %276 = vrot.lane.b32.xlu0 %v275, 1
  %v277 = vpop.permute.xlu0 %276
  %v279 = vmul.f32 %v261, %v277
  %v280 = vmul.f32 %v262, %v277
  %v281 = vmul.f32 %v263, %v277
  %v282 = vmul.f32 %v264, %v277
  %v283 = vmul.f32 %v265, %v277
  %v284 = vmul.f32 %v266, %v277
  %v285 = vmul.f32 %v267, %v277
  %v286 = vmul.f32 %v268, %v277
  %v287 = vpack.c.bf16 %v281, %v279
  %v288 = vpack.c.bf16 %v282, %v280
  %v289 = vpack.c.bf16 %v285, %v283
  %v290 = vpack.c.bf16 %v286, %v284
  %295 = vrot.lane.b32.xlu0 %v287, 127
  %v296 = vpop.permute.xlu0 %295
  %297 = vrot.lane.b32.xlu0 %v288, 127
  %v298 = vpop.permute.xlu0 %297
  %299 = vrot.lane.b32.xlu0 %v289, 127
  %v300 = vpop.permute.xlu0 %299
  %301 = vrot.lane.b32.xlu0 %v290, 127
  %v302 = vpop.permute.xlu0 %301
  %vm303 = vcmask 1039360
  %v304 = vsel %vm303, %v296, %v298
  %v305 = vsel %vm303, %v300, %v302
  %308 = vst [vmem:[#allocation3 + $0x50] sm:$0xff] %v304
  %309 = vst [vmem:[#allocation3 + $0x58] sm:$0xff] %v305
  %v310 = vld [vmem:[#allocation2 + $0x8] sm:$0xff]
  %v311 = vld [vmem:[#allocation2 + $0x10] sm:$0xff]
  %v312 = vld [vmem:[#allocation2 + $0x20] sm:$0xff]
  %v313 = vld [vmem:[#allocation2 + $0x28] sm:$0xff]
  %v314 = vld [vmem:[#allocation2 + $0x38] sm:$0xff]
  %v315 = vld [vmem:[#allocation2 + $0x40] sm:$0xff]
  %v316 = vld [vmem:[#allocation2 + $0x50] sm:$0xff]
  %v317 = vld [vmem:[#allocation2 + $0x58] sm:$0xff]
  %s318 = scalar_lea.vmem %s1, 6
  %v319 = vld [vmem:[%s318] sm:$0x1]
  %v321 = vlaneseq
  %v322 = vshrl.u32 %v321, 7
  %v323 = vsub.s32 0, %v322
  %v324 = vrot.slane %v319, %v323
  %325 = vrot.lane.b32.xlu0 %v324, 7
  %v326 = vpop.permute.xlu0 %325
  %v328 = vmul.f32 %v310, %v326
  %v329 = vmul.f32 %v311, %v326
  %v330 = vmul.f32 %v312, %v326
  %v331 = vmul.f32 %v313, %v326
  %v332 = vmul.f32 %v314, %v326
  %v333 = vmul.f32 %v315, %v326
  %v334 = vmul.f32 %v316, %v326
  %v335 = vmul.f32 %v317, %v326
  %v336 = vpack.c.bf16 %v330, %v328
  %v337 = vpack.c.bf16 %v331, %v329
  %v338 = vpack.c.bf16 %v334, %v332
  %v339 = vpack.c.bf16 %v335, %v333
  %344 = vrot.lane.b32.xlu0 %v336, 121
  %v345 = vpop.permute.xlu0 %344
  %346 = vrot.lane.b32.xlu0 %v337, 121
  %v347 = vpop.permute.xlu0 %346
  %348 = vrot.lane.b32.xlu0 %v338, 121
  %v349 = vpop.permute.xlu0 %348
  %350 = vrot.lane.b32.xlu0 %v339, 121
  %v351 = vpop.permute.xlu0 %350
  %vm352 = vcmask 990208
  %v353 = vsel %vm352, %v345, %v347
  %v354 = vsel %vm352, %v349, %v351
  %357 = vst [vmem:[#allocation3 + $0x60] sm:$0xff] %v353
  %358 = vst [vmem:[#allocation3 + $0x68] sm:$0xff] %v354
  %v359 = vld [vmem:[#allocation2 + $0x8] sm:$0xff]
  %v360 = vld [vmem:[#allocation2 + $0x10] sm:$0xff]
  %v361 = vld [vmem:[#allocation2 + $0x20] sm:$0xff]
  %v362 = vld [vmem:[#allocation2 + $0x28] sm:$0xff]
  %v363 = vld [vmem:[#allocation2 + $0x38] sm:$0xff]
  %v364 = vld [vmem:[#allocation2 + $0x40] sm:$0xff]
  %v365 = vld [vmem:[#allocation2 + $0x50] sm:$0xff]
  %v366 = vld [vmem:[#allocation2 + $0x58] sm:$0xff]
  %s367 = scalar_lea.vmem %s1, 7
  %v368 = vld [vmem:[%s367] sm:$0x1]
  %v370 = vlaneseq
  %v371 = vshrl.u32 %v370, 7
  %v372 = vsub.s32 0, %v371
  %v373 = vrot.slane %v368, %v372
  %374 = vrot.lane.b32.xlu0 %v373, 8
  %v375 = vpop.permute.xlu0 %374
  %v377 = vmul.f32 %v359, %v375
  %v378 = vmul.f32 %v360, %v375
  %v379 = vmul.f32 %v361, %v375
  %v380 = vmul.f32 %v362, %v375
  %v381 = vmul.f32 %v363, %v375
  %v382 = vmul.f32 %v364, %v375
  %v383 = vmul.f32 %v365, %v375
  %v384 = vmul.f32 %v366, %v375
  %v385 = vpack.c.bf16 %v379, %v377
  %v386 = vpack.c.bf16 %v380, %v378
  %v387 = vpack.c.bf16 %v383, %v381
  %v388 = vpack.c.bf16 %v384, %v382
  %393 = vrot.lane.b32.xlu0 %v385, 120
  %v394 = vpop.permute.xlu0 %393
  %395 = vrot.lane.b32.xlu0 %v386, 120
  %v396 = vpop.permute.xlu0 %395
  %397 = vrot.lane.b32.xlu0 %v387, 120
  %v398 = vpop.permute.xlu0 %397
  %399 = vrot.lane.b32.xlu0 %v388, 120
  %v400 = vpop.permute.xlu0 %399
  %vm401 = vcmask 982016
  %v402 = vsel %vm401, %v394, %v396
  %v403 = vsel %vm401, %v398, %v400
  %406 = vst [vmem:[#allocation3 + $0x70] sm:$0xff] %v402
  %407 = vst [vmem:[#allocation3 + $0x78] sm:$0xff] %v403
  %v408 = vld [vmem:[#allocation2 + $0x8] sm:$0xff]
  %v409 = vld [vmem:[#allocation2 + $0x10] sm:$0xff]
  %v410 = vld [vmem:[#allocation2 + $0x20] sm:$0xff]
  %v411 = vld [vmem:[#allocation2 + $0x28] sm:$0xff]
  %v412 = vld [vmem:[#allocation2 + $0x38] sm:$0xff]
  %v413 = vld [vmem:[#allocation2 + $0x40] sm:$0xff]
  %v414 = vld [vmem:[#allocation2 + $0x50] sm:$0xff]
  %v415 = vld [vmem:[#allocation2 + $0x58] sm:$0xff]
  %s416 = scalar_lea.vmem %s1, 8
  %v417 = vld [vmem:[%s416] sm:$0x1]
  %v419 = vlaneseq
  %v420 = vshrl.u32 %v419, 7
  %v421 = vsub.s32 0, %v420
  %v422 = vrot.slane %v417, %v421
  %423 = vrot.lane.b32.xlu0 %v422, 9
  %v424 = vpop.permute.xlu0 %423
  %v426 = vmul.f32 %v408, %v424
  %v427 = vmul.f32 %v409, %v424
  %v428 = vmul.f32 %v410, %v424
  %v429 = vmul.f32 %v411, %v424
  %v430 = vmul.f32 %v412, %v424
  %v431 = vmul.f32 %v413, %v424
  %v432 = vmul.f32 %v414, %v424
  %v433 = vmul.f32 %v415, %v424
  %v434 = vpack.c.bf16 %v428, %v426
  %v435 = vpack.c.bf16 %v429, %v427
  %v436 = vpack.c.bf16 %v432, %v430
  %v437 = vpack.c.bf16 %v433, %v431
  %442 = vrot.lane.b32.xlu0 %v434, 119
  %v443 = vpop.permute.xlu0 %442
  %444 = vrot.lane.b32.xlu0 %v435, 119
  %v445 = vpop.permute.xlu0 %444
  %446 = vrot.lane.b32.xlu0 %v436, 119
  %v447 = vpop.permute.xlu0 %446
  %448 = vrot.lane.b32.xlu0 %v437, 119
  %v449 = vpop.permute.xlu0 %448
  %vm450 = vcmask 973824
  %v451 = vsel %vm450, %v443, %v445
  %v452 = vsel %vm450, %v447, %v449
  %455 = vst [vmem:[#allocation3 + $0x80] sm:$0xff] %v451
  %456 = vst [vmem:[#allocation3 + $0x88] sm:$0xff] %v452
  %v457 = vld [vmem:[%s2] sm:$0xff]
  %v458 = vld [vmem:[%s2 + $0x8] sm:$0xf]
  %v459 = vld [vmem:[%s2 + $0xc] sm:$0xff]
  %v460 = vld [vmem:[%s2 + $0x14] sm:$0xf]
  %v461 = vld [vmem:[#allocation3] sm:$0xff]
  %v462 = vld [vmem:[#allocation3 + $0x8] sm:$0xff]
  %v463 = vld [vmem:[#allocation3 + $0x10] sm:$0xff]
  %v464 = vld [vmem:[#allocation3 + $0x18] sm:$0xff]
  %v465 = vld [vmem:[#allocation3 + $0x20] sm:$0xff]
  %v466 = vld [vmem:[#allocation3 + $0x28] sm:$0xff]
  %v467 = vld [vmem:[#allocation3 + $0x30] sm:$0xff]
  %v468 = vld [vmem:[#allocation3 + $0x38] sm:$0xff]
  %v469 = vld [vmem:[#allocation3 + $0x40] sm:$0xff]
  %v470 = vld [vmem:[#allocation3 + $0x48] sm:$0xff]
  %v471 = vld [vmem:[#allocation3 + $0x50] sm:$0xff]
  %v472 = vld [vmem:[#allocation3 + $0x58] sm:$0xff]
  %v473 = vld [vmem:[#allocation3 + $0x60] sm:$0xff]
  %v474 = vld [vmem:[#allocation3 + $0x68] sm:$0xff]
  %v475 = vld [vmem:[#allocation3 + $0x70] sm:$0xff]
  %v476 = vld [vmem:[#allocation3 + $0x78] sm:$0xff]
  %v477 = vld [vmem:[#allocation3 + $0x80] sm:$0xff]
  %v478 = vld [vmem:[#allocation3 + $0x88] sm:$0xff]
  %v479 = vld [vmem:[%s3] sm:$0xff]
  %v480 = vld [vmem:[%s3 + $0x8] sm:$0xff]
  %482 = vset.pattern.permute.xlu0 0
  %483 = vperm.xlu0 %482, %v479
  %v484 = vpop.permute.xlu0 %483
  %487 = vset.pattern.permute.xlu0 0
  %488 = vperm.xlu0 %487, %v480
  %v489 = vpop.permute.xlu0 %488
  %v495 = vunpack.c.l.b16 %v457
  %v496 = vunpack.c.h.b16 %v457
  %v497 = vunpack.c.l.b16 %v458
  %v498 = vunpack.c.l.b16 %v459
  %v499 = vunpack.c.h.b16 %v459
  %v500 = vunpack.c.l.b16 %v460
  %v501 = vpack.c.b16 %v498, %v495
  %v502 = vpack.c.b16 %v499, %v496
  %v503 = vpack.c.b16 %v500, %v497
  %vm506 = vcmask 261120
  %v508 = vsel %vm506, %v503, 0
  %510 = vmatprep.subr.bf16.mxu0 0
  %511 = vmatpush1.bf16.msra.mxu0 %v461
  %512 = vmatprep.subr.bf16.mxu0 0
  %513 = vmatpush1.bf16.msra.mxu0 %v462
  %514 = vmatprep.subr.bf16.mxu0 0
  %515 = vmatpush1.bf16.msra.mxu0 %v463
  %516 = vmatprep.subr.bf16.mxu0 0
  %517 = vmatpush1.bf16.msra.mxu0 %v464
  %518 = vmatprep.subr.bf16.mxu0 0
  %519 = vmatpush1.bf16.msra.mxu0 %v465
  %520 = vmatprep.subr.bf16.mxu0 0
  %521 = vmatpush1.bf16.msra.mxu0 %v466
  %522 = vmatprep.subr.bf16.mxu0 0
  %523 = vmatpush1.bf16.msra.mxu0 %v467
  %524 = vmatprep.subr.bf16.mxu0 0
  %525 = vmatpush1.bf16.msra.mxu0 %v468
  %526 = vmatprep.subr.bf16.mxu0 0
  %527 = vmatpush1.bf16.msra.mxu0 %v469
  %528 = vmatprep.subr.bf16.mxu0 0
  %529 = vmatpush1.bf16.msra.mxu0 %v470
  %530 = vmatprep.subr.bf16.mxu0 0
  %531 = vmatpush1.bf16.msra.mxu0 %v471
  %532 = vmatprep.subr.bf16.mxu0 0
  %533 = vmatpush1.bf16.msra.mxu0 %v472
  %534 = vmatprep.subr.bf16.mxu0 0
  %535 = vmatpush1.bf16.msra.mxu0 %v473
  %536 = vmatprep.subr.bf16.mxu0 0
  %537 = vmatpush1.bf16.msra.mxu0 %v474
  %538 = vmatprep.subr.bf16.mxu0 0
  %539 = vmatpush1.bf16.msra.mxu0 %v475
  %540 = vmatprep.subr.bf16.mxu0 0
  %541 = vmatpush1.bf16.msra.mxu0 %v476
  %542 = vmatprep.mubr.bf16.mxu0 %v502
  %543 = vmatmul.mubr.bf16.gmra.mrb[0].mxu0 %v501
  %v544 = vpop.f32.mrb[0].mxu0
  %v545 = vadd.f32 %v484, %v544
  %v546 = vpop.f32.mrb[0].mxu0
  %v547 = vpop.f32.mrb[0].mxu0
  %v548 = vadd.f32 %v489, %v547
  %v549 = vpop.f32.mrb[0].mxu0
  %550 = vdwg.mxu0
  %551 = vmatprep.subr.bf16.mxu0 0
  %552 = vmatpush1.bf16.msra.mxu0 %v477
  %553 = vmatprep.subr.bf16.mxu0 0
  %554 = vmatpush1.bf16.msra.mxu0 %v478
  %555 = vmatprep.subr.bf16.mxu0 0
  %556 = vmatpush1.bf16.msra.mxu0 0
  %557 = vmatprep.subr.bf16.mxu0 0
  %558 = vmatpush1.bf16.msra.mxu0 0
  %559 = vmatprep.subr.bf16.mxu0 0
  %560 = vmatpush1.bf16.msra.mxu0 0
  %561 = vmatprep.subr.bf16.mxu0 0
  %562 = vmatpush1.bf16.msra.mxu0 0
  %563 = vmatprep.subr.bf16.mxu0 0
  %564 = vmatpush1.bf16.msra.mxu0 0
  %565 = vmatprep.subr.bf16.mxu0 0
  %566 = vmatpush1.bf16.msra.mxu0 0
  %567 = vmatprep.subr.bf16.mxu0 0
  %568 = vmatpush1.bf16.msra.mxu0 0
  %569 = vmatprep.subr.bf16.mxu0 0
  %570 = vmatpush1.bf16.msra.mxu0 0
  %571 = vmatprep.subr.bf16.mxu0 0
  %572 = vmatpush1.bf16.msra.mxu0 0
  %573 = vmatprep.subr.bf16.mxu0 0
  %574 = vmatpush1.bf16.msra.mxu0 0
  %575 = vmatprep.subr.bf16.mxu0 0
  %576 = vmatpush1.bf16.msra.mxu0 0
  %577 = vmatprep.subr.bf16.mxu0 0
  %578 = vmatpush1.bf16.msra.mxu0 0
  %579 = vmatprep.subr.bf16.mxu0 0
  %580 = vmatpush1.bf16.msra.mxu0 0
  %581 = vmatprep.subr.bf16.mxu0 0
  %582 = vmatpush1.bf16.msra.mxu0 0
  %583 = vmatprep.mubr.bf16.mxu0 0
  %584 = vmatmul.mubr.bf16.gmra.mrb[0].mxu0 %v508
  %v585 = vpop.f32.mrb[0].mxu0
  %v586 = vadd.f32 %v545, %v585
  %v587 = vpop.f32.mrb[0].mxu0
  %v588 = vpop.f32.mrb[0].mxu0
  %v589 = vadd.f32 %v548, %v588
  %v590 = vpop.f32.mrb[0].mxu0
  %591 = vdwg.mxu0
  %v592 = vmul.f32 %v586, 0.5
  %v593 = vmul.f32 %v589, 0.5
  %v594 = vmul.f32 %v586, 0.044715
  %v595 = vmul.f32 %v589, 0.044715
  %v596 = vmul.f32 %v594, %v586
  %v597 = vmul.f32 %v595, %v589
  %v598 = vmul.f32 %v596, %v586
  %v599 = vmul.f32 %v597, %v589
  %v600 = vadd.f32 %v586, %v598
  %v601 = vadd.f32 %v589, %v599
  %v602 = vmul.f32 %v600, 0.7978846
  %v603 = vmul.f32 %v601, 0.7978846
  %v604 = vtanh.pop %v602
  %v605 = vtanh.pop %v603
  %v606 = vadd.f32 %v604, 1.0
  %v607 = vadd.f32 %v605, 1.0
  %v608 = vmul.f32 %v592, %v606
  %v609 = vmul.f32 %v593, %v607
  %610 = vst [vmem:[#allocation2] sm:$0xff] 0.0
  %611 = vst [vmem:[#allocation2 + $0x18] sm:$0xff] 0.0
  %612 = vst [vmem:[#allocation2 + $0x8] sm:$0xff] %v608
  %613 = vst [vmem:[#allocation2 + $0x20] sm:$0xff] %v609
  %614 = vst [vmem:[#allocation2 + $0x10] sm:$0xff] 0.0
  %615 = vst [vmem:[#allocation2 + $0x28] sm:$0xff] 0.0
  %v616 = vld [vmem:[#allocation2] sm:$0xff]
  %v617 = vld [vmem:[#allocation2 + $0x8] sm:$0xff]
  %v618 = vld [vmem:[#allocation2 + $0x18] sm:$0xff]
  %v619 = vld [vmem:[#allocation2 + $0x20] sm:$0xff]
  %v620 = vld [vmem:[%s1] sm:$0x1]
  %v622 = vlaneseq
  %v623 = vshrl.u32 %v622, 7
  %v624 = vsub.s32 0, %v623
  %v625 = vrot.slane %v620, %v624
  %626 = vrot.lane.b32.xlu0 %v625, 119
  %v627 = vpop.permute.xlu0 %626
  %v629 = vmul.f32 %v616, %v627
  %v630 = vmul.f32 %v617, %v627
  %v631 = vmul.f32 %v618, %v627
  %v632 = vmul.f32 %v619, %v627
  %v633 = vpack.c.bf16 %v631, %v629
  %v634 = vpack.c.bf16 %v632, %v630
  %637 = vrot.lane.b32.xlu0 %v633, 9
  %v638 = vpop.permute.xlu0 %637
  %639 = vrot.lane.b32.xlu0 %v634, 9
  %v640 = vpop.permute.xlu0 %639
  %v641 = vsel %vm87, %v638, %v640
  %643 = vst [vmem:[#allocation3] sm:$0xff] %v641
  %v644 = vld [vmem:[#allocation2] sm:$0xff]
  %v645 = vld [vmem:[#allocation2 + $0x8] sm:$0xff]
  %v646 = vld [vmem:[#allocation2 + $0x18] sm:$0xff]
  %v647 = vld [vmem:[#allocation2 + $0x20] sm:$0xff]
  %v648 = vld [vmem:[%s102] sm:$0x1]
  %v650 = vlaneseq
  %v651 = vshrl.u32 %v650, 7
  %v652 = vsub.s32 0, %v651
  %v653 = vrot.slane %v648, %v652
  %654 = vrot.lane.b32.xlu0 %v653, 120
  %v655 = vpop.permute.xlu0 %654
  %v657 = vmul.f32 %v644, %v655
  %v658 = vmul.f32 %v645, %v655
  %v659 = vmul.f32 %v646, %v655
  %v660 = vmul.f32 %v647, %v655
  %v661 = vpack.c.bf16 %v659, %v657
  %v662 = vpack.c.bf16 %v660, %v658
  %665 = vrot.lane.b32.xlu0 %v661, 8
  %v666 = vpop.permute.xlu0 %665
  %667 = vrot.lane.b32.xlu0 %v662, 8
  %v668 = vpop.permute.xlu0 %667
  %v669 = vsel %vm136, %v666, %v668
  %671 = vst [vmem:[#allocation3 + $0x8] sm:$0xff] %v669
  %v672 = vld [vmem:[#allocation2] sm:$0xff]
  %v673 = vld [vmem:[#allocation2 + $0x8] sm:$0xff]
  %v674 = vld [vmem:[#allocation2 + $0x18] sm:$0xff]
  %v675 = vld [vmem:[#allocation2 + $0x20] sm:$0xff]
  %v676 = vld [vmem:[%s151] sm:$0x1]
  %v678 = vlaneseq
  %v679 = vshrl.u32 %v678, 7
  %v680 = vsub.s32 0, %v679
  %v681 = vrot.slane %v676, %v680
  %682 = vrot.lane.b32.xlu0 %v681, 121
  %v683 = vpop.permute.xlu0 %682
  %v685 = vmul.f32 %v672, %v683
  %v686 = vmul.f32 %v673, %v683
  %v687 = vmul.f32 %v674, %v683
  %v688 = vmul.f32 %v675, %v683
  %v689 = vpack.c.bf16 %v687, %v685
  %v690 = vpack.c.bf16 %v688, %v686
  %693 = vrot.lane.b32.xlu0 %v689, 7
  %v694 = vpop.permute.xlu0 %693
  %695 = vrot.lane.b32.xlu0 %v690, 7
  %v696 = vpop.permute.xlu0 %695
  %v697 = vsel %vm185, %v694, %v696
  %699 = vst [vmem:[#allocation3 + $0x10] sm:$0xff] %v697
  %v700 = vld [vmem:[#allocation2] sm:$0xff]
  %v701 = vld [vmem:[#allocation2 + $0x8] sm:$0xff]
  %v702 = vld [vmem:[#allocation2 + $0x18] sm:$0xff]
  %v703 = vld [vmem:[#allocation2 + $0x20] sm:$0xff]
  %v704 = vld [vmem:[%s200] sm:$0x1]
  %v706 = vlaneseq
  %v707 = vshrl.u32 %v706, 7
  %v708 = vsub.s32 0, %v707
  %v709 = vrot.slane %v704, %v708
  %710 = vrot.lane.b32.xlu0 %v709, 127
  %v711 = vpop.permute.xlu0 %710
  %v713 = vmul.f32 %v700, %v711
  %v714 = vmul.f32 %v701, %v711
  %v715 = vmul.f32 %v702, %v711
  %v716 = vmul.f32 %v703, %v711
  %v717 = vpack.c.bf16 %v715, %v713
  %v718 = vpack.c.bf16 %v716, %v714
  %721 = vrot.lane.b32.xlu0 %v717, 1
  %v722 = vpop.permute.xlu0 %721
  %723 = vrot.lane.b32.xlu0 %v718, 1
  %v724 = vpop.permute.xlu0 %723
  %v725 = vsel %vm234, %v722, %v724
  %727 = vst [vmem:[#allocation3 + $0x18] sm:$0xff] %v725
  %v728 = vld [vmem:[#allocation2 + $0x8] sm:$0xff]
  %v729 = vld [vmem:[#allocation2 + $0x20] sm:$0xff]
  %v730 = vld [vmem:[%s245] sm:$0x1]
  %v732 = vlaneseq
  %v733 = vshrl.u32 %v732, 7
  %v734 = vsub.s32 0, %v733
  %v735 = vrot.slane %v730, %v734
  %v737 = vmul.f32 %v728, %v735
  %v738 = vmul.f32 %v729, %v735
  %v739 = vpack.c.bf16 %v738, %v737
  %740 = vst [vmem:[#allocation3 + $0x20] sm:$0xff] %v739
  %v741 = vld [vmem:[#allocation2 + $0x8] sm:$0xff]
  %v742 = vld [vmem:[#allocation2 + $0x10] sm:$0xff]
  %v743 = vld [vmem:[#allocation2 + $0x20] sm:$0xff]
  %v744 = vld [vmem:[#allocation2 + $0x28] sm:$0xff]
  %v745 = vld [vmem:[%s269] sm:$0x1]
  %v747 = vlaneseq
  %v748 = vshrl.u32 %v747, 7
  %v749 = vsub.s32 0, %v748
  %v750 = vrot.slane %v745, %v749
  %751 = vrot.lane.b32.xlu0 %v750, 1
  %v752 = vpop.permute.xlu0 %751
  %v754 = vmul.f32 %v741, %v752
  %v755 = vmul.f32 %v742, %v752
  %v756 = vmul.f32 %v743, %v752
  %v757 = vmul.f32 %v744, %v752
  %v758 = vpack.c.bf16 %v756, %v754
  %v759 = vpack.c.bf16 %v757, %v755
  %762 = vrot.lane.b32.xlu0 %v758, 127
  %v763 = vpop.permute.xlu0 %762
  %764 = vrot.lane.b32.xlu0 %v759, 127
  %v765 = vpop.permute.xlu0 %764
  %v766 = vsel %vm303, %v763, %v765
  %768 = vst [vmem:[#allocation3 + $0x28] sm:$0xff] %v766
  %v769 = vld [vmem:[#allocation2 + $0x8] sm:$0xff]
  %v770 = vld [vmem:[#allocation2 + $0x10] sm:$0xff]
  %v771 = vld [vmem:[#allocation2 + $0x20] sm:$0xff]
  %v772 = vld [vmem:[#allocation2 + $0x28] sm:$0xff]
  %v773 = vld [vmem:[%s318] sm:$0x1]
  %v775 = vlaneseq
  %v776 = vshrl.u32 %v775, 7
  %v777 = vsub.s32 0, %v776
  %v778 = vrot.slane %v773, %v777
  %779 = vrot.lane.b32.xlu0 %v778, 7
  %v780 = vpop.permute.xlu0 %779
  %v782 = vmul.f32 %v769, %v780
  %v783 = vmul.f32 %v770, %v780
  %v784 = vmul.f32 %v771, %v780
  %v785 = vmul.f32 %v772, %v780
  %v786 = vpack.c.bf16 %v784, %v782
  %v787 = vpack.c.bf16 %v785, %v783
  %790 = vrot.lane.b32.xlu0 %v786, 121
  %v791 = vpop.permute.xlu0 %790
  %792 = vrot.lane.b32.xlu0 %v787, 121
  %v793 = vpop.permute.xlu0 %792
  %v794 = vsel %vm352, %v791, %v793
  %796 = vst [vmem:[#allocation3 + $0x30] sm:$0xff] %v794
  %v797 = vld [vmem:[#allocation2 + $0x8] sm:$0xff]
  %v798 = vld [vmem:[#allocation2 + $0x10] sm:$0xff]
  %v799 = vld [vmem:[#allocation2 + $0x20] sm:$0xff]
  %v800 = vld [vmem:[#allocation2 + $0x28] sm:$0xff]
  %v801 = vld [vmem:[%s367] sm:$0x1]
  %v803 = vlaneseq
  %v804 = vshrl.u32 %v803, 7
  %v805 = vsub.s32 0, %v804
  %v806 = vrot.slane %v801, %v805
  %807 = vrot.lane.b32.xlu0 %v806, 8
  %v808 = vpop.permute.xlu0 %807
  %v810 = vmul.f32 %v797, %v808
  %v811 = vmul.f32 %v798, %v808
  %v812 = vmul.f32 %v799, %v808
  %v813 = vmul.f32 %v800, %v808
  %v814 = vpack.c.bf16 %v812, %v810
  %v815 = vpack.c.bf16 %v813, %v811
  %818 = vrot.lane.b32.xlu0 %v814, 120
  %v819 = vpop.permute.xlu0 %818
  %820 = vrot.lane.b32.xlu0 %v815, 120
  %v821 = vpop.permute.xlu0 %820
  %v822 = vsel %vm401, %v819, %v821
  %824 = vst [vmem:[#allocation3 + $0x38] sm:$0xff] %v822
  %v825 = vld [vmem:[#allocation2 + $0x8] sm:$0xff]
  %v826 = vld [vmem:[#allocation2 + $0x10] sm:$0xff]
  %v827 = vld [vmem:[#allocation2 + $0x20] sm:$0xff]
  %v828 = vld [vmem:[#allocation2 + $0x28] sm:$0xff]
  %v829 = vld [vmem:[%s416] sm:$0x1]
  %v831 = vlaneseq
  %v832 = vshrl.u32 %v831, 7
  %v833 = vsub.s32 0, %v832
  %v834 = vrot.slane %v829, %v833
  %835 = vrot.lane.b32.xlu0 %v834, 9
  %v836 = vpop.permute.xlu0 %835
  %v838 = vmul.f32 %v825, %v836
  %v839 = vmul.f32 %v826, %v836
  %v840 = vmul.f32 %v827, %v836
  %v841 = vmul.f32 %v828, %v836
  %v842 = vpack.c.bf16 %v840, %v838
  %v843 = vpack.c.bf16 %v841, %v839
  %846 = vrot.lane.b32.xlu0 %v842, 119
  %v847 = vpop.permute.xlu0 %846
  %848 = vrot.lane.b32.xlu0 %v843, 119
  %v849 = vpop.permute.xlu0 %848
  %v850 = vsel %vm450, %v847, %v849
  %852 = vst [vmem:[#allocation3 + $0x40] sm:$0xff] %v850
  %v853 = vld [vmem:[%s4] sm:$0xff]
  %v854 = vld [vmem:[%s4 + $0x8] sm:$0xff]
  %v855 = vld [vmem:[%s4 + $0x10] sm:$0xff]
  %v856 = vld [vmem:[%s4 + $0x18] sm:$0xff]
  %v857 = vld [vmem:[#allocation3] sm:$0xff]
  %v858 = vld [vmem:[#allocation3 + $0x8] sm:$0xff]
  %v859 = vld [vmem:[#allocation3 + $0x10] sm:$0xff]
  %v860 = vld [vmem:[#allocation3 + $0x18] sm:$0xff]
  %v861 = vld [vmem:[#allocation3 + $0x20] sm:$0xff]
  %v862 = vld [vmem:[#allocation3 + $0x28] sm:$0xff]
  %v863 = vld [vmem:[#allocation3 + $0x30] sm:$0xff]
  %v864 = vld [vmem:[#allocation3 + $0x38] sm:$0xff]
  %v865 = vld [vmem:[#allocation3 + $0x40] sm:$0xff]
  %v866 = vld [vmem:[%s5] sm:$0xff]
  %v867 = vld [vmem:[%s5 + $0x8] sm:$0xff]
  %v868 = vld [vmem:[%s5 + $0x10] sm:$0xff]
  %v869 = vld [vmem:[%s5 + $0x18] sm:$0xff]
  %871 = vset.pattern.permute.xlu0 0
  %872 = vperm.xlu0 %871, %v866
  %v873 = vpop.permute.xlu0 %872
  %876 = vset.pattern.permute.xlu0 0
  %877 = vperm.xlu0 %876, %v867
  %v878 = vpop.permute.xlu0 %877
  %881 = vset.pattern.permute.xlu0 0
  %882 = vperm.xlu0 %881, %v868
  %v883 = vpop.permute.xlu0 %882
  %886 = vset.pattern.permute.xlu0 0
  %887 = vperm.xlu0 %886, %v869
  %v888 = vpop.permute.xlu0 %887
  %v894 = vunpack.c.l.b16 %v853
  %v895 = vunpack.c.h.b16 %v853
  %v896 = vunpack.c.l.b16 %v854
  %v897 = vunpack.c.h.b16 %v854
  %v898 = vunpack.c.l.b16 %v855
  %v899 = vunpack.c.h.b16 %v855
  %v900 = vunpack.c.l.b16 %v856
  %v901 = vunpack.c.h.b16 %v856
  %v902 = vpack.c.b16 %v896, %v894
  %v903 = vpack.c.b16 %v897, %v895
  %v904 = vpack.c.b16 %v900, %v898
  %v905 = vpack.c.b16 %v901, %v899
  %vm908 = vcmask 130048
  %v910 = vsel %vm908, %v903, 0
  %v913 = vsel %vm908, %v905, 0
  %915 = vmatprep.subr.bf16.mxu0 0
  %916 = vmatpush1.bf16.msra.mxu0 %v857
  %917 = vmatprep.subr.bf16.mxu0 0
  %918 = vmatpush1.bf16.msra.mxu0 %v858
  %919 = vmatprep.subr.bf16.mxu0 0
  %920 = vmatpush1.bf16.msra.mxu0 %v859
  %921 = vmatprep.subr.bf16.mxu0 0
  %922 = vmatpush1.bf16.msra.mxu0 %v860
  %923 = vmatprep.subr.bf16.mxu0 0
  %924 = vmatpush1.bf16.msra.mxu0 %v861
  %925 = vmatprep.subr.bf16.mxu0 0
  %926 = vmatpush1.bf16.msra.mxu0 %v862
  %927 = vmatprep.subr.bf16.mxu0 0
  %928 = vmatpush1.bf16.msra.mxu0 %v863
  %929 = vmatprep.subr.bf16.mxu0 0
  %930 = vmatpush1.bf16.msra.mxu0 %v864
  %931 = vmatprep.subr.bf16.mxu0 0
  %932 = vmatpush1.bf16.msra.mxu0 %v865
  %933 = vmatprep.subr.bf16.mxu0 0
  %934 = vmatpush1.bf16.msra.mxu0 0
  %935 = vmatprep.subr.bf16.mxu0 0
  %936 = vmatpush1.bf16.msra.mxu0 0
  %937 = vmatprep.subr.bf16.mxu0 0
  %938 = vmatpush1.bf16.msra.mxu0 0
  %939 = vmatprep.subr.bf16.mxu0 0
  %940 = vmatpush1.bf16.msra.mxu0 0
  %941 = vmatprep.subr.bf16.mxu0 0
  %942 = vmatpush1.bf16.msra.mxu0 0
  %943 = vmatprep.subr.bf16.mxu0 0
  %944 = vmatpush1.bf16.msra.mxu0 0
  %945 = vmatprep.subr.bf16.mxu0 0
  %946 = vmatpush1.bf16.msra.mxu0 0
  %947 = vmatprep.mubr.bf16.mxu0 %v910
  %948 = vmatmul.mubr.bf16.gmra.mrb[0].mxu0 %v902
  %v949 = vpop.f32.mrb[0].mxu0
  %v950 = vadd.f32 %v873, %v949
  %v951 = vpop.f32.mrb[0].mxu0
  %v952 = vpop.f32.mrb[0].mxu0
  %v953 = vadd.f32 %v878, %v952
  %v954 = vpop.f32.mrb[0].mxu0
  %955 = vmatprep.mubr.bf16.mxu0 %v913
  %956 = vmatmul.mubr.bf16.gmra.mrb[0].mxu0 %v904
  %v957 = vpop.f32.mrb[0].mxu0
  %v958 = vadd.f32 %v883, %v957
  %v959 = vpop.f32.mrb[0].mxu0
  %v960 = vpop.f32.mrb[0].mxu0
  %v961 = vadd.f32 %v888, %v960
  %v962 = vpop.f32.mrb[0].mxu0
  %963 = vdwg.mxu0
  %v964 = vmul.f32 %v950, 0.5
  %v965 = vmul.f32 %v953, 0.5
  %v966 = vmul.f32 %v958, 0.5
  %v967 = vmul.f32 %v961, 0.5
  %v968 = vmul.f32 %v950, 0.044715
  %v969 = vmul.f32 %v953, 0.044715
  %v970 = vmul.f32 %v958, 0.044715
  %v971 = vmul.f32 %v961, 0.044715
  %v972 = vmul.f32 %v968, %v950
  %v973 = vmul.f32 %v969, %v953
  %v974 = vmul.f32 %v970, %v958
  %v975 = vmul.f32 %v971, %v961
  %v976 = vmul.f32 %v972, %v950
  %v977 = vmul.f32 %v973, %v953
  %v978 = vmul.f32 %v974, %v958
  %v979 = vmul.f32 %v975, %v961
  %v980 = vadd.f32 %v950, %v976
  %v981 = vadd.f32 %v953, %v977
  %v982 = vadd.f32 %v958, %v978
  %v983 = vadd.f32 %v961, %v979
  %v984 = vmul.f32 %v980, 0.7978846
  %v985 = vmul.f32 %v981, 0.7978846
  %v986 = vmul.f32 %v982, 0.7978846
  %v987 = vmul.f32 %v983, 0.7978846
  %v988 = vtanh.pop %v984
  %v989 = vtanh.pop %v985
  %v990 = vtanh.pop %v986
  %v991 = vtanh.pop %v987
  %v992 = vadd.f32 %v988, 1.0
  %v993 = vadd.f32 %v989, 1.0
  %v994 = vadd.f32 %v990, 1.0
  %v995 = vadd.f32 %v991, 1.0
  %v996 = vmul.f32 %v964, %v992
  %v997 = vmul.f32 %v965, %v993
  %v998 = vmul.f32 %v966, %v994
  %v999 = vmul.f32 %v967, %v995
  %v1000 = vsub.f32 %v996, %v30
  %v1001 = vsub.f32 %v997, %v31
  %v1002 = vsub.f32 %v998, %v32
  %v1003 = vsub.f32 %v999, %v33
  %1004 = vst [vmem:[#allocation2] sm:$0xff] 0.0
  %1005 = vst [vmem:[#allocation2 + $0x18] sm:$0xff] 0.0
  %1006 = vst [vmem:[#allocation2 + $0x30] sm:$0xff] 0.0
  %1007 = vst [vmem:[#allocation2 + $0x48] sm:$0xff] 0.0
  %1008 = vst [vmem:[#allocation2 + $0x8] sm:$0xff] %v1000
  %1009 = vst [vmem:[#allocation2 + $0x20] sm:$0xff] %v1001
  %1010 = vst [vmem:[#allocation2 + $0x38] sm:$0xff] %v1002
  %1011 = vst [vmem:[#allocation2 + $0x50] sm:$0xff] %v1003
  %1012 = vst [vmem:[#allocation2 + $0x10] sm:$0xff] 0.0
  %1013 = vst [vmem:[#allocation2 + $0x28] sm:$0xff] 0.0
  %1014 = vst [vmem:[#allocation2 + $0x40] sm:$0xff] 0.0
  %1015 = vst [vmem:[#allocation2 + $0x58] sm:$0xff] 0.0
  %v1016 = vld [vmem:[#allocation2] sm:$0xff]
  %v1017 = vld [vmem:[#allocation2 + $0x8] sm:$0xff]
  %v1018 = vld [vmem:[#allocation2 + $0x18] sm:$0xff]
  %v1019 = vld [vmem:[#allocation2 + $0x20] sm:$0xff]
  %v1020 = vld [vmem:[#allocation2 + $0x30] sm:$0xff]
  %v1021 = vld [vmem:[#allocation2 + $0x38] sm:$0xff]
  %v1022 = vld [vmem:[#allocation2 + $0x48] sm:$0xff]
  %v1023 = vld [vmem:[#allocation2 + $0x50] sm:$0xff]
  %v1024 = vld [vmem:[%s1] sm:$0x1]
  %v1026 = vlaneseq
  %v1027 = vshrl.u32 %v1026, 7
  %v1028 = vsub.s32 0, %v1027
  %v1029 = vrot.slane %v1024, %v1028
  %1030 = vrot.lane.b32.xlu0 %v1029, 119
  %v1031 = vpop.permute.xlu0 %1030
  %v1033 = vmul.f32 %v1016, %v1031
  %v1034 = vmul.f32 %v1017, %v1031
  %v1035 = vmul.f32 %v1018, %v1031
  %v1036 = vmul.f32 %v1019, %v1031
  %v1037 = vmul.f32 %v1020, %v1031
  %v1038 = vmul.f32 %v1021, %v1031
  %v1039 = vmul.f32 %v1022, %v1031
  %v1040 = vmul.f32 %v1023, %v1031
  %v1041 = vpack.c.bf16 %v1035, %v1033
  %v1042 = vpack.c.bf16 %v1036, %v1034
  %v1043 = vpack.c.bf16 %v1039, %v1037
  %v1044 = vpack.c.bf16 %v1040, %v1038
  %1049 = vrot.lane.b32.xlu0 %v1041, 9
  %v1050 = vpop.permute.xlu0 %1049
  %1051 = vrot.lane.b32.xlu0 %v1042, 9
  %v1052 = vpop.permute.xlu0 %1051
  %1053 = vrot.lane.b32.xlu0 %v1043, 9
  %v1054 = vpop.permute.xlu0 %1053
  %1055 = vrot.lane.b32.xlu0 %v1044, 9
  %v1056 = vpop.permute.xlu0 %1055
  %v1057 = vsel %vm87, %v1050, %v1052
  %v1058 = vsel %vm87, %v1054, %v1056
  %1061 = vst [vmem:[#allocation3] sm:$0xff] %v1057
  %1062 = vst [vmem:[#allocation3 + $0x8] sm:$0xff] %v1058
  %v1063 = vld [vmem:[#allocation2] sm:$0xff]
  %v1064 = vld [vmem:[#allocation2 + $0x8] sm:$0xff]
  %v1065 = vld [vmem:[#allocation2 + $0x18] sm:$0xff]
  %v1066 = vld [vmem:[#allocation2 + $0x20] sm:$0xff]
  %v1067 = vld [vmem:[#allocation2 + $0x30] sm:$0xff]
  %v1068 = vld [vmem:[#allocation2 + $0x38] sm:$0xff]
  %v1069 = vld [vmem:[#allocation2 + $0x48] sm:$0xff]
  %v1070 = vld [vmem:[#allocation2 + $0x50] sm:$0xff]
  %v1071 = vld [vmem:[%s102] sm:$0x1]
  %v1073 = vlaneseq
  %v1074 = vshrl.u32 %v1073, 7
  %v1075 = vsub.s32 0, %v1074
  %v1076 = vrot.slane %v1071, %v1075
  %1077 = vrot.lane.b32.xlu0 %v1076, 120
  %v1078 = vpop.permute.xlu0 %1077
  %v1080 = vmul.f32 %v1063, %v1078
  %v1081 = vmul.f32 %v1064, %v1078
  %v1082 = vmul.f32 %v1065, %v1078
  %v1083 = vmul.f32 %v1066, %v1078
  %v1084 = vmul.f32 %v1067, %v1078
  %v1085 = vmul.f32 %v1068, %v1078
  %v1086 = vmul.f32 %v1069, %v1078
  %v1087 = vmul.f32 %v1070, %v1078
  %v1088 = vpack.c.bf16 %v1082, %v1080
  %v1089 = vpack.c.bf16 %v1083, %v1081
  %v1090 = vpack.c.bf16 %v1086, %v1084
  %v1091 = vpack.c.bf16 %v1087, %v1085
  %1096 = vrot.lane.b32.xlu0 %v1088, 8
  %v1097 = vpop.permute.xlu0 %1096
  %1098 = vrot.lane.b32.xlu0 %v1089, 8
  %v1099 = vpop.permute.xlu0 %1098
  %1100 = vrot.lane.b32.xlu0 %v1090, 8
  %v1101 = vpop.permute.xlu0 %1100
  %1102 = vrot.lane.b32.xlu0 %v1091, 8
  %v1103 = vpop.permute.xlu0 %1102
  %v1104 = vsel %vm136, %v1097, %v1099
  %v1105 = vsel %vm136, %v1101, %v1103
  %1108 = vst [vmem:[#allocation3 + $0x10] sm:$0xff] %v1104
  %1109 = vst [vmem:[#allocation3 + $0x18] sm:$0xff] %v1105
  %v1110 = vld [vmem:[#allocation2] sm:$0xff]
  %v1111 = vld [vmem:[#allocation2 + $0x8] sm:$0xff]
  %v1112 = vld [vmem:[#allocation2 + $0x18] sm:$0xff]
  %v1113 = vld [vmem:[#allocation2 + $0x20] sm:$0xff]
  %v1114 = vld [vmem:[#allocation2 + $0x30] sm:$0xff]
  %v1115 = vld [vmem:[#allocation2 + $0x38] sm:$0xff]
  %v1116 = vld [vmem:[#allocation2 + $0x48] sm:$0xff]
  %v1117 = vld [vmem:[#allocation2 + $0x50] sm:$0xff]
  %v1118 = vld [vmem:[%s151] sm:$0x1]
  %v1120 = vlaneseq
  %v1121 = vshrl.u32 %v1120, 7
  %v1122 = vsub.s32 0, %v1121
  %v1123 = vrot.slane %v1118, %v1122
  %1124 = vrot.lane.b32.xlu0 %v1123, 121
  %v1125 = vpop.permute.xlu0 %1124
  %v1127 = vmul.f32 %v1110, %v1125
  %v1128 = vmul.f32 %v1111, %v1125
  %v1129 = vmul.f32 %v1112, %v1125
  %v1130 = vmul.f32 %v1113, %v1125
  %v1131 = vmul.f32 %v1114, %v1125
  %v1132 = vmul.f32 %v1115, %v1125
  %v1133 = vmul.f32 %v1116, %v1125
  %v1134 = vmul.f32 %v1117, %v1125
  %v1135 = vpack.c.bf16 %v1129, %v1127
  %v1136 = vpack.c.bf16 %v1130, %v1128
  %v1137 = vpack.c.bf16 %v1133, %v1131
  %v1138 = vpack.c.bf16 %v1134, %v1132
  %1143 = vrot.lane.b32.xlu0 %v1135, 7
  %v1144 = vpop.permute.xlu0 %1143
  %1145 = vrot.lane.b32.xlu0 %v1136, 7
  %v1146 = vpop.permute.xlu0 %1145
  %1147 = vrot.lane.b32.xlu0 %v1137, 7
  %v1148 = vpop.permute.xlu0 %1147
  %1149 = vrot.lane.b32.xlu0 %v1138, 7
  %v1150 = vpop.permute.xlu0 %1149
  %v1151 = vsel %vm185, %v1144, %v1146
  %v1152 = vsel %vm185, %v1148, %v1150
  %1155 = vst [vmem:[#allocation3 + $0x20] sm:$0xff] %v1151
  %1156 = vst [vmem:[#allocation3 + $0x28] sm:$0xff] %v1152
  %v1157 = vld [vmem:[#allocation2] sm:$0xff]
  %v1158 = vld [vmem:[#allocation2 + $0x8] sm:$0xff]
  %v1159 = vld [vmem:[#allocation2 + $0x18] sm:$0xff]
  %v1160 = vld [vmem:[#allocation2 + $0x20] sm:$0xff]
  %v1161 = vld [vmem:[#allocation2 + $0x30] sm:$0xff]
  %v1162 = vld [vmem:[#allocation2 + $0x38] sm:$0xff]
  %v1163 = vld [vmem:[#allocation2 + $0x48] sm:$0xff]
  %v1164 = vld [vmem:[#allocation2 + $0x50] sm:$0xff]
  %v1165 = vld [vmem:[%s200] sm:$0x1]
  %v1167 = vlaneseq
  %v1168 = vshrl.u32 %v1167, 7
  %v1169 = vsub.s32 0, %v1168
  %v1170 = vrot.slane %v1165, %v1169
  %1171 = vrot.lane.b32.xlu0 %v1170, 127
  %v1172 = vpop.permute.xlu0 %1171
  %v1174 = vmul.f32 %v1157, %v1172
  %v1175 = vmul.f32 %v1158, %v1172
  %v1176 = vmul.f32 %v1159, %v1172
  %v1177 = vmul.f32 %v1160, %v1172
  %v1178 = vmul.f32 %v1161, %v1172
  %v1179 = vmul.f32 %v1162, %v1172
  %v1180 = vmul.f32 %v1163, %v1172
  %v1181 = vmul.f32 %v1164, %v1172
  %v1182 = vpack.c.bf16 %v1176, %v1174
  %v1183 = vpack.c.bf16 %v1177, %v1175
  %v1184 = vpack.c.bf16 %v1180, %v1178
  %v1185 = vpack.c.bf16 %v1181, %v1179
  %1190 = vrot.lane.b32.xlu0 %v1182, 1
  %v1191 = vpop.permute.xlu0 %1190
  %1192 = vrot.lane.b32.xlu0 %v1183, 1
  %v1193 = vpop.permute.xlu0 %1192
  %1194 = vrot.lane.b32.xlu0 %v1184, 1
  %v1195 = vpop.permute.xlu0 %1194
  %1196 = vrot.lane.b32.xlu0 %v1185, 1
  %v1197 = vpop.permute.xlu0 %1196
  %v1198 = vsel %vm234, %v1191, %v1193
  %v1199 = vsel %vm234, %v1195, %v1197
  %1202 = vst [vmem:[#allocation3 + $0x30] sm:$0xff] %v1198
  %1203 = vst [vmem:[#allocation3 + $0x38] sm:$0xff] %v1199
  %v1204 = vld [vmem:[#allocation2 + $0x8] sm:$0xff]
  %v1205 = vld [vmem:[#allocation2 + $0x20] sm:$0xff]
  %v1206 = vld [vmem:[#allocation2 + $0x38] sm:$0xff]
  %v1207 = vld [vmem:[#allocation2 + $0x50] sm:$0xff]
  %v1208 = vld [vmem:[%s245] sm:$0x1]
  %v1210 = vlaneseq
  %v1211 = vshrl.u32 %v1210, 7
  %v1212 = vsub.s32 0, %v1211
  %v1213 = vrot.slane %v1208, %v1212
  %v1215 = vmul.f32 %v1204, %v1213
  %v1216 = vmul.f32 %v1205, %v1213
  %v1217 = vmul.f32 %v1206, %v1213
  %v1218 = vmul.f32 %v1207, %v1213
  %v1219 = vpack.c.bf16 %v1216, %v1215
  %v1220 = vpack.c.bf16 %v1218, %v1217
  %1221 = vst [vmem:[#allocation3 + $0x40] sm:$0xff] %v1219
  %1222 = vst [vmem:[#allocation3 + $0x48] sm:$0xff] %v1220
  %v1223 = vld [vmem:[#allocation2 + $0x8] sm:$0xff]
  %v1224 = vld [vmem:[#allocation2 + $0x10] sm:$0xff]
  %v1225 = vld [vmem:[#allocation2 + $0x20] sm:$0xff]
  %v1226 = vld [vmem:[#allocation2 + $0x28] sm:$0xff]
  %v1227 = vld [vmem:[#allocation2 + $0x38] sm:$0xff]
  %v1228 = vld [vmem:[#allocation2 + $0x40] sm:$0xff]
  %v1229 = vld [vmem:[#allocation2 + $0x50] sm:$0xff]
  %v1230 = vld [vmem:[#allocation2 + $0x58] sm:$0xff]
  %v1231 = vld [vmem:[%s269] sm:$0x1]
  %v1233 = vlaneseq
  %v1234 = vshrl.u32 %v1233, 7
  %v1235 = vsub.s32 0, %v1234
  %v1236 = vrot.slane %v1231, %v1235
  %1237 = vrot.lane.b32.xlu0 %v1236, 1
  %v1238 = vpop.permute.xlu0 %1237
  %v1240 = vmul.f32 %v1223, %v1238
  %v1241 = vmul.f32 %v1224, %v1238
  %v1242 = vmul.f32 %v1225, %v1238
  %v1243 = vmul.f32 %v1226, %v1238
  %v1244 = vmul.f32 %v1227, %v1238
  %v1245 = vmul.f32 %v1228, %v1238
  %v1246 = vmul.f32 %v1229, %v1238
  %v1247 = vmul.f32 %v1230, %v1238
  %v1248 = vpack.c.bf16 %v1242, %v1240
  %v1249 = vpack.c.bf16 %v1243, %v1241
  %v1250 = vpack.c.bf16 %v1246, %v1244
  %v1251 = vpack.c.bf16 %v1247, %v1245
  %1256 = vrot.lane.b32.xlu0 %v1248, 127
  %v1257 = vpop.permute.xlu0 %1256
  %1258 = vrot.lane.b32.xlu0 %v1249, 127
  %v1259 = vpop.permute.xlu0 %1258
  %1260 = vrot.lane.b32.xlu0 %v1250, 127
  %v1261 = vpop.permute.xlu0 %1260
  %1262 = vrot.lane.b32.xlu0 %v1251, 127
  %v1263 = vpop.permute.xlu0 %1262
  %v1264 = vsel %vm303, %v1257, %v1259
  %v1265 = vsel %vm303, %v1261, %v1263
  %1268 = vst [vmem:[#allocation3 + $0x50] sm:$0xff] %v1264
  %1269 = vst [vmem:[#allocation3 + $0x58] sm:$0xff] %v1265
  %v1270 = vld [vmem:[#allocation2 + $0x8] sm:$0xff]
  %v1271 = vld [vmem:[#allocation2 + $0x10] sm:$0xff]
  %v1272 = vld [vmem:[#allocation2 + $0x20] sm:$0xff]
  %v1273 = vld [vmem:[#allocation2 + $0x28] sm:$0xff]
  %v1274 = vld [vmem:[#allocation2 + $0x38] sm:$0xff]
  %v1275 = vld [vmem:[#allocation2 + $0x40] sm:$0xff]
  %v1276 = vld [vmem:[#allocation2 + $0x50] sm:$0xff]
  %v1277 = vld [vmem:[#allocation2 + $0x58] sm:$0xff]
  %v1278 = vld [vmem:[%s318] sm:$0x1]
  %v1280 = vlaneseq
  %v1281 = vshrl.u32 %v1280, 7
  %v1282 = vsub.s32 0, %v1281
  %v1283 = vrot.slane %v1278, %v1282
  %1284 = vrot.lane.b32.xlu0 %v1283, 7
  %v1285 = vpop.permute.xlu0 %1284
  %v1287 = vmul.f32 %v1270, %v1285
  %v1288 = vmul.f32 %v1271, %v1285
  %v1289 = vmul.f32 %v1272, %v1285
  %v1290 = vmul.f32 %v1273, %v1285
  %v1291 = vmul.f32 %v1274, %v1285
  %v1292 = vmul.f32 %v1275, %v1285
  %v1293 = vmul.f32 %v1276, %v1285
  %v1294 = vmul.f32 %v1277, %v1285
  %v1295 = vpack.c.bf16 %v1289, %v1287
  %v1296 = vpack.c.bf16 %v1290, %v1288
  %v1297 = vpack.c.bf16 %v1293, %v1291
  %v1298 = vpack.c.bf16 %v1294, %v1292
  %1303 = vrot.lane.b32.xlu0 %v1295, 121
  %v1304 = vpop.permute.xlu0 %1303
  %1305 = vrot.lane.b32.xlu0 %v1296, 121
  %v1306 = vpop.permute.xlu0 %1305
  %1307 = vrot.lane.b32.xlu0 %v1297, 121
  %v1308 = vpop.permute.xlu0 %1307
  %1309 = vrot.lane.b32.xlu0 %v1298, 121
  %v1310 = vpop.permute.xlu0 %1309
  %v1311 = vsel %vm352, %v1304, %v1306
  %v1312 = vsel %vm352, %v1308, %v1310
  %1315 = vst [vmem:[#allocation3 + $0x60] sm:$0xff] %v1311
  %1316 = vst [vmem:[#allocation3 + $0x68] sm:$0xff] %v1312
  %v1317 = vld [vmem:[#allocation2 + $0x8] sm:$0xff]
  %v1318 = vld [vmem:[#allocation2 + $0x10] sm:$0xff]
  %v1319 = vld [vmem:[#allocation2 + $0x20] sm:$0xff]
  %v1320 = vld [vmem:[#allocation2 + $0x28] sm:$0xff]
  %v1321 = vld [vmem:[#allocation2 + $0x38] sm:$0xff]
  %v1322 = vld [vmem:[#allocation2 + $0x40] sm:$0xff]
  %v1323 = vld [vmem:[#allocation2 + $0x50] sm:$0xff]
  %v1324 = vld [vmem:[#allocation2 + $0x58] sm:$0xff]
  %v1325 = vld [vmem:[%s367] sm:$0x1]
  %v1327 = vlaneseq
  %v1328 = vshrl.u32 %v1327, 7
  %v1329 = vsub.s32 0, %v1328
  %v1330 = vrot.slane %v1325, %v1329
  %1331 = vrot.lane.b32.xlu0 %v1330, 8
  %v1332 = vpop.permute.xlu0 %1331
  %v1334 = vmul.f32 %v1317, %v1332
  %v1335 = vmul.f32 %v1318, %v1332
  %v1336 = vmul.f32 %v1319, %v1332
  %v1337 = vmul.f32 %v1320, %v1332
  %v1338 = vmul.f32 %v1321, %v1332
  %v1339 = vmul.f32 %v1322, %v1332
  %v1340 = vmul.f32 %v1323, %v1332
  %v1341 = vmul.f32 %v1324, %v1332
  %v1342 = vpack.c.bf16 %v1336, %v1334
  %v1343 = vpack.c.bf16 %v1337, %v1335
  %v1344 = vpack.c.bf16 %v1340, %v1338
  %v1345 = vpack.c.bf16 %v1341, %v1339
  %1350 = vrot.lane.b32.xlu0 %v1342, 120
  %v1351 = vpop.permute.xlu0 %1350
  %1352 = vrot.lane.b32.xlu0 %v1343, 120
  %v1353 = vpop.permute.xlu0 %1352
  %1354 = vrot.lane.b32.xlu0 %v1344, 120
  %v1355 = vpop.permute.xlu0 %1354
  %1356 = vrot.lane.b32.xlu0 %v1345, 120
  %v1357 = vpop.permute.xlu0 %1356
  %v1358 = vsel %vm401, %v1351, %v1353
  %v1359 = vsel %vm401, %v1355, %v1357
  %1362 = vst [vmem:[#allocation3 + $0x70] sm:$0xff] %v1358
  %1363 = vst [vmem:[#allocation3 + $0x78] sm:$0xff] %v1359
  %v1364 = vld [vmem:[#allocation2 + $0x8] sm:$0xff]
  %v1365 = vld [vmem:[#allocation2 + $0x10] sm:$0xff]
  %v1366 = vld [vmem:[#allocation2 + $0x20] sm:$0xff]
  %v1367 = vld [vmem:[#allocation2 + $0x28] sm:$0xff]
  %v1368 = vld [vmem:[#allocation2 + $0x38] sm:$0xff]
  %v1369 = vld [vmem:[#allocation2 + $0x40] sm:$0xff]
  %v1370 = vld [vmem:[#allocation2 + $0x50] sm:$0xff]
  %v1371 = vld [vmem:[#allocation2 + $0x58] sm:$0xff]
  %v1372 = vld [vmem:[%s416] sm:$0x1]
  %v1374 = vlaneseq
  %v1375 = vshrl.u32 %v1374, 7
  %v1376 = vsub.s32 0, %v1375
  %v1377 = vrot.slane %v1372, %v1376
  %1378 = vrot.lane.b32.xlu0 %v1377, 9
  %v1379 = vpop.permute.xlu0 %1378
  %v1381 = vmul.f32 %v1364, %v1379
  %v1382 = vmul.f32 %v1365, %v1379
  %v1383 = vmul.f32 %v1366, %v1379
  %v1384 = vmul.f32 %v1367, %v1379
  %v1385 = vmul.f32 %v1368, %v1379
  %v1386 = vmul.f32 %v1369, %v1379
  %v1387 = vmul.f32 %v1370, %v1379
  %v1388 = vmul.f32 %v1371, %v1379
  %v1389 = vpack.c.bf16 %v1383, %v1381
  %v1390 = vpack.c.bf16 %v1384, %v1382
  %v1391 = vpack.c.bf16 %v1387, %v1385
  %v1392 = vpack.c.bf16 %v1388, %v1386
  %1397 = vrot.lane.b32.xlu0 %v1389, 119
  %v1398 = vpop.permute.xlu0 %1397
  %1399 = vrot.lane.b32.xlu0 %v1390, 119
  %v1400 = vpop.permute.xlu0 %1399
  %1401 = vrot.lane.b32.xlu0 %v1391, 119
  %v1402 = vpop.permute.xlu0 %1401
  %1403 = vrot.lane.b32.xlu0 %v1392, 119
  %v1404 = vpop.permute.xlu0 %1403
  %v1405 = vsel %vm450, %v1398, %v1400
  %v1406 = vsel %vm450, %v1402, %v1404
  %1409 = vst [vmem:[#allocation3 + $0x80] sm:$0xff] %v1405
  %1410 = vst [vmem:[#allocation3 + $0x88] sm:$0xff] %v1406
  %v1411 = vld [vmem:[%s6] sm:$0xff]
  %v1412 = vld [vmem:[%s6 + $0x8] sm:$0xf]
  %v1413 = vld [vmem:[%s6 + $0xc] sm:$0xff]
  %v1414 = vld [vmem:[%s6 + $0x14] sm:$0xf]
  %v1415 = vld [vmem:[#allocation3] sm:$0xff]
  %v1416 = vld [vmem:[#allocation3 + $0x8] sm:$0xff]
  %v1417 = vld [vmem:[#allocation3 + $0x10] sm:$0xff]
  %v1418 = vld [vmem:[#allocation3 + $0x18] sm:$0xff]
  %v1419 = vld [vmem:[#allocation3 + $0x20] sm:$0xff]
  %v1420 = vld [vmem:[#allocation3 + $0x28] sm:$0xff]
  %v1421 = vld [vmem:[#allocation3 + $0x30] sm:$0xff]
  %v1422 = vld [vmem:[#allocation3 + $0x38] sm:$0xff]
  %v1423 = vld [vmem:[#allocation3 + $0x40] sm:$0xff]
  %v1424 = vld [vmem:[#allocation3 + $0x48] sm:$0xff]
  %v1425 = vld [vmem:[#allocation3 + $0x50] sm:$0xff]
  %v1426 = vld [vmem:[#allocation3 + $0x58] sm:$0xff]
  %v1427 = vld [vmem:[#allocation3 + $0x60] sm:$0xff]
  %v1428 = vld [vmem:[#allocation3 + $0x68] sm:$0xff]
  %v1429 = vld [vmem:[#allocation3 + $0x70] sm:$0xff]
  %v1430 = vld [vmem:[#allocation3 + $0x78] sm:$0xff]
  %v1431 = vld [vmem:[#allocation3 + $0x80] sm:$0xff]
  %v1432 = vld [vmem:[#allocation3 + $0x88] sm:$0xff]
  %v1433 = vld [vmem:[%s7] sm:$0xff]
  %v1434 = vld [vmem:[%s7 + $0x8] sm:$0xff]
  %1436 = vset.pattern.permute.xlu0 0
  %1437 = vperm.xlu0 %1436, %v1433
  %v1438 = vpop.permute.xlu0 %1437
  %1441 = vset.pattern.permute.xlu0 0
  %1442 = vperm.xlu0 %1441, %v1434
  %v1443 = vpop.permute.xlu0 %1442
  %v1449 = vunpack.c.l.b16 %v1411
  %v1450 = vunpack.c.h.b16 %v1411
  %v1451 = vunpack.c.l.b16 %v1412
  %v1452 = vunpack.c.l.b16 %v1413
  %v1453 = vunpack.c.h.b16 %v1413
  %v1454 = vunpack.c.l.b16 %v1414
  %v1455 = vpack.c.b16 %v1452, %v1449
  %v1456 = vpack.c.b16 %v1453, %v1450
  %v1457 = vpack.c.b16 %v1454, %v1451
  %v1461 = vsel %vm506, %v1457, 0
  %1463 = vmatprep.subr.bf16.mxu0 0
  %1464 = vmatpush1.bf16.msra.mxu0 %v1415
  %1465 = vmatprep.subr.bf16.mxu0 0
  %1466 = vmatpush1.bf16.msra.mxu0 %v1416
  %1467 = vmatprep.subr.bf16.mxu0 0
  %1468 = vmatpush1.bf16.msra.mxu0 %v1417
  %1469 = vmatprep.subr.bf16.mxu0 0
  %1470 = vmatpush1.bf16.msra.mxu0 %v1418
  %1471 = vmatprep.subr.bf16.mxu0 0
  %1472 = vmatpush1.bf16.msra.mxu0 %v1419
  %1473 = vmatprep.subr.bf16.mxu0 0
  %1474 = vmatpush1.bf16.msra.mxu0 %v1420
  %1475 = vmatprep.subr.bf16.mxu0 0
  %1476 = vmatpush1.bf16.msra.mxu0 %v1421
  %1477 = vmatprep.subr.bf16.mxu0 0
  %1478 = vmatpush1.bf16.msra.mxu0 %v1422
  %1479 = vmatprep.subr.bf16.mxu0 0
  %1480 = vmatpush1.bf16.msra.mxu0 %v1423
  %1481 = vmatprep.subr.bf16.mxu0 0
  %1482 = vmatpush1.bf16.msra.mxu0 %v1424
  %1483 = vmatprep.subr.bf16.mxu0 0
  %1484 = vmatpush1.bf16.msra.mxu0 %v1425
  %1485 = vmatprep.subr.bf16.mxu0 0
  %1486 = vmatpush1.bf16.msra.mxu0 %v1426
  %1487 = vmatprep.subr.bf16.mxu0 0
  %1488 = vmatpush1.bf16.msra.mxu0 %v1427
  %1489 = vmatprep.subr.bf16.mxu0 0
  %1490 = vmatpush1.bf16.msra.mxu0 %v1428
  %1491 = vmatprep.subr.bf16.mxu0 0
  %1492 = vmatpush1.bf16.msra.mxu0 %v1429
  %1493 = vmatprep.subr.bf16.mxu0 0
  %1494 = vmatpush1.bf16.msra.mxu0 %v1430
  %1495 = vmatprep.mubr.bf16.mxu0 %v1456
  %1496 = vmatmul.mubr.bf16.gmra.mrb[0].mxu0 %v1455
  %v1497 = vpop.f32.mrb[0].mxu0
  %v1498 = vadd.f32 %v1438, %v1497
  %v1499 = vpop.f32.mrb[0].mxu0
  %v1500 = vpop.f32.mrb[0].mxu0
  %v1501 = vadd.f32 %v1443, %v1500
  %v1502 = vpop.f32.mrb[0].mxu0
  %1503 = vdwg.mxu0
  %1504 = vmatprep.subr.bf16.mxu0 0
  %1505 = vmatpush1.bf16.msra.mxu0 %v1431
  %1506 = vmatprep.subr.bf16.mxu0 0
  %1507 = vmatpush1.bf16.msra.mxu0 %v1432
  %1508 = vmatprep.subr.bf16.mxu0 0
  %1509 = vmatpush1.bf16.msra.mxu0 0
  %1510 = vmatprep.subr.bf16.mxu0 0
  %1511 = vmatpush1.bf16.msra.mxu0 0
  %1512 = vmatprep.subr.bf16.mxu0 0
  %1513 = vmatpush1.bf16.msra.mxu0 0
  %1514 = vmatprep.subr.bf16.mxu0 0
  %1515 = vmatpush1.bf16.msra.mxu0 0
  %1516 = vmatprep.subr.bf16.mxu0 0
  %1517 = vmatpush1.bf16.msra.mxu0 0
  %1518 = vmatprep.subr.bf16.mxu0 0
  %1519 = vmatpush1.bf16.msra.mxu0 0
  %1520 = vmatprep.subr.bf16.mxu0 0
  %1521 = vmatpush1.bf16.msra.mxu0 0
  %1522 = vmatprep.subr.bf16.mxu0 0
  %1523 = vmatpush1.bf16.msra.mxu0 0
  %1524 = vmatprep.subr.bf16.mxu0 0
  %1525 = vmatpush1.bf16.msra.mxu0 0
  %1526 = vmatprep.subr.bf16.mxu0 0
  %1527 = vmatpush1.bf16.msra.mxu0 0
  %1528 = vmatprep.subr.bf16.mxu0 0
  %1529 = vmatpush1.bf16.msra.mxu0 0
  %1530 = vmatprep.subr.bf16.mxu0 0
  %1531 = vmatpush1.bf16.msra.mxu0 0
  %1532 = vmatprep.subr.bf16.mxu0 0
  %1533 = vmatpush1.bf16.msra.mxu0 0
  %1534 = vmatprep.subr.bf16.mxu0 0
  %1535 = vmatpush1.bf16.msra.mxu0 0
  %1536 = vmatprep.mubr.bf16.mxu0 0
  %1537 = vmatmul.mubr.bf16.gmra.mrb[0].mxu0 %v1461
  %v1538 = vpop.f32.mrb[0].mxu0
  %v1539 = vadd.f32 %v1498, %v1538
  %v1540 = vpop.f32.mrb[0].mxu0
  %v1541 = vpop.f32.mrb[0].mxu0
  %v1542 = vadd.f32 %v1501, %v1541
  %v1543 = vpop.f32.mrb[0].mxu0
  %1544 = vdwg.mxu0
  %v1545 = vmul.f32 %v1539, 0.5
  %v1546 = vmul.f32 %v1542, 0.5
  %v1547 = vmul.f32 %v1539, 0.044715
  %v1548 = vmul.f32 %v1542, 0.044715
  %v1549 = vmul.f32 %v1547, %v1539
  %v1550 = vmul.f32 %v1548, %v1542
  %v1551 = vmul.f32 %v1549, %v1539
  %v1552 = vmul.f32 %v1550, %v1542
  %v1553 = vadd.f32 %v1539, %v1551
  %v1554 = vadd.f32 %v1542, %v1552
  %v1555 = vmul.f32 %v1553, 0.7978846
  %v1556 = vmul.f32 %v1554, 0.7978846
  %v1557 = vtanh.pop %v1555
  %v1558 = vtanh.pop %v1556
  %v1559 = vadd.f32 %v1557, 1.0
  %v1560 = vadd.f32 %v1558, 1.0
  %v1561 = vmul.f32 %v1545, %v1559
  %v1562 = vmul.f32 %v1546, %v1560
  %v1563 = vadd.f32 %v608, %v1561
  %v1564 = vadd.f32 %v609, %v1562
  %1565 = vst [vmem:[%s8] sm:$0xff] %v1563
  %1566 = vst [vmem:[%s8 + $0x8] sm:$0xff] %v1564
  // Predicated region
  $region34: #{far_moduls_forward.9} parent=0 // pred_check
    _
  $region35: #{far_moduls_forward.9} parent=0 // pred_check_branch
    %1568 = sbr.rel (0) target = $region37
  $region36: #{far_moduls_forward.9} parent=0 // pred_region
    _
  $region37: #{far_moduls_forward.9} parent=0 // pred_fallthru
    _
  // Predicated region
  $region38: #{far_moduls_forward.9} parent=0 // pred_check
    _
  $region39: #{far_moduls_forward.9} parent=0 // pred_check_branch
    %1570 = sbr.rel (0) target = $region41
  $region40: #{far_moduls_forward.9} parent=0 // pred_region
    _
  $region41: #{far_moduls_forward.9} parent=0 // pred_fallthru
    _

// kernel: far_moduls_forward.7
$region0: #{far_moduls_forward.7}
  #allocation0 [shape = 'u32[]', space=smem, size = 0x4, offset = 0x4, fixed_abs, tag = 'smem constant byte address 0x4 - core index']
  #allocation1 [shape = 'u32[144,128]{1,0:T(1,128)}', space=vmem, size = 0x12000, scoped, tag = 'internal scratch']
  #allocation2 [shape = 'f32[96,384]{1,0:T(8,128)}', space=vmem, size = 0x24000, scoped, tag = 'scratch operand']
  #allocation3 [shape = 'f32[48,128]{1,0:T(8,128)}', space=vmem, size = 0x6000, scoped, tag = 'scratch operand']
  #allocation4 [shape = 'f32[16,128]{1,0:T(8,128)}', space=vmem, size = 0x2000, scoped, tag = 'scratch operand']
  #allocation5 [shape = 'f32[1,1,1]{2,1,0:T(1,128)S(1)}', space=vmem, size = 0x200, scoped, tag = 'scoped memory for far_moduls_forward.7']
  %s0 = inlined_call_operand.vmem [shape: f32[16,128], index: 0, kind: input, shape index: {}]
  %s1 = inlined_call_operand.vmem [shape: f32[9,1,128], index: 1, kind: input, shape index: {}]
  %s2 = inlined_call_operand.vmem [shape: f32[16,1], index: 2, kind: input, shape index: {}]
  %s3 = inlined_call_operand.vmem [shape: f32[16,1], index: 3, kind: input, shape index: {}]
  %s4 = inlined_call_operand.vmem [shape: bf16[48,16], index: 4, kind: input, shape index: {}]
  %s5 = inlined_call_operand.vmem [shape: f32[9,48,1], index: 5, kind: input, shape index: {}]
  %s6 = inlined_call_operand.<no memory space> [shape: f32[1,1,1], index: 6, kind: input, shape index: {}]
  %s7 = inlined_call_operand.vmem [shape: bf16[16,16], index: 7, kind: input, shape index: {}]
  %s8 = inlined_call_operand.vmem [shape: f32[16,1], index: 8, kind: input, shape index: {}]
  %s9 = inlined_call_operand.vmem [shape: f32[16,1], index: 9, kind: input, shape index: {}]
  %s10 = inlined_call_operand.vmem [shape: bf16[96,16], index: 10, kind: input, shape index: {}]
  %s11 = inlined_call_operand.vmem [shape: f32[9,96,1], index: 11, kind: input, shape index: {}]
  %s12 = inlined_call_operand.vmem [shape: bf16[16,48], index: 12, kind: input, shape index: {}]
  %s13 = inlined_call_operand.vmem [shape: f32[16,128], index: 13, kind: output, shape index: {}]
  %s14 = sld [smem:[#allocation0]]
  $region62: #{far_moduls_forward.7} parent=0
    _
  %s16 = ssub.s32 1, %s14
  %s17 = scalar_select 0, %s16, %s14
  %v18 = vstv %s6
  %19 = vst [vmem:[#allocation5] sm:$0x1] %v18
  // Predicated region
  $region2: #{far_moduls_forward.7} parent=0 // pred_check
    _
  $region3: #{far_moduls_forward.7} parent=0 // pred_check_branch
    %21 = sbr.rel (0) target = $region5
  $region4: #{far_moduls_forward.7} parent=0 // pred_region
    _
  $region5: #{far_moduls_forward.7} parent=0 // pred_fallthru
    _
  // Predicated region
  $region6: #{far_moduls_forward.7} parent=0 // pred_check
    _
  $region7: #{far_moduls_forward.7} parent=0 // pred_check_branch
    %23 = sbr.rel (0) target = $region9
  $region8: #{far_moduls_forward.7} parent=0 // pred_region
    _
  $region9: #{far_moduls_forward.7} parent=0 // pred_fallthru
    _
  // Predicated region
  $region10: #{far_moduls_forward.7} parent=0 // pred_check
    _
  $region11: #{far_moduls_forward.7} parent=0 // pred_check_branch
    %25 = sbr.rel (0) target = $region13
  $region12: #{far_moduls_forward.7} parent=0 // pred_region
    _
  $region13: #{far_moduls_forward.7} parent=0 // pred_fallthru
    _
  // Predicated region
  $region14: #{far_moduls_forward.7} parent=0 // pred_check
    _
  $region15: #{far_moduls_forward.7} parent=0 // pred_check_branch
    %27 = sbr.rel (0) target = $region17
  $region16: #{far_moduls_forward.7} parent=0 // pred_region
    _
  $region17: #{far_moduls_forward.7} parent=0 // pred_fallthru
    _
  // Predicated region
  $region18: #{far_moduls_forward.7} parent=0 // pred_check
    _
  $region19: #{far_moduls_forward.7} parent=0 // pred_check_branch
    %29 = sbr.rel (0) target = $region21
  $region20: #{far_moduls_forward.7} parent=0 // pred_region
    _
  $region21: #{far_moduls_forward.7} parent=0 // pred_fallthru
    _
  // Predicated region
  $region22: #{far_moduls_forward.7} parent=0 // pred_check
    _
  $region23: #{far_moduls_forward.7} parent=0 // pred_check_branch
    %31 = sbr.rel (0) target = $region25
  $region24: #{far_moduls_forward.7} parent=0 // pred_region
    _
  $region25: #{far_moduls_forward.7} parent=0 // pred_fallthru
    _
  // Predicated region
  $region26: #{far_moduls_forward.7} parent=0 // pred_check
    _
  $region27: #{far_moduls_forward.7} parent=0 // pred_check_branch
    %33 = sbr.rel (0) target = $region29
  $region28: #{far_moduls_forward.7} parent=0 // pred_region
    _
  $region29: #{far_moduls_forward.7} parent=0 // pred_fallthru
    _
  // Predicated region
  $region30: #{far_moduls_forward.7} parent=0 // pred_check
    _
  $region31: #{far_moduls_forward.7} parent=0 // pred_check_branch
    %35 = sbr.rel (0) target = $region33
  $region32: #{far_moduls_forward.7} parent=0 // pred_region
    _
  $region33: #{far_moduls_forward.7} parent=0 // pred_fallthru
    _
  // Predicated region
  $region34: #{far_moduls_forward.7} parent=0 // pred_check
    _
  $region35: #{far_moduls_forward.7} parent=0 // pred_check_branch
    %37 = sbr.rel (0) target = $region37
  $region36: #{far_moduls_forward.7} parent=0 // pred_region
    _
  $region37: #{far_moduls_forward.7} parent=0 // pred_fallthru
    _
  // Predicated region
  $region38: #{far_moduls_forward.7} parent=0 // pred_check
    _
  $region39: #{far_moduls_forward.7} parent=0 // pred_check_branch
    %39 = sbr.rel (0) target = $region41
  $region40: #{far_moduls_forward.7} parent=0 // pred_region
    _
  $region41: #{far_moduls_forward.7} parent=0 // pred_fallthru
    _
  // Predicated region
  $region42: #{far_moduls_forward.7} parent=0 // pred_check
    _
  $region43: #{far_moduls_forward.7} parent=0 // pred_check_branch
    %41 = sbr.rel (0) target = $region45
  $region44: #{far_moduls_forward.7} parent=0 // pred_region
    _
  $region45: #{far_moduls_forward.7} parent=0 // pred_fallthru
    _
  // Predicated region
  $region46: #{far_moduls_forward.7} parent=0 // pred_check
    _
  $region47: #{far_moduls_forward.7} parent=0 // pred_check_branch
    %43 = sbr.rel (0) target = $region49
  $region48: #{far_moduls_forward.7} parent=0 // pred_region
    _
  $region49: #{far_moduls_forward.7} parent=0 // pred_fallthru
    _
  // Predicated region
  $region50: #{far_moduls_forward.7} parent=0 // pred_check
    _
  $region51: #{far_moduls_forward.7} parent=0 // pred_check_branch
    %45 = sbr.rel (0) target = $region53
  $region52: #{far_moduls_forward.7} parent=0 // pred_region
    _
  $region53: #{far_moduls_forward.7} parent=0 // pred_fallthru
    _
  %v47 = vld [vmem:[%s0] sm:$0xff]
  %v48 = vld [vmem:[%s0 + $0x8] sm:$0xff]
  %v49 = vadd.f32 %v47, %v48
  %v50 = vrot.slane %v49, 4
  %v51 = vadd.f32 %v49, %v50
  %v52 = vrot.slane %v51, 2
  %v53 = vadd.f32 %v51, %v52
  %v54 = vrot.slane %v53, 1
  %v55 = vadd.f32 %v53, %v54
  %v56 = vrcp.pop 16.0
  %v57 = vmul.f32 %v55, %v56
  %v58 = vsub.f32 %v47, %v57
  %v59 = vsub.f32 %v48, %v57
  %v60 = vmul.f32 %v58, %v58
  %v61 = vmul.f32 %v59, %v59
  %v62 = vadd.f32 %v60, %v61
  %v63 = vrot.slane %v62, 4
  %v64 = vadd.f32 %v62, %v63
  %v65 = vrot.slane %v64, 2
  %v66 = vadd.f32 %v64, %v65
  %v67 = vrot.slane %v66, 1
  %v68 = vadd.f32 %v66, %v67
  %v69 = vmul.f32 %v68, %v56
  %v70 = vadd.f32 %v69, 1e-05
  %v71 = vrsqrt.pop %v70
  %v72 = vmul.f32 %v58, %v71
  %v73 = vmul.f32 %v59, %v71
  %v74 = vld [vmem:[%s2] sm:$0xff]
  %v75 = vld [vmem:[%s2 + $0x8] sm:$0xff]
  %77 = vset.pattern.permute.xlu0 0
  %78 = vperm.xlu0 %77, %v74
  %v79 = vpop.permute.xlu0 %78
  %82 = vset.pattern.permute.xlu0 0
  %83 = vperm.xlu0 %82, %v75
  %v84 = vpop.permute.xlu0 %83
  %v86 = vmul.f32 %v72, %v79
  %v87 = vmul.f32 %v73, %v84
  %v88 = vld [vmem:[%s3] sm:$0xff]
  %v89 = vld [vmem:[%s3 + $0x8] sm:$0xff]
  %91 = vset.pattern.permute.xlu0 0
  %92 = vperm.xlu0 %91, %v88
  %v93 = vpop.permute.xlu0 %92
  %96 = vset.pattern.permute.xlu0 0
  %97 = vperm.xlu0 %96, %v89
  %v98 = vpop.permute.xlu0 %97
  %v100 = vadd.f32 %v86, %v93
  %v101 = vadd.f32 %v87, %v98
  %v102 = vld [vmem:[%s4] sm:$0xf]
  %v103 = vld [vmem:[%s4 + $0x4] sm:$0xf]
  %v104 = vld [vmem:[%s4 + $0x8] sm:$0xf]
  %v105 = vld [vmem:[%s4 + $0xc] sm:$0xf]
  %v106 = vld [vmem:[%s4 + $0x10] sm:$0xf]
  %v107 = vld [vmem:[%s4 + $0x14] sm:$0xf]
  %v108 = vpack.c.bf16 %v101, %v100
  %v115 = vunpack.c.l.b16 %v102
  %v116 = vunpack.c.l.b16 %v103
  %v117 = vunpack.c.l.b16 %v104
  %v118 = vunpack.c.l.b16 %v105
  %v119 = vunpack.c.l.b16 %v106
  %v120 = vunpack.c.l.b16 %v107
  %v121 = vpack.c.b16 %v116, %v115
  %v122 = vpack.c.b16 %v118, %v117
  %v123 = vpack.c.b16 %v120, %v119
  %vm124 = vcmask 130048
  %v126 = vsel %vm124, %v121, 0
  %v129 = vsel %vm124, %v122, 0
  %v132 = vsel %vm124, %v123, 0
  %134 = vmatprep.subr.bf16.mxu0 0
  %135 = vmatpush1.bf16.msra.mxu0 %v108
  %136 = vmatprep.subr.bf16.mxu0 0
  %137 = vmatpush1.bf16.msra.mxu0 0
  %138 = vmatprep.subr.bf16.mxu0 0
  %139 = vmatpush1.bf16.msra.mxu0 0
  %140 = vmatprep.subr.bf16.mxu0 0
  %141 = vmatpush1.bf16.msra.mxu0 0
  %142 = vmatprep.subr.bf16.mxu0 0
  %143 = vmatpush1.bf16.msra.mxu0 0
  %144 = vmatprep.subr.bf16.mxu0 0
  %145 = vmatpush1.bf16.msra.mxu0 0
  %146 = vmatprep.subr.bf16.mxu0 0
  %147 = vmatpush1.bf16.msra.mxu0 0
  %148 = vmatprep.subr.bf16.mxu0 0
  %149 = vmatpush1.bf16.msra.mxu0 0
  %150 = vmatprep.subr.bf16.mxu0 0
  %151 = vmatpush1.bf16.msra.mxu0 0
  %152 = vmatprep.subr.bf16.mxu0 0
  %153 = vmatpush1.bf16.msra.mxu0 0
  %154 = vmatprep.subr.bf16.mxu0 0
  %155 = vmatpush1.bf16.msra.mxu0 0
  %156 = vmatprep.subr.bf16.mxu0 0
  %157 = vmatpush1.bf16.msra.mxu0 0
  %158 = vmatprep.subr.bf16.mxu0 0
  %159 = vmatpush1.bf16.msra.mxu0 0
  %160 = vmatprep.subr.bf16.mxu0 0
  %161 = vmatpush1.bf16.msra.mxu0 0
  %162 = vmatprep.subr.bf16.mxu0 0
  %163 = vmatpush1.bf16.msra.mxu0 0
  %164 = vmatprep.subr.bf16.mxu0 0
  %165 = vmatpush1.bf16.msra.mxu0 0
  %166 = vmatprep.mubr.bf16.mxu0 0
  %167 = vmatmul.mubr.bf16.gmra.mrb[0].mxu0 %v126
  %v168 = vpop.f32.mrb[0].mxu0
  %v169 = vadd.f32 0.0, %v168
  %v170 = vpop.f32.mrb[0].mxu0
  %v171 = vpop.f32.mrb[0].mxu0
  %v172 = vadd.f32 0.0, %v171
  %v173 = vpop.f32.mrb[0].mxu0
  %174 = vmatprep.mubr.bf16.mxu0 0
  %175 = vmatmul.mubr.bf16.gmra.mrb[0].mxu0 %v129
  %v176 = vpop.f32.mrb[0].mxu0
  %v177 = vadd.f32 0.0, %v176
  %v178 = vpop.f32.mrb[0].mxu0
  %v179 = vpop.f32.mrb[0].mxu0
  %v180 = vadd.f32 0.0, %v179
  %v181 = vpop.f32.mrb[0].mxu0
  %182 = vmatprep.mubr.bf16.mxu0 0
  %183 = vmatmul.mubr.bf16.gmra.mrb[0].mxu0 %v132
  %v184 = vpop.f32.mrb[0].mxu0
  %v185 = vadd.f32 0.0, %v184
  %v186 = vpop.f32.mrb[0].mxu0
  %v187 = vpop.f32.mrb[0].mxu0
  %v188 = vadd.f32 0.0, %v187
  %v189 = vpop.f32.mrb[0].mxu0
  %190 = vdwg.mxu0
  %191 = vst [vmem:[#allocation2] sm:$0xff] 0.0
  %192 = vst [vmem:[#allocation2 + $0x18] sm:$0xff] 0.0
  %193 = vst [vmem:[#allocation2 + $0x30] sm:$0xff] 0.0
  %194 = vst [vmem:[#allocation2 + $0x48] sm:$0xff] 0.0
  %195 = vst [vmem:[#allocation2 + $0x60] sm:$0xff] 0.0
  %196 = vst [vmem:[#allocation2 + $0x78] sm:$0xff] 0.0
  %197 = vst [vmem:[#allocation2 + $0x8] sm:$0xff] %v169
  %198 = vst [vmem:[#allocation2 + $0x20] sm:$0xff] %v172
  %199 = vst [vmem:[#allocation2 + $0x38] sm:$0xff] %v177
  %200 = vst [vmem:[#allocation2 + $0x50] sm:$0xff] %v180
  %201 = vst [vmem:[#allocation2 + $0x68] sm:$0xff] %v185
  %202 = vst [vmem:[#allocation2 + $0x80] sm:$0xff] %v188
  %203 = vst [vmem:[#allocation2 + $0x10] sm:$0xff] 0.0
  %204 = vst [vmem:[#allocation2 + $0x28] sm:$0xff] 0.0
  %205 = vst [vmem:[#allocation2 + $0x40] sm:$0xff] 0.0
  %206 = vst [vmem:[#allocation2 + $0x58] sm:$0xff] 0.0
  %207 = vst [vmem:[#allocation2 + $0x70] sm:$0xff] 0.0
  %208 = vst [vmem:[#allocation2 + $0x88] sm:$0xff] 0.0
  %v209 = vld [vmem:[#allocation2] sm:$0xff]
  %v210 = vld [vmem:[#allocation2 + $0x8] sm:$0xff]
  %v211 = vld [vmem:[#allocation2 + $0x18] sm:$0xff]
  %v212 = vld [vmem:[#allocation2 + $0x20] sm:$0xff]
  %v213 = vld [vmem:[#allocation2 + $0x30] sm:$0xff]
  %v214 = vld [vmem:[#allocation2 + $0x38] sm:$0xff]
  %v215 = vld [vmem:[#allocation2 + $0x48] sm:$0xff]
  %v216 = vld [vmem:[#allocation2 + $0x50] sm:$0xff]
  %v217 = vld [vmem:[#allocation2 + $0x60] sm:$0xff]
  %v218 = vld [vmem:[#allocation2 + $0x68] sm:$0xff]
  %v219 = vld [vmem:[#allocation2 + $0x78] sm:$0xff]
  %v220 = vld [vmem:[#allocation2 + $0x80] sm:$0xff]
  %v221 = vld [vmem:[%s1] sm:$0x1]
  %v223 = vlaneseq
  %v224 = vshrl.u32 %v223, 7
  %v225 = vsub.s32 0, %v224
  %v226 = vrot.slane %v221, %v225
  %227 = vrot.lane.b32.xlu0 %v226, 119
  %v228 = vpop.permute.xlu0 %227
  %v230 = vmul.f32 %v209, %v228
  %v231 = vmul.f32 %v210, %v228
  %v232 = vmul.f32 %v211, %v228
  %v233 = vmul.f32 %v212, %v228
  %v234 = vmul.f32 %v213, %v228
  %v235 = vmul.f32 %v214, %v228
  %v236 = vmul.f32 %v215, %v228
  %v237 = vmul.f32 %v216, %v228
  %v238 = vmul.f32 %v217, %v228
  %v239 = vmul.f32 %v218, %v228
  %v240 = vmul.f32 %v219, %v228
  %v241 = vmul.f32 %v220, %v228
  %v242 = vld [vmem:[%s5] sm:$0xff]
  %v243 = vld [vmem:[%s5 + $0x8] sm:$0xff]
  %v244 = vld [vmem:[%s5 + $0x10] sm:$0xff]
  %v245 = vld [vmem:[%s5 + $0x18] sm:$0xff]
  %v246 = vld [vmem:[%s5 + $0x20] sm:$0xff]
  %v247 = vld [vmem:[%s5 + $0x28] sm:$0xff]
  %249 = vset.pattern.permute.xlu0 0
  %250 = vperm.xlu0 %249, %v242
  %v251 = vpop.permute.xlu0 %250
  %254 = vset.pattern.permute.xlu0 0
  %255 = vperm.xlu0 %254, %v243
  %v256 = vpop.permute.xlu0 %255
  %259 = vset.pattern.permute.xlu0 0
  %260 = vperm.xlu0 %259, %v244
  %v261 = vpop.permute.xlu0 %260
  %264 = vset.pattern.permute.xlu0 0
  %265 = vperm.xlu0 %264, %v245
  %v266 = vpop.permute.xlu0 %265
  %269 = vset.pattern.permute.xlu0 0
  %270 = vperm.xlu0 %269, %v246
  %v271 = vpop.permute.xlu0 %270
  %274 = vset.pattern.permute.xlu0 0
  %275 = vperm.xlu0 %274, %v247
  %v276 = vpop.permute.xlu0 %275
  %v278 = vmul.f32 %v230, %v251
  %v279 = vmul.f32 %v231, %v251
  %v280 = vmul.f32 %v232, %v256
  %v281 = vmul.f32 %v233, %v256
  %v282 = vmul.f32 %v234, %v261
  %v283 = vmul.f32 %v235, %v261
  %v284 = vmul.f32 %v236, %v266
  %v285 = vmul.f32 %v237, %v266
  %v286 = vmul.f32 %v238, %v271
  %v287 = vmul.f32 %v239, %v271
  %v288 = vmul.f32 %v240, %v276
  %v289 = vmul.f32 %v241, %v276
  %v290 = vadd.f32 %v278, 0.0
  %v291 = vadd.f32 %v279, 0.0
  %v292 = vadd.f32 %v280, 0.0
  %v293 = vadd.f32 %v281, 0.0
  %v294 = vadd.f32 %v282, 0.0
  %v295 = vadd.f32 %v283, 0.0
  %v296 = vadd.f32 %v284, 0.0
  %v297 = vadd.f32 %v285, 0.0
  %v298 = vadd.f32 %v286, 0.0
  %v299 = vadd.f32 %v287, 0.0
  %v300 = vadd.f32 %v288, 0.0
  %v301 = vadd.f32 %v289, 0.0
  %s302 = scalar_lea.vmem %s1, 1
  %v303 = vld [vmem:[%s302] sm:$0x1]
  %v305 = vlaneseq
  %v306 = vshrl.u32 %v305, 7
  %v307 = vsub.s32 0, %v306
  %v308 = vrot.slane %v303, %v307
  %309 = vrot.lane.b32.xlu0 %v308, 120
  %v310 = vpop.permute.xlu0 %309
  %v312 = vmul.f32 %v209, %v310
  %v313 = vmul.f32 %v210, %v310
  %v314 = vmul.f32 %v211, %v310
  %v315 = vmul.f32 %v212, %v310
  %v316 = vmul.f32 %v213, %v310
  %v317 = vmul.f32 %v214, %v310
  %v318 = vmul.f32 %v215, %v310
  %v319 = vmul.f32 %v216, %v310
  %v320 = vmul.f32 %v217, %v310
  %v321 = vmul.f32 %v218, %v310
  %v322 = vmul.f32 %v219, %v310
  %v323 = vmul.f32 %v220, %v310
  %s324 = scalar_lea.vmem %s5, 48
  %v325 = vld [vmem:[%s324] sm:$0xff]
  %v326 = vld [vmem:[%s324 + $0x8] sm:$0xff]
  %v327 = vld [vmem:[%s324 + $0x10] sm:$0xff]
  %v328 = vld [vmem:[%s324 + $0x18] sm:$0xff]
  %v329 = vld [vmem:[%s324 + $0x20] sm:$0xff]
  %v330 = vld [vmem:[%s324 + $0x28] sm:$0xff]
  %332 = vset.pattern.permute.xlu0 0
  %333 = vperm.xlu0 %332, %v325
  %v334 = vpop.permute.xlu0 %333
  %337 = vset.pattern.permute.xlu0 0
  %338 = vperm.xlu0 %337, %v326
  %v339 = vpop.permute.xlu0 %338
  %342 = vset.pattern.permute.xlu0 0
  %343 = vperm.xlu0 %342, %v327
  %v344 = vpop.permute.xlu0 %343
  %347 = vset.pattern.permute.xlu0 0
  %348 = vperm.xlu0 %347, %v328
  %v349 = vpop.permute.xlu0 %348
  %352 = vset.pattern.permute.xlu0 0
  %353 = vperm.xlu0 %352, %v329
  %v354 = vpop.permute.xlu0 %353
  %357 = vset.pattern.permute.xlu0 0
  %358 = vperm.xlu0 %357, %v330
  %v359 = vpop.permute.xlu0 %358
  %v361 = vmul.f32 %v312, %v334
  %v362 = vmul.f32 %v313, %v334
  %v363 = vmul.f32 %v314, %v339
  %v364 = vmul.f32 %v315, %v339
  %v365 = vmul.f32 %v316, %v344
  %v366 = vmul.f32 %v317, %v344
  %v367 = vmul.f32 %v318, %v349
  %v368 = vmul.f32 %v319, %v349
  %v369 = vmul.f32 %v320, %v354
  %v370 = vmul.f32 %v321, %v354
  %v371 = vmul.f32 %v322, %v359
  %v372 = vmul.f32 %v323, %v359
  %385 = vrot.lane.b32.xlu0 %v361, 127
  %v386 = vpop.permute.xlu0 %385
  %387 = vrot.lane.b32.xlu0 %v362, 127
  %v388 = vpop.permute.xlu0 %387
  %389 = vrot.lane.b32.xlu0 %v363, 127
  %v390 = vpop.permute.xlu0 %389
  %391 = vrot.lane.b32.xlu0 %v364, 127
  %v392 = vpop.permute.xlu0 %391
  %393 = vrot.lane.b32.xlu0 %v365, 127
  %v394 = vpop.permute.xlu0 %393
  %395 = vrot.lane.b32.xlu0 %v366, 127
  %v396 = vpop.permute.xlu0 %395
  %397 = vrot.lane.b32.xlu0 %v367, 127
  %v398 = vpop.permute.xlu0 %397
  %399 = vrot.lane.b32.xlu0 %v368, 127
  %v400 = vpop.permute.xlu0 %399
  %401 = vrot.lane.b32.xlu0 %v369, 127
  %v402 = vpop.permute.xlu0 %401
  %403 = vrot.lane.b32.xlu0 %v370, 127
  %v404 = vpop.permute.xlu0 %403
  %405 = vrot.lane.b32.xlu0 %v371, 127
  %v406 = vpop.permute.xlu0 %405
  %407 = vrot.lane.b32.xlu0 %v372, 127
  %v408 = vpop.permute.xlu0 %407
  %vm409 = vcmask 1039360
  %v410 = vsel %vm409, %v386, %v388
  %v411 = vsel %vm409, %v390, %v392
  %v412 = vsel %vm409, %v394, %v396
  %v413 = vsel %vm409, %v398, %v400
  %v414 = vsel %vm409, %v402, %v404
  %v415 = vsel %vm409, %v406, %v408
  %v428 = vadd.f32 %v290, %v410
  %v429 = vadd.f32 %v291, %v388
  %v430 = vadd.f32 %v292, %v411
  %v431 = vadd.f32 %v293, %v392
  %v432 = vadd.f32 %v294, %v412
  %v433 = vadd.f32 %v295, %v396
  %v434 = vadd.f32 %v296, %v413
  %v435 = vadd.f32 %v297, %v400
  %v436 = vadd.f32 %v298, %v414
  %v437 = vadd.f32 %v299, %v404
  %v438 = vadd.f32 %v300, %v415
  %v439 = vadd.f32 %v301, %v408
  %s440 = scalar_lea.vmem %s1, 2
  %v441 = vld [vmem:[%s440] sm:$0x1]
  %v443 = vlaneseq
  %v444 = vshrl.u32 %v443, 7
  %v445 = vsub.s32 0, %v444
  %v446 = vrot.slane %v441, %v445
  %447 = vrot.lane.b32.xlu0 %v446, 121
  %v448 = vpop.permute.xlu0 %447
  %v450 = vmul.f32 %v209, %v448
  %v451 = vmul.f32 %v210, %v448
  %v452 = vmul.f32 %v211, %v448
  %v453 = vmul.f32 %v212, %v448
  %v454 = vmul.f32 %v213, %v448
  %v455 = vmul.f32 %v214, %v448
  %v456 = vmul.f32 %v215, %v448
  %v457 = vmul.f32 %v216, %v448
  %v458 = vmul.f32 %v217, %v448
  %v459 = vmul.f32 %v218, %v448
  %v460 = vmul.f32 %v219, %v448
  %v461 = vmul.f32 %v220, %v448
  %s462 = scalar_lea.vmem %s5, 96
  %v463 = vld [vmem:[%s462] sm:$0xff]
  %v464 = vld [vmem:[%s462 + $0x8] sm:$0xff]
  %v465 = vld [vmem:[%s462 + $0x10] sm:$0xff]
  %v466 = vld [vmem:[%s462 + $0x18] sm:$0xff]
  %v467 = vld [vmem:[%s462 + $0x20] sm:$0xff]
  %v468 = vld [vmem:[%s462 + $0x28] sm:$0xff]
  %470 = vset.pattern.permute.xlu0 0
  %471 = vperm.xlu0 %470, %v463
  %v472 = vpop.permute.xlu0 %471
  %475 = vset.pattern.permute.xlu0 0
  %476 = vperm.xlu0 %475, %v464
  %v477 = vpop.permute.xlu0 %476
  %480 = vset.pattern.permute.xlu0 0
  %481 = vperm.xlu0 %480, %v465
  %v482 = vpop.permute.xlu0 %481
  %485 = vset.pattern.permute.xlu0 0
  %486 = vperm.xlu0 %485, %v466
  %v487 = vpop.permute.xlu0 %486
  %490 = vset.pattern.permute.xlu0 0
  %491 = vperm.xlu0 %490, %v467
  %v492 = vpop.permute.xlu0 %491
  %495 = vset.pattern.permute.xlu0 0
  %496 = vperm.xlu0 %495, %v468
  %v497 = vpop.permute.xlu0 %496
  %v499 = vmul.f32 %v450, %v472
  %v500 = vmul.f32 %v451, %v472
  %v501 = vmul.f32 %v452, %v477
  %v502 = vmul.f32 %v453, %v477
  %v503 = vmul.f32 %v454, %v482
  %v504 = vmul.f32 %v455, %v482
  %v505 = vmul.f32 %v456, %v487
  %v506 = vmul.f32 %v457, %v487
  %v507 = vmul.f32 %v458, %v492
  %v508 = vmul.f32 %v459, %v492
  %v509 = vmul.f32 %v460, %v497
  %v510 = vmul.f32 %v461, %v497
  %523 = vrot.lane.b32.xlu0 %v499, 126
  %v524 = vpop.permute.xlu0 %523
  %525 = vrot.lane.b32.xlu0 %v500, 126
  %v526 = vpop.permute.xlu0 %525
  %527 = vrot.lane.b32.xlu0 %v501, 126
  %v528 = vpop.permute.xlu0 %527
  %529 = vrot.lane.b32.xlu0 %v502, 126
  %v530 = vpop.permute.xlu0 %529
  %531 = vrot.lane.b32.xlu0 %v503, 126
  %v532 = vpop.permute.xlu0 %531
  %533 = vrot.lane.b32.xlu0 %v504, 126
  %v534 = vpop.permute.xlu0 %533
  %535 = vrot.lane.b32.xlu0 %v505, 126
  %v536 = vpop.permute.xlu0 %535
  %537 = vrot.lane.b32.xlu0 %v506, 126
  %v538 = vpop.permute.xlu0 %537
  %539 = vrot.lane.b32.xlu0 %v507, 126
  %v540 = vpop.permute.xlu0 %539
  %541 = vrot.lane.b32.xlu0 %v508, 126
  %v542 = vpop.permute.xlu0 %541
  %543 = vrot.lane.b32.xlu0 %v509, 126
  %v544 = vpop.permute.xlu0 %543
  %545 = vrot.lane.b32.xlu0 %v510, 126
  %v546 = vpop.permute.xlu0 %545
  %vm547 = vcmask 1031168
  %v548 = vsel %vm547, %v524, %v526
  %v549 = vsel %vm547, %v528, %v530
  %v550 = vsel %vm547, %v532, %v534
  %v551 = vsel %vm547, %v536, %v538
  %v552 = vsel %vm547, %v540, %v542
  %v553 = vsel %vm547, %v544, %v546
  %v566 = vadd.f32 %v428, %v548
  %v567 = vadd.f32 %v429, %v526
  %v568 = vadd.f32 %v430, %v549
  %v569 = vadd.f32 %v431, %v530
  %v570 = vadd.f32 %v432, %v550
  %v571 = vadd.f32 %v433, %v534
  %v572 = vadd.f32 %v434, %v551
  %v573 = vadd.f32 %v435, %v538
  %v574 = vadd.f32 %v436, %v552
  %v575 = vadd.f32 %v437, %v542
  %v576 = vadd.f32 %v438, %v553
  %v577 = vadd.f32 %v439, %v546
  %s578 = scalar_lea.vmem %s1, 3
  %v579 = vld [vmem:[%s578] sm:$0x1]
  %v581 = vlaneseq
  %v582 = vshrl.u32 %v581, 7
  %v583 = vsub.s32 0, %v582
  %v584 = vrot.slane %v579, %v583
  %585 = vrot.lane.b32.xlu0 %v584, 127
  %v586 = vpop.permute.xlu0 %585
  %v588 = vmul.f32 %v209, %v586
  %v589 = vmul.f32 %v210, %v586
  %v590 = vmul.f32 %v211, %v586
  %v591 = vmul.f32 %v212, %v586
  %v592 = vmul.f32 %v213, %v586
  %v593 = vmul.f32 %v214, %v586
  %v594 = vmul.f32 %v215, %v586
  %v595 = vmul.f32 %v216, %v586
  %v596 = vmul.f32 %v217, %v586
  %v597 = vmul.f32 %v218, %v586
  %v598 = vmul.f32 %v219, %v586
  %v599 = vmul.f32 %v220, %v586
  %s600 = scalar_lea.vmem %s5, 144
  %v601 = vld [vmem:[%s600] sm:$0xff]
  %v602 = vld [vmem:[%s600 + $0x8] sm:$0xff]
  %v603 = vld [vmem:[%s600 + $0x10] sm:$0xff]
  %v604 = vld [vmem:[%s600 + $0x18] sm:$0xff]
  %v605 = vld [vmem:[%s600 + $0x20] sm:$0xff]
  %v606 = vld [vmem:[%s600 + $0x28] sm:$0xff]
  %608 = vset.pattern.permute.xlu0 0
  %609 = vperm.xlu0 %608, %v601
  %v610 = vpop.permute.xlu0 %609
  %613 = vset.pattern.permute.xlu0 0
  %614 = vperm.xlu0 %613, %v602
  %v615 = vpop.permute.xlu0 %614
  %618 = vset.pattern.permute.xlu0 0
  %619 = vperm.xlu0 %618, %v603
  %v620 = vpop.permute.xlu0 %619
  %623 = vset.pattern.permute.xlu0 0
  %624 = vperm.xlu0 %623, %v604
  %v625 = vpop.permute.xlu0 %624
  %628 = vset.pattern.permute.xlu0 0
  %629 = vperm.xlu0 %628, %v605
  %v630 = vpop.permute.xlu0 %629
  %633 = vset.pattern.permute.xlu0 0
  %634 = vperm.xlu0 %633, %v606
  %v635 = vpop.permute.xlu0 %634
  %v637 = vmul.f32 %v588, %v610
  %v638 = vmul.f32 %v589, %v610
  %v639 = vmul.f32 %v590, %v615
  %v640 = vmul.f32 %v591, %v615
  %v641 = vmul.f32 %v592, %v620
  %v642 = vmul.f32 %v593, %v620
  %v643 = vmul.f32 %v594, %v625
  %v644 = vmul.f32 %v595, %v625
  %v645 = vmul.f32 %v596, %v630
  %v646 = vmul.f32 %v597, %v630
  %v647 = vmul.f32 %v598, %v635
  %v648 = vmul.f32 %v599, %v635
  %661 = vrot.lane.b32.xlu0 %v637, 120
  %v662 = vpop.permute.xlu0 %661
  %663 = vrot.lane.b32.xlu0 %v638, 120
  %v664 = vpop.permute.xlu0 %663
  %665 = vrot.lane.b32.xlu0 %v639, 120
  %v666 = vpop.permute.xlu0 %665
  %667 = vrot.lane.b32.xlu0 %v640, 120
  %v668 = vpop.permute.xlu0 %667
  %669 = vrot.lane.b32.xlu0 %v641, 120
  %v670 = vpop.permute.xlu0 %669
  %671 = vrot.lane.b32.xlu0 %v642, 120
  %v672 = vpop.permute.xlu0 %671
  %673 = vrot.lane.b32.xlu0 %v643, 120
  %v674 = vpop.permute.xlu0 %673
  %675 = vrot.lane.b32.xlu0 %v644, 120
  %v676 = vpop.permute.xlu0 %675
  %677 = vrot.lane.b32.xlu0 %v645, 120
  %v678 = vpop.permute.xlu0 %677
  %679 = vrot.lane.b32.xlu0 %v646, 120
  %v680 = vpop.permute.xlu0 %679
  %681 = vrot.lane.b32.xlu0 %v647, 120
  %v682 = vpop.permute.xlu0 %681
  %683 = vrot.lane.b32.xlu0 %v648, 120
  %v684 = vpop.permute.xlu0 %683
  %vm685 = vcmask 982016
  %v686 = vsel %vm685, %v662, %v664
  %v687 = vsel %vm685, %v666, %v668
  %v688 = vsel %vm685, %v670, %v672
  %v689 = vsel %vm685, %v674, %v676
  %v690 = vsel %vm685, %v678, %v680
  %v691 = vsel %vm685, %v682, %v684
  %v704 = vadd.f32 %v566, %v686
  %v705 = vadd.f32 %v567, %v664
  %v706 = vadd.f32 %v568, %v687
  %v707 = vadd.f32 %v569, %v668
  %v708 = vadd.f32 %v570, %v688
  %v709 = vadd.f32 %v571, %v672
  %v710 = vadd.f32 %v572, %v689
  %v711 = vadd.f32 %v573, %v676
  %v712 = vadd.f32 %v574, %v690
  %v713 = vadd.f32 %v575, %v680
  %v714 = vadd.f32 %v576, %v691
  %v715 = vadd.f32 %v577, %v684
  %s716 = scalar_lea.vmem %s1, 4
  %v717 = vld [vmem:[%s716] sm:$0x1]
  %v719 = vlaneseq
  %v720 = vshrl.u32 %v719, 7
  %v721 = vsub.s32 0, %v720
  %v722 = vrot.slane %v717, %v721
  %v724 = vmul.f32 %v210, %v722
  %v725 = vmul.f32 %v212, %v722
  %v726 = vmul.f32 %v214, %v722
  %v727 = vmul.f32 %v216, %v722
  %v728 = vmul.f32 %v218, %v722
  %v729 = vmul.f32 %v220, %v722
  %s730 = scalar_lea.vmem %s5, 192
  %v731 = vld [vmem:[%s730] sm:$0xff]
  %v732 = vld [vmem:[%s730 + $0x8] sm:$0xff]
  %v733 = vld [vmem:[%s730 + $0x10] sm:$0xff]
  %v734 = vld [vmem:[%s730 + $0x18] sm:$0xff]
  %v735 = vld [vmem:[%s730 + $0x20] sm:$0xff]
  %v736 = vld [vmem:[%s730 + $0x28] sm:$0xff]
  %738 = vset.pattern.permute.xlu0 0
  %739 = vperm.xlu0 %738, %v731
  %v740 = vpop.permute.xlu0 %739
  %743 = vset.pattern.permute.xlu0 0
  %744 = vperm.xlu0 %743, %v732
  %v745 = vpop.permute.xlu0 %744
  %748 = vset.pattern.permute.xlu0 0
  %749 = vperm.xlu0 %748, %v733
  %v750 = vpop.permute.xlu0 %749
  %753 = vset.pattern.permute.xlu0 0
  %754 = vperm.xlu0 %753, %v734
  %v755 = vpop.permute.xlu0 %754
  %758 = vset.pattern.permute.xlu0 0
  %759 = vperm.xlu0 %758, %v735
  %v760 = vpop.permute.xlu0 %759
  %763 = vset.pattern.permute.xlu0 0
  %764 = vperm.xlu0 %763, %v736
  %v765 = vpop.permute.xlu0 %764
  %v767 = vmul.f32 %v724, %v740
  %v768 = vmul.f32 %v725, %v745
  %v769 = vmul.f32 %v726, %v750
  %v770 = vmul.f32 %v727, %v755
  %v771 = vmul.f32 %v728, %v760
  %v772 = vmul.f32 %v729, %v765
  %779 = vrot.lane.b32.xlu0 %v767, 119
  %v780 = vpop.permute.xlu0 %779
  %781 = vrot.lane.b32.xlu0 %v768, 119
  %v782 = vpop.permute.xlu0 %781
  %783 = vrot.lane.b32.xlu0 %v769, 119
  %v784 = vpop.permute.xlu0 %783
  %785 = vrot.lane.b32.xlu0 %v770, 119
  %v786 = vpop.permute.xlu0 %785
  %787 = vrot.lane.b32.xlu0 %v771, 119
  %v788 = vpop.permute.xlu0 %787
  %789 = vrot.lane.b32.xlu0 %v772, 119
  %v790 = vpop.permute.xlu0 %789
  %v797 = vadd.f32 %v704, %v780
  %v798 = vadd.f32 %v705, %v780
  %v799 = vadd.f32 %v706, %v782
  %v800 = vadd.f32 %v707, %v782
  %v801 = vadd.f32 %v708, %v784
  %v802 = vadd.f32 %v709, %v784
  %v803 = vadd.f32 %v710, %v786
  %v804 = vadd.f32 %v711, %v786
  %v805 = vadd.f32 %v712, %v788
  %v806 = vadd.f32 %v713, %v788
  %v807 = vadd.f32 %v714, %v790
  %v808 = vadd.f32 %v715, %v790
  %v809 = vld [vmem:[#allocation2 + $0x8] sm:$0xff]
  %v810 = vld [vmem:[#allocation2 + $0x10] sm:$0xff]
  %v811 = vld [vmem:[#allocation2 + $0x20] sm:$0xff]
  %v812 = vld [vmem:[#allocation2 + $0x28] sm:$0xff]
  %v813 = vld [vmem:[#allocation2 + $0x38] sm:$0xff]
  %v814 = vld [vmem:[#allocation2 + $0x40] sm:$0xff]
  %v815 = vld [vmem:[#allocation2 + $0x50] sm:$0xff]
  %v816 = vld [vmem:[#allocation2 + $0x58] sm:$0xff]
  %v817 = vld [vmem:[#allocation2 + $0x68] sm:$0xff]
  %v818 = vld [vmem:[#allocation2 + $0x70] sm:$0xff]
  %v819 = vld [vmem:[#allocation2 + $0x80] sm:$0xff]
  %v820 = vld [vmem:[#allocation2 + $0x88] sm:$0xff]
  %s821 = scalar_lea.vmem %s1, 5
  %v822 = vld [vmem:[%s821] sm:$0x1]
  %v824 = vlaneseq
  %v825 = vshrl.u32 %v824, 7
  %v826 = vsub.s32 0, %v825
  %v827 = vrot.slane %v822, %v826
  %828 = vrot.lane.b32.xlu0 %v827, 1
  %v829 = vpop.permute.xlu0 %828
  %v831 = vmul.f32 %v809, %v829
  %v832 = vmul.f32 %v810, %v829
  %v833 = vmul.f32 %v811, %v829
  %v834 = vmul.f32 %v812, %v829
  %v835 = vmul.f32 %v813, %v829
  %v836 = vmul.f32 %v814, %v829
  %v837 = vmul.f32 %v815, %v829
  %v838 = vmul.f32 %v816, %v829
  %v839 = vmul.f32 %v817, %v829
  %v840 = vmul.f32 %v818, %v829
  %v841 = vmul.f32 %v819, %v829
  %v842 = vmul.f32 %v820, %v829
  %s843 = scalar_lea.vmem %s5, 240
  %v844 = vld [vmem:[%s843] sm:$0xff]
  %v845 = vld [vmem:[%s843 + $0x8] sm:$0xff]
  %v846 = vld [vmem:[%s843 + $0x10] sm:$0xff]
  %v847 = vld [vmem:[%s843 + $0x18] sm:$0xff]
  %v848 = vld [vmem:[%s843 + $0x20] sm:$0xff]
  %v849 = vld [vmem:[%s843 + $0x28] sm:$0xff]
  %851 = vset.pattern.permute.xlu0 0
  %852 = vperm.xlu0 %851, %v844
  %v853 = vpop.permute.xlu0 %852
  %856 = vset.pattern.permute.xlu0 0
  %857 = vperm.xlu0 %856, %v845
  %v858 = vpop.permute.xlu0 %857
  %861 = vset.pattern.permute.xlu0 0
  %862 = vperm.xlu0 %861, %v846
  %v863 = vpop.permute.xlu0 %862
  %866 = vset.pattern.permute.xlu0 0
  %867 = vperm.xlu0 %866, %v847
  %v868 = vpop.permute.xlu0 %867
  %871 = vset.pattern.permute.xlu0 0
  %872 = vperm.xlu0 %871, %v848
  %v873 = vpop.permute.xlu0 %872
  %876 = vset.pattern.permute.xlu0 0
  %877 = vperm.xlu0 %876, %v849
  %v878 = vpop.permute.xlu0 %877
  %v880 = vmul.f32 %v831, %v853
  %v881 = vmul.f32 %v832, %v853
  %v882 = vmul.f32 %v833, %v858
  %v883 = vmul.f32 %v834, %v858
  %v884 = vmul.f32 %v835, %v863
  %v885 = vmul.f32 %v836, %v863
  %v886 = vmul.f32 %v837, %v868
  %v887 = vmul.f32 %v838, %v868
  %v888 = vmul.f32 %v839, %v873
  %v889 = vmul.f32 %v840, %v873
  %v890 = vmul.f32 %v841, %v878
  %v891 = vmul.f32 %v842, %v878
  %904 = vrot.lane.b32.xlu0 %v880, 118
  %v905 = vpop.permute.xlu0 %904
  %906 = vrot.lane.b32.xlu0 %v881, 118
  %v907 = vpop.permute.xlu0 %906
  %908 = vrot.lane.b32.xlu0 %v882, 118
  %v909 = vpop.permute.xlu0 %908
  %910 = vrot.lane.b32.xlu0 %v883, 118
  %v911 = vpop.permute.xlu0 %910
  %912 = vrot.lane.b32.xlu0 %v884, 118
  %v913 = vpop.permute.xlu0 %912
  %914 = vrot.lane.b32.xlu0 %v885, 118
  %v915 = vpop.permute.xlu0 %914
  %916 = vrot.lane.b32.xlu0 %v886, 118
  %v917 = vpop.permute.xlu0 %916
  %918 = vrot.lane.b32.xlu0 %v887, 118
  %v919 = vpop.permute.xlu0 %918
  %920 = vrot.lane.b32.xlu0 %v888, 118
  %v921 = vpop.permute.xlu0 %920
  %922 = vrot.lane.b32.xlu0 %v889, 118
  %v923 = vpop.permute.xlu0 %922
  %924 = vrot.lane.b32.xlu0 %v890, 118
  %v925 = vpop.permute.xlu0 %924
  %926 = vrot.lane.b32.xlu0 %v891, 118
  %v927 = vpop.permute.xlu0 %926
  %vm928 = vcmask 965632
  %v929 = vsel %vm928, %v905, %v907
  %v930 = vsel %vm928, %v909, %v911
  %v931 = vsel %vm928, %v913, %v915
  %v932 = vsel %vm928, %v917, %v919
  %v933 = vsel %vm928, %v921, %v923
  %v934 = vsel %vm928, %v925, %v927
  %v947 = vadd.f32 %v797, %v905
  %v948 = vadd.f32 %v798, %v929
  %v949 = vadd.f32 %v799, %v909
  %v950 = vadd.f32 %v800, %v930
  %v951 = vadd.f32 %v801, %v913
  %v952 = vadd.f32 %v802, %v931
  %v953 = vadd.f32 %v803, %v917
  %v954 = vadd.f32 %v804, %v932
  %v955 = vadd.f32 %v805, %v921
  %v956 = vadd.f32 %v806, %v933
  %v957 = vadd.f32 %v807, %v925
  %v958 = vadd.f32 %v808, %v934
  %s959 = scalar_lea.vmem %s1, 6
  %v960 = vld [vmem:[%s959] sm:$0x1]
  %v962 = vlaneseq
  %v963 = vshrl.u32 %v962, 7
  %v964 = vsub.s32 0, %v963
  %v965 = vrot.slane %v960, %v964
  %966 = vrot.lane.b32.xlu0 %v965, 7
  %v967 = vpop.permute.xlu0 %966
  %v969 = vmul.f32 %v809, %v967
  %v970 = vmul.f32 %v810, %v967
  %v971 = vmul.f32 %v811, %v967
  %v972 = vmul.f32 %v812, %v967
  %v973 = vmul.f32 %v813, %v967
  %v974 = vmul.f32 %v814, %v967
  %v975 = vmul.f32 %v815, %v967
  %v976 = vmul.f32 %v816, %v967
  %v977 = vmul.f32 %v817, %v967
  %v978 = vmul.f32 %v818, %v967
  %v979 = vmul.f32 %v819, %v967
  %v980 = vmul.f32 %v820, %v967
  %s981 = scalar_lea.vmem %s5, 288
  %v982 = vld [vmem:[%s981] sm:$0xff]
  %v983 = vld [vmem:[%s981 + $0x8] sm:$0xff]
  %v984 = vld [vmem:[%s981 + $0x10] sm:$0xff]
  %v985 = vld [vmem:[%s981 + $0x18] sm:$0xff]
  %v986 = vld [vmem:[%s981 + $0x20] sm:$0xff]
  %v987 = vld [vmem:[%s981 + $0x28] sm:$0xff]
  %989 = vset.pattern.permute.xlu0 0
  %990 = vperm.xlu0 %989, %v982
  %v991 = vpop.permute.xlu0 %990
  %994 = vset.pattern.permute.xlu0 0
  %995 = vperm.xlu0 %994, %v983
  %v996 = vpop.permute.xlu0 %995
  %999 = vset.pattern.permute.xlu0 0
  %1000 = vperm.xlu0 %999, %v984
  %v1001 = vpop.permute.xlu0 %1000
  %1004 = vset.pattern.permute.xlu0 0
  %1005 = vperm.xlu0 %1004, %v985
  %v1006 = vpop.permute.xlu0 %1005
  %1009 = vset.pattern.permute.xlu0 0
  %1010 = vperm.xlu0 %1009, %v986
  %v1011 = vpop.permute.xlu0 %1010
  %1014 = vset.pattern.permute.xlu0 0
  %1015 = vperm.xlu0 %1014, %v987
  %v1016 = vpop.permute.xlu0 %1015
  %v1018 = vmul.f32 %v969, %v991
  %v1019 = vmul.f32 %v970, %v991
  %v1020 = vmul.f32 %v971, %v996
  %v1021 = vmul.f32 %v972, %v996
  %v1022 = vmul.f32 %v973, %v1001
  %v1023 = vmul.f32 %v974, %v1001
  %v1024 = vmul.f32 %v975, %v1006
  %v1025 = vmul.f32 %v976, %v1006
  %v1026 = vmul.f32 %v977, %v1011
  %v1027 = vmul.f32 %v978, %v1011
  %v1028 = vmul.f32 %v979, %v1016
  %v1029 = vmul.f32 %v980, %v1016
  %1042 = vrot.lane.b32.xlu0 %v1018, 112
  %v1043 = vpop.permute.xlu0 %1042
  %1044 = vrot.lane.b32.xlu0 %v1019, 112
  %v1045 = vpop.permute.xlu0 %1044
  %1046 = vrot.lane.b32.xlu0 %v1020, 112
  %v1047 = vpop.permute.xlu0 %1046
  %1048 = vrot.lane.b32.xlu0 %v1021, 112
  %v1049 = vpop.permute.xlu0 %1048
  %1050 = vrot.lane.b32.xlu0 %v1022, 112
  %v1051 = vpop.permute.xlu0 %1050
  %1052 = vrot.lane.b32.xlu0 %v1023, 112
  %v1053 = vpop.permute.xlu0 %1052
  %1054 = vrot.lane.b32.xlu0 %v1024, 112
  %v1055 = vpop.permute.xlu0 %1054
  %1056 = vrot.lane.b32.xlu0 %v1025, 112
  %v1057 = vpop.permute.xlu0 %1056
  %1058 = vrot.lane.b32.xlu0 %v1026, 112
  %v1059 = vpop.permute.xlu0 %1058
  %1060 = vrot.lane.b32.xlu0 %v1027, 112
  %v1061 = vpop.permute.xlu0 %1060
  %1062 = vrot.lane.b32.xlu0 %v1028, 112
  %v1063 = vpop.permute.xlu0 %1062
  %1064 = vrot.lane.b32.xlu0 %v1029, 112
  %v1065 = vpop.permute.xlu0 %1064
  %vm1066 = vcmask 916480
  %v1067 = vsel %vm1066, %v1043, %v1045
  %v1068 = vsel %vm1066, %v1047, %v1049
  %v1069 = vsel %vm1066, %v1051, %v1053
  %v1070 = vsel %vm1066, %v1055, %v1057
  %v1071 = vsel %vm1066, %v1059, %v1061
  %v1072 = vsel %vm1066, %v1063, %v1065
  %v1085 = vadd.f32 %v947, %v1043
  %v1086 = vadd.f32 %v948, %v1067
  %v1087 = vadd.f32 %v949, %v1047
  %v1088 = vadd.f32 %v950, %v1068
  %v1089 = vadd.f32 %v951, %v1051
  %v1090 = vadd.f32 %v952, %v1069
  %v1091 = vadd.f32 %v953, %v1055
  %v1092 = vadd.f32 %v954, %v1070
  %v1093 = vadd.f32 %v955, %v1059
  %v1094 = vadd.f32 %v956, %v1071
  %v1095 = vadd.f32 %v957, %v1063
  %v1096 = vadd.f32 %v958, %v1072
  %s1097 = scalar_lea.vmem %s1, 7
  %v1098 = vld [vmem:[%s1097] sm:$0x1]
  %v1100 = vlaneseq
  %v1101 = vshrl.u32 %v1100, 7
  %v1102 = vsub.s32 0, %v1101
  %v1103 = vrot.slane %v1098, %v1102
  %1104 = vrot.lane.b32.xlu0 %v1103, 8
  %v1105 = vpop.permute.xlu0 %1104
  %v1107 = vmul.f32 %v809, %v1105
  %v1108 = vmul.f32 %v810, %v1105
  %v1109 = vmul.f32 %v811, %v1105
  %v1110 = vmul.f32 %v812, %v1105
  %v1111 = vmul.f32 %v813, %v1105
  %v1112 = vmul.f32 %v814, %v1105
  %v1113 = vmul.f32 %v815, %v1105
  %v1114 = vmul.f32 %v816, %v1105
  %v1115 = vmul.f32 %v817, %v1105
  %v1116 = vmul.f32 %v818, %v1105
  %v1117 = vmul.f32 %v819, %v1105
  %v1118 = vmul.f32 %v820, %v1105
  %s1119 = scalar_lea.vmem %s5, 336
  %v1120 = vld [vmem:[%s1119] sm:$0xff]
  %v1121 = vld [vmem:[%s1119 + $0x8] sm:$0xff]
  %v1122 = vld [vmem:[%s1119 + $0x10] sm:$0xff]
  %v1123 = vld [vmem:[%s1119 + $0x18] sm:$0xff]
  %v1124 = vld [vmem:[%s1119 + $0x20] sm:$0xff]
  %v1125 = vld [vmem:[%s1119 + $0x28] sm:$0xff]
  %1127 = vset.pattern.permute.xlu0 0
  %1128 = vperm.xlu0 %1127, %v1120
  %v1129 = vpop.permute.xlu0 %1128
  %1132 = vset.pattern.permute.xlu0 0
  %1133 = vperm.xlu0 %1132, %v1121
  %v1134 = vpop.permute.xlu0 %1133
  %1137 = vset.pattern.permute.xlu0 0
  %1138 = vperm.xlu0 %1137, %v1122
  %v1139 = vpop.permute.xlu0 %1138
  %1142 = vset.pattern.permute.xlu0 0
  %1143 = vperm.xlu0 %1142, %v1123
  %v1144 = vpop.permute.xlu0 %1143
  %1147 = vset.pattern.permute.xlu0 0
  %1148 = vperm.xlu0 %1147, %v1124
  %v1149 = vpop.permute.xlu0 %1148
  %1152 = vset.pattern.permute.xlu0 0
  %1153 = vperm.xlu0 %1152, %v1125
  %v1154 = vpop.permute.xlu0 %1153
  %v1156 = vmul.f32 %v1107, %v1129
  %v1157 = vmul.f32 %v1108, %v1129
  %v1158 = vmul.f32 %v1109, %v1134
  %v1159 = vmul.f32 %v1110, %v1134
  %v1160 = vmul.f32 %v1111, %v1139
  %v1161 = vmul.f32 %v1112, %v1139
  %v1162 = vmul.f32 %v1113, %v1144
  %v1163 = vmul.f32 %v1114, %v1144
  %v1164 = vmul.f32 %v1115, %v1149
  %v1165 = vmul.f32 %v1116, %v1149
  %v1166 = vmul.f32 %v1117, %v1154
  %v1167 = vmul.f32 %v1118, %v1154
  %1180 = vrot.lane.b32.xlu0 %v1156, 111
  %v1181 = vpop.permute.xlu0 %1180
  %1182 = vrot.lane.b32.xlu0 %v1157, 111
  %v1183 = vpop.permute.xlu0 %1182
  %1184 = vrot.lane.b32.xlu0 %v1158, 111
  %v1185 = vpop.permute.xlu0 %1184
  %1186 = vrot.lane.b32.xlu0 %v1159, 111
  %v1187 = vpop.permute.xlu0 %1186
  %1188 = vrot.lane.b32.xlu0 %v1160, 111
  %v1189 = vpop.permute.xlu0 %1188
  %1190 = vrot.lane.b32.xlu0 %v1161, 111
  %v1191 = vpop.permute.xlu0 %1190
  %1192 = vrot.lane.b32.xlu0 %v1162, 111
  %v1193 = vpop.permute.xlu0 %1192
  %1194 = vrot.lane.b32.xlu0 %v1163, 111
  %v1195 = vpop.permute.xlu0 %1194
  %1196 = vrot.lane.b32.xlu0 %v1164, 111
  %v1197 = vpop.permute.xlu0 %1196
  %1198 = vrot.lane.b32.xlu0 %v1165, 111
  %v1199 = vpop.permute.xlu0 %1198
  %1200 = vrot.lane.b32.xlu0 %v1166, 111
  %v1201 = vpop.permute.xlu0 %1200
  %1202 = vrot.lane.b32.xlu0 %v1167, 111
  %v1203 = vpop.permute.xlu0 %1202
  %vm1204 = vcmask 908288
  %v1205 = vsel %vm1204, %v1181, %v1183
  %v1206 = vsel %vm1204, %v1185, %v1187
  %v1207 = vsel %vm1204, %v1189, %v1191
  %v1208 = vsel %vm1204, %v1193, %v1195
  %v1209 = vsel %vm1204, %v1197, %v1199
  %v1210 = vsel %vm1204, %v1201, %v1203
  %v1223 = vadd.f32 %v1085, %v1181
  %v1224 = vadd.f32 %v1086, %v1205
  %v1225 = vadd.f32 %v1087, %v1185
  %v1226 = vadd.f32 %v1088, %v1206
  %v1227 = vadd.f32 %v1089, %v1189
  %v1228 = vadd.f32 %v1090, %v1207
  %v1229 = vadd.f32 %v1091, %v1193
  %v1230 = vadd.f32 %v1092, %v1208
  %v1231 = vadd.f32 %v1093, %v1197
  %v1232 = vadd.f32 %v1094, %v1209
  %v1233 = vadd.f32 %v1095, %v1201
  %v1234 = vadd.f32 %v1096, %v1210
  %s1235 = scalar_lea.vmem %s1, 8
  %v1236 = vld [vmem:[%s1235] sm:$0x1]
  %v1238 = vlaneseq
  %v1239 = vshrl.u32 %v1238, 7
  %v1240 = vsub.s32 0, %v1239
  %v1241 = vrot.slane %v1236, %v1240
  %1242 = vrot.lane.b32.xlu0 %v1241, 9
  %v1243 = vpop.permute.xlu0 %1242
  %v1245 = vmul.f32 %v809, %v1243
  %v1246 = vmul.f32 %v810, %v1243
  %v1247 = vmul.f32 %v811, %v1243
  %v1248 = vmul.f32 %v812, %v1243
  %v1249 = vmul.f32 %v813, %v1243
  %v1250 = vmul.f32 %v814, %v1243
  %v1251 = vmul.f32 %v815, %v1243
  %v1252 = vmul.f32 %v816, %v1243
  %v1253 = vmul.f32 %v817, %v1243
  %v1254 = vmul.f32 %v818, %v1243
  %v1255 = vmul.f32 %v819, %v1243
  %v1256 = vmul.f32 %v820, %v1243
  %s1257 = scalar_lea.vmem %s5, 384
  %v1258 = vld [vmem:[%s1257] sm:$0xff]
  %v1259 = vld [vmem:[%s1257 + $0x8] sm:$0xff]
  %v1260 = vld [vmem:[%s1257 + $0x10] sm:$0xff]
  %v1261 = vld [vmem:[%s1257 + $0x18] sm:$0xff]
  %v1262 = vld [vmem:[%s1257 + $0x20] sm:$0xff]
  %v1263 = vld [vmem:[%s1257 + $0x28] sm:$0xff]
  %1265 = vset.pattern.permute.xlu0 0
  %1266 = vperm.xlu0 %1265, %v1258
  %v1267 = vpop.permute.xlu0 %1266
  %1270 = vset.pattern.permute.xlu0 0
  %1271 = vperm.xlu0 %1270, %v1259
  %v1272 = vpop.permute.xlu0 %1271
  %1275 = vset.pattern.permute.xlu0 0
  %1276 = vperm.xlu0 %1275, %v1260
  %v1277 = vpop.permute.xlu0 %1276
  %1280 = vset.pattern.permute.xlu0 0
  %1281 = vperm.xlu0 %1280, %v1261
  %v1282 = vpop.permute.xlu0 %1281
  %1285 = vset.pattern.permute.xlu0 0
  %1286 = vperm.xlu0 %1285, %v1262
  %v1287 = vpop.permute.xlu0 %1286
  %1290 = vset.pattern.permute.xlu0 0
  %1291 = vperm.xlu0 %1290, %v1263
  %v1292 = vpop.permute.xlu0 %1291
  %v1294 = vmul.f32 %v1245, %v1267
  %v1295 = vmul.f32 %v1246, %v1267
  %v1296 = vmul.f32 %v1247, %v1272
  %v1297 = vmul.f32 %v1248, %v1272
  %v1298 = vmul.f32 %v1249, %v1277
  %v1299 = vmul.f32 %v1250, %v1277
  %v1300 = vmul.f32 %v1251, %v1282
  %v1301 = vmul.f32 %v1252, %v1282
  %v1302 = vmul.f32 %v1253, %v1287
  %v1303 = vmul.f32 %v1254, %v1287
  %v1304 = vmul.f32 %v1255, %v1292
  %v1305 = vmul.f32 %v1256, %v1292
  %1318 = vrot.lane.b32.xlu0 %v1294, 110
  %v1319 = vpop.permute.xlu0 %1318
  %1320 = vrot.lane.b32.xlu0 %v1295, 110
  %v1321 = vpop.permute.xlu0 %1320
  %1322 = vrot.lane.b32.xlu0 %v1296, 110
  %v1323 = vpop.permute.xlu0 %1322
  %1324 = vrot.lane.b32.xlu0 %v1297, 110
  %v1325 = vpop.permute.xlu0 %1324
  %1326 = vrot.lane.b32.xlu0 %v1298, 110
  %v1327 = vpop.permute.xlu0 %1326
  %1328 = vrot.lane.b32.xlu0 %v1299, 110
  %v1329 = vpop.permute.xlu0 %1328
  %1330 = vrot.lane.b32.xlu0 %v1300, 110
  %v1331 = vpop.permute.xlu0 %1330
  %1332 = vrot.lane.b32.xlu0 %v1301, 110
  %v1333 = vpop.permute.xlu0 %1332
  %1334 = vrot.lane.b32.xlu0 %v1302, 110
  %v1335 = vpop.permute.xlu0 %1334
  %1336 = vrot.lane.b32.xlu0 %v1303, 110
  %v1337 = vpop.permute.xlu0 %1336
  %1338 = vrot.lane.b32.xlu0 %v1304, 110
  %v1339 = vpop.permute.xlu0 %1338
  %1340 = vrot.lane.b32.xlu0 %v1305, 110
  %v1341 = vpop.permute.xlu0 %1340
  %vm1342 = vcmask 900096
  %v1343 = vsel %vm1342, %v1319, %v1321
  %v1344 = vsel %vm1342, %v1323, %v1325
  %v1345 = vsel %vm1342, %v1327, %v1329
  %v1346 = vsel %vm1342, %v1331, %v1333
  %v1347 = vsel %vm1342, %v1335, %v1337
  %v1348 = vsel %vm1342, %v1339, %v1341
  %v1361 = vadd.f32 %v1223, %v1319
  %v1362 = vadd.f32 %v1224, %v1343
  %v1363 = vadd.f32 %v1225, %v1323
  %v1364 = vadd.f32 %v1226, %v1344
  %v1365 = vadd.f32 %v1227, %v1327
  %v1366 = vadd.f32 %v1228, %v1345
  %v1367 = vadd.f32 %v1229, %v1331
  %v1368 = vadd.f32 %v1230, %v1346
  %v1369 = vadd.f32 %v1231, %v1335
  %v1370 = vadd.f32 %v1232, %v1347
  %v1371 = vadd.f32 %v1233, %v1339
  %v1372 = vadd.f32 %v1234, %v1348
  %1385 = vrot.lane.b32.xlu0 %v1361, 9
  %v1386 = vpop.permute.xlu0 %1385
  %1387 = vrot.lane.b32.xlu0 %v1362, 9
  %v1388 = vpop.permute.xlu0 %1387
  %1389 = vrot.lane.b32.xlu0 %v1363, 9
  %v1390 = vpop.permute.xlu0 %1389
  %1391 = vrot.lane.b32.xlu0 %v1364, 9
  %v1392 = vpop.permute.xlu0 %1391
  %1393 = vrot.lane.b32.xlu0 %v1365, 9
  %v1394 = vpop.permute.xlu0 %1393
  %1395 = vrot.lane.b32.xlu0 %v1366, 9
  %v1396 = vpop.permute.xlu0 %1395
  %1397 = vrot.lane.b32.xlu0 %v1367, 9
  %v1398 = vpop.permute.xlu0 %1397
  %1399 = vrot.lane.b32.xlu0 %v1368, 9
  %v1400 = vpop.permute.xlu0 %1399
  %1401 = vrot.lane.b32.xlu0 %v1369, 9
  %v1402 = vpop.permute.xlu0 %1401
  %1403 = vrot.lane.b32.xlu0 %v1370, 9
  %v1404 = vpop.permute.xlu0 %1403
  %1405 = vrot.lane.b32.xlu0 %v1371, 9
  %v1406 = vpop.permute.xlu0 %1405
  %1407 = vrot.lane.b32.xlu0 %v1372, 9
  %v1408 = vpop.permute.xlu0 %1407
  %vm1409 = vcmask 72704
  %v1410 = vsel %vm1409, %v1386, %v1388
  %v1411 = vsel %vm1409, %v1390, %v1392
  %v1412 = vsel %vm1409, %v1394, %v1396
  %v1413 = vsel %vm1409, %v1398, %v1400
  %v1414 = vsel %vm1409, %v1402, %v1404
  %v1415 = vsel %vm1409, %v1406, %v1408
  %1422 = vst [vmem:[#allocation3] sm:$0xff] %v1410
  %1423 = vst [vmem:[#allocation3 + $0x8] sm:$0xff] %v1411
  %1424 = vst [vmem:[#allocation3 + $0x10] sm:$0xff] %v1412
  %1425 = vst [vmem:[#allocation3 + $0x18] sm:$0xff] %v1413
  %1426 = vst [vmem:[#allocation3 + $0x20] sm:$0xff] %v1414
  %1427 = vst [vmem:[#allocation3 + $0x28] sm:$0xff] %v1415
  %v1428 = vld [vmem:[#allocation3] sm:$0xff]
  %v1429 = vld [vmem:[#allocation3 + $0x8] sm:$0xff]
  %v1430 = vld [vmem:[#allocation3 + $0x10] sm:$0xff]
  %v1431 = vld [vmem:[#allocation3 + $0x18] sm:$0xff]
  %v1432 = vld [vmem:[#allocation3 + $0x20] sm:$0xff]
  %v1433 = vld [vmem:[#allocation3 + $0x28] sm:$0xff]
  %v1434 = vmul.f32 %v1428, %v1428
  %v1435 = vmul.f32 %v1429, %v1429
  %vm1436 = vcmask 523264
  %v1437 = vsel %vm1436, %v1434, 0.0
  %1438 = vadd.xlane.f32.xlu0 %v1437
  %v1439 = vpop.xlane.xlu0 %1438
  %v1440 = vsel %vm1436, %v1435, 0.0
  %1441 = vadd.xlane.f32.xlu0 %v1440
  %v1442 = vpop.xlane.xlu0 %1441
  %v1443 = vmax.f32 %v1439, 1e-24
  %v1444 = vmax.f32 %v1442, 1e-24
  %v1445 = vrsqrt.pop %v1443
  %v1446 = vrsqrt.pop %v1444
  %v1447 = vmul.f32 %v1428, %v1445
  %v1448 = vmul.f32 %v1429, %v1446
  %v1449 = vmul.f32 %v1430, %v1430
  %v1450 = vmul.f32 %v1431, %v1431
  %v1451 = vsel %vm1436, %v1449, 0.0
  %1452 = vadd.xlane.f32.xlu0 %v1451
  %v1453 = vpop.xlane.xlu0 %1452
  %v1454 = vsel %vm1436, %v1450, 0.0
  %1455 = vadd.xlane.f32.xlu0 %v1454
  %v1456 = vpop.xlane.xlu0 %1455
  %v1457 = vmax.f32 %v1453, 1e-24
  %v1458 = vmax.f32 %v1456, 1e-24
  %v1459 = vrsqrt.pop %v1457
  %v1460 = vrsqrt.pop %v1458
  %v1461 = vmul.f32 %v1430, %v1459
  %v1462 = vmul.f32 %v1431, %v1460
  %v1463 = vpack.c.bf16 %v1448, %v1447
  %v1464 = vpack.c.bf16 %v1462, %v1461
  %v1466 = vsel %vm1436, %v1463, 0
  %v1469 = vsel %vm1436, %v1464, 0
  %1471 = vmatprep.subr.bf16.mxu0 0
  %1472 = vmatpush1.bf16.xpose.msra.mxu0 %v1469
  %1473 = vmatprep.subr.bf16.mxu0 0
  %1474 = vmatpush1.bf16.xpose.msra.mxu0 0
  %1475 = vmatprep.subr.bf16.mxu0 0
  %1476 = vmatpush1.bf16.xpose.msra.mxu0 0
  %1477 = vmatprep.subr.bf16.mxu0 0
  %1478 = vmatpush1.bf16.xpose.msra.mxu0 0
  %1479 = vmatprep.subr.bf16.mxu0 0
  %1480 = vmatpush1.bf16.xpose.msra.mxu0 0
  %1481 = vmatprep.subr.bf16.mxu0 0
  %1482 = vmatpush1.bf16.xpose.msra.mxu0 0
  %1483 = vmatprep.subr.bf16.mxu0 0
  %1484 = vmatpush1.bf16.xpose.msra.mxu0 0
  %1485 = vmatprep.subr.bf16.mxu0 0
  %1486 = vmatpush1.bf16.xpose.msra.mxu0 0
  %1487 = vmatprep.subr.bf16.mxu0 0
  %1488 = vmatpush1.bf16.xpose.msra.mxu0 0
  %1489 = vmatprep.subr.bf16.mxu0 0
  %1490 = vmatpush1.bf16.xpose.msra.mxu0 0
  %1491 = vmatprep.subr.bf16.mxu0 0
  %1492 = vmatpush1.bf16.xpose.msra.mxu0 0
  %1493 = vmatprep.subr.bf16.mxu0 0
  %1494 = vmatpush1.bf16.xpose.msra.mxu0 0
  %1495 = vmatprep.subr.bf16.mxu0 0
  %1496 = vmatpush1.bf16.xpose.msra.mxu0 0
  %1497 = vmatprep.subr.bf16.mxu0 0
  %1498 = vmatpush1.bf16.xpose.msra.mxu0 0
  %1499 = vmatprep.subr.bf16.mxu0 0
  %1500 = vmatpush1.bf16.xpose.msra.mxu0 0
  %1501 = vmatprep.subr.bf16.mxu0 0
  %1502 = vmatpush1.bf16.xpose.msra.mxu0 0
  %1503 = vmatprep.mubr.bf16.mxu0 0
  %1504 = vmatmul.mubr.bf16.gmra.mrb[0].mxu0 %v1466
  %v1505 = vpop.f32.mrb[0].mxu0
  %v1506 = vadd.f32 0.0, %v1505
  %v1507 = vpop.f32.mrb[0].mxu0
  %v1508 = vpop.f32.mrb[0].mxu0
  %v1509 = vadd.f32 0.0, %v1508
  %v1510 = vpop.f32.mrb[0].mxu0
  %1511 = vdwg.mxu0
  %v1512 = vld [vmem:[#allocation5] sm:$0x1]
  %v1514 = vlaneseq
  %v1515 = vshrl.u32 %v1514, 7
  %v1516 = vsub.s32 0, %v1515
  %v1517 = vrot.slane %v1512, %v1516
  %1518 = vset.pattern.permute.xlu0 0
  %1519 = vperm.xlu0 %1518, %v1517
  %v1520 = vpop.permute.xlu0 %1519
  %v1522 = vmul.f32 %v1506, %v1520
  %v1523 = vmul.f32 %v1509, %v1520
  %v1524 = vsel %vm124, %v1522, -inf
  %1525 = vmax.xlane.f32.xlu0 %v1524
  %v1526 = vpop.xlane.xlu0 %1525
  %v1527 = vsel %vm124, %v1523, -inf
  %1528 = vmax.xlane.f32.xlu0 %v1527
  %v1529 = vpop.xlane.xlu0 %1528
  %v1530 = vsub.f32 %v1522, %v1526
  %v1531 = vsub.f32 %v1523, %v1529
  %v1532 = vmul.f32 %v1530, 1.442695
  %v1533 = vpow.pop %v1532
  %v1534 = vmul.f32 %v1531, 1.442695
  %v1535 = vpow.pop %v1534
  %v1536 = vsel %vm124, %v1533, 0.0
  %1537 = vadd.xlane.f32.xlu0 %v1536
  %v1538 = vpop.xlane.xlu0 %1537
  %v1539 = vsel %vm124, %v1535, 0.0
  %1540 = vadd.xlane.f32.xlu0 %v1539
  %v1541 = vpop.xlane.xlu0 %1540
  %v1542 = vrcp.pop %v1538
  %v1543 = vmul.f32 %v1533, %v1542
  %v1544 = vrcp.pop %v1541
  %v1545 = vmul.f32 %v1535, %v1544
  %v1546 = vpack.c.bf16 %v1545, %v1543
  %v1547 = vpack.c.bf16 %v1433, %v1432
  %v1549 = vsel %vm124, %v1546, 0
  %1551 = vmatprep.subr.bf16.mxu0 0
  %1552 = vmatpush1.bf16.msra.mxu0 %v1547
  %1553 = vmatprep.subr.bf16.mxu0 0
  %1554 = vmatpush1.bf16.msra.mxu0 0
  %1555 = vmatprep.subr.bf16.mxu0 0
  %1556 = vmatpush1.bf16.msra.mxu0 0
  %1557 = vmatprep.subr.bf16.mxu0 0
  %1558 = vmatpush1.bf16.msra.mxu0 0
  %1559 = vmatprep.subr.bf16.mxu0 0
  %1560 = vmatpush1.bf16.msra.mxu0 0
  %1561 = vmatprep.subr.bf16.mxu0 0
  %1562 = vmatpush1.bf16.msra.mxu0 0
  %1563 = vmatprep.subr.bf16.mxu0 0
  %1564 = vmatpush1.bf16.msra.mxu0 0
  %1565 = vmatprep.subr.bf16.mxu0 0
  %1566 = vmatpush1.bf16.msra.mxu0 0
  %1567 = vmatprep.subr.bf16.mxu0 0
  %1568 = vmatpush1.bf16.msra.mxu0 0
  %1569 = vmatprep.subr.bf16.mxu0 0
  %1570 = vmatpush1.bf16.msra.mxu0 0
  %1571 = vmatprep.subr.bf16.mxu0 0
  %1572 = vmatpush1.bf16.msra.mxu0 0
  %1573 = vmatprep.subr.bf16.mxu0 0
  %1574 = vmatpush1.bf16.msra.mxu0 0
  %1575 = vmatprep.subr.bf16.mxu0 0
  %1576 = vmatpush1.bf16.msra.mxu0 0
  %1577 = vmatprep.subr.bf16.mxu0 0
  %1578 = vmatpush1.bf16.msra.mxu0 0
  %1579 = vmatprep.subr.bf16.mxu0 0
  %1580 = vmatpush1.bf16.msra.mxu0 0
  %1581 = vmatprep.subr.bf16.mxu0 0
  %1582 = vmatpush1.bf16.msra.mxu0 0
  %1583 = vmatprep.mubr.bf16.mxu0 0
  %1584 = vmatmul.mubr.bf16.gmra.mrb[0].mxu0 %v1549
  %v1585 = vpop.f32.mrb[0].mxu0
  %v1586 = vadd.f32 0.0, %v1585
  %v1587 = vpop.f32.mrb[0].mxu0
  %v1588 = vpop.f32.mrb[0].mxu0
  %v1589 = vadd.f32 0.0, %v1588
  %v1590 = vpop.f32.mrb[0].mxu0
  %1591 = vdwg.mxu0
  %1592 = vst.msk [vmem:[#allocation4] sm:$0xff] %vm1436, %v1586
  %1593 = vst.msk [vmem:[#allocation4 + $0x8] sm:$0xff] %vm1436, %v1589
  %v1594 = vld [vmem:[#allocation3] sm:$0xff]
  %v1595 = vld [vmem:[#allocation3 + $0x8] sm:$0xff]
  %v1596 = vld [vmem:[#allocation3 + $0x10] sm:$0xff]
  %v1597 = vld [vmem:[#allocation3 + $0x18] sm:$0xff]
  %v1598 = vld [vmem:[#allocation3 + $0x20] sm:$0xff]
  %v1599 = vld [vmem:[#allocation3 + $0x28] sm:$0xff]
  %v1600 = vmul.f32 %v1594, %v1594
  %v1601 = vmul.f32 %v1595, %v1595
  %1604 = vrot.lane.b32.xlu0 %v1600, 64
  %v1605 = vpop.permute.xlu0 %1604
  %1606 = vrot.lane.b32.xlu0 %v1601, 64
  %v1607 = vpop.permute.xlu0 %1606
  %v1610 = vsel %vm1436, %v1605, 0.0
  %1611 = vadd.xlane.f32.xlu0 %v1610
  %v1612 = vpop.xlane.xlu0 %1611
  %v1613 = vsel %vm1436, %v1607, 0.0
  %1614 = vadd.xlane.f32.xlu0 %v1613
  %v1615 = vpop.xlane.xlu0 %1614
  %v1616 = vmax.f32 %v1612, 1e-24
  %v1617 = vmax.f32 %v1615, 1e-24
  %v1618 = vrsqrt.pop %v1616
  %v1619 = vrsqrt.pop %v1617
  %v1620 = vmul.f32 %v1594, %v1618
  %v1621 = vmul.f32 %v1595, %v1619
  %v1622 = vmul.f32 %v1596, %v1596
  %v1623 = vmul.f32 %v1597, %v1597
  %1626 = vrot.lane.b32.xlu0 %v1622, 64
  %v1627 = vpop.permute.xlu0 %1626
  %1628 = vrot.lane.b32.xlu0 %v1623, 64
  %v1629 = vpop.permute.xlu0 %1628
  %v1632 = vsel %vm1436, %v1627, 0.0
  %1633 = vadd.xlane.f32.xlu0 %v1632
  %v1634 = vpop.xlane.xlu0 %1633
  %v1635 = vsel %vm1436, %v1629, 0.0
  %1636 = vadd.xlane.f32.xlu0 %v1635
  %v1637 = vpop.xlane.xlu0 %1636
  %v1638 = vmax.f32 %v1634, 1e-24
  %v1639 = vmax.f32 %v1637, 1e-24
  %v1640 = vrsqrt.pop %v1638
  %v1641 = vrsqrt.pop %v1639
  %v1642 = vmul.f32 %v1596, %v1640
  %v1643 = vmul.f32 %v1597, %v1641
  %v1644 = vpack.c.bf16 %v1621, %v1620
  %v1645 = vpack.c.bf16 %v1643, %v1642
  %1647 = vrot.lane.b32.xlu0 %v1644, 64
  %v1648 = vpop.permute.xlu0 %1647
  %1650 = vrot.lane.b32.xlu0 %v1645, 64
  %v1651 = vpop.permute.xlu0 %1650
  %v1653 = vsel %vm1436, %v1648, 0
  %v1656 = vsel %vm1436, %v1651, 0
  %1658 = vmatprep.subr.bf16.mxu0 0
  %1659 = vmatpush1.bf16.xpose.msra.mxu0 %v1656
  %1660 = vmatprep.subr.bf16.mxu0 0
  %1661 = vmatpush1.bf16.xpose.msra.mxu0 0
  %1662 = vmatprep.subr.bf16.mxu0 0
  %1663 = vmatpush1.bf16.xpose.msra.mxu0 0
  %1664 = vmatprep.subr.bf16.mxu0 0
  %1665 = vmatpush1.bf16.xpose.msra.mxu0 0
  %1666 = vmatprep.subr.bf16.mxu0 0
  %1667 = vmatpush1.bf16.xpose.msra.mxu0 0
  %1668 = vmatprep.subr.bf16.mxu0 0
  %1669 = vmatpush1.bf16.xpose.msra.mxu0 0
  %1670 = vmatprep.subr.bf16.mxu0 0
  %1671 = vmatpush1.bf16.xpose.msra.mxu0 0
  %1672 = vmatprep.subr.bf16.mxu0 0
  %1673 = vmatpush1.bf16.xpose.msra.mxu0 0
  %1674 = vmatprep.subr.bf16.mxu0 0
  %1675 = vmatpush1.bf16.xpose.msra.mxu0 0
  %1676 = vmatprep.subr.bf16.mxu0 0
  %1677 = vmatpush1.bf16.xpose.msra.mxu0 0
  %1678 = vmatprep.subr.bf16.mxu0 0
  %1679 = vmatpush1.bf16.xpose.msra.mxu0 0
  %1680 = vmatprep.subr.bf16.mxu0 0
  %1681 = vmatpush1.bf16.xpose.msra.mxu0 0
  %1682 = vmatprep.subr.bf16.mxu0 0
  %1683 = vmatpush1.bf16.xpose.msra.mxu0 0
  %1684 = vmatprep.subr.bf16.mxu0 0
  %1685 = vmatpush1.bf16.xpose.msra.mxu0 0
  %1686 = vmatprep.subr.bf16.mxu0 0
  %1687 = vmatpush1.bf16.xpose.msra.mxu0 0
  %1688 = vmatprep.subr.bf16.mxu0 0
  %1689 = vmatpush1.bf16.xpose.msra.mxu0 0
  %1690 = vmatprep.mubr.bf16.mxu0 0
  %1691 = vmatmul.mubr.bf16.gmra.mrb[0].mxu0 %v1653
  %v1692 = vpop.f32.mrb[0].mxu0
  %v1693 = vadd.f32 0.0, %v1692
  %v1694 = vpop.f32.mrb[0].mxu0
  %v1695 = vpop.f32.mrb[0].mxu0
  %v1696 = vadd.f32 0.0, %v1695
  %v1697 = vpop.f32.mrb[0].mxu0
  %1698 = vdwg.mxu0
  %v1699 = vld [vmem:[#allocation5] sm:$0x1]
  %v1701 = vlaneseq
  %v1702 = vshrl.u32 %v1701, 7
  %v1703 = vsub.s32 0, %v1702
  %v1704 = vrot.slane %v1699, %v1703
  %1705 = vset.pattern.permute.xlu0 0
  %1706 = vperm.xlu0 %1705, %v1704
  %v1707 = vpop.permute.xlu0 %1706
  %v1709 = vmul.f32 %v1693, %v1707
  %v1710 = vmul.f32 %v1696, %v1707
  %v1711 = vsel %vm124, %v1709, -inf
  %1712 = vmax.xlane.f32.xlu0 %v1711
  %v1713 = vpop.xlane.xlu0 %1712
  %v1714 = vsel %vm124, %v1710, -inf
  %1715 = vmax.xlane.f32.xlu0 %v1714
  %v1716 = vpop.xlane.xlu0 %1715
  %v1717 = vsub.f32 %v1709, %v1713
  %v1718 = vsub.f32 %v1710, %v1716
  %v1719 = vmul.f32 %v1717, 1.442695
  %v1720 = vpow.pop %v1719
  %v1721 = vmul.f32 %v1718, 1.442695
  %v1722 = vpow.pop %v1721
  %v1723 = vsel %vm124, %v1720, 0.0
  %1724 = vadd.xlane.f32.xlu0 %v1723
  %v1725 = vpop.xlane.xlu0 %1724
  %v1726 = vsel %vm124, %v1722, 0.0
  %1727 = vadd.xlane.f32.xlu0 %v1726
  %v1728 = vpop.xlane.xlu0 %1727
  %v1729 = vrcp.pop %v1725
  %v1730 = vmul.f32 %v1720, %v1729
  %v1731 = vrcp.pop %v1728
  %v1732 = vmul.f32 %v1722, %v1731
  %v1733 = vpack.c.bf16 %v1732, %v1730
  %v1734 = vpack.c.bf16 %v1599, %v1598
  %1736 = vrot.lane.b32.xlu0 %v1734, 64
  %v1737 = vpop.permute.xlu0 %1736
  %v1740 = vsel %vm124, %v1733, 0
  %1742 = vmatprep.subr.bf16.mxu0 0
  %1743 = vmatpush1.bf16.msra.mxu0 %v1737
  %1744 = vmatprep.subr.bf16.mxu0 0
  %1745 = vmatpush1.bf16.msra.mxu0 0
  %1746 = vmatprep.subr.bf16.mxu0 0
  %1747 = vmatpush1.bf16.msra.mxu0 0
  %1748 = vmatprep.subr.bf16.mxu0 0
  %1749 = vmatpush1.bf16.msra.mxu0 0
  %1750 = vmatprep.subr.bf16.mxu0 0
  %1751 = vmatpush1.bf16.msra.mxu0 0
  %1752 = vmatprep.subr.bf16.mxu0 0
  %1753 = vmatpush1.bf16.msra.mxu0 0
  %1754 = vmatprep.subr.bf16.mxu0 0
  %1755 = vmatpush1.bf16.msra.mxu0 0
  %1756 = vmatprep.subr.bf16.mxu0 0
  %1757 = vmatpush1.bf16.msra.mxu0 0
  %1758 = vmatprep.subr.bf16.mxu0 0
  %1759 = vmatpush1.bf16.msra.mxu0 0
  %1760 = vmatprep.subr.bf16.mxu0 0
  %1761 = vmatpush1.bf16.msra.mxu0 0
  %1762 = vmatprep.subr.bf16.mxu0 0
  %1763 = vmatpush1.bf16.msra.mxu0 0
  %1764 = vmatprep.subr.bf16.mxu0 0
  %1765 = vmatpush1.bf16.msra.mxu0 0
  %1766 = vmatprep.subr.bf16.mxu0 0
  %1767 = vmatpush1.bf16.msra.mxu0 0
  %1768 = vmatprep.subr.bf16.mxu0 0
  %1769 = vmatpush1.bf16.msra.mxu0 0
  %1770 = vmatprep.subr.bf16.mxu0 0
  %1771 = vmatpush1.bf16.msra.mxu0 0
  %1772 = vmatprep.subr.bf16.mxu0 0
  %1773 = vmatpush1.bf16.msra.mxu0 0
  %1774 = vmatprep.mubr.bf16.mxu0 0
  %1775 = vmatmul.mubr.bf16.gmra.mrb[0].mxu0 %v1740
  %v1776 = vpop.f32.mrb[0].mxu0
  %v1777 = vadd.f32 0.0, %v1776
  %v1778 = vpop.f32.mrb[0].mxu0
  %v1779 = vpop.f32.mrb[0].mxu0
  %v1780 = vadd.f32 0.0, %v1779
  %v1781 = vpop.f32.mrb[0].mxu0
  %1782 = vdwg.mxu0
  %1785 = vrot.lane.b32.xlu0 %v1777, 64
  %v1786 = vpop.permute.xlu0 %1785
  %1787 = vrot.lane.b32.xlu0 %v1780, 64
  %v1788 = vpop.permute.xlu0 %1787
  %vm1791 = vcmask 1048064
  %1792 = vst.msk [vmem:[#allocation4] sm:$0xff] %vm1791, %v1786
  %1793 = vst.msk [vmem:[#allocation4 + $0x8] sm:$0xff] %vm1791, %v1788
  %v1794 = vld [vmem:[%s7] sm:$0xf]
  %v1795 = vld [vmem:[%s7 + $0x4] sm:$0xf]
  %v1796 = vld [vmem:[#allocation4] sm:$0xff]
  %v1797 = vld [vmem:[#allocation4 + $0x8] sm:$0xff]
  %v1798 = vpack.c.bf16 %v1797, %v1796
  %v1801 = vunpack.c.l.b16 %v1794
  %v1802 = vunpack.c.l.b16 %v1795
  %v1803 = vpack.c.b16 %v1802, %v1801
  %v1805 = vsel %vm124, %v1803, 0
  %1807 = vmatprep.subr.bf16.mxu0 0
  %1808 = vmatpush1.bf16.msra.mxu0 %v1798
  %1809 = vmatprep.subr.bf16.mxu0 0
  %1810 = vmatpush1.bf16.msra.mxu0 0
  %1811 = vmatprep.subr.bf16.mxu0 0
  %1812 = vmatpush1.bf16.msra.mxu0 0
  %1813 = vmatprep.subr.bf16.mxu0 0
  %1814 = vmatpush1.bf16.msra.mxu0 0
  %1815 = vmatprep.subr.bf16.mxu0 0
  %1816 = vmatpush1.bf16.msra.mxu0 0
  %1817 = vmatprep.subr.bf16.mxu0 0
  %1818 = vmatpush1.bf16.msra.mxu0 0
  %1819 = vmatprep.subr.bf16.mxu0 0
  %1820 = vmatpush1.bf16.msra.mxu0 0
  %1821 = vmatprep.subr.bf16.mxu0 0
  %1822 = vmatpush1.bf16.msra.mxu0 0
  %1823 = vmatprep.subr.bf16.mxu0 0
  %1824 = vmatpush1.bf16.msra.mxu0 0
  %1825 = vmatprep.subr.bf16.mxu0 0
  %1826 = vmatpush1.bf16.msra.mxu0 0
  %1827 = vmatprep.subr.bf16.mxu0 0
  %1828 = vmatpush1.bf16.msra.mxu0 0
  %1829 = vmatprep.subr.bf16.mxu0 0
  %1830 = vmatpush1.bf16.msra.mxu0 0
  %1831 = vmatprep.subr.bf16.mxu0 0
  %1832 = vmatpush1.bf16.msra.mxu0 0
  %1833 = vmatprep.subr.bf16.mxu0 0
  %1834 = vmatpush1.bf16.msra.mxu0 0
  %1835 = vmatprep.subr.bf16.mxu0 0
  %1836 = vmatpush1.bf16.msra.mxu0 0
  %1837 = vmatprep.subr.bf16.mxu0 0
  %1838 = vmatpush1.bf16.msra.mxu0 0
  %1839 = vmatprep.mubr.bf16.mxu0 0
  %1840 = vmatmul.mubr.bf16.gmra.mrb[0].mxu0 %v1805
  %v1841 = vpop.f32.mrb[0].mxu0
  %v1842 = vadd.f32 0.0, %v1841
  %v1843 = vpop.f32.mrb[0].mxu0
  %v1844 = vpop.f32.mrb[0].mxu0
  %v1845 = vadd.f32 0.0, %v1844
  %v1846 = vpop.f32.mrb[0].mxu0
  %1847 = vdwg.mxu0
  %v1848 = vadd.f32 %v47, %v1842
  %v1849 = vadd.f32 %v48, %v1845
  %v1850 = vadd.f32 %v1848, %v1849
  %v1851 = vrot.slane %v1850, 4
  %v1852 = vadd.f32 %v1850, %v1851
  %v1853 = vrot.slane %v1852, 2
  %v1854 = vadd.f32 %v1852, %v1853
  %v1855 = vrot.slane %v1854, 1
  %v1856 = vadd.f32 %v1854, %v1855
  %v1857 = vmul.f32 %v1856, %v56
  %v1858 = vsub.f32 %v1848, %v1857
  %v1859 = vsub.f32 %v1849, %v1857
  %v1860 = vmul.f32 %v1858, %v1858
  %v1861 = vmul.f32 %v1859, %v1859
  %v1862 = vadd.f32 %v1860, %v1861
  %v1863 = vrot.slane %v1862, 4
  %v1864 = vadd.f32 %v1862, %v1863
  %v1865 = vrot.slane %v1864, 2
  %v1866 = vadd.f32 %v1864, %v1865
  %v1867 = vrot.slane %v1866, 1
  %v1868 = vadd.f32 %v1866, %v1867
  %v1869 = vmul.f32 %v1868, %v56
  %v1870 = vadd.f32 %v1869, 1e-05
  %v1871 = vrsqrt.pop %v1870
  %v1872 = vmul.f32 %v1858, %v1871
  %v1873 = vmul.f32 %v1859, %v1871
  %v1874 = vld [vmem:[%s8] sm:$0xff]
  %v1875 = vld [vmem:[%s8 + $0x8] sm:$0xff]
  %1877 = vset.pattern.permute.xlu0 0
  %1878 = vperm.xlu0 %1877, %v1874
  %v1879 = vpop.permute.xlu0 %1878
  %1882 = vset.pattern.permute.xlu0 0
  %1883 = vperm.xlu0 %1882, %v1875
  %v1884 = vpop.permute.xlu0 %1883
  %v1886 = vmul.f32 %v1872, %v1879
  %v1887 = vmul.f32 %v1873, %v1884
  %v1888 = vld [vmem:[%s9] sm:$0xff]
  %v1889 = vld [vmem:[%s9 + $0x8] sm:$0xff]
  %1891 = vset.pattern.permute.xlu0 0
  %1892 = vperm.xlu0 %1891, %v1888
  %v1893 = vpop.permute.xlu0 %1892
  %1896 = vset.pattern.permute.xlu0 0
  %1897 = vperm.xlu0 %1896, %v1889
  %v1898 = vpop.permute.xlu0 %1897
  %v1900 = vadd.f32 %v1886, %v1893
  %v1901 = vadd.f32 %v1887, %v1898
  %v1902 = vld [vmem:[%s10] sm:$0xf]
  %v1903 = vld [vmem:[%s10 + $0x4] sm:$0xf]
  %v1904 = vld [vmem:[%s10 + $0x8] sm:$0xf]
  %v1905 = vld [vmem:[%s10 + $0xc] sm:$0xf]
  %v1906 = vld [vmem:[%s10 + $0x10] sm:$0xf]
  %v1907 = vld [vmem:[%s10 + $0x14] sm:$0xf]
  %v1908 = vld [vmem:[%s10 + $0x18] sm:$0xf]
  %v1909 = vld [vmem:[%s10 + $0x1c] sm:$0xf]
  %v1910 = vld [vmem:[%s10 + $0x20] sm:$0xf]
  %v1911 = vld [vmem:[%s10 + $0x24] sm:$0xf]
  %v1912 = vld [vmem:[%s10 + $0x28] sm:$0xf]
  %v1913 = vld [vmem:[%s10 + $0x2c] sm:$0xf]
  %v1914 = vpack.c.bf16 %v1901, %v1900
  %v1927 = vunpack.c.l.b16 %v1902
  %v1928 = vunpack.c.l.b16 %v1903
  %v1929 = vunpack.c.l.b16 %v1904
  %v1930 = vunpack.c.l.b16 %v1905
  %v1931 = vunpack.c.l.b16 %v1906
  %v1932 = vunpack.c.l.b16 %v1907
  %v1933 = vunpack.c.l.b16 %v1908
  %v1934 = vunpack.c.l.b16 %v1909
  %v1935 = vunpack.c.l.b16 %v1910
  %v1936 = vunpack.c.l.b16 %v1911
  %v1937 = vunpack.c.l.b16 %v1912
  %v1938 = vunpack.c.l.b16 %v1913
  %v1939 = vpack.c.b16 %v1928, %v1927
  %v1940 = vpack.c.b16 %v1930, %v1929
  %v1941 = vpack.c.b16 %v1932, %v1931
  %v1942 = vpack.c.b16 %v1934, %v1933
  %v1943 = vpack.c.b16 %v1936, %v1935
  %v1944 = vpack.c.b16 %v1938, %v1937
  %v1946 = vsel %vm124, %v1939, 0
  %v1949 = vsel %vm124, %v1940, 0
  %v1952 = vsel %vm124, %v1941, 0
  %v1955 = vsel %vm124, %v1942, 0
  %v1958 = vsel %vm124, %v1943, 0
  %v1961 = vsel %vm124, %v1944, 0
  %1963 = vmatprep.subr.bf16.mxu0 0
  %1964 = vmatpush1.bf16.msra.mxu0 %v1914
  %1965 = vmatprep.subr.bf16.mxu0 0
  %1966 = vmatpush1.bf16.msra.mxu0 0
  %1967 = vmatprep.subr.bf16.mxu0 0
  %1968 = vmatpush1.bf16.msra.mxu0 0
  %1969 = vmatprep.subr.bf16.mxu0 0
  %1970 = vmatpush1.bf16.msra.mxu0 0
  %1971 = vmatprep.subr.bf16.mxu0 0
  %1972 = vmatpush1.bf16.msra.mxu0 0
  %1973 = vmatprep.subr.bf16.mxu0 0
  %1974 = vmatpush1.bf16.msra.mxu0 0
  %1975 = vmatprep.subr.bf16.mxu0 0
  %1976 = vmatpush1.bf16.msra.mxu0 0
  %1977 = vmatprep.subr.bf16.mxu0 0
  %1978 = vmatpush1.bf16.msra.mxu0 0
  %1979 = vmatprep.subr.bf16.mxu0 0
  %1980 = vmatpush1.bf16.msra.mxu0 0
  %1981 = vmatprep.subr.bf16.mxu0 0
  %1982 = vmatpush1.bf16.msra.mxu0 0
  %1983 = vmatprep.subr.bf16.mxu0 0
  %1984 = vmatpush1.bf16.msra.mxu0 0
  %1985 = vmatprep.subr.bf16.mxu0 0
  %1986 = vmatpush1.bf16.msra.mxu0 0
  %1987 = vmatprep.subr.bf16.mxu0 0
  %1988 = vmatpush1.bf16.msra.mxu0 0
  %1989 = vmatprep.subr.bf16.mxu0 0
  %1990 = vmatpush1.bf16.msra.mxu0 0
  %1991 = vmatprep.subr.bf16.mxu0 0
  %1992 = vmatpush1.bf16.msra.mxu0 0
  %1993 = vmatprep.subr.bf16.mxu0 0
  %1994 = vmatpush1.bf16.msra.mxu0 0
  %1995 = vmatprep.mubr.bf16.mxu0 0
  %1996 = vmatmul.mubr.bf16.gmra.mrb[0].mxu0 %v1946
  %v1997 = vpop.f32.mrb[0].mxu0
  %v1998 = vadd.f32 0.0, %v1997
  %v1999 = vpop.f32.mrb[0].mxu0
  %v2000 = vpop.f32.mrb[0].mxu0
  %v2001 = vadd.f32 0.0, %v2000
  %v2002 = vpop.f32.mrb[0].mxu0
  %2003 = vmatprep.mubr.bf16.mxu0 0
  %2004 = vmatmul.mubr.bf16.gmra.mrb[0].mxu0 %v1949
  %v2005 = vpop.f32.mrb[0].mxu0
  %v2006 = vadd.f32 0.0, %v2005
  %v2007 = vpop.f32.mrb[0].mxu0
  %v2008 = vpop.f32.mrb[0].mxu0
  %v2009 = vadd.f32 0.0, %v2008
  %v2010 = vpop.f32.mrb[0].mxu0
  %2011 = vmatprep.mubr.bf16.mxu0 0
  %2012 = vmatmul.mubr.bf16.gmra.mrb[0].mxu0 %v1952
  %v2013 = vpop.f32.mrb[0].mxu0
  %v2014 = vadd.f32 0.0, %v2013
  %v2015 = vpop.f32.mrb[0].mxu0
  %v2016 = vpop.f32.mrb[0].mxu0
  %v2017 = vadd.f32 0.0, %v2016
  %v2018 = vpop.f32.mrb[0].mxu0
  %2019 = vmatprep.mubr.bf16.mxu0 0
  %2020 = vmatmul.mubr.bf16.gmra.mrb[0].mxu0 %v1955
  %v2021 = vpop.f32.mrb[0].mxu0
  %v2022 = vadd.f32 0.0, %v2021
  %v2023 = vpop.f32.mrb[0].mxu0
  %v2024 = vpop.f32.mrb[0].mxu0
  %v2025 = vadd.f32 0.0, %v2024
  %v2026 = vpop.f32.mrb[0].mxu0
  %2027 = vmatprep.mubr.bf16.mxu0 0
  %2028 = vmatmul.mubr.bf16.gmra.mrb[0].mxu0 %v1958
  %v2029 = vpop.f32.mrb[0].mxu0
  %v2030 = vadd.f32 0.0, %v2029
  %v2031 = vpop.f32.mrb[0].mxu0
  %v2032 = vpop.f32.mrb[0].mxu0
  %v2033 = vadd.f32 0.0, %v2032
  %v2034 = vpop.f32.mrb[0].mxu0
  %2035 = vmatprep.mubr.bf16.mxu0 0
  %2036 = vmatmul.mubr.bf16.gmra.mrb[0].mxu0 %v1961
  %v2037 = vpop.f32.mrb[0].mxu0
  %v2038 = vadd.f32 0.0, %v2037
  %v2039 = vpop.f32.mrb[0].mxu0
  %v2040 = vpop.f32.mrb[0].mxu0
  %v2041 = vadd.f32 0.0, %v2040
  %v2042 = vpop.f32.mrb[0].mxu0
  %2043 = vdwg.mxu0
  %2044 = vst [vmem:[#allocation2] sm:$0xff] 0.0
  %2045 = vst [vmem:[#allocation2 + $0x18] sm:$0xff] 0.0
  %2046 = vst [vmem:[#allocation2 + $0x30] sm:$0xff] 0.0
  %2047 = vst [vmem:[#allocation2 + $0x48] sm:$0xff] 0.0
  %2048 = vst [vmem:[#allocation2 + $0x60] sm:$0xff] 0.0
  %2049 = vst [vmem:[#allocation2 + $0x78] sm:$0xff] 0.0
  %2050 = vst [vmem:[#allocation2 + $0x90] sm:$0xff] 0.0
  %2051 = vst [vmem:[#allocation2 + $0xa8] sm:$0xff] 0.0
  %2052 = vst [vmem:[#allocation2 + $0xc0] sm:$0xff] 0.0
  %2053 = vst [vmem:[#allocation2 + $0xd8] sm:$0xff] 0.0
  %2054 = vst [vmem:[#allocation2 + $0xf0] sm:$0xff] 0.0
  %2055 = vst [vmem:[#allocation2 + $0x108] sm:$0xff] 0.0
  %2056 = vst [vmem:[#allocation2 + $0x8] sm:$0xff] %v1998
  %2057 = vst [vmem:[#allocation2 + $0x20] sm:$0xff] %v2001
  %2058 = vst [vmem:[#allocation2 + $0x38] sm:$0xff] %v2006
  %2059 = vst [vmem:[#allocation2 + $0x50] sm:$0xff] %v2009
  %2060 = vst [vmem:[#allocation2 + $0x68] sm:$0xff] %v2014
  %2061 = vst [vmem:[#allocation2 + $0x80] sm:$0xff] %v2017
  %2062 = vst [vmem:[#allocation2 + $0x98] sm:$0xff] %v2022
  %2063 = vst [vmem:[#allocation2 + $0xb0] sm:$0xff] %v2025
  %2064 = vst [vmem:[#allocation2 + $0xc8] sm:$0xff] %v2030
  %2065 = vst [vmem:[#allocation2 + $0xe0] sm:$0xff] %v2033
  %2066 = vst [vmem:[#allocation2 + $0xf8] sm:$0xff] %v2038
  %2067 = vst [vmem:[#allocation2 + $0x110] sm:$0xff] %v2041
  %2068 = vst [vmem:[#allocation2 + $0x10] sm:$0xff] 0.0
  %2069 = vst [vmem:[#allocation2 + $0x28] sm:$0xff] 0.0
  %2070 = vst [vmem:[#allocation2 + $0x40] sm:$0xff] 0.0
  %2071 = vst [vmem:[#allocation2 + $0x58] sm:$0xff] 0.0
  %2072 = vst [vmem:[#allocation2 + $0x70] sm:$0xff] 0.0
  %2073 = vst [vmem:[#allocation2 + $0x88] sm:$0xff] 0.0
  %2074 = vst [vmem:[#allocation2 + $0xa0] sm:$0xff] 0.0
  %2075 = vst [vmem:[#allocation2 + $0xb8] sm:$0xff] 0.0
  %2076 = vst [vmem:[#allocation2 + $0xd0] sm:$0xff] 0.0
  %2077 = vst [vmem:[#allocation2 + $0xe8] sm:$0xff] 0.0
  %2078 = vst [vmem:[#allocation2 + $0x100] sm:$0xff] 0.0
  %2079 = vst [vmem:[#allocation2 + $0x118] sm:$0xff] 0.0
  %v2080 = vld [vmem:[#allocation2] sm:$0xff]
  %v2081 = vld [vmem:[#allocation2 + $0x8] sm:$0xff]
  %v2082 = vld [vmem:[#allocation2 + $0x18] sm:$0xff]
  %v2083 = vld [vmem:[#allocation2 + $0x20] sm:$0xff]
  %v2084 = vld [vmem:[#allocation2 + $0x30] sm:$0xff]
  %v2085 = vld [vmem:[#allocation2 + $0x38] sm:$0xff]
  %v2086 = vld [vmem:[#allocation2 + $0x48] sm:$0xff]
  %v2087 = vld [vmem:[#allocation2 + $0x50] sm:$0xff]
  %v2088 = vld [vmem:[#allocation2 + $0x60] sm:$0xff]
  %v2089 = vld [vmem:[#allocation2 + $0x68] sm:$0xff]
  %v2090 = vld [vmem:[#allocation2 + $0x78] sm:$0xff]
  %v2091 = vld [vmem:[#allocation2 + $0x80] sm:$0xff]
  %v2092 = vld [vmem:[#allocation2 + $0x90] sm:$0xff]
  %v2093 = vld [vmem:[#allocation2 + $0x98] sm:$0xff]
  %v2094 = vld [vmem:[#allocation2 + $0xa8] sm:$0xff]
  %v2095 = vld [vmem:[#allocation2 + $0xb0] sm:$0xff]
  %v2096 = vld [vmem:[#allocation2 + $0xc0] sm:$0xff]
  %v2097 = vld [vmem:[#allocation2 + $0xc8] sm:$0xff]
  %v2098 = vld [vmem:[#allocation2 + $0xd8] sm:$0xff]
  %v2099 = vld [vmem:[#allocation2 + $0xe0] sm:$0xff]
  %v2100 = vld [vmem:[#allocation2 + $0xf0] sm:$0xff]
  %v2101 = vld [vmem:[#allocation2 + $0xf8] sm:$0xff]
  %v2102 = vld [vmem:[#allocation2 + $0x108] sm:$0xff]
  %v2103 = vld [vmem:[#allocation2 + $0x110] sm:$0xff]
  %v2104 = vld [vmem:[%s1] sm:$0x1]
  %v2106 = vlaneseq
  %v2107 = vshrl.u32 %v2106, 7
  %v2108 = vsub.s32 0, %v2107
  %v2109 = vrot.slane %v2104, %v2108
  %2110 = vrot.lane.b32.xlu0 %v2109, 119
  %v2111 = vpop.permute.xlu0 %2110
  %v2113 = vmul.f32 %v2080, %v2111
  %v2114 = vmul.f32 %v2081, %v2111
  %v2115 = vmul.f32 %v2082, %v2111
  %v2116 = vmul.f32 %v2083, %v2111
  %v2117 = vmul.f32 %v2084, %v2111
  %v2118 = vmul.f32 %v2085, %v2111
  %v2119 = vmul.f32 %v2086, %v2111
  %v2120 = vmul.f32 %v2087, %v2111
  %v2121 = vmul.f32 %v2088, %v2111
  %v2122 = vmul.f32 %v2089, %v2111
  %v2123 = vmul.f32 %v2090, %v2111
  %v2124 = vmul.f32 %v2091, %v2111
  %v2125 = vmul.f32 %v2092, %v2111
  %v2126 = vmul.f32 %v2093, %v2111
  %v2127 = vmul.f32 %v2094, %v2111
  %v2128 = vmul.f32 %v2095, %v2111
  %v2129 = vmul.f32 %v2096, %v2111
  %v2130 = vmul.f32 %v2097, %v2111
  %v2131 = vmul.f32 %v2098, %v2111
  %v2132 = vmul.f32 %v2099, %v2111
  %v2133 = vmul.f32 %v2100, %v2111
  %v2134 = vmul.f32 %v2101, %v2111
  %v2135 = vmul.f32 %v2102, %v2111
  %v2136 = vmul.f32 %v2103, %v2111
  %v2137 = vld [vmem:[%s11] sm:$0xff]
  %v2138 = vld [vmem:[%s11 + $0x8] sm:$0xff]
  %v2139 = vld [vmem:[%s11 + $0x10] sm:$0xff]
  %v2140 = vld [vmem:[%s11 + $0x18] sm:$0xff]
  %v2141 = vld [vmem:[%s11 + $0x20] sm:$0xff]
  %v2142 = vld [vmem:[%s11 + $0x28] sm:$0xff]
  %v2143 = vld [vmem:[%s11 + $0x30] sm:$0xff]
  %v2144 = vld [vmem:[%s11 + $0x38] sm:$0xff]
  %v2145 = vld [vmem:[%s11 + $0x40] sm:$0xff]
  %v2146 = vld [vmem:[%s11 + $0x48] sm:$0xff]
  %v2147 = vld [vmem:[%s11 + $0x50] sm:$0xff]
  %v2148 = vld [vmem:[%s11 + $0x58] sm:$0xff]
  %2150 = vset.pattern.permute.xlu0 0
  %2151 = vperm.xlu0 %2150, %v2137
  %v2152 = vpop.permute.xlu0 %2151
  %2155 = vset.pattern.permute.xlu0 0
  %2156 = vperm.xlu0 %2155, %v2138
  %v2157 = vpop.permute.xlu0 %2156
  %2160 = vset.pattern.permute.xlu0 0
  %2161 = vperm.xlu0 %2160, %v2139
  %v2162 = vpop.permute.xlu0 %2161
  %2165 = vset.pattern.permute.xlu0 0
  %2166 = vperm.xlu0 %2165, %v2140
  %v2167 = vpop.permute.xlu0 %2166
  %2170 = vset.pattern.permute.xlu0 0
  %2171 = vperm.xlu0 %2170, %v2141
  %v2172 = vpop.permute.xlu0 %2171
  %2175 = vset.pattern.permute.xlu0 0
  %2176 = vperm.xlu0 %2175, %v2142
  %v2177 = vpop.permute.xlu0 %2176
  %2180 = vset.pattern.permute.xlu0 0
  %2181 = vperm.xlu0 %2180, %v2143
  %v2182 = vpop.permute.xlu0 %2181
  %2185 = vset.pattern.permute.xlu0 0
  %2186 = vperm.xlu0 %2185, %v2144
  %v2187 = vpop.permute.xlu0 %2186
  %2190 = vset.pattern.permute.xlu0 0
  %2191 = vperm.xlu0 %2190, %v2145
  %v2192 = vpop.permute.xlu0 %2191
  %2195 = vset.pattern.permute.xlu0 0
  %2196 = vperm.xlu0 %2195, %v2146
  %v2197 = vpop.permute.xlu0 %2196
  %2200 = vset.pattern.permute.xlu0 0
  %2201 = vperm.xlu0 %2200, %v2147
  %v2202 = vpop.permute.xlu0 %2201
  %2205 = vset.pattern.permute.xlu0 0
  %2206 = vperm.xlu0 %2205, %v2148
  %v2207 = vpop.permute.xlu0 %2206
  %v2209 = vmul.f32 %v2113, %v2152
  %v2210 = vmul.f32 %v2114, %v2152
  %v2211 = vmul.f32 %v2115, %v2157
  %v2212 = vmul.f32 %v2116, %v2157
  %v2213 = vmul.f32 %v2117, %v2162
  %v2214 = vmul.f32 %v2118, %v2162
  %v2215 = vmul.f32 %v2119, %v2167
  %v2216 = vmul.f32 %v2120, %v2167
  %v2217 = vmul.f32 %v2121, %v2172
  %v2218 = vmul.f32 %v2122, %v2172
  %v2219 = vmul.f32 %v2123, %v2177
  %v2220 = vmul.f32 %v2124, %v2177
  %v2221 = vmul.f32 %v2125, %v2182
  %v2222 = vmul.f32 %v2126, %v2182
  %v2223 = vmul.f32 %v2127, %v2187
  %v2224 = vmul.f32 %v2128, %v2187
  %v2225 = vmul.f32 %v2129, %v2192
  %v2226 = vmul.f32 %v2130, %v2192
  %v2227 = vmul.f32 %v2131, %v2197
  %v2228 = vmul.f32 %v2132, %v2197
  %v2229 = vmul.f32 %v2133, %v2202
  %v2230 = vmul.f32 %v2134, %v2202
  %v2231 = vmul.f32 %v2135, %v2207
  %v2232 = vmul.f32 %v2136, %v2207
  %v2233 = vadd.f32 %v2209, 0.0
  %v2234 = vadd.f32 %v2210, 0.0
  %v2235 = vadd.f32 %v2211, 0.0
  %v2236 = vadd.f32 %v2212, 0.0
  %v2237 = vadd.f32 %v2213, 0.0
  %v2238 = vadd.f32 %v2214, 0.0
  %v2239 = vadd.f32 %v2215, 0.0
  %v2240 = vadd.f32 %v2216, 0.0
  %v2241 = vadd.f32 %v2217, 0.0
  %v2242 = vadd.f32 %v2218, 0.0
  %v2243 = vadd.f32 %v2219, 0.0
  %v2244 = vadd.f32 %v2220, 0.0
  %v2245 = vadd.f32 %v2221, 0.0
  %v2246 = vadd.f32 %v2222, 0.0
  %v2247 = vadd.f32 %v2223, 0.0
  %v2248 = vadd.f32 %v2224, 0.0
  %v2249 = vadd.f32 %v2225, 0.0
  %v2250 = vadd.f32 %v2226, 0.0
  %v2251 = vadd.f32 %v2227, 0.0
  %v2252 = vadd.f32 %v2228, 0.0
  %v2253 = vadd.f32 %v2229, 0.0
  %v2254 = vadd.f32 %v2230, 0.0
  %v2255 = vadd.f32 %v2231, 0.0
  %v2256 = vadd.f32 %v2232, 0.0
  %v2257 = vld [vmem:[%s302] sm:$0x1]
  %v2259 = vlaneseq
  %v2260 = vshrl.u32 %v2259, 7
  %v2261 = vsub.s32 0, %v2260
  %v2262 = vrot.slane %v2257, %v2261
  %2263 = vrot.lane.b32.xlu0 %v2262, 120
  %v2264 = vpop.permute.xlu0 %2263
  %v2266 = vmul.f32 %v2080, %v2264
  %v2267 = vmul.f32 %v2081, %v2264
  %v2268 = vmul.f32 %v2082, %v2264
  %v2269 = vmul.f32 %v2083, %v2264
  %v2270 = vmul.f32 %v2084, %v2264
  %v2271 = vmul.f32 %v2085, %v2264
  %v2272 = vmul.f32 %v2086, %v2264
  %v2273 = vmul.f32 %v2087, %v2264
  %v2274 = vmul.f32 %v2088, %v2264
  %v2275 = vmul.f32 %v2089, %v2264
  %v2276 = vmul.f32 %v2090, %v2264
  %v2277 = vmul.f32 %v2091, %v2264
  %v2278 = vmul.f32 %v2092, %v2264
  %v2279 = vmul.f32 %v2093, %v2264
  %v2280 = vmul.f32 %v2094, %v2264
  %v2281 = vmul.f32 %v2095, %v2264
  %v2282 = vmul.f32 %v2096, %v2264
  %v2283 = vmul.f32 %v2097, %v2264
  %v2284 = vmul.f32 %v2098, %v2264
  %v2285 = vmul.f32 %v2099, %v2264
  %v2286 = vmul.f32 %v2100, %v2264
  %v2287 = vmul.f32 %v2101, %v2264
  %v2288 = vmul.f32 %v2102, %v2264
  %v2289 = vmul.f32 %v2103, %v2264
  %s2290 = scalar_lea.vmem %s11, 96
  %v2291 = vld [vmem:[%s2290] sm:$0xff]
  %v2292 = vld [vmem:[%s2290 + $0x8] sm:$0xff]
  %v2293 = vld [vmem:[%s2290 + $0x10] sm:$0xff]
  %v2294 = vld [vmem:[%s2290 + $0x18] sm:$0xff]
  %v2295 = vld [vmem:[%s2290 + $0x20] sm:$0xff]
  %v2296 = vld [vmem:[%s2290 + $0x28] sm:$0xff]
  %v2297 = vld [vmem:[%s2290 + $0x30] sm:$0xff]
  %v2298 = vld [vmem:[%s2290 + $0x38] sm:$0xff]
  %v2299 = vld [vmem:[%s2290 + $0x40] sm:$0xff]
  %v2300 = vld [vmem:[%s2290 + $0x48] sm:$0xff]
  %v2301 = vld [vmem:[%s2290 + $0x50] sm:$0xff]
  %v2302 = vld [vmem:[%s2290 + $0x58] sm:$0xff]
  %2304 = vset.pattern.permute.xlu0 0
  %2305 = vperm.xlu0 %2304, %v2291
  %v2306 = vpop.permute.xlu0 %2305
  %2309 = vset.pattern.permute.xlu0 0
  %2310 = vperm.xlu0 %2309, %v2292
  %v2311 = vpop.permute.xlu0 %2310
  %2314 = vset.pattern.permute.xlu0 0
  %2315 = vperm.xlu0 %2314, %v2293
  %v2316 = vpop.permute.xlu0 %2315
  %2319 = vset.pattern.permute.xlu0 0
  %2320 = vperm.xlu0 %2319, %v2294
  %v2321 = vpop.permute.xlu0 %2320
  %2324 = vset.pattern.permute.xlu0 0
  %2325 = vperm.xlu0 %2324, %v2295
  %v2326 = vpop.permute.xlu0 %2325
  %2329 = vset.pattern.permute.xlu0 0
  %2330 = vperm.xlu0 %2329, %v2296
  %v2331 = vpop.permute.xlu0 %2330
  %2334 = vset.pattern.permute.xlu0 0
  %2335 = vperm.xlu0 %2334, %v2297
  %v2336 = vpop.permute.xlu0 %2335
  %2339 = vset.pattern.permute.xlu0 0
  %2340 = vperm.xlu0 %2339, %v2298
  %v2341 = vpop.permute.xlu0 %2340
  %2344 = vset.pattern.permute.xlu0 0
  %2345 = vperm.xlu0 %2344, %v2299
  %v2346 = vpop.permute.xlu0 %2345
  %2349 = vset.pattern.permute.xlu0 0
  %2350 = vperm.xlu0 %2349, %v2300
  %v2351 = vpop.permute.xlu0 %2350
  %2354 = vset.pattern.permute.xlu0 0
  %2355 = vperm.xlu0 %2354, %v2301
  %v2356 = vpop.permute.xlu0 %2355
  %2359 = vset.pattern.permute.xlu0 0
  %2360 = vperm.xlu0 %2359, %v2302
  %v2361 = vpop.permute.xlu0 %2360
  %v2363 = vmul.f32 %v2266, %v2306
  %v2364 = vmul.f32 %v2267, %v2306
  %v2365 = vmul.f32 %v2268, %v2311
  %v2366 = vmul.f32 %v2269, %v2311
  %v2367 = vmul.f32 %v2270, %v2316
  %v2368 = vmul.f32 %v2271, %v2316
  %v2369 = vmul.f32 %v2272, %v2321
  %v2370 = vmul.f32 %v2273, %v2321
  %v2371 = vmul.f32 %v2274, %v2326
  %v2372 = vmul.f32 %v2275, %v2326
  %v2373 = vmul.f32 %v2276, %v2331
  %v2374 = vmul.f32 %v2277, %v2331
  %v2375 = vmul.f32 %v2278, %v2336
  %v2376 = vmul.f32 %v2279, %v2336
  %v2377 = vmul.f32 %v2280, %v2341
  %v2378 = vmul.f32 %v2281, %v2341
  %v2379 = vmul.f32 %v2282, %v2346
  %v2380 = vmul.f32 %v2283, %v2346
  %v2381 = vmul.f32 %v2284, %v2351
  %v2382 = vmul.f32 %v2285, %v2351
  %v2383 = vmul.f32 %v2286, %v2356
  %v2384 = vmul.f32 %v2287, %v2356
  %v2385 = vmul.f32 %v2288, %v2361
  %v2386 = vmul.f32 %v2289, %v2361
  %2411 = vrot.lane.b32.xlu0 %v2363, 127
  %v2412 = vpop.permute.xlu0 %2411
  %2413 = vrot.lane.b32.xlu0 %v2364, 127
  %v2414 = vpop.permute.xlu0 %2413
  %2415 = vrot.lane.b32.xlu0 %v2365, 127
  %v2416 = vpop.permute.xlu0 %2415
  %2417 = vrot.lane.b32.xlu0 %v2366, 127
  %v2418 = vpop.permute.xlu0 %2417
  %2419 = vrot.lane.b32.xlu0 %v2367, 127
  %v2420 = vpop.permute.xlu0 %2419
  %2421 = vrot.lane.b32.xlu0 %v2368, 127
  %v2422 = vpop.permute.xlu0 %2421
  %2423 = vrot.lane.b32.xlu0 %v2369, 127
  %v2424 = vpop.permute.xlu0 %2423
  %2425 = vrot.lane.b32.xlu0 %v2370, 127
  %v2426 = vpop.permute.xlu0 %2425
  %2427 = vrot.lane.b32.xlu0 %v2371, 127
  %v2428 = vpop.permute.xlu0 %2427
  %2429 = vrot.lane.b32.xlu0 %v2372, 127
  %v2430 = vpop.permute.xlu0 %2429
  %2431 = vrot.lane.b32.xlu0 %v2373, 127
  %v2432 = vpop.permute.xlu0 %2431
  %2433 = vrot.lane.b32.xlu0 %v2374, 127
  %v2434 = vpop.permute.xlu0 %2433
  %2435 = vrot.lane.b32.xlu0 %v2375, 127
  %v2436 = vpop.permute.xlu0 %2435
  %2437 = vrot.lane.b32.xlu0 %v2376, 127
  %v2438 = vpop.permute.xlu0 %2437
  %2439 = vrot.lane.b32.xlu0 %v2377, 127
  %v2440 = vpop.permute.xlu0 %2439
  %2441 = vrot.lane.b32.xlu0 %v2378, 127
  %v2442 = vpop.permute.xlu0 %2441
  %2443 = vrot.lane.b32.xlu0 %v2379, 127
  %v2444 = vpop.permute.xlu0 %2443
  %2445 = vrot.lane.b32.xlu0 %v2380, 127
  %v2446 = vpop.permute.xlu0 %2445
  %2447 = vrot.lane.b32.xlu0 %v2381, 127
  %v2448 = vpop.permute.xlu0 %2447
  %2449 = vrot.lane.b32.xlu0 %v2382, 127
  %v2450 = vpop.permute.xlu0 %2449
  %2451 = vrot.lane.b32.xlu0 %v2383, 127
  %v2452 = vpop.permute.xlu0 %2451
  %2453 = vrot.lane.b32.xlu0 %v2384, 127
  %v2454 = vpop.permute.xlu0 %2453
  %2455 = vrot.lane.b32.xlu0 %v2385, 127
  %v2456 = vpop.permute.xlu0 %2455
  %2457 = vrot.lane.b32.xlu0 %v2386, 127
  %v2458 = vpop.permute.xlu0 %2457
  %v2459 = vsel %vm409, %v2412, %v2414
  %v2460 = vsel %vm409, %v2416, %v2418
  %v2461 = vsel %vm409, %v2420, %v2422
  %v2462 = vsel %vm409, %v2424, %v2426
  %v2463 = vsel %vm409, %v2428, %v2430
  %v2464 = vsel %vm409, %v2432, %v2434
  %v2465 = vsel %vm409, %v2436, %v2438
  %v2466 = vsel %vm409, %v2440, %v2442
  %v2467 = vsel %vm409, %v2444, %v2446
  %v2468 = vsel %vm409, %v2448, %v2450
  %v2469 = vsel %vm409, %v2452, %v2454
  %v2470 = vsel %vm409, %v2456, %v2458
  %v2495 = vadd.f32 %v2233, %v2459
  %v2496 = vadd.f32 %v2234, %v2414
  %v2497 = vadd.f32 %v2235, %v2460
  %v2498 = vadd.f32 %v2236, %v2418
  %v2499 = vadd.f32 %v2237, %v2461
  %v2500 = vadd.f32 %v2238, %v2422
  %v2501 = vadd.f32 %v2239, %v2462
  %v2502 = vadd.f32 %v2240, %v2426
  %v2503 = vadd.f32 %v2241, %v2463
  %v2504 = vadd.f32 %v2242, %v2430
  %v2505 = vadd.f32 %v2243, %v2464
  %v2506 = vadd.f32 %v2244, %v2434
  %v2507 = vadd.f32 %v2245, %v2465
  %v2508 = vadd.f32 %v2246, %v2438
  %v2509 = vadd.f32 %v2247, %v2466
  %v2510 = vadd.f32 %v2248, %v2442
  %v2511 = vadd.f32 %v2249, %v2467
  %v2512 = vadd.f32 %v2250, %v2446
  %v2513 = vadd.f32 %v2251, %v2468
  %v2514 = vadd.f32 %v2252, %v2450
  %v2515 = vadd.f32 %v2253, %v2469
  %v2516 = vadd.f32 %v2254, %v2454
  %v2517 = vadd.f32 %v2255, %v2470
  %v2518 = vadd.f32 %v2256, %v2458
  %v2519 = vld [vmem:[%s440] sm:$0x1]
  %v2521 = vlaneseq
  %v2522 = vshrl.u32 %v2521, 7
  %v2523 = vsub.s32 0, %v2522
  %v2524 = vrot.slane %v2519, %v2523
  %2525 = vrot.lane.b32.xlu0 %v2524, 121
  %v2526 = vpop.permute.xlu0 %2525
  %v2528 = vmul.f32 %v2080, %v2526
  %v2529 = vmul.f32 %v2081, %v2526
  %v2530 = vmul.f32 %v2082, %v2526
  %v2531 = vmul.f32 %v2083, %v2526
  %v2532 = vmul.f32 %v2084, %v2526
  %v2533 = vmul.f32 %v2085, %v2526
  %v2534 = vmul.f32 %v2086, %v2526
  %v2535 = vmul.f32 %v2087, %v2526
  %v2536 = vmul.f32 %v2088, %v2526
  %v2537 = vmul.f32 %v2089, %v2526
  %v2538 = vmul.f32 %v2090, %v2526
  %v2539 = vmul.f32 %v2091, %v2526
  %v2540 = vmul.f32 %v2092, %v2526
  %v2541 = vmul.f32 %v2093, %v2526
  %v2542 = vmul.f32 %v2094, %v2526
  %v2543 = vmul.f32 %v2095, %v2526
  %v2544 = vmul.f32 %v2096, %v2526
  %v2545 = vmul.f32 %v2097, %v2526
  %v2546 = vmul.f32 %v2098, %v2526
  %v2547 = vmul.f32 %v2099, %v2526
  %v2548 = vmul.f32 %v2100, %v2526
  %v2549 = vmul.f32 %v2101, %v2526
  %v2550 = vmul.f32 %v2102, %v2526
  %v2551 = vmul.f32 %v2103, %v2526
  %s2552 = scalar_lea.vmem %s11, 192
  %v2553 = vld [vmem:[%s2552] sm:$0xff]
  %v2554 = vld [vmem:[%s2552 + $0x8] sm:$0xff]
  %v2555 = vld [vmem:[%s2552 + $0x10] sm:$0xff]
  %v2556 = vld [vmem:[%s2552 + $0x18] sm:$0xff]
  %v2557 = vld [vmem:[%s2552 + $0x20] sm:$0xff]
  %v2558 = vld [vmem:[%s2552 + $0x28] sm:$0xff]
  %v2559 = vld [vmem:[%s2552 + $0x30] sm:$0xff]
  %v2560 = vld [vmem:[%s2552 + $0x38] sm:$0xff]
  %v2561 = vld [vmem:[%s2552 + $0x40] sm:$0xff]
  %v2562 = vld [vmem:[%s2552 + $0x48] sm:$0xff]
  %v2563 = vld [vmem:[%s2552 + $0x50] sm:$0xff]
  %v2564 = vld [vmem:[%s2552 + $0x58] sm:$0xff]
  %2566 = vset.pattern.permute.xlu0 0
  %2567 = vperm.xlu0 %2566, %v2553
  %v2568 = vpop.permute.xlu0 %2567
  %2571 = vset.pattern.permute.xlu0 0
  %2572 = vperm.xlu0 %2571, %v2554
  %v2573 = vpop.permute.xlu0 %2572
  %2576 = vset.pattern.permute.xlu0 0
  %2577 = vperm.xlu0 %2576, %v2555
  %v2578 = vpop.permute.xlu0 %2577
  %2581 = vset.pattern.permute.xlu0 0
  %2582 = vperm.xlu0 %2581, %v2556
  %v2583 = vpop.permute.xlu0 %2582
  %2586 = vset.pattern.permute.xlu0 0
  %2587 = vperm.xlu0 %2586, %v2557
  %v2588 = vpop.permute.xlu0 %2587
  %2591 = vset.pattern.permute.xlu0 0
  %2592 = vperm.xlu0 %2591, %v2558
  %v2593 = vpop.permute.xlu0 %2592
  %2596 = vset.pattern.permute.xlu0 0
  %2597 = vperm.xlu0 %2596, %v2559
  %v2598 = vpop.permute.xlu0 %2597
  %2601 = vset.pattern.permute.xlu0 0
  %2602 = vperm.xlu0 %2601, %v2560
  %v2603 = vpop.permute.xlu0 %2602
  %2606 = vset.pattern.permute.xlu0 0
  %2607 = vperm.xlu0 %2606, %v2561
  %v2608 = vpop.permute.xlu0 %2607
  %2611 = vset.pattern.permute.xlu0 0
  %2612 = vperm.xlu0 %2611, %v2562
  %v2613 = vpop.permute.xlu0 %2612
  %2616 = vset.pattern.permute.xlu0 0
  %2617 = vperm.xlu0 %2616, %v2563
  %v2618 = vpop.permute.xlu0 %2617
  %2621 = vset.pattern.permute.xlu0 0
  %2622 = vperm.xlu0 %2621, %v2564
  %v2623 = vpop.permute.xlu0 %2622
  %v2625 = vmul.f32 %v2528, %v2568
  %v2626 = vmul.f32 %v2529, %v2568
  %v2627 = vmul.f32 %v2530, %v2573
  %v2628 = vmul.f32 %v2531, %v2573
  %v2629 = vmul.f32 %v2532, %v2578
  %v2630 = vmul.f32 %v2533, %v2578
  %v2631 = vmul.f32 %v2534, %v2583
  %v2632 = vmul.f32 %v2535, %v2583
  %v2633 = vmul.f32 %v2536, %v2588
  %v2634 = vmul.f32 %v2537, %v2588
  %v2635 = vmul.f32 %v2538, %v2593
  %v2636 = vmul.f32 %v2539, %v2593
  %v2637 = vmul.f32 %v2540, %v2598
  %v2638 = vmul.f32 %v2541, %v2598
  %v2639 = vmul.f32 %v2542, %v2603
  %v2640 = vmul.f32 %v2543, %v2603
  %v2641 = vmul.f32 %v2544, %v2608
  %v2642 = vmul.f32 %v2545, %v2608
  %v2643 = vmul.f32 %v2546, %v2613
  %v2644 = vmul.f32 %v2547, %v2613
  %v2645 = vmul.f32 %v2548, %v2618
  %v2646 = vmul.f32 %v2549, %v2618
  %v2647 = vmul.f32 %v2550, %v2623
  %v2648 = vmul.f32 %v2551, %v2623
  %2673 = vrot.lane.b32.xlu0 %v2625, 126
  %v2674 = vpop.permute.xlu0 %2673
  %2675 = vrot.lane.b32.xlu0 %v2626, 126
  %v2676 = vpop.permute.xlu0 %2675
  %2677 = vrot.lane.b32.xlu0 %v2627, 126
  %v2678 = vpop.permute.xlu0 %2677
  %2679 = vrot.lane.b32.xlu0 %v2628, 126
  %v2680 = vpop.permute.xlu0 %2679
  %2681 = vrot.lane.b32.xlu0 %v2629, 126
  %v2682 = vpop.permute.xlu0 %2681
  %2683 = vrot.lane.b32.xlu0 %v2630, 126
  %v2684 = vpop.permute.xlu0 %2683
  %2685 = vrot.lane.b32.xlu0 %v2631, 126
  %v2686 = vpop.permute.xlu0 %2685
  %2687 = vrot.lane.b32.xlu0 %v2632, 126
  %v2688 = vpop.permute.xlu0 %2687
  %2689 = vrot.lane.b32.xlu0 %v2633, 126
  %v2690 = vpop.permute.xlu0 %2689
  %2691 = vrot.lane.b32.xlu0 %v2634, 126
  %v2692 = vpop.permute.xlu0 %2691
  %2693 = vrot.lane.b32.xlu0 %v2635, 126
  %v2694 = vpop.permute.xlu0 %2693
  %2695 = vrot.lane.b32.xlu0 %v2636, 126
  %v2696 = vpop.permute.xlu0 %2695
  %2697 = vrot.lane.b32.xlu0 %v2637, 126
  %v2698 = vpop.permute.xlu0 %2697
  %2699 = vrot.lane.b32.xlu0 %v2638, 126
  %v2700 = vpop.permute.xlu0 %2699
  %2701 = vrot.lane.b32.xlu0 %v2639, 126
  %v2702 = vpop.permute.xlu0 %2701
  %2703 = vrot.lane.b32.xlu0 %v2640, 126
  %v2704 = vpop.permute.xlu0 %2703
  %2705 = vrot.lane.b32.xlu0 %v2641, 126
  %v2706 = vpop.permute.xlu0 %2705
  %2707 = vrot.lane.b32.xlu0 %v2642, 126
  %v2708 = vpop.permute.xlu0 %2707
  %2709 = vrot.lane.b32.xlu0 %v2643, 126
  %v2710 = vpop.permute.xlu0 %2709
  %2711 = vrot.lane.b32.xlu0 %v2644, 126
  %v2712 = vpop.permute.xlu0 %2711
  %2713 = vrot.lane.b32.xlu0 %v2645, 126
  %v2714 = vpop.permute.xlu0 %2713
  %2715 = vrot.lane.b32.xlu0 %v2646, 126
  %v2716 = vpop.permute.xlu0 %2715
  %2717 = vrot.lane.b32.xlu0 %v2647, 126
  %v2718 = vpop.permute.xlu0 %2717
  %2719 = vrot.lane.b32.xlu0 %v2648, 126
  %v2720 = vpop.permute.xlu0 %2719
  %v2721 = vsel %vm547, %v2674, %v2676
  %v2722 = vsel %vm547, %v2678, %v2680
  %v2723 = vsel %vm547, %v2682, %v2684
  %v2724 = vsel %vm547, %v2686, %v2688
  %v2725 = vsel %vm547, %v2690, %v2692
  %v2726 = vsel %vm547, %v2694, %v2696
  %v2727 = vsel %vm547, %v2698, %v2700
  %v2728 = vsel %vm547, %v2702, %v2704
  %v2729 = vsel %vm547, %v2706, %v2708
  %v2730 = vsel %vm547, %v2710, %v2712
  %v2731 = vsel %vm547, %v2714, %v2716
  %v2732 = vsel %vm547, %v2718, %v2720
  %v2757 = vadd.f32 %v2495, %v2721
  %v2758 = vadd.f32 %v2496, %v2676
  %v2759 = vadd.f32 %v2497, %v2722
  %v2760 = vadd.f32 %v2498, %v2680
  %v2761 = vadd.f32 %v2499, %v2723
  %v2762 = vadd.f32 %v2500, %v2684
  %v2763 = vadd.f32 %v2501, %v2724
  %v2764 = vadd.f32 %v2502, %v2688
  %v2765 = vadd.f32 %v2503, %v2725
  %v2766 = vadd.f32 %v2504, %v2692
  %v2767 = vadd.f32 %v2505, %v2726
  %v2768 = vadd.f32 %v2506, %v2696
  %v2769 = vadd.f32 %v2507, %v2727
  %v2770 = vadd.f32 %v2508, %v2700
  %v2771 = vadd.f32 %v2509, %v2728
  %v2772 = vadd.f32 %v2510, %v2704
  %v2773 = vadd.f32 %v2511, %v2729
  %v2774 = vadd.f32 %v2512, %v2708
  %v2775 = vadd.f32 %v2513, %v2730
  %v2776 = vadd.f32 %v2514, %v2712
  %v2777 = vadd.f32 %v2515, %v2731
  %v2778 = vadd.f32 %v2516, %v2716
  %v2779 = vadd.f32 %v2517, %v2732
  %v2780 = vadd.f32 %v2518, %v2720
  %v2781 = vld [vmem:[%s578] sm:$0x1]
  %v2783 = vlaneseq
  %v2784 = vshrl.u32 %v2783, 7
  %v2785 = vsub.s32 0, %v2784
  %v2786 = vrot.slane %v2781, %v2785
  %2787 = vrot.lane.b32.xlu0 %v2786, 127
  %v2788 = vpop.permute.xlu0 %2787
  %v2790 = vmul.f32 %v2080, %v2788
  %v2791 = vmul.f32 %v2081, %v2788
  %v2792 = vmul.f32 %v2082, %v2788
  %v2793 = vmul.f32 %v2083, %v2788
  %v2794 = vmul.f32 %v2084, %v2788
  %v2795 = vmul.f32 %v2085, %v2788
  %v2796 = vmul.f32 %v2086, %v2788
  %v2797 = vmul.f32 %v2087, %v2788
  %v2798 = vmul.f32 %v2088, %v2788
  %v2799 = vmul.f32 %v2089, %v2788
  %v2800 = vmul.f32 %v2090, %v2788
  %v2801 = vmul.f32 %v2091, %v2788
  %v2802 = vmul.f32 %v2092, %v2788
  %v2803 = vmul.f32 %v2093, %v2788
  %v2804 = vmul.f32 %v2094, %v2788
  %v2805 = vmul.f32 %v2095, %v2788
  %v2806 = vmul.f32 %v2096, %v2788
  %v2807 = vmul.f32 %v2097, %v2788
  %v2808 = vmul.f32 %v2098, %v2788
  %v2809 = vmul.f32 %v2099, %v2788
  %v2810 = vmul.f32 %v2100, %v2788
  %v2811 = vmul.f32 %v2101, %v2788
  %v2812 = vmul.f32 %v2102, %v2788
  %v2813 = vmul.f32 %v2103, %v2788
  %s2814 = scalar_lea.vmem %s11, 288
  %v2815 = vld [vmem:[%s2814] sm:$0xff]
  %v2816 = vld [vmem:[%s2814 + $0x8] sm:$0xff]
  %v2817 = vld [vmem:[%s2814 + $0x10] sm:$0xff]
  %v2818 = vld [vmem:[%s2814 + $0x18] sm:$0xff]
  %v2819 = vld [vmem:[%s2814 + $0x20] sm:$0xff]
  %v2820 = vld [vmem:[%s2814 + $0x28] sm:$0xff]
  %v2821 = vld [vmem:[%s2814 + $0x30] sm:$0xff]
  %v2822 = vld [vmem:[%s2814 + $0x38] sm:$0xff]
  %v2823 = vld [vmem:[%s2814 + $0x40] sm:$0xff]
  %v2824 = vld [vmem:[%s2814 + $0x48] sm:$0xff]
  %v2825 = vld [vmem:[%s2814 + $0x50] sm:$0xff]
  %v2826 = vld [vmem:[%s2814 + $0x58] sm:$0xff]
  %2828 = vset.pattern.permute.xlu0 0
  %2829 = vperm.xlu0 %2828, %v2815
  %v2830 = vpop.permute.xlu0 %2829
  %2833 = vset.pattern.permute.xlu0 0
  %2834 = vperm.xlu0 %2833, %v2816
  %v2835 = vpop.permute.xlu0 %2834
  %2838 = vset.pattern.permute.xlu0 0
  %2839 = vperm.xlu0 %2838, %v2817
  %v2840 = vpop.permute.xlu0 %2839
  %2843 = vset.pattern.permute.xlu0 0
  %2844 = vperm.xlu0 %2843, %v2818
  %v2845 = vpop.permute.xlu0 %2844
  %2848 = vset.pattern.permute.xlu0 0
  %2849 = vperm.xlu0 %2848, %v2819
  %v2850 = vpop.permute.xlu0 %2849
  %2853 = vset.pattern.permute.xlu0 0
  %2854 = vperm.xlu0 %2853, %v2820
  %v2855 = vpop.permute.xlu0 %2854
  %2858 = vset.pattern.permute.xlu0 0
  %2859 = vperm.xlu0 %2858, %v2821
  %v2860 = vpop.permute.xlu0 %2859
  %2863 = vset.pattern.permute.xlu0 0
  %2864 = vperm.xlu0 %2863, %v2822
  %v2865 = vpop.permute.xlu0 %2864
  %2868 = vset.pattern.permute.xlu0 0
  %2869 = vperm.xlu0 %2868, %v2823
  %v2870 = vpop.permute.xlu0 %2869
  %2873 = vset.pattern.permute.xlu0 0
  %2874 = vperm.xlu0 %2873, %v2824
  %v2875 = vpop.permute.xlu0 %2874
  %2878 = vset.pattern.permute.xlu0 0
  %2879 = vperm.xlu0 %2878, %v2825
  %v2880 = vpop.permute.xlu0 %2879
  %2883 = vset.pattern.permute.xlu0 0
  %2884 = vperm.xlu0 %2883, %v2826
  %v2885 = vpop.permute.xlu0 %2884
  %v2887 = vmul.f32 %v2790, %v2830
  %v2888 = vmul.f32 %v2791, %v2830
  %v2889 = vmul.f32 %v2792, %v2835
  %v2890 = vmul.f32 %v2793, %v2835
  %v2891 = vmul.f32 %v2794, %v2840
  %v2892 = vmul.f32 %v2795, %v2840
  %v2893 = vmul.f32 %v2796, %v2845
  %v2894 = vmul.f32 %v2797, %v2845
  %v2895 = vmul.f32 %v2798, %v2850
  %v2896 = vmul.f32 %v2799, %v2850
  %v2897 = vmul.f32 %v2800, %v2855
  %v2898 = vmul.f32 %v2801, %v2855
  %v2899 = vmul.f32 %v2802, %v2860
  %v2900 = vmul.f32 %v2803, %v2860
  %v2901 = vmul.f32 %v2804, %v2865
  %v2902 = vmul.f32 %v2805, %v2865
  %v2903 = vmul.f32 %v2806, %v2870
  %v2904 = vmul.f32 %v2807, %v2870
  %v2905 = vmul.f32 %v2808, %v2875
  %v2906 = vmul.f32 %v2809, %v2875
  %v2907 = vmul.f32 %v2810, %v2880
  %v2908 = vmul.f32 %v2811, %v2880
  %v2909 = vmul.f32 %v2812, %v2885
  %v2910 = vmul.f32 %v2813, %v2885
  %2935 = vrot.lane.b32.xlu0 %v2887, 120
  %v2936 = vpop.permute.xlu0 %2935
  %2937 = vrot.lane.b32.xlu0 %v2888, 120
  %v2938 = vpop.permute.xlu0 %2937
  %2939 = vrot.lane.b32.xlu0 %v2889, 120
  %v2940 = vpop.permute.xlu0 %2939
  %2941 = vrot.lane.b32.xlu0 %v2890, 120
  %v2942 = vpop.permute.xlu0 %2941
  %2943 = vrot.lane.b32.xlu0 %v2891, 120
  %v2944 = vpop.permute.xlu0 %2943
  %2945 = vrot.lane.b32.xlu0 %v2892, 120
  %v2946 = vpop.permute.xlu0 %2945
  %2947 = vrot.lane.b32.xlu0 %v2893, 120
  %v2948 = vpop.permute.xlu0 %2947
  %2949 = vrot.lane.b32.xlu0 %v2894, 120
  %v2950 = vpop.permute.xlu0 %2949
  %2951 = vrot.lane.b32.xlu0 %v2895, 120
  %v2952 = vpop.permute.xlu0 %2951
  %2953 = vrot.lane.b32.xlu0 %v2896, 120
  %v2954 = vpop.permute.xlu0 %2953
  %2955 = vrot.lane.b32.xlu0 %v2897, 120
  %v2956 = vpop.permute.xlu0 %2955
  %2957 = vrot.lane.b32.xlu0 %v2898, 120
  %v2958 = vpop.permute.xlu0 %2957
  %2959 = vrot.lane.b32.xlu0 %v2899, 120
  %v2960 = vpop.permute.xlu0 %2959
  %2961 = vrot.lane.b32.xlu0 %v2900, 120
  %v2962 = vpop.permute.xlu0 %2961
  %2963 = vrot.lane.b32.xlu0 %v2901, 120
  %v2964 = vpop.permute.xlu0 %2963
  %2965 = vrot.lane.b32.xlu0 %v2902, 120
  %v2966 = vpop.permute.xlu0 %2965
  %2967 = vrot.lane.b32.xlu0 %v2903, 120
  %v2968 = vpop.permute.xlu0 %2967
  %2969 = vrot.lane.b32.xlu0 %v2904, 120
  %v2970 = vpop.permute.xlu0 %2969
  %2971 = vrot.lane.b32.xlu0 %v2905, 120
  %v2972 = vpop.permute.xlu0 %2971
  %2973 = vrot.lane.b32.xlu0 %v2906, 120
  %v2974 = vpop.permute.xlu0 %2973
  %2975 = vrot.lane.b32.xlu0 %v2907, 120
  %v2976 = vpop.permute.xlu0 %2975
  %2977 = vrot.lane.b32.xlu0 %v2908, 120
  %v2978 = vpop.permute.xlu0 %2977
  %2979 = vrot.lane.b32.xlu0 %v2909, 120
  %v2980 = vpop.permute.xlu0 %2979
  %2981 = vrot.lane.b32.xlu0 %v2910, 120
  %v2982 = vpop.permute.xlu0 %2981
  %v2983 = vsel %vm685, %v2936, %v2938
  %v2984 = vsel %vm685, %v2940, %v2942
  %v2985 = vsel %vm685, %v2944, %v2946
  %v2986 = vsel %vm685, %v2948, %v2950
  %v2987 = vsel %vm685, %v2952, %v2954
  %v2988 = vsel %vm685, %v2956, %v2958
  %v2989 = vsel %vm685, %v2960, %v2962
  %v2990 = vsel %vm685, %v2964, %v2966
  %v2991 = vsel %vm685, %v2968, %v2970
  %v2992 = vsel %vm685, %v2972, %v2974
  %v2993 = vsel %vm685, %v2976, %v2978
  %v2994 = vsel %vm685, %v2980, %v2982
  %v3019 = vadd.f32 %v2757, %v2983
  %v3020 = vadd.f32 %v2758, %v2938
  %v3021 = vadd.f32 %v2759, %v2984
  %v3022 = vadd.f32 %v2760, %v2942
  %v3023 = vadd.f32 %v2761, %v2985
  %v3024 = vadd.f32 %v2762, %v2946
  %v3025 = vadd.f32 %v2763, %v2986
  %v3026 = vadd.f32 %v2764, %v2950
  %v3027 = vadd.f32 %v2765, %v2987
  %v3028 = vadd.f32 %v2766, %v2954
  %v3029 = vadd.f32 %v2767, %v2988
  %v3030 = vadd.f32 %v2768, %v2958
  %v3031 = vadd.f32 %v2769, %v2989
  %v3032 = vadd.f32 %v2770, %v2962
  %v3033 = vadd.f32 %v2771, %v2990
  %v3034 = vadd.f32 %v2772, %v2966
  %v3035 = vadd.f32 %v2773, %v2991
  %v3036 = vadd.f32 %v2774, %v2970
  %v3037 = vadd.f32 %v2775, %v2992
  %v3038 = vadd.f32 %v2776, %v2974
  %v3039 = vadd.f32 %v2777, %v2993
  %v3040 = vadd.f32 %v2778, %v2978
  %v3041 = vadd.f32 %v2779, %v2994
  %v3042 = vadd.f32 %v2780, %v2982
  %v3043 = vld [vmem:[%s716] sm:$0x1]
  %v3045 = vlaneseq
  %v3046 = vshrl.u32 %v3045, 7
  %v3047 = vsub.s32 0, %v3046
  %v3048 = vrot.slane %v3043, %v3047
  %v3050 = vmul.f32 %v2081, %v3048
  %v3051 = vmul.f32 %v2083, %v3048
  %v3052 = vmul.f32 %v2085, %v3048
  %v3053 = vmul.f32 %v2087, %v3048
  %v3054 = vmul.f32 %v2089, %v3048
  %v3055 = vmul.f32 %v2091, %v3048
  %v3056 = vmul.f32 %v2093, %v3048
  %v3057 = vmul.f32 %v2095, %v3048
  %v3058 = vmul.f32 %v2097, %v3048
  %v3059 = vmul.f32 %v2099, %v3048
  %v3060 = vmul.f32 %v2101, %v3048
  %v3061 = vmul.f32 %v2103, %v3048
  %s3062 = scalar_lea.vmem %s11, 384
  %v3063 = vld [vmem:[%s3062] sm:$0xff]
  %v3064 = vld [vmem:[%s3062 + $0x8] sm:$0xff]
  %v3065 = vld [vmem:[%s3062 + $0x10] sm:$0xff]
  %v3066 = vld [vmem:[%s3062 + $0x18] sm:$0xff]
  %v3067 = vld [vmem:[%s3062 + $0x20] sm:$0xff]
  %v3068 = vld [vmem:[%s3062 + $0x28] sm:$0xff]
  %v3069 = vld [vmem:[%s3062 + $0x30] sm:$0xff]
  %v3070 = vld [vmem:[%s3062 + $0x38] sm:$0xff]
  %v3071 = vld [vmem:[%s3062 + $0x40] sm:$0xff]
  %v3072 = vld [vmem:[%s3062 + $0x48] sm:$0xff]
  %v3073 = vld [vmem:[%s3062 + $0x50] sm:$0xff]
  %v3074 = vld [vmem:[%s3062 + $0x58] sm:$0xff]
  %3076 = vset.pattern.permute.xlu0 0
  %3077 = vperm.xlu0 %3076, %v3063
  %v3078 = vpop.permute.xlu0 %3077
  %3081 = vset.pattern.permute.xlu0 0
  %3082 = vperm.xlu0 %3081, %v3064
  %v3083 = vpop.permute.xlu0 %3082
  %3086 = vset.pattern.permute.xlu0 0
  %3087 = vperm.xlu0 %3086, %v3065
  %v3088 = vpop.permute.xlu0 %3087
  %3091 = vset.pattern.permute.xlu0 0
  %3092 = vperm.xlu0 %3091, %v3066
  %v3093 = vpop.permute.xlu0 %3092
  %3096 = vset.pattern.permute.xlu0 0
  %3097 = vperm.xlu0 %3096, %v3067
  %v3098 = vpop.permute.xlu0 %3097
  %3101 = vset.pattern.permute.xlu0 0
  %3102 = vperm.xlu0 %3101, %v3068
  %v3103 = vpop.permute.xlu0 %3102
  %3106 = vset.pattern.permute.xlu0 0
  %3107 = vperm.xlu0 %3106, %v3069
  %v3108 = vpop.permute.xlu0 %3107
  %3111 = vset.pattern.permute.xlu0 0
  %3112 = vperm.xlu0 %3111, %v3070
  %v3113 = vpop.permute.xlu0 %3112
  %3116 = vset.pattern.permute.xlu0 0
  %3117 = vperm.xlu0 %3116, %v3071
  %v3118 = vpop.permute.xlu0 %3117
  %3121 = vset.pattern.permute.xlu0 0
  %3122 = vperm.xlu0 %3121, %v3072
  %v3123 = vpop.permute.xlu0 %3122
  %3126 = vset.pattern.permute.xlu0 0
  %3127 = vperm.xlu0 %3126, %v3073
  %v3128 = vpop.permute.xlu0 %3127
  %3131 = vset.pattern.permute.xlu0 0
  %3132 = vperm.xlu0 %3131, %v3074
  %v3133 = vpop.permute.xlu0 %3132
  %v3135 = vmul.f32 %v3050, %v3078
  %v3136 = vmul.f32 %v3051, %v3083
  %v3137 = vmul.f32 %v3052, %v3088
  %v3138 = vmul.f32 %v3053, %v3093
  %v3139 = vmul.f32 %v3054, %v3098
  %v3140 = vmul.f32 %v3055, %v3103
  %v3141 = vmul.f32 %v3056, %v3108
  %v3142 = vmul.f32 %v3057, %v3113
  %v3143 = vmul.f32 %v3058, %v3118
  %v3144 = vmul.f32 %v3059, %v3123
  %v3145 = vmul.f32 %v3060, %v3128
  %v3146 = vmul.f32 %v3061, %v3133
  %3159 = vrot.lane.b32.xlu0 %v3135, 119
  %v3160 = vpop.permute.xlu0 %3159
  %3161 = vrot.lane.b32.xlu0 %v3136, 119
  %v3162 = vpop.permute.xlu0 %3161
  %3163 = vrot.lane.b32.xlu0 %v3137, 119
  %v3164 = vpop.permute.xlu0 %3163
  %3165 = vrot.lane.b32.xlu0 %v3138, 119
  %v3166 = vpop.permute.xlu0 %3165
  %3167 = vrot.lane.b32.xlu0 %v3139, 119
  %v3168 = vpop.permute.xlu0 %3167
  %3169 = vrot.lane.b32.xlu0 %v3140, 119
  %v3170 = vpop.permute.xlu0 %3169
  %3171 = vrot.lane.b32.xlu0 %v3141, 119
  %v3172 = vpop.permute.xlu0 %3171
  %3173 = vrot.lane.b32.xlu0 %v3142, 119
  %v3174 = vpop.permute.xlu0 %3173
  %3175 = vrot.lane.b32.xlu0 %v3143, 119
  %v3176 = vpop.permute.xlu0 %3175
  %3177 = vrot.lane.b32.xlu0 %v3144, 119
  %v3178 = vpop.permute.xlu0 %3177
  %3179 = vrot.lane.b32.xlu0 %v3145, 119
  %v3180 = vpop.permute.xlu0 %3179
  %3181 = vrot.lane.b32.xlu0 %v3146, 119
  %v3182 = vpop.permute.xlu0 %3181
  %v3195 = vadd.f32 %v3019, %v3160
  %v3196 = vadd.f32 %v3020, %v3160
  %v3197 = vadd.f32 %v3021, %v3162
  %v3198 = vadd.f32 %v3022, %v3162
  %v3199 = vadd.f32 %v3023, %v3164
  %v3200 = vadd.f32 %v3024, %v3164
  %v3201 = vadd.f32 %v3025, %v3166
  %v3202 = vadd.f32 %v3026, %v3166
  %v3203 = vadd.f32 %v3027, %v3168
  %v3204 = vadd.f32 %v3028, %v3168
  %v3205 = vadd.f32 %v3029, %v3170
  %v3206 = vadd.f32 %v3030, %v3170
  %v3207 = vadd.f32 %v3031, %v3172
  %v3208 = vadd.f32 %v3032, %v3172
  %v3209 = vadd.f32 %v3033, %v3174
  %v3210 = vadd.f32 %v3034, %v3174
  %v3211 = vadd.f32 %v3035, %v3176
  %v3212 = vadd.f32 %v3036, %v3176
  %v3213 = vadd.f32 %v3037, %v3178
  %v3214 = vadd.f32 %v3038, %v3178
  %v3215 = vadd.f32 %v3039, %v3180
  %v3216 = vadd.f32 %v3040, %v3180
  %v3217 = vadd.f32 %v3041, %v3182
  %v3218 = vadd.f32 %v3042, %v3182
  %v3219 = vld [vmem:[#allocation2 + $0x8] sm:$0xff]
  %v3220 = vld [vmem:[#allocation2 + $0x10] sm:$0xff]
  %v3221 = vld [vmem:[#allocation2 + $0x20] sm:$0xff]
  %v3222 = vld [vmem:[#allocation2 + $0x28] sm:$0xff]
  %v3223 = vld [vmem:[#allocation2 + $0x38] sm:$0xff]
  %v3224 = vld [vmem:[#allocation2 + $0x40] sm:$0xff]
  %v3225 = vld [vmem:[#allocation2 + $0x50] sm:$0xff]
  %v3226 = vld [vmem:[#allocation2 + $0x58] sm:$0xff]
  %v3227 = vld [vmem:[#allocation2 + $0x68] sm:$0xff]
  %v3228 = vld [vmem:[#allocation2 + $0x70] sm:$0xff]
  %v3229 = vld [vmem:[#allocation2 + $0x80] sm:$0xff]
  %v3230 = vld [vmem:[#allocation2 + $0x88] sm:$0xff]
  %v3231 = vld [vmem:[#allocation2 + $0x98] sm:$0xff]
  %v3232 = vld [vmem:[#allocation2 + $0xa0] sm:$0xff]
  %v3233 = vld [vmem:[#allocation2 + $0xb0] sm:$0xff]
  %v3234 = vld [vmem:[#allocation2 + $0xb8] sm:$0xff]
  %v3235 = vld [vmem:[#allocation2 + $0xc8] sm:$0xff]
  %v3236 = vld [vmem:[#allocation2 + $0xd0] sm:$0xff]
  %v3237 = vld [vmem:[#allocation2 + $0xe0] sm:$0xff]
  %v3238 = vld [vmem:[#allocation2 + $0xe8] sm:$0xff]
  %v3239 = vld [vmem:[#allocation2 + $0xf8] sm:$0xff]
  %v3240 = vld [vmem:[#allocation2 + $0x100] sm:$0xff]
  %v3241 = vld [vmem:[#allocation2 + $0x110] sm:$0xff]
  %v3242 = vld [vmem:[#allocation2 + $0x118] sm:$0xff]
  %v3243 = vld [vmem:[%s821] sm:$0x1]
  %v3245 = vlaneseq
  %v3246 = vshrl.u32 %v3245, 7
  %v3247 = vsub.s32 0, %v3246
  %v3248 = vrot.slane %v3243, %v3247
  %3249 = vrot.lane.b32.xlu0 %v3248, 1
  %v3250 = vpop.permute.xlu0 %3249
  %v3252 = vmul.f32 %v3219, %v3250
  %v3253 = vmul.f32 %v3220, %v3250
  %v3254 = vmul.f32 %v3221, %v3250
  %v3255 = vmul.f32 %v3222, %v3250
  %v3256 = vmul.f32 %v3223, %v3250
  %v3257 = vmul.f32 %v3224, %v3250
  %v3258 = vmul.f32 %v3225, %v3250
  %v3259 = vmul.f32 %v3226, %v3250
  %v3260 = vmul.f32 %v3227, %v3250
  %v3261 = vmul.f32 %v3228, %v3250
  %v3262 = vmul.f32 %v3229, %v3250
  %v3263 = vmul.f32 %v3230, %v3250
  %v3264 = vmul.f32 %v3231, %v3250
  %v3265 = vmul.f32 %v3232, %v3250
  %v3266 = vmul.f32 %v3233, %v3250
  %v3267 = vmul.f32 %v3234, %v3250
  %v3268 = vmul.f32 %v3235, %v3250
  %v3269 = vmul.f32 %v3236, %v3250
  %v3270 = vmul.f32 %v3237, %v3250
  %v3271 = vmul.f32 %v3238, %v3250
  %v3272 = vmul.f32 %v3239, %v3250
  %v3273 = vmul.f32 %v3240, %v3250
  %v3274 = vmul.f32 %v3241, %v3250
  %v3275 = vmul.f32 %v3242, %v3250
  %s3276 = scalar_lea.vmem %s11, 480
  %v3277 = vld [vmem:[%s3276] sm:$0xff]
  %v3278 = vld [vmem:[%s3276 + $0x8] sm:$0xff]
  %v3279 = vld [vmem:[%s3276 + $0x10] sm:$0xff]
  %v3280 = vld [vmem:[%s3276 + $0x18] sm:$0xff]
  %v3281 = vld [vmem:[%s3276 + $0x20] sm:$0xff]
  %v3282 = vld [vmem:[%s3276 + $0x28] sm:$0xff]
  %v3283 = vld [vmem:[%s3276 + $0x30] sm:$0xff]
  %v3284 = vld [vmem:[%s3276 + $0x38] sm:$0xff]
  %v3285 = vld [vmem:[%s3276 + $0x40] sm:$0xff]
  %v3286 = vld [vmem:[%s3276 + $0x48] sm:$0xff]
  %v3287 = vld [vmem:[%s3276 + $0x50] sm:$0xff]
  %v3288 = vld [vmem:[%s3276 + $0x58] sm:$0xff]
  %3290 = vset.pattern.permute.xlu0 0
  %3291 = vperm.xlu0 %3290, %v3277
  %v3292 = vpop.permute.xlu0 %3291
  %3295 = vset.pattern.permute.xlu0 0
  %3296 = vperm.xlu0 %3295, %v3278
  %v3297 = vpop.permute.xlu0 %3296
  %3300 = vset.pattern.permute.xlu0 0
  %3301 = vperm.xlu0 %3300, %v3279
  %v3302 = vpop.permute.xlu0 %3301
  %3305 = vset.pattern.permute.xlu0 0
  %3306 = vperm.xlu0 %3305, %v3280
  %v3307 = vpop.permute.xlu0 %3306
  %3310 = vset.pattern.permute.xlu0 0
  %3311 = vperm.xlu0 %3310, %v3281
  %v3312 = vpop.permute.xlu0 %3311
  %3315 = vset.pattern.permute.xlu0 0
  %3316 = vperm.xlu0 %3315, %v3282
  %v3317 = vpop.permute.xlu0 %3316
  %3320 = vset.pattern.permute.xlu0 0
  %3321 = vperm.xlu0 %3320, %v3283
  %v3322 = vpop.permute.xlu0 %3321
  %3325 = vset.pattern.permute.xlu0 0
  %3326 = vperm.xlu0 %3325, %v3284
  %v3327 = vpop.permute.xlu0 %3326
  %3330 = vset.pattern.permute.xlu0 0
  %3331 = vperm.xlu0 %3330, %v3285
  %v3332 = vpop.permute.xlu0 %3331
  %3335 = vset.pattern.permute.xlu0 0
  %3336 = vperm.xlu0 %3335, %v3286
  %v3337 = vpop.permute.xlu0 %3336
  %3340 = vset.pattern.permute.xlu0 0
  %3341 = vperm.xlu0 %3340, %v3287
  %v3342 = vpop.permute.xlu0 %3341
  %3345 = vset.pattern.permute.xlu0 0
  %3346 = vperm.xlu0 %3345, %v3288
  %v3347 = vpop.permute.xlu0 %3346
  %v3349 = vmul.f32 %v3252, %v3292
  %v3350 = vmul.f32 %v3253, %v3292
  %v3351 = vmul.f32 %v3254, %v3297
  %v3352 = vmul.f32 %v3255, %v3297
  %v3353 = vmul.f32 %v3256, %v3302
  %v3354 = vmul.f32 %v3257, %v3302
  %v3355 = vmul.f32 %v3258, %v3307
  %v3356 = vmul.f32 %v3259, %v3307
  %v3357 = vmul.f32 %v3260, %v3312
  %v3358 = vmul.f32 %v3261, %v3312
  %v3359 = vmul.f32 %v3262, %v3317
  %v3360 = vmul.f32 %v3263, %v3317
  %v3361 = vmul.f32 %v3264, %v3322
  %v3362 = vmul.f32 %v3265, %v3322
  %v3363 = vmul.f32 %v3266, %v3327
  %v3364 = vmul.f32 %v3267, %v3327
  %v3365 = vmul.f32 %v3268, %v3332
  %v3366 = vmul.f32 %v3269, %v3332
  %v3367 = vmul.f32 %v3270, %v3337
  %v3368 = vmul.f32 %v3271, %v3337
  %v3369 = vmul.f32 %v3272, %v3342
  %v3370 = vmul.f32 %v3273, %v3342
  %v3371 = vmul.f32 %v3274, %v3347
  %v3372 = vmul.f32 %v3275, %v3347
  %3397 = vrot.lane.b32.xlu0 %v3349, 118
  %v3398 = vpop.permute.xlu0 %3397
  %3399 = vrot.lane.b32.xlu0 %v3350, 118
  %v3400 = vpop.permute.xlu0 %3399
  %3401 = vrot.lane.b32.xlu0 %v3351, 118
  %v3402 = vpop.permute.xlu0 %3401
  %3403 = vrot.lane.b32.xlu0 %v3352, 118
  %v3404 = vpop.permute.xlu0 %3403
  %3405 = vrot.lane.b32.xlu0 %v3353, 118
  %v3406 = vpop.permute.xlu0 %3405
  %3407 = vrot.lane.b32.xlu0 %v3354, 118
  %v3408 = vpop.permute.xlu0 %3407
  %3409 = vrot.lane.b32.xlu0 %v3355, 118
  %v3410 = vpop.permute.xlu0 %3409
  %3411 = vrot.lane.b32.xlu0 %v3356, 118
  %v3412 = vpop.permute.xlu0 %3411
  %3413 = vrot.lane.b32.xlu0 %v3357, 118
  %v3414 = vpop.permute.xlu0 %3413
  %3415 = vrot.lane.b32.xlu0 %v3358, 118
  %v3416 = vpop.permute.xlu0 %3415
  %3417 = vrot.lane.b32.xlu0 %v3359, 118
  %v3418 = vpop.permute.xlu0 %3417
  %3419 = vrot.lane.b32.xlu0 %v3360, 118
  %v3420 = vpop.permute.xlu0 %3419
  %3421 = vrot.lane.b32.xlu0 %v3361, 118
  %v3422 = vpop.permute.xlu0 %3421
  %3423 = vrot.lane.b32.xlu0 %v3362, 118
  %v3424 = vpop.permute.xlu0 %3423
  %3425 = vrot.lane.b32.xlu0 %v3363, 118
  %v3426 = vpop.permute.xlu0 %3425
  %3427 = vrot.lane.b32.xlu0 %v3364, 118
  %v3428 = vpop.permute.xlu0 %3427
  %3429 = vrot.lane.b32.xlu0 %v3365, 118
  %v3430 = vpop.permute.xlu0 %3429
  %3431 = vrot.lane.b32.xlu0 %v3366, 118
  %v3432 = vpop.permute.xlu0 %3431
  %3433 = vrot.lane.b32.xlu0 %v3367, 118
  %v3434 = vpop.permute.xlu0 %3433
  %3435 = vrot.lane.b32.xlu0 %v3368, 118
  %v3436 = vpop.permute.xlu0 %3435
  %3437 = vrot.lane.b32.xlu0 %v3369, 118
  %v3438 = vpop.permute.xlu0 %3437
  %3439 = vrot.lane.b32.xlu0 %v3370, 118
  %v3440 = vpop.permute.xlu0 %3439
  %3441 = vrot.lane.b32.xlu0 %v3371, 118
  %v3442 = vpop.permute.xlu0 %3441
  %3443 = vrot.lane.b32.xlu0 %v3372, 118
  %v3444 = vpop.permute.xlu0 %3443
  %v3445 = vsel %vm928, %v3398, %v3400
  %v3446 = vsel %vm928, %v3402, %v3404
  %v3447 = vsel %vm928, %v3406, %v3408
  %v3448 = vsel %vm928, %v3410, %v3412
  %v3449 = vsel %vm928, %v3414, %v3416
  %v3450 = vsel %vm928, %v3418, %v3420
  %v3451 = vsel %vm928, %v3422, %v3424
  %v3452 = vsel %vm928, %v3426, %v3428
  %v3453 = vsel %vm928, %v3430, %v3432
  %v3454 = vsel %vm928, %v3434, %v3436
  %v3455 = vsel %vm928, %v3438, %v3440
  %v3456 = vsel %vm928, %v3442, %v3444
  %v3481 = vadd.f32 %v3195, %v3398
  %v3482 = vadd.f32 %v3196, %v3445
  %v3483 = vadd.f32 %v3197, %v3402
  %v3484 = vadd.f32 %v3198, %v3446
  %v3485 = vadd.f32 %v3199, %v3406
  %v3486 = vadd.f32 %v3200, %v3447
  %v3487 = vadd.f32 %v3201, %v3410
  %v3488 = vadd.f32 %v3202, %v3448
  %v3489 = vadd.f32 %v3203, %v3414
  %v3490 = vadd.f32 %v3204, %v3449
  %v3491 = vadd.f32 %v3205, %v3418
  %v3492 = vadd.f32 %v3206, %v3450
  %v3493 = vadd.f32 %v3207, %v3422
  %v3494 = vadd.f32 %v3208, %v3451
  %v3495 = vadd.f32 %v3209, %v3426
  %v3496 = vadd.f32 %v3210, %v3452
  %v3497 = vadd.f32 %v3211, %v3430
  %v3498 = vadd.f32 %v3212, %v3453
  %v3499 = vadd.f32 %v3213, %v3434
  %v3500 = vadd.f32 %v3214, %v3454
  %v3501 = vadd.f32 %v3215, %v3438
  %v3502 = vadd.f32 %v3216, %v3455
  %v3503 = vadd.f32 %v3217, %v3442
  %v3504 = vadd.f32 %v3218, %v3456
  %v3505 = vld [vmem:[%s959] sm:$0x1]
  %v3507 = vlaneseq
  %v3508 = vshrl.u32 %v3507, 7
  %v3509 = vsub.s32 0, %v3508
  %v3510 = vrot.slane %v3505, %v3509
  %3511 = vrot.lane.b32.xlu0 %v3510, 7
  %v3512 = vpop.permute.xlu0 %3511
  %v3514 = vmul.f32 %v3219, %v3512
  %v3515 = vmul.f32 %v3220, %v3512
  %v3516 = vmul.f32 %v3221, %v3512
  %v3517 = vmul.f32 %v3222, %v3512
  %v3518 = vmul.f32 %v3223, %v3512
  %v3519 = vmul.f32 %v3224, %v3512
  %v3520 = vmul.f32 %v3225, %v3512
  %v3521 = vmul.f32 %v3226, %v3512
  %v3522 = vmul.f32 %v3227, %v3512
  %v3523 = vmul.f32 %v3228, %v3512
  %v3524 = vmul.f32 %v3229, %v3512
  %v3525 = vmul.f32 %v3230, %v3512
  %v3526 = vmul.f32 %v3231, %v3512
  %v3527 = vmul.f32 %v3232, %v3512
  %v3528 = vmul.f32 %v3233, %v3512
  %v3529 = vmul.f32 %v3234, %v3512
  %v3530 = vmul.f32 %v3235, %v3512
  %v3531 = vmul.f32 %v3236, %v3512
  %v3532 = vmul.f32 %v3237, %v3512
  %v3533 = vmul.f32 %v3238, %v3512
  %v3534 = vmul.f32 %v3239, %v3512
  %v3535 = vmul.f32 %v3240, %v3512
  %v3536 = vmul.f32 %v3241, %v3512
  %v3537 = vmul.f32 %v3242, %v3512
  %s3538 = scalar_lea.vmem %s11, 576
  %v3539 = vld [vmem:[%s3538] sm:$0xff]
  %v3540 = vld [vmem:[%s3538 + $0x8] sm:$0xff]
  %v3541 = vld [vmem:[%s3538 + $0x10] sm:$0xff]
  %v3542 = vld [vmem:[%s3538 + $0x18] sm:$0xff]
  %v3543 = vld [vmem:[%s3538 + $0x20] sm:$0xff]
  %v3544 = vld [vmem:[%s3538 + $0x28] sm:$0xff]
  %v3545 = vld [vmem:[%s3538 + $0x30] sm:$0xff]
  %v3546 = vld [vmem:[%s3538 + $0x38] sm:$0xff]
  %v3547 = vld [vmem:[%s3538 + $0x40] sm:$0xff]
  %v3548 = vld [vmem:[%s3538 + $0x48] sm:$0xff]
  %v3549 = vld [vmem:[%s3538 + $0x50] sm:$0xff]
  %v3550 = vld [vmem:[%s3538 + $0x58] sm:$0xff]
  %3552 = vset.pattern.permute.xlu0 0
  %3553 = vperm.xlu0 %3552, %v3539
  %v3554 = vpop.permute.xlu0 %3553
  %3557 = vset.pattern.permute.xlu0 0
  %3558 = vperm.xlu0 %3557, %v3540
  %v3559 = vpop.permute.xlu0 %3558
  %3562 = vset.pattern.permute.xlu0 0
  %3563 = vperm.xlu0 %3562, %v3541
  %v3564 = vpop.permute.xlu0 %3563
  %3567 = vset.pattern.permute.xlu0 0
  %3568 = vperm.xlu0 %3567, %v3542
  %v3569 = vpop.permute.xlu0 %3568
  %3572 = vset.pattern.permute.xlu0 0
  %3573 = vperm.xlu0 %3572, %v3543
  %v3574 = vpop.permute.xlu0 %3573
  %3577 = vset.pattern.permute.xlu0 0
  %3578 = vperm.xlu0 %3577, %v3544
  %v3579 = vpop.permute.xlu0 %3578
  %3582 = vset.pattern.permute.xlu0 0
  %3583 = vperm.xlu0 %3582, %v3545
  %v3584 = vpop.permute.xlu0 %3583
  %3587 = vset.pattern.permute.xlu0 0
  %3588 = vperm.xlu0 %3587, %v3546
  %v3589 = vpop.permute.xlu0 %3588
  %3592 = vset.pattern.permute.xlu0 0
  %3593 = vperm.xlu0 %3592, %v3547
  %v3594 = vpop.permute.xlu0 %3593
  %3597 = vset.pattern.permute.xlu0 0
  %3598 = vperm.xlu0 %3597, %v3548
  %v3599 = vpop.permute.xlu0 %3598
  %3602 = vset.pattern.permute.xlu0 0
  %3603 = vperm.xlu0 %3602, %v3549
  %v3604 = vpop.permute.xlu0 %3603
  %3607 = vset.pattern.permute.xlu0 0
  %3608 = vperm.xlu0 %3607, %v3550
  %v3609 = vpop.permute.xlu0 %3608
  %v3611 = vmul.f32 %v3514, %v3554
  %v3612 = vmul.f32 %v3515, %v3554
  %v3613 = vmul.f32 %v3516, %v3559
  %v3614 = vmul.f32 %v3517, %v3559
  %v3615 = vmul.f32 %v3518, %v3564
  %v3616 = vmul.f32 %v3519, %v3564
  %v3617 = vmul.f32 %v3520, %v3569
  %v3618 = vmul.f32 %v3521, %v3569
  %v3619 = vmul.f32 %v3522, %v3574
  %v3620 = vmul.f32 %v3523, %v3574
  %v3621 = vmul.f32 %v3524, %v3579
  %v3622 = vmul.f32 %v3525, %v3579
  %v3623 = vmul.f32 %v3526, %v3584
  %v3624 = vmul.f32 %v3527, %v3584
  %v3625 = vmul.f32 %v3528, %v3589
  %v3626 = vmul.f32 %v3529, %v3589
  %v3627 = vmul.f32 %v3530, %v3594
  %v3628 = vmul.f32 %v3531, %v3594
  %v3629 = vmul.f32 %v3532, %v3599
  %v3630 = vmul.f32 %v3533, %v3599
  %v3631 = vmul.f32 %v3534, %v3604
  %v3632 = vmul.f32 %v3535, %v3604
  %v3633 = vmul.f32 %v3536, %v3609
  %v3634 = vmul.f32 %v3537, %v3609
  %3659 = vrot.lane.b32.xlu0 %v3611, 112
  %v3660 = vpop.permute.xlu0 %3659
  %3661 = vrot.lane.b32.xlu0 %v3612, 112
  %v3662 = vpop.permute.xlu0 %3661
  %3663 = vrot.lane.b32.xlu0 %v3613, 112
  %v3664 = vpop.permute.xlu0 %3663
  %3665 = vrot.lane.b32.xlu0 %v3614, 112
  %v3666 = vpop.permute.xlu0 %3665
  %3667 = vrot.lane.b32.xlu0 %v3615, 112
  %v3668 = vpop.permute.xlu0 %3667
  %3669 = vrot.lane.b32.xlu0 %v3616, 112
  %v3670 = vpop.permute.xlu0 %3669
  %3671 = vrot.lane.b32.xlu0 %v3617, 112
  %v3672 = vpop.permute.xlu0 %3671
  %3673 = vrot.lane.b32.xlu0 %v3618, 112
  %v3674 = vpop.permute.xlu0 %3673
  %3675 = vrot.lane.b32.xlu0 %v3619, 112
  %v3676 = vpop.permute.xlu0 %3675
  %3677 = vrot.lane.b32.xlu0 %v3620, 112
  %v3678 = vpop.permute.xlu0 %3677
  %3679 = vrot.lane.b32.xlu0 %v3621, 112
  %v3680 = vpop.permute.xlu0 %3679
  %3681 = vrot.lane.b32.xlu0 %v3622, 112
  %v3682 = vpop.permute.xlu0 %3681
  %3683 = vrot.lane.b32.xlu0 %v3623, 112
  %v3684 = vpop.permute.xlu0 %3683
  %3685 = vrot.lane.b32.xlu0 %v3624, 112
  %v3686 = vpop.permute.xlu0 %3685
  %3687 = vrot.lane.b32.xlu0 %v3625, 112
  %v3688 = vpop.permute.xlu0 %3687
  %3689 = vrot.lane.b32.xlu0 %v3626, 112
  %v3690 = vpop.permute.xlu0 %3689
  %3691 = vrot.lane.b32.xlu0 %v3627, 112
  %v3692 = vpop.permute.xlu0 %3691
  %3693 = vrot.lane.b32.xlu0 %v3628, 112
  %v3694 = vpop.permute.xlu0 %3693
  %3695 = vrot.lane.b32.xlu0 %v3629, 112
  %v3696 = vpop.permute.xlu0 %3695
  %3697 = vrot.lane.b32.xlu0 %v3630, 112
  %v3698 = vpop.permute.xlu0 %3697
  %3699 = vrot.lane.b32.xlu0 %v3631, 112
  %v3700 = vpop.permute.xlu0 %3699
  %3701 = vrot.lane.b32.xlu0 %v3632, 112
  %v3702 = vpop.permute.xlu0 %3701
  %3703 = vrot.lane.b32.xlu0 %v3633, 112
  %v3704 = vpop.permute.xlu0 %3703
  %3705 = vrot.lane.b32.xlu0 %v3634, 112
  %v3706 = vpop.permute.xlu0 %3705
  %v3707 = vsel %vm1066, %v3660, %v3662
  %v3708 = vsel %vm1066, %v3664, %v3666
  %v3709 = vsel %vm1066, %v3668, %v3670
  %v3710 = vsel %vm1066, %v3672, %v3674
  %v3711 = vsel %vm1066, %v3676, %v3678
  %v3712 = vsel %vm1066, %v3680, %v3682
  %v3713 = vsel %vm1066, %v3684, %v3686
  %v3714 = vsel %vm1066, %v3688, %v3690
  %v3715 = vsel %vm1066, %v3692, %v3694
  %v3716 = vsel %vm1066, %v3696, %v3698
  %v3717 = vsel %vm1066, %v3700, %v3702
  %v3718 = vsel %vm1066, %v3704, %v3706
  %v3743 = vadd.f32 %v3481, %v3660
  %v3744 = vadd.f32 %v3482, %v3707
  %v3745 = vadd.f32 %v3483, %v3664
  %v3746 = vadd.f32 %v3484, %v3708
  %v3747 = vadd.f32 %v3485, %v3668
  %v3748 = vadd.f32 %v3486, %v3709
  %v3749 = vadd.f32 %v3487, %v3672
  %v3750 = vadd.f32 %v3488, %v3710
  %v3751 = vadd.f32 %v3489, %v3676
  %v3752 = vadd.f32 %v3490, %v3711
  %v3753 = vadd.f32 %v3491, %v3680
  %v3754 = vadd.f32 %v3492, %v3712
  %v3755 = vadd.f32 %v3493, %v3684
  %v3756 = vadd.f32 %v3494, %v3713
  %v3757 = vadd.f32 %v3495, %v3688
  %v3758 = vadd.f32 %v3496, %v3714
  %v3759 = vadd.f32 %v3497, %v3692
  %v3760 = vadd.f32 %v3498, %v3715
  %v3761 = vadd.f32 %v3499, %v3696
  %v3762 = vadd.f32 %v3500, %v3716
  %v3763 = vadd.f32 %v3501, %v3700
  %v3764 = vadd.f32 %v3502, %v3717
  %v3765 = vadd.f32 %v3503, %v3704
  %v3766 = vadd.f32 %v3504, %v3718
  %v3767 = vld [vmem:[%s1097] sm:$0x1]
  %v3769 = vlaneseq
  %v3770 = vshrl.u32 %v3769, 7
  %v3771 = vsub.s32 0, %v3770
  %v3772 = vrot.slane %v3767, %v3771
  %3773 = vrot.lane.b32.xlu0 %v3772, 8
  %v3774 = vpop.permute.xlu0 %3773
  %v3776 = vmul.f32 %v3219, %v3774
  %v3777 = vmul.f32 %v3220, %v3774
  %v3778 = vmul.f32 %v3221, %v3774
  %v3779 = vmul.f32 %v3222, %v3774
  %v3780 = vmul.f32 %v3223, %v3774
  %v3781 = vmul.f32 %v3224, %v3774
  %v3782 = vmul.f32 %v3225, %v3774
  %v3783 = vmul.f32 %v3226, %v3774
  %v3784 = vmul.f32 %v3227, %v3774
  %v3785 = vmul.f32 %v3228, %v3774
  %v3786 = vmul.f32 %v3229, %v3774
  %v3787 = vmul.f32 %v3230, %v3774
  %v3788 = vmul.f32 %v3231, %v3774
  %v3789 = vmul.f32 %v3232, %v3774
  %v3790 = vmul.f32 %v3233, %v3774
  %v3791 = vmul.f32 %v3234, %v3774
  %v3792 = vmul.f32 %v3235, %v3774
  %v3793 = vmul.f32 %v3236, %v3774
  %v3794 = vmul.f32 %v3237, %v3774
  %v3795 = vmul.f32 %v3238, %v3774
  %v3796 = vmul.f32 %v3239, %v3774
  %v3797 = vmul.f32 %v3240, %v3774
  %v3798 = vmul.f32 %v3241, %v3774
  %v3799 = vmul.f32 %v3242, %v3774
  %s3800 = scalar_lea.vmem %s11, 672
  %v3801 = vld [vmem:[%s3800] sm:$0xff]
  %v3802 = vld [vmem:[%s3800 + $0x8] sm:$0xff]
  %v3803 = vld [vmem:[%s3800 + $0x10] sm:$0xff]
  %v3804 = vld [vmem:[%s3800 + $0x18] sm:$0xff]
  %v3805 = vld [vmem:[%s3800 + $0x20] sm:$0xff]
  %v3806 = vld [vmem:[%s3800 + $0x28] sm:$0xff]
  %v3807 = vld [vmem:[%s3800 + $0x30] sm:$0xff]
  %v3808 = vld [vmem:[%s3800 + $0x38] sm:$0xff]
  %v3809 = vld [vmem:[%s3800 + $0x40] sm:$0xff]
  %v3810 = vld [vmem:[%s3800 + $0x48] sm:$0xff]
  %v3811 = vld [vmem:[%s3800 + $0x50] sm:$0xff]
  %v3812 = vld [vmem:[%s3800 + $0x58] sm:$0xff]
  %3814 = vset.pattern.permute.xlu0 0
  %3815 = vperm.xlu0 %3814, %v3801
  %v3816 = vpop.permute.xlu0 %3815
  %3819 = vset.pattern.permute.xlu0 0
  %3820 = vperm.xlu0 %3819, %v3802
  %v3821 = vpop.permute.xlu0 %3820
  %3824 = vset.pattern.permute.xlu0 0
  %3825 = vperm.xlu0 %3824, %v3803
  %v3826 = vpop.permute.xlu0 %3825
  %3829 = vset.pattern.permute.xlu0 0
  %3830 = vperm.xlu0 %3829, %v3804
  %v3831 = vpop.permute.xlu0 %3830
  %3834 = vset.pattern.permute.xlu0 0
  %3835 = vperm.xlu0 %3834, %v3805
  %v3836 = vpop.permute.xlu0 %3835
  %3839 = vset.pattern.permute.xlu0 0
  %3840 = vperm.xlu0 %3839, %v3806
  %v3841 = vpop.permute.xlu0 %3840
  %3844 = vset.pattern.permute.xlu0 0
  %3845 = vperm.xlu0 %3844, %v3807
  %v3846 = vpop.permute.xlu0 %3845
  %3849 = vset.pattern.permute.xlu0 0
  %3850 = vperm.xlu0 %3849, %v3808
  %v3851 = vpop.permute.xlu0 %3850
  %3854 = vset.pattern.permute.xlu0 0
  %3855 = vperm.xlu0 %3854, %v3809
  %v3856 = vpop.permute.xlu0 %3855
  %3859 = vset.pattern.permute.xlu0 0
  %3860 = vperm.xlu0 %3859, %v3810
  %v3861 = vpop.permute.xlu0 %3860
  %3864 = vset.pattern.permute.xlu0 0
  %3865 = vperm.xlu0 %3864, %v3811
  %v3866 = vpop.permute.xlu0 %3865
  %3869 = vset.pattern.permute.xlu0 0
  %3870 = vperm.xlu0 %3869, %v3812
  %v3871 = vpop.permute.xlu0 %3870
  %v3873 = vmul.f32 %v3776, %v3816
  %v3874 = vmul.f32 %v3777, %v3816
  %v3875 = vmul.f32 %v3778, %v3821
  %v3876 = vmul.f32 %v3779, %v3821
  %v3877 = vmul.f32 %v3780, %v3826
  %v3878 = vmul.f32 %v3781, %v3826
  %v3879 = vmul.f32 %v3782, %v3831
  %v3880 = vmul.f32 %v3783, %v3831
  %v3881 = vmul.f32 %v3784, %v3836
  %v3882 = vmul.f32 %v3785, %v3836
  %v3883 = vmul.f32 %v3786, %v3841
  %v3884 = vmul.f32 %v3787, %v3841
  %v3885 = vmul.f32 %v3788, %v3846
  %v3886 = vmul.f32 %v3789, %v3846
  %v3887 = vmul.f32 %v3790, %v3851
  %v3888 = vmul.f32 %v3791, %v3851
  %v3889 = vmul.f32 %v3792, %v3856
  %v3890 = vmul.f32 %v3793, %v3856
  %v3891 = vmul.f32 %v3794, %v3861
  %v3892 = vmul.f32 %v3795, %v3861
  %v3893 = vmul.f32 %v3796, %v3866
  %v3894 = vmul.f32 %v3797, %v3866
  %v3895 = vmul.f32 %v3798, %v3871
  %v3896 = vmul.f32 %v3799, %v3871
  %3921 = vrot.lane.b32.xlu0 %v3873, 111
  %v3922 = vpop.permute.xlu0 %3921
  %3923 = vrot.lane.b32.xlu0 %v3874, 111
  %v3924 = vpop.permute.xlu0 %3923
  %3925 = vrot.lane.b32.xlu0 %v3875, 111
  %v3926 = vpop.permute.xlu0 %3925
  %3927 = vrot.lane.b32.xlu0 %v3876, 111
  %v3928 = vpop.permute.xlu0 %3927
  %3929 = vrot.lane.b32.xlu0 %v3877, 111
  %v3930 = vpop.permute.xlu0 %3929
  %3931 = vrot.lane.b32.xlu0 %v3878, 111
  %v3932 = vpop.permute.xlu0 %3931
  %3933 = vrot.lane.b32.xlu0 %v3879, 111
  %v3934 = vpop.permute.xlu0 %3933
  %3935 = vrot.lane.b32.xlu0 %v3880, 111
  %v3936 = vpop.permute.xlu0 %3935
  %3937 = vrot.lane.b32.xlu0 %v3881, 111
  %v3938 = vpop.permute.xlu0 %3937
  %3939 = vrot.lane.b32.xlu0 %v3882, 111
  %v3940 = vpop.permute.xlu0 %3939
  %3941 = vrot.lane.b32.xlu0 %v3883, 111
  %v3942 = vpop.permute.xlu0 %3941
  %3943 = vrot.lane.b32.xlu0 %v3884, 111
  %v3944 = vpop.permute.xlu0 %3943
  %3945 = vrot.lane.b32.xlu0 %v3885, 111
  %v3946 = vpop.permute.xlu0 %3945
  %3947 = vrot.lane.b32.xlu0 %v3886, 111
  %v3948 = vpop.permute.xlu0 %3947
  %3949 = vrot.lane.b32.xlu0 %v3887, 111
  %v3950 = vpop.permute.xlu0 %3949
  %3951 = vrot.lane.b32.xlu0 %v3888, 111
  %v3952 = vpop.permute.xlu0 %3951
  %3953 = vrot.lane.b32.xlu0 %v3889, 111
  %v3954 = vpop.permute.xlu0 %3953
  %3955 = vrot.lane.b32.xlu0 %v3890, 111
  %v3956 = vpop.permute.xlu0 %3955
  %3957 = vrot.lane.b32.xlu0 %v3891, 111
  %v3958 = vpop.permute.xlu0 %3957
  %3959 = vrot.lane.b32.xlu0 %v3892, 111
  %v3960 = vpop.permute.xlu0 %3959
  %3961 = vrot.lane.b32.xlu0 %v3893, 111
  %v3962 = vpop.permute.xlu0 %3961
  %3963 = vrot.lane.b32.xlu0 %v3894, 111
  %v3964 = vpop.permute.xlu0 %3963
  %3965 = vrot.lane.b32.xlu0 %v3895, 111
  %v3966 = vpop.permute.xlu0 %3965
  %3967 = vrot.lane.b32.xlu0 %v3896, 111
  %v3968 = vpop.permute.xlu0 %3967
  %v3969 = vsel %vm1204, %v3922, %v3924
  %v3970 = vsel %vm1204, %v3926, %v3928
  %v3971 = vsel %vm1204, %v3930, %v3932
  %v3972 = vsel %vm1204, %v3934, %v3936
  %v3973 = vsel %vm1204, %v3938, %v3940
  %v3974 = vsel %vm1204, %v3942, %v3944
  %v3975 = vsel %vm1204, %v3946, %v3948
  %v3976 = vsel %vm1204, %v3950, %v3952
  %v3977 = vsel %vm1204, %v3954, %v3956
  %v3978 = vsel %vm1204, %v3958, %v3960
  %v3979 = vsel %vm1204, %v3962, %v3964
  %v3980 = vsel %vm1204, %v3966, %v3968
  %v4005 = vadd.f32 %v3743, %v3922
  %v4006 = vadd.f32 %v3744, %v3969
  %v4007 = vadd.f32 %v3745, %v3926
  %v4008 = vadd.f32 %v3746, %v3970
  %v4009 = vadd.f32 %v3747, %v3930
  %v4010 = vadd.f32 %v3748, %v3971
  %v4011 = vadd.f32 %v3749, %v3934
  %v4012 = vadd.f32 %v3750, %v3972
  %v4013 = vadd.f32 %v3751, %v3938
  %v4014 = vadd.f32 %v3752, %v3973
  %v4015 = vadd.f32 %v3753, %v3942
  %v4016 = vadd.f32 %v3754, %v3974
  %v4017 = vadd.f32 %v3755, %v3946
  %v4018 = vadd.f32 %v3756, %v3975
  %v4019 = vadd.f32 %v3757, %v3950
  %v4020 = vadd.f32 %v3758, %v3976
  %v4021 = vadd.f32 %v3759, %v3954
  %v4022 = vadd.f32 %v3760, %v3977
  %v4023 = vadd.f32 %v3761, %v3958
  %v4024 = vadd.f32 %v3762, %v3978
  %v4025 = vadd.f32 %v3763, %v3962
  %v4026 = vadd.f32 %v3764, %v3979
  %v4027 = vadd.f32 %v3765, %v3966
  %v4028 = vadd.f32 %v3766, %v3980
  %v4029 = vld [vmem:[%s1235] sm:$0x1]
  %v4031 = vlaneseq
  %v4032 = vshrl.u32 %v4031, 7
  %v4033 = vsub.s32 0, %v4032
  %v4034 = vrot.slane %v4029, %v4033
  %4035 = vrot.lane.b32.xlu0 %v4034, 9
  %v4036 = vpop.permute.xlu0 %4035
  %v4038 = vmul.f32 %v3219, %v4036
  %v4039 = vmul.f32 %v3220, %v4036
  %v4040 = vmul.f32 %v3221, %v4036
  %v4041 = vmul.f32 %v3222, %v4036
  %v4042 = vmul.f32 %v3223, %v4036
  %v4043 = vmul.f32 %v3224, %v4036
  %v4044 = vmul.f32 %v3225, %v4036
  %v4045 = vmul.f32 %v3226, %v4036
  %v4046 = vmul.f32 %v3227, %v4036
  %v4047 = vmul.f32 %v3228, %v4036
  %v4048 = vmul.f32 %v3229, %v4036
  %v4049 = vmul.f32 %v3230, %v4036
  %v4050 = vmul.f32 %v3231, %v4036
  %v4051 = vmul.f32 %v3232, %v4036
  %v4052 = vmul.f32 %v3233, %v4036
  %v4053 = vmul.f32 %v3234, %v4036
  %v4054 = vmul.f32 %v3235, %v4036
  %v4055 = vmul.f32 %v3236, %v4036
  %v4056 = vmul.f32 %v3237, %v4036
  %v4057 = vmul.f32 %v3238, %v4036
  %v4058 = vmul.f32 %v3239, %v4036
  %v4059 = vmul.f32 %v3240, %v4036
  %v4060 = vmul.f32 %v3241, %v4036
  %v4061 = vmul.f32 %v3242, %v4036
  %s4062 = scalar_lea.vmem %s11, 768
  %v4063 = vld [vmem:[%s4062] sm:$0xff]
  %v4064 = vld [vmem:[%s4062 + $0x8] sm:$0xff]
  %v4065 = vld [vmem:[%s4062 + $0x10] sm:$0xff]
  %v4066 = vld [vmem:[%s4062 + $0x18] sm:$0xff]
  %v4067 = vld [vmem:[%s4062 + $0x20] sm:$0xff]
  %v4068 = vld [vmem:[%s4062 + $0x28] sm:$0xff]
  %v4069 = vld [vmem:[%s4062 + $0x30] sm:$0xff]
  %v4070 = vld [vmem:[%s4062 + $0x38] sm:$0xff]
  %v4071 = vld [vmem:[%s4062 + $0x40] sm:$0xff]
  %v4072 = vld [vmem:[%s4062 + $0x48] sm:$0xff]
  %v4073 = vld [vmem:[%s4062 + $0x50] sm:$0xff]
  %v4074 = vld [vmem:[%s4062 + $0x58] sm:$0xff]
  %4076 = vset.pattern.permute.xlu0 0
  %4077 = vperm.xlu0 %4076, %v4063
  %v4078 = vpop.permute.xlu0 %4077
  %4081 = vset.pattern.permute.xlu0 0
  %4082 = vperm.xlu0 %4081, %v4064
  %v4083 = vpop.permute.xlu0 %4082
  %4086 = vset.pattern.permute.xlu0 0
  %4087 = vperm.xlu0 %4086, %v4065
  %v4088 = vpop.permute.xlu0 %4087
  %4091 = vset.pattern.permute.xlu0 0
  %4092 = vperm.xlu0 %4091, %v4066
  %v4093 = vpop.permute.xlu0 %4092
  %4096 = vset.pattern.permute.xlu0 0
  %4097 = vperm.xlu0 %4096, %v4067
  %v4098 = vpop.permute.xlu0 %4097
  %4101 = vset.pattern.permute.xlu0 0
  %4102 = vperm.xlu0 %4101, %v4068
  %v4103 = vpop.permute.xlu0 %4102
  %4106 = vset.pattern.permute.xlu0 0
  %4107 = vperm.xlu0 %4106, %v4069
  %v4108 = vpop.permute.xlu0 %4107
  %4111 = vset.pattern.permute.xlu0 0
  %4112 = vperm.xlu0 %4111, %v4070
  %v4113 = vpop.permute.xlu0 %4112
  %4116 = vset.pattern.permute.xlu0 0
  %4117 = vperm.xlu0 %4116, %v4071
  %v4118 = vpop.permute.xlu0 %4117
  %4121 = vset.pattern.permute.xlu0 0
  %4122 = vperm.xlu0 %4121, %v4072
  %v4123 = vpop.permute.xlu0 %4122
  %4126 = vset.pattern.permute.xlu0 0
  %4127 = vperm.xlu0 %4126, %v4073
  %v4128 = vpop.permute.xlu0 %4127
  %4131 = vset.pattern.permute.xlu0 0
  %4132 = vperm.xlu0 %4131, %v4074
  %v4133 = vpop.permute.xlu0 %4132
  %v4135 = vmul.f32 %v4038, %v4078
  %v4136 = vmul.f32 %v4039, %v4078
  %v4137 = vmul.f32 %v4040, %v4083
  %v4138 = vmul.f32 %v4041, %v4083
  %v4139 = vmul.f32 %v4042, %v4088
  %v4140 = vmul.f32 %v4043, %v4088
  %v4141 = vmul.f32 %v4044, %v4093
  %v4142 = vmul.f32 %v4045, %v4093
  %v4143 = vmul.f32 %v4046, %v4098
  %v4144 = vmul.f32 %v4047, %v4098
  %v4145 = vmul.f32 %v4048, %v4103
  %v4146 = vmul.f32 %v4049, %v4103
  %v4147 = vmul.f32 %v4050, %v4108
  %v4148 = vmul.f32 %v4051, %v4108
  %v4149 = vmul.f32 %v4052, %v4113
  %v4150 = vmul.f32 %v4053, %v4113
  %v4151 = vmul.f32 %v4054, %v4118
  %v4152 = vmul.f32 %v4055, %v4118
  %v4153 = vmul.f32 %v4056, %v4123
  %v4154 = vmul.f32 %v4057, %v4123
  %v4155 = vmul.f32 %v4058, %v4128
  %v4156 = vmul.f32 %v4059, %v4128
  %v4157 = vmul.f32 %v4060, %v4133
  %v4158 = vmul.f32 %v4061, %v4133
  %4183 = vrot.lane.b32.xlu0 %v4135, 110
  %v4184 = vpop.permute.xlu0 %4183
  %4185 = vrot.lane.b32.xlu0 %v4136, 110
  %v4186 = vpop.permute.xlu0 %4185
  %4187 = vrot.lane.b32.xlu0 %v4137, 110
  %v4188 = vpop.permute.xlu0 %4187
  %4189 = vrot.lane.b32.xlu0 %v4138, 110
  %v4190 = vpop.permute.xlu0 %4189
  %4191 = vrot.lane.b32.xlu0 %v4139, 110
  %v4192 = vpop.permute.xlu0 %4191
  %4193 = vrot.lane.b32.xlu0 %v4140, 110
  %v4194 = vpop.permute.xlu0 %4193
  %4195 = vrot.lane.b32.xlu0 %v4141, 110
  %v4196 = vpop.permute.xlu0 %4195
  %4197 = vrot.lane.b32.xlu0 %v4142, 110
  %v4198 = vpop.permute.xlu0 %4197
  %4199 = vrot.lane.b32.xlu0 %v4143, 110
  %v4200 = vpop.permute.xlu0 %4199
  %4201 = vrot.lane.b32.xlu0 %v4144, 110
  %v4202 = vpop.permute.xlu0 %4201
  %4203 = vrot.lane.b32.xlu0 %v4145, 110
  %v4204 = vpop.permute.xlu0 %4203
  %4205 = vrot.lane.b32.xlu0 %v4146, 110
  %v4206 = vpop.permute.xlu0 %4205
  %4207 = vrot.lane.b32.xlu0 %v4147, 110
  %v4208 = vpop.permute.xlu0 %4207
  %4209 = vrot.lane.b32.xlu0 %v4148, 110
  %v4210 = vpop.permute.xlu0 %4209
  %4211 = vrot.lane.b32.xlu0 %v4149, 110
  %v4212 = vpop.permute.xlu0 %4211
  %4213 = vrot.lane.b32.xlu0 %v4150, 110
  %v4214 = vpop.permute.xlu0 %4213
  %4215 = vrot.lane.b32.xlu0 %v4151, 110
  %v4216 = vpop.permute.xlu0 %4215
  %4217 = vrot.lane.b32.xlu0 %v4152, 110
  %v4218 = vpop.permute.xlu0 %4217
  %4219 = vrot.lane.b32.xlu0 %v4153, 110
  %v4220 = vpop.permute.xlu0 %4219
  %4221 = vrot.lane.b32.xlu0 %v4154, 110
  %v4222 = vpop.permute.xlu0 %4221
  %4223 = vrot.lane.b32.xlu0 %v4155, 110
  %v4224 = vpop.permute.xlu0 %4223
  %4225 = vrot.lane.b32.xlu0 %v4156, 110
  %v4226 = vpop.permute.xlu0 %4225
  %4227 = vrot.lane.b32.xlu0 %v4157, 110
  %v4228 = vpop.permute.xlu0 %4227
  %4229 = vrot.lane.b32.xlu0 %v4158, 110
  %v4230 = vpop.permute.xlu0 %4229
  %v4231 = vsel %vm1342, %v4184, %v4186
  %v4232 = vsel %vm1342, %v4188, %v4190
  %v4233 = vsel %vm1342, %v4192, %v4194
  %v4234 = vsel %vm1342, %v4196, %v4198
  %v4235 = vsel %vm1342, %v4200, %v4202
  %v4236 = vsel %vm1342, %v4204, %v4206
  %v4237 = vsel %vm1342, %v4208, %v4210
  %v4238 = vsel %vm1342, %v4212, %v4214
  %v4239 = vsel %vm1342, %v4216, %v4218
  %v4240 = vsel %vm1342, %v4220, %v4222
  %v4241 = vsel %vm1342, %v4224, %v4226
  %v4242 = vsel %vm1342, %v4228, %v4230
  %v4267 = vadd.f32 %v4005, %v4184
  %v4268 = vadd.f32 %v4006, %v4231
  %v4269 = vadd.f32 %v4007, %v4188
  %v4270 = vadd.f32 %v4008, %v4232
  %v4271 = vadd.f32 %v4009, %v4192
  %v4272 = vadd.f32 %v4010, %v4233
  %v4273 = vadd.f32 %v4011, %v4196
  %v4274 = vadd.f32 %v4012, %v4234
  %v4275 = vadd.f32 %v4013, %v4200
  %v4276 = vadd.f32 %v4014, %v4235
  %v4277 = vadd.f32 %v4015, %v4204
  %v4278 = vadd.f32 %v4016, %v4236
  %v4279 = vadd.f32 %v4017, %v4208
  %v4280 = vadd.f32 %v4018, %v4237
  %v4281 = vadd.f32 %v4019, %v4212
  %v4282 = vadd.f32 %v4020, %v4238
  %v4283 = vadd.f32 %v4021, %v4216
  %v4284 = vadd.f32 %v4022, %v4239
  %v4285 = vadd.f32 %v4023, %v4220
  %v4286 = vadd.f32 %v4024, %v4240
  %v4287 = vadd.f32 %v4025, %v4224
  %v4288 = vadd.f32 %v4026, %v4241
  %v4289 = vadd.f32 %v4027, %v4228
  %v4290 = vadd.f32 %v4028, %v4242
  %v4291 = vmul.f32 %v4267, 0.5
  %v4292 = vmul.f32 %v4268, 0.5
  %v4293 = vmul.f32 %v4269, 0.5
  %v4294 = vmul.f32 %v4270, 0.5
  %v4295 = vmul.f32 %v4271, 0.5
  %v4296 = vmul.f32 %v4272, 0.5
  %v4297 = vmul.f32 %v4273, 0.5
  %v4298 = vmul.f32 %v4274, 0.5
  %v4299 = vmul.f32 %v4275, 0.5
  %v4300 = vmul.f32 %v4276, 0.5
  %v4301 = vmul.f32 %v4277, 0.5
  %v4302 = vmul.f32 %v4278, 0.5
  %v4303 = vmul.f32 %v4267, 0.044715
  %v4304 = vmul.f32 %v4268, 0.044715
  %v4305 = vmul.f32 %v4269, 0.044715
  %v4306 = vmul.f32 %v4270, 0.044715
  %v4307 = vmul.f32 %v4271, 0.044715
  %v4308 = vmul.f32 %v4272, 0.044715
  %v4309 = vmul.f32 %v4273, 0.044715
  %v4310 = vmul.f32 %v4274, 0.044715
  %v4311 = vmul.f32 %v4275, 0.044715
  %v4312 = vmul.f32 %v4276, 0.044715
  %v4313 = vmul.f32 %v4277, 0.044715
  %v4314 = vmul.f32 %v4278, 0.044715
  %v4315 = vmul.f32 %v4303, %v4267
  %v4316 = vmul.f32 %v4304, %v4268
  %v4317 = vmul.f32 %v4305, %v4269
  %v4318 = vmul.f32 %v4306, %v4270
  %v4319 = vmul.f32 %v4307, %v4271
  %v4320 = vmul.f32 %v4308, %v4272
  %v4321 = vmul.f32 %v4309, %v4273
  %v4322 = vmul.f32 %v4310, %v4274
  %v4323 = vmul.f32 %v4311, %v4275
  %v4324 = vmul.f32 %v4312, %v4276
  %v4325 = vmul.f32 %v4313, %v4277
  %v4326 = vmul.f32 %v4314, %v4278
  %v4327 = vmul.f32 %v4315, %v4267
  %v4328 = vmul.f32 %v4316, %v4268
  %v4329 = vmul.f32 %v4317, %v4269
  %v4330 = vmul.f32 %v4318, %v4270
  %v4331 = vmul.f32 %v4319, %v4271
  %v4332 = vmul.f32 %v4320, %v4272
  %v4333 = vmul.f32 %v4321, %v4273
  %v4334 = vmul.f32 %v4322, %v4274
  %v4335 = vmul.f32 %v4323, %v4275
  %v4336 = vmul.f32 %v4324, %v4276
  %v4337 = vmul.f32 %v4325, %v4277
  %v4338 = vmul.f32 %v4326, %v4278
  %v4339 = vadd.f32 %v4267, %v4327
  %v4340 = vadd.f32 %v4268, %v4328
  %v4341 = vadd.f32 %v4269, %v4329
  %v4342 = vadd.f32 %v4270, %v4330
  %v4343 = vadd.f32 %v4271, %v4331
  %v4344 = vadd.f32 %v4272, %v4332
  %v4345 = vadd.f32 %v4273, %v4333
  %v4346 = vadd.f32 %v4274, %v4334
  %v4347 = vadd.f32 %v4275, %v4335
  %v4348 = vadd.f32 %v4276, %v4336
  %v4349 = vadd.f32 %v4277, %v4337
  %v4350 = vadd.f32 %v4278, %v4338
  %v4351 = vmul.f32 %v4339, 0.7978846
  %v4352 = vmul.f32 %v4340, 0.7978846
  %v4353 = vmul.f32 %v4341, 0.7978846
  %v4354 = vmul.f32 %v4342, 0.7978846
  %v4355 = vmul.f32 %v4343, 0.7978846
  %v4356 = vmul.f32 %v4344, 0.7978846
  %v4357 = vmul.f32 %v4345, 0.7978846
  %v4358 = vmul.f32 %v4346, 0.7978846
  %v4359 = vmul.f32 %v4347, 0.7978846
  %v4360 = vmul.f32 %v4348, 0.7978846
  %v4361 = vmul.f32 %v4349, 0.7978846
  %v4362 = vmul.f32 %v4350, 0.7978846
  %v4363 = vtanh.pop %v4351
  %v4364 = vtanh.pop %v4352
  %v4365 = vtanh.pop %v4353
  %v4366 = vtanh.pop %v4354
  %v4367 = vtanh.pop %v4355
  %v4368 = vtanh.pop %v4356
  %v4369 = vtanh.pop %v4357
  %v4370 = vtanh.pop %v4358
  %v4371 = vtanh.pop %v4359
  %v4372 = vtanh.pop %v4360
  %v4373 = vtanh.pop %v4361
  %v4374 = vtanh.pop %v4362
  %v4375 = vadd.f32 %v4363, 1.0
  %v4376 = vadd.f32 %v4364, 1.0
  %v4377 = vadd.f32 %v4365, 1.0
  %v4378 = vadd.f32 %v4366, 1.0
  %v4379 = vadd.f32 %v4367, 1.0
  %v4380 = vadd.f32 %v4368, 1.0
  %v4381 = vadd.f32 %v4369, 1.0
  %v4382 = vadd.f32 %v4370, 1.0
  %v4383 = vadd.f32 %v4371, 1.0
  %v4384 = vadd.f32 %v4372, 1.0
  %v4385 = vadd.f32 %v4373, 1.0
  %v4386 = vadd.f32 %v4374, 1.0
  %v4387 = vmul.f32 %v4291, %v4375
  %v4388 = vmul.f32 %v4292, %v4376
  %v4389 = vmul.f32 %v4293, %v4377
  %v4390 = vmul.f32 %v4294, %v4378
  %v4391 = vmul.f32 %v4295, %v4379
  %v4392 = vmul.f32 %v4296, %v4380
  %v4393 = vmul.f32 %v4297, %v4381
  %v4394 = vmul.f32 %v4298, %v4382
  %v4395 = vmul.f32 %v4299, %v4383
  %v4396 = vmul.f32 %v4300, %v4384
  %v4397 = vmul.f32 %v4301, %v4385
  %v4398 = vmul.f32 %v4302, %v4386
  %v4399 = vmul.f32 %v4387, %v4279
  %v4400 = vmul.f32 %v4388, %v4280
  %v4401 = vmul.f32 %v4389, %v4281
  %v4402 = vmul.f32 %v4390, %v4282
  %v4403 = vmul.f32 %v4391, %v4283
  %v4404 = vmul.f32 %v4392, %v4284
  %v4405 = vmul.f32 %v4393, %v4285
  %v4406 = vmul.f32 %v4394, %v4286
  %v4407 = vmul.f32 %v4395, %v4287
  %v4408 = vmul.f32 %v4396, %v4288
  %v4409 = vmul.f32 %v4397, %v4289
  %v4410 = vmul.f32 %v4398, %v4290
  %v4411 = vld [vmem:[%s12] sm:$0xf]
  %v4412 = vld [vmem:[%s12 + $0x4] sm:$0xf]
  %v4413 = vpack.c.bf16 %v4401, %v4399
  %v4414 = vpack.c.bf16 %v4402, %v4400
  %v4415 = vpack.c.bf16 %v4405, %v4403
  %v4416 = vpack.c.bf16 %v4406, %v4404
  %v4417 = vpack.c.bf16 %v4409, %v4407
  %v4418 = vpack.c.bf16 %v4410, %v4408
  %v4421 = vunpack.c.l.b16 %v4411
  %v4422 = vunpack.c.l.b16 %v4412
  %v4423 = vpack.c.b16 %v4422, %v4421
  %4430 = vrot.lane.b32.xlu0 %v4413, 9
  %v4431 = vpop.permute.xlu0 %4430
  %4432 = vrot.lane.b32.xlu0 %v4414, 9
  %v4433 = vpop.permute.xlu0 %4432
  %4434 = vrot.lane.b32.xlu0 %v4415, 9
  %v4435 = vpop.permute.xlu0 %4434
  %4436 = vrot.lane.b32.xlu0 %v4416, 9
  %v4437 = vpop.permute.xlu0 %4436
  %4438 = vrot.lane.b32.xlu0 %v4417, 9
  %v4439 = vpop.permute.xlu0 %4438
  %4440 = vrot.lane.b32.xlu0 %v4418, 9
  %v4441 = vpop.permute.xlu0 %4440
  %vm4442 = vcmask 72704
  %v4443 = vsel %vm4442, %v4431, %v4433
  %v4444 = vsel %vm4442, %v4435, %v4437
  %v4445 = vsel %vm4442, %v4439, %v4441
  %vm4449 = vcmask 392192
  %v4451 = vsel %vm4449, %v4423, 0
  %4453 = vmatprep.subr.bf16.mxu0 0
  %4454 = vmatpush1.bf16.msra.mxu0 %v4443
  %4455 = vmatprep.subr.bf16.mxu0 0
  %4456 = vmatpush1.bf16.msra.mxu0 %v4444
  %4457 = vmatprep.subr.bf16.mxu0 0
  %4458 = vmatpush1.bf16.msra.mxu0 %v4445
  %4459 = vmatprep.subr.bf16.mxu0 0
  %4460 = vmatpush1.bf16.msra.mxu0 0
  %4461 = vmatprep.subr.bf16.mxu0 0
  %4462 = vmatpush1.bf16.msra.mxu0 0
  %4463 = vmatprep.subr.bf16.mxu0 0
  %4464 = vmatpush1.bf16.msra.mxu0 0
  %4465 = vmatprep.subr.bf16.mxu0 0
  %4466 = vmatpush1.bf16.msra.mxu0 0
  %4467 = vmatprep.subr.bf16.mxu0 0
  %4468 = vmatpush1.bf16.msra.mxu0 0
  %4469 = vmatprep.subr.bf16.mxu0 0
  %4470 = vmatpush1.bf16.msra.mxu0 0
  %4471 = vmatprep.subr.bf16.mxu0 0
  %4472 = vmatpush1.bf16.msra.mxu0 0
  %4473 = vmatprep.subr.bf16.mxu0 0
  %4474 = vmatpush1.bf16.msra.mxu0 0
  %4475 = vmatprep.subr.bf16.mxu0 0
  %4476 = vmatpush1.bf16.msra.mxu0 0
  %4477 = vmatprep.subr.bf16.mxu0 0
  %4478 = vmatpush1.bf16.msra.mxu0 0
  %4479 = vmatprep.subr.bf16.mxu0 0
  %4480 = vmatpush1.bf16.msra.mxu0 0
  %4481 = vmatprep.subr.bf16.mxu0 0
  %4482 = vmatpush1.bf16.msra.mxu0 0
  %4483 = vmatprep.subr.bf16.mxu0 0
  %4484 = vmatpush1.bf16.msra.mxu0 0
  %4485 = vmatprep.mubr.bf16.mxu0 0
  %4486 = vmatmul.mubr.bf16.gmra.mrb[0].mxu0 %v4451
  %v4487 = vpop.f32.mrb[0].mxu0
  %v4488 = vadd.f32 0.0, %v4487
  %v4489 = vpop.f32.mrb[0].mxu0
  %v4490 = vpop.f32.mrb[0].mxu0
  %v4491 = vadd.f32 0.0, %v4490
  %v4492 = vpop.f32.mrb[0].mxu0
  %4493 = vdwg.mxu0
  %v4494 = vadd.f32 %v1848, %v4488
  %v4495 = vadd.f32 %v1849, %v4491
  %4496 = vst [vmem:[%s13] sm:$0xff] %v4494
  %4497 = vst [vmem:[%s13 + $0x8] sm:$0xff] %v4495
  // Predicated region
  $region54: #{far_moduls_forward.7} parent=0 // pred_check
    _
  $region55: #{far_moduls_forward.7} parent=0 // pred_check_branch
    %4499 = sbr.rel (0) target = $region57
  $region56: #{far_moduls_forward.7} parent=0 // pred_region
    _
  $region57: #{far_moduls_forward.7} parent=0 // pred_fallthru
    _
  // Predicated region
  $region58: #{far_moduls_forward.7} parent=0 // pred_check
    _
  $region59: #{far_moduls_forward.7} parent=0 // pred_check_branch
    %4501 = sbr.rel (0) target = $region61
  $region60: #{far_moduls_forward.7} parent=0 // pred_region
    _
  $region61: #{far_moduls_forward.7} parent=0 // pred_fallthru
    _

</llo_original>
